<compile_context>
chip_gen: v7x
topology: tpu7x:2x2x1
jax: 0.10.0
libtpu: 0.0.40
codegen_flags: <defaults>
</compile_context>

<pallas_src>
import functools

import jax
import jax.numpy as jnp
from jax import lax
from jax.experimental import pallas as pl
from jax.experimental.pallas import tpu as pltpu

BN_EPS = 1e-5
MID = 32                # OutConv mid_channels (fixed to 32 in the torch module)
C1_PAD = 128            # fused mid channels (3*32 = 96) padded to a full 128-lane row
COUT_PAD = 128          # fused 1x1-conv output channels padded to a full 128-lane row


def _tree_sum(parts):
    """Balanced pairwise sum -> independent accumulators for VALU co-issue."""
    while len(parts) > 1:
        nxt = [parts[i] + parts[i + 1] for i in range(0, len(parts) - 1, 2)]
        if len(parts) % 2:
            nxt.append(parts[-1])
        parts = nxt
    return parts[0]


def multitask_head_kernel(
    x_ref,      # (1, H, W, Cin)        VMEM  input image (NHWC)
    w1_ref,     # (9, Cin, C1_PAD)      VMEM  fused conv1 weights (3 heads side by side)
    s1_ref,     # (1, C1_PAD)           VMEM  folded BN1 scale
    t1_ref,     # (1, C1_PAD)           VMEM  folded BN1 shift (includes conv1 bias)
    w2_ref,     # (9, C1_PAD, C1_PAD)   VMEM  block-diagonal fused conv2 weights
    s2_ref,     # (1, C1_PAD)           VMEM  folded BN2 scale
    t2_ref,     # (1, C1_PAD)           VMEM  folded BN2 shift (includes conv2 bias)
    w3_ref,     # (C1_PAD, COUT_PAD)    VMEM  fused 1x1 conv weights, zero-padded
    b3_ref,     # (1, COUT_PAD)         VMEM  fused 1x1 conv bias, zero-padded
    out_ref,    # (1, H*W, COUT_PAD)    VMEM  lane-dense fused output
    xpad_ref,   # scratch (H+2, W+2, Cin)     zero-padded input (halo = 1)
    hpad_ref,   # scratch (H+2, W+2, C1_PAD)  zero-padded hidden activations
):
    _, H, W, Cin = x_ref.shape
    C1 = w1_ref.shape[2]
    HW = H * W

    def conv3x3(pad_ref, w_ref, cin):
        # 9-tap 3x3 conv as static slices of the padded scratch + MXU matmuls.
        parts = []
        for kh in range(3):
            for kw in range(3):
                tap = pad_ref[kh:kh + H, kw:kw + W, :].reshape(HW, cin)
                parts.append(jnp.dot(tap, w_ref[kh * 3 + kw],
                                     preferred_element_type=jnp.float32))
        return _tree_sum(parts)

    # ---------------- zero-padded input ----------------
    # Full-buffer zero each step (megacore-safe; interior is overwritten right below).
    xpad_ref[...] = jnp.zeros_like(xpad_ref)
    xpad_ref[1:H + 1, 1:W + 1, :] = x_ref[0]

    # ------- conv1 + BN(eval) + ReLU (all three heads fused on channels) -------
    a1 = conv3x3(xpad_ref, w1_ref, Cin)                        # (HW, C1_PAD)
    h1 = jnp.maximum(a1 * s1_ref[...] + t1_ref[...], 0.0)      # full-lane VPU ops

    # ------- conv2 + BN(eval) + ReLU (block-diagonal fused weights) -------
    hpad_ref[...] = jnp.zeros_like(hpad_ref)
    hpad_ref[1:H + 1, 1:W + 1, :] = h1.reshape(H, W, C1)       # unmasked 128-lane store
    a2 = conv3x3(hpad_ref, w2_ref, C1)                         # (HW, C1_PAD)
    h2 = jnp.maximum(a2 * s2_ref[...] + t2_ref[...], 0.0)

    # ------- fused 1x1 conv; N padded to 128 so the store is a full-lane vst -------
    y = jnp.dot(h2, w3_ref[...], preferred_element_type=jnp.float32) + b3_ref[...]
    out_ref[0] = y                                             # (HW, 128) lane-dense


def _fold_outconv(p):
    """torch-layout OutConv params -> kernel layout with BN folded into scale/shift."""
    mid = p["w1"].shape[0]
    cin = p["w1"].shape[1]
    w1 = jnp.transpose(p["w1"], (2, 3, 1, 0)).reshape(9, cin, mid)   # [kh*3+kw, ci, co]
    w2 = jnp.transpose(p["w2"], (2, 3, 1, 0)).reshape(9, mid, mid)
    w3 = p["w3"][:, :, 0, 0].T                                       # (mid, cout)
    s1 = p["g1"] / jnp.sqrt(p["v1"] + BN_EPS)
    t1 = (p["b1"] - p["m1"]) * s1 + p["beta1"]
    s2 = p["g2"] / jnp.sqrt(p["v2"] + BN_EPS)
    t2 = (p["b2"] - p["m2"]) * s2 + p["beta2"]
    return w1, s1, t1, w2, s2, t2, w3, p["b3"]


def _build_fused_params(params, num_classes):
    """Fuse the seg / edge / expansion OutConv heads along a 128-padded channel axis."""
    heads = [("seg", num_classes), ("edge", 1), ("expansion", num_classes)]
    folded = [_fold_outconv(params[name]) for name, _ in heads]
    cin = folded[0][0].shape[1]

    w1 = jnp.zeros((9, cin, C1_PAD), jnp.float32)
    s1 = jnp.zeros((1, C1_PAD), jnp.float32)
    t1 = jnp.zeros((1, C1_PAD), jnp.float32)
    w2 = jnp.zeros((9, C1_PAD, C1_PAD), jnp.float32)              # block-diagonal
    s2 = jnp.zeros((1, C1_PAD), jnp.float32)
    t2 = jnp.zeros((1, C1_PAD), jnp.float32)
    w3 = jnp.zeros((C1_PAD, COUT_PAD), jnp.float32)
    b3 = jnp.zeros((1, COUT_PAD), jnp.float32)

    col = 0
    for i, (f, (_, cout)) in enumerate(zip(folded, heads)):
        r0 = i * MID
        w1 = w1.at[:, :, r0:r0 + MID].set(f[0])
        s1 = s1.at[0, r0:r0 + MID].set(f[1])
        t1 = t1.at[0, r0:r0 + MID].set(f[2])
        w2 = w2.at[:, r0:r0 + MID, r0:r0 + MID].set(f[3])
        s2 = s2.at[0, r0:r0 + MID].set(f[4])
        t2 = t2.at[0, r0:r0 + MID].set(f[5])
        w3 = w3.at[r0:r0 + MID, col:col + cout].set(f[6])
        b3 = b3.at[0, col:col + cout].set(f[7])
        col += cout
    return w1, s1, t1, w2, s2, t2, w3, b3


@functools.partial(jax.jit, static_argnames=("num_classes",))
def multitask_head_forward(x_nchw, params, num_classes):
    """x_nchw: (B, filters[0], H, W) float32.  Returns dict like the torch module."""
    B, Cin, H, W = x_nchw.shape
    HW = H * W
    w1, s1, t1, w2, s2, t2, w3, b3 = _build_fused_params(params, num_classes)

    x_nhwc = jnp.transpose(x_nchw, (0, 2, 3, 1))     # channels-last for lane layout

    # TODO(synk): training-mode Dropout(0.3) on the expansion branch and training-mode
    # BatchNorm (batch statistics / running-stat updates) are not implemented (eval mode).

    out = pl.pallas_call(
        multitask_head_kernel,
        out_shape=jax.ShapeDtypeStruct((B, HW, COUT_PAD), jnp.float32),
        grid=(B,),
        in_specs=[
            pl.BlockSpec((1, H, W, Cin), lambda b: (b, 0, 0, 0)),
            pl.BlockSpec((9, Cin, C1_PAD), lambda b: (0, 0, 0)),
            pl.BlockSpec((1, C1_PAD), lambda b: (0, 0)),
            pl.BlockSpec((1, C1_PAD), lambda b: (0, 0)),
            pl.BlockSpec((9, C1_PAD, C1_PAD), lambda b: (0, 0, 0)),
            pl.BlockSpec((1, C1_PAD), lambda b: (0, 0)),
            pl.BlockSpec((1, C1_PAD), lambda b: (0, 0)),
            pl.BlockSpec((C1_PAD, COUT_PAD), lambda b: (0, 0)),
            pl.BlockSpec((1, COUT_PAD), lambda b: (0, 0)),
        ],
        out_specs=pl.BlockSpec((1, HW, COUT_PAD), lambda b: (b, 0, 0)),
        scratch_shapes=[
            pltpu.VMEM((H + 2, W + 2, Cin), jnp.float32),
            pltpu.VMEM((H + 2, W + 2, C1_PAD), jnp.float32),
        ],
        compiler_params=pltpu.CompilerParams(dimension_semantics=("parallel",)),
    )(x_nhwc, w1, s1, t1, w2, s2, t2, w3, b3)

    # Unpack the lane-padded fused output and re-export in the torch NCHW convention.
    ctot = 2 * num_classes + 1
    y = out[:, :, :ctot].reshape(B, H, W, ctot)
    y = jnp.transpose(y, (0, 3, 1, 2))               # (B, 2*nc+1, H, W)
    seg = y[:, :num_classes]
    edge = y[:, num_classes:num_classes + 1]
    expansion = y[:, num_classes + 1:ctot]
    return {"seg": seg, "edge": edge, "expansion": expansion, "feature": x_nchw}


# ----------------------------- pure-JAX reference -----------------------------

def _outconv_ref(x, p):
    def conv(h, w, b, pad):
        y = lax.conv_general_dilated(
            h, w, window_strides=(1, 1), padding=[(pad, pad), (pad, pad)],
            dimension_numbers=("NCHW", "OIHW", "NCHW"))
        return y + b[None, :, None, None]

    def bn(y, g, beta, m, v):
        s = (g / jnp.sqrt(v + BN_EPS))[None, :, None, None]
        return (y - m[None, :, None, None]) * s + beta[None, :, None, None]

    h = jnp.maximum(bn(conv(x, p["w1"], p["b1"], 1),
                       p["g1"], p["beta1"], p["m1"], p["v1"]), 0.0)
    h = jnp.maximum(bn(conv(h, p["w2"], p["b2"], 1),
                       p["g2"], p["beta2"], p["m2"], p["v2"]), 0.0)
    return conv(h, p["w3"], p["b3"], 0)


def multitask_head_reference(x_nchw, params):
    return {
        "seg": _outconv_ref(x_nchw, params["seg"]),
        "edge": _outconv_ref(x_nchw, params["edge"]),
        "expansion": _outconv_ref(x_nchw, params["expansion"]),
        "feature": x_nchw,
    }


if __name__ == "__main__":
    key = jax.random.PRNGKey(0)
    B, Cin, H, W = 2, 32, 16, 16          # filters[0] = 32
    num_classes = 4

    def make_outconv_params(k, cin, cout):
        ks = jax.random.split(k, 14)
        n = lambda kk, shape, s=0.1: s * jax.random.normal(kk, shape, jnp.float32)
        return {
            "w1": n(ks[0], (MID, cin, 3, 3), 0.15), "b1": n(ks[1], (MID,)),
            "g1": 1.0 + n(ks[2], (MID,)), "beta1": n(ks[3], (MID,)),
            "m1": n(ks[4], (MID,)),
            "v1": 1.0 + 0.1 * jnp.abs(jax.random.normal(ks[5], (MID,), jnp.float32)),
            "w2": n(ks[6], (MID, MID, 3, 3), 0.15), "b2": n(ks[7], (MID,)),
            "g2": 1.0 + n(ks[8], (MID,)), "beta2": n(ks[9], (MID,)),
            "m2": n(ks[10], (MID,)),
            "v2": 1.0 + 0.1 * jnp.abs(jax.random.normal(ks[11], (MID,), jnp.float32)),
            "w3": n(ks[12], (cout, MID, 1, 1), 0.2), "b3": n(ks[13], (cout,)),
        }

    k_x, k_seg, k_edge, k_exp = jax.random.split(key, 4)
    x = jax.random.normal(k_x, (B, Cin, H, W), jnp.float32)
    params = {
        "seg": make_outconv_params(k_seg, Cin, num_classes),
        "edge": make_outconv_params(k_edge, Cin, 1),
        "expansion": make_outconv_params(k_exp, Cin, num_classes),
    }

    pred = multitask_head_forward(x, params, num_classes=num_classes)
    pred = jax.block_until_ready(pred)

    ref = multitask_head_reference(x, params)
    assert pred["seg"].shape == (B, num_classes, H, W)
    assert pred["edge"].shape == (B, 1, H, W)
    assert pred["expansion"].shape == (B, num_classes, H, W)
    assert pred["feature"].shape == (B, Cin, H, W)
    for name in ("seg", "edge", "expansion", "feature"):
        assert jnp.allclose(pred[name], ref[name], atol=2e-2, rtol=2e-2), f"{name} mismatch"

    print("KERNEL_OK")
</pallas_src>

<mosaic_0001>
module attributes {stable_mosaic.version = 11 : i64} {
  func.func @multitask_head_kernel(%arg0: i32, %arg1: memref<1x16x16x32xf32, #tpu.memory_space<vmem>>, %arg2: memref<9x32x128xf32, #tpu.memory_space<vmem>>, %arg3: memref<1x128xf32, #tpu.memory_space<vmem>>, %arg4: memref<1x128xf32, #tpu.memory_space<vmem>>, %arg5: memref<9x128x128xf32, #tpu.memory_space<vmem>>, %arg6: memref<1x128xf32, #tpu.memory_space<vmem>>, %arg7: memref<1x128xf32, #tpu.memory_space<vmem>>, %arg8: memref<128x128xf32, #tpu.memory_space<vmem>>, %arg9: memref<1x128xf32, #tpu.memory_space<vmem>>, %arg10: memref<1x256x128xf32, #tpu.memory_space<vmem>>, %arg11: memref<18x18x32xf32, #tpu.memory_space<vmem>>, %arg12: memref<18x18x128xf32, #tpu.memory_space<vmem>>) attributes {dimension_semantics = [#tpu.dimension_semantics<parallel>], iteration_bounds = array<i64: 2>, scalar_prefetch = 0 : i64, scratch_operands = 2 : i64, tpu.core_type = #tpu.core_type<tc>, window_params = [{transform_indices = @transform_0, window_bounds = array<i64: 1, 16, 16, 32>}, {pipeline_mode = #tpu.pipeline_mode<synchronous>, transform_indices = @transform_1, window_bounds = array<i64: 9, 32, 128>}, {pipeline_mode = #tpu.pipeline_mode<synchronous>, transform_indices = @transform_2, window_bounds = array<i64: 1, 128>}, {pipeline_mode = #tpu.pipeline_mode<synchronous>, transform_indices = @transform_3, window_bounds = array<i64: 1, 128>}, {pipeline_mode = #tpu.pipeline_mode<synchronous>, transform_indices = @transform_4, window_bounds = array<i64: 9, 128, 128>}, {pipeline_mode = #tpu.pipeline_mode<synchronous>, transform_indices = @transform_5, window_bounds = array<i64: 1, 128>}, {pipeline_mode = #tpu.pipeline_mode<synchronous>, transform_indices = @transform_6, window_bounds = array<i64: 1, 128>}, {pipeline_mode = #tpu.pipeline_mode<synchronous>, transform_indices = @transform_7, window_bounds = array<i64: 128, 128>}, {pipeline_mode = #tpu.pipeline_mode<synchronous>, transform_indices = @transform_8, window_bounds = array<i64: 1, 128>}, {transform_indices = @transform_9, window_bounds = array<i64: 1, 256, 128>}]} {
    %cst = arith.constant 0.000000e+00 : f32
    %0 = vector.broadcast %cst : f32 to vector<18x18x32xf32>
    %c0 = arith.constant 0 : index
    %c0_0 = arith.constant 0 : index
    %c0_1 = arith.constant 0 : index
    %1 = vector.load %arg11[%c0, %c0_0, %c0_1] : memref<18x18x32xf32, #tpu.memory_space<vmem>>, vector<18x18x32xf32>
    tpu.vector_store %arg11[%c0, %c0_0, %c0_1], %0 {strides = array<i32>} : memref<18x18x32xf32, #tpu.memory_space<vmem>>, vector<18x18x32xf32>,
    %c0_2 = arith.constant 0 : index
    %c0_3 = arith.constant 0 : index
    %c0_4 = arith.constant 0 : index
    %c0_5 = arith.constant 0 : index
    %2 = vector.load %arg1[%c0_2, %c0_3, %c0_4, %c0_5] : memref<1x16x16x32xf32, #tpu.memory_space<vmem>>, vector<1x16x16x32xf32>
    %3 = vector.shape_cast %2 : vector<1x16x16x32xf32> to vector<16x16x32xf32>
    %c1 = arith.constant 1 : index
    %c1_6 = arith.constant 1 : index
    %c0_7 = arith.constant 0 : index
    %4 = vector.load %arg11[%c1, %c1_6, %c0_7] : memref<18x18x32xf32, #tpu.memory_space<vmem>>, vector<16x16x32xf32>
    tpu.vector_store %arg11[%c1, %c1_6, %c0_7], %3 {strides = array<i32>} : memref<18x18x32xf32, #tpu.memory_space<vmem>>, vector<16x16x32xf32>,
    %c0_8 = arith.constant 0 : index
    %c0_9 = arith.constant 0 : index
    %c0_10 = arith.constant 0 : index
    %5 = vector.load %arg11[%c0_8, %c0_9, %c0_10] : memref<18x18x32xf32, #tpu.memory_space<vmem>>, vector<16x16x32xf32>
    %6 = vector.shape_cast %5 : vector<16x16x32xf32> to vector<256x32xf32>
    %c0_11 = arith.constant 0 : index
    %c0_12 = arith.constant 0 : index
    %c0_13 = arith.constant 0 : index
    %7 = vector.load %arg2[%c0_11, %c0_12, %c0_13] : memref<9x32x128xf32, #tpu.memory_space<vmem>>, vector<1x32x128xf32>
    %8 = vector.shape_cast %7 : vector<1x32x128xf32> to vector<32x128xf32>
    %cst_14 = arith.constant dense<0.000000e+00> : vector<256x128xf32>
    %9 = tpu.matmul %6, %8, %cst_14 {dimension_numbers = #tpu.dot_dimension_numbers<[1], [0], [0], [1], [0, 0, 1, 1], [], []>} : vector<256x32xf32>, vector<32x128xf32>, vector<256x128xf32> -> vector<256x128xf32>
    %c0_15 = arith.constant 0 : index
    %c1_16 = arith.constant 1 : index
    %c0_17 = arith.constant 0 : index
    %10 = vector.load %arg11[%c0_15, %c1_16, %c0_17] : memref<18x18x32xf32, #tpu.memory_space<vmem>>, vector<16x16x32xf32>
    %11 = vector.shape_cast %10 : vector<16x16x32xf32> to vector<256x32xf32>
    %c1_18 = arith.constant 1 : index
    %c0_19 = arith.constant 0 : index
    %c0_20 = arith.constant 0 : index
    %12 = vector.load %arg2[%c1_18, %c0_19, %c0_20] : memref<9x32x128xf32, #tpu.memory_space<vmem>>, vector<1x32x128xf32>
    %13 = vector.shape_cast %12 : vector<1x32x128xf32> to vector<32x128xf32>
    %cst_21 = arith.constant dense<0.000000e+00> : vector<256x128xf32>
    %14 = tpu.matmul %11, %13, %cst_21 {dimension_numbers = #tpu.dot_dimension_numbers<[1], [0], [0], [1], [0, 0, 1, 1], [], []>} : vector<256x32xf32>, vector<32x128xf32>, vector<256x128xf32> -> vector<256x128xf32>
    %c0_22 = arith.constant 0 : index
    %c2 = arith.constant 2 : index
    %c0_23 = arith.constant 0 : index
    %15 = vector.load %arg11[%c0_22, %c2, %c0_23] : memref<18x18x32xf32, #tpu.memory_space<vmem>>, vector<16x16x32xf32>
    %16 = vector.shape_cast %15 : vector<16x16x32xf32> to vector<256x32xf32>
    %c2_24 = arith.constant 2 : index
    %c0_25 = arith.constant 0 : index
    %c0_26 = arith.constant 0 : index
    %17 = vector.load %arg2[%c2_24, %c0_25, %c0_26] : memref<9x32x128xf32, #tpu.memory_space<vmem>>, vector<1x32x128xf32>
    %18 = vector.shape_cast %17 : vector<1x32x128xf32> to vector<32x128xf32>
    %cst_27 = arith.constant dense<0.000000e+00> : vector<256x128xf32>
    %19 = tpu.matmul %16, %18, %cst_27 {dimension_numbers = #tpu.dot_dimension_numbers<[1], [0], [0], [1], [0, 0, 1, 1], [], []>} : vector<256x32xf32>, vector<32x128xf32>, vector<256x128xf32> -> vector<256x128xf32>
    %c1_28 = arith.constant 1 : index
    %c0_29 = arith.constant 0 : index
    %c0_30 = arith.constant 0 : index
    %20 = vector.load %arg11[%c1_28, %c0_29, %c0_30] : memref<18x18x32xf32, #tpu.memory_space<vmem>>, vector<16x16x32xf32>
    %21 = vector.shape_cast %20 : vector<16x16x32xf32> to vector<256x32xf32>
    %c3 = arith.constant 3 : index
    %c0_31 = arith.constant 0 : index
    %c0_32 = arith.constant 0 : index
    %22 = vector.load %arg2[%c3, %c0_31, %c0_32] : memref<9x32x128xf32, #tpu.memory_space<vmem>>, vector<1x32x128xf32>
    %23 = vector.shape_cast %22 : vector<1x32x128xf32> to vector<32x128xf32>
    %cst_33 = arith.constant dense<0.000000e+00> : vector<256x128xf32>
    %24 = tpu.matmul %21, %23, %cst_33 {dimension_numbers = #tpu.dot_dimension_numbers<[1], [0], [0], [1], [0, 0, 1, 1], [], []>} : vector<256x32xf32>, vector<32x128xf32>, vector<256x128xf32> -> vector<256x128xf32>
    %c1_34 = arith.constant 1 : index
    %c1_35 = arith.constant 1 : index
    %c0_36 = arith.constant 0 : index
    %25 = vector.load %arg11[%c1_34, %c1_35, %c0_36] : memref<18x18x32xf32, #tpu.memory_space<vmem>>, vector<16x16x32xf32>
    %26 = vector.shape_cast %25 : vector<16x16x32xf32> to vector<256x32xf32>
    %c4 = arith.constant 4 : index
    %c0_37 = arith.constant 0 : index
    %c0_38 = arith.constant 0 : index
    %27 = vector.load %arg2[%c4, %c0_37, %c0_38] : memref<9x32x128xf32, #tpu.memory_space<vmem>>, vector<1x32x128xf32>
    %28 = vector.shape_cast %27 : vector<1x32x128xf32> to vector<32x128xf32>
    %cst_39 = arith.constant dense<0.000000e+00> : vector<256x128xf32>
    %29 = tpu.matmul %26, %28, %cst_39 {dimension_numbers = #tpu.dot_dimension_numbers<[1], [0], [0], [1], [0, 0, 1, 1], [], []>} : vector<256x32xf32>, vector<32x128xf32>, vector<256x128xf32> -> vector<256x128xf32>
    %c1_40 = arith.constant 1 : index
    %c2_41 = arith.constant 2 : index
    %c0_42 = arith.constant 0 : index
    %30 = vector.load %arg11[%c1_40, %c2_41, %c0_42] : memref<18x18x32xf32, #tpu.memory_space<vmem>>, vector<16x16x32xf32>
    %31 = vector.shape_cast %30 : vector<16x16x32xf32> to vector<256x32xf32>
    %c5 = arith.constant 5 : index
    %c0_43 = arith.constant 0 : index
    %c0_44 = arith.constant 0 : index
    %32 = vector.load %arg2[%c5, %c0_43, %c0_44] : memref<9x32x128xf32, #tpu.memory_space<vmem>>, vector<1x32x128xf32>
    %33 = vector.shape_cast %32 : vector<1x32x128xf32> to vector<32x128xf32>
    %cst_45 = arith.constant dense<0.000000e+00> : vector<256x128xf32>
    %34 = tpu.matmul %31, %33, %cst_45 {dimension_numbers = #tpu.dot_dimension_numbers<[1], [0], [0], [1], [0, 0, 1, 1], [], []>} : vector<256x32xf32>, vector<32x128xf32>, vector<256x128xf32> -> vector<256x128xf32>
    %c2_46 = arith.constant 2 : index
    %c0_47 = arith.constant 0 : index
    %c0_48 = arith.constant 0 : index
    %35 = vector.load %arg11[%c2_46, %c0_47, %c0_48] : memref<18x18x32xf32, #tpu.memory_space<vmem>>, vector<16x16x32xf32>
    %36 = vector.shape_cast %35 : vector<16x16x32xf32> to vector<256x32xf32>
    %c6 = arith.constant 6 : index
    %c0_49 = arith.constant 0 : index
    %c0_50 = arith.constant 0 : index
    %37 = vector.load %arg2[%c6, %c0_49, %c0_50] : memref<9x32x128xf32, #tpu.memory_space<vmem>>, vector<1x32x128xf32>
    %38 = vector.shape_cast %37 : vector<1x32x128xf32> to vector<32x128xf32>
    %cst_51 = arith.constant dense<0.000000e+00> : vector<256x128xf32>
    %39 = tpu.matmul %36, %38, %cst_51 {dimension_numbers = #tpu.dot_dimension_numbers<[1], [0], [0], [1], [0, 0, 1, 1], [], []>} : vector<256x32xf32>, vector<32x128xf32>, vector<256x128xf32> -> vector<256x128xf32>
    %c2_52 = arith.constant 2 : index
    %c1_53 = arith.constant 1 : index
    %c0_54 = arith.constant 0 : index
    %40 = vector.load %arg11[%c2_52, %c1_53, %c0_54] : memref<18x18x32xf32, #tpu.memory_space<vmem>>, vector<16x16x32xf32>
    %41 = vector.shape_cast %40 : vector<16x16x32xf32> to vector<256x32xf32>
    %c7 = arith.constant 7 : index
    %c0_55 = arith.constant 0 : index
    %c0_56 = arith.constant 0 : index
    %42 = vector.load %arg2[%c7, %c0_55, %c0_56] : memref<9x32x128xf32, #tpu.memory_space<vmem>>, vector<1x32x128xf32>
    %43 = vector.shape_cast %42 : vector<1x32x128xf32> to vector<32x128xf32>
    %cst_57 = arith.constant dense<0.000000e+00> : vector<256x128xf32>
    %44 = tpu.matmul %41, %43, %cst_57 {dimension_numbers = #tpu.dot_dimension_numbers<[1], [0], [0], [1], [0, 0, 1, 1], [], []>} : vector<256x32xf32>, vector<32x128xf32>, vector<256x128xf32> -> vector<256x128xf32>
    %c2_58 = arith.constant 2 : index
    %c2_59 = arith.constant 2 : index
    %c0_60 = arith.constant 0 : index
    %45 = vector.load %arg11[%c2_58, %c2_59, %c0_60] : memref<18x18x32xf32, #tpu.memory_space<vmem>>, vector<16x16x32xf32>
    %46 = vector.shape_cast %45 : vector<16x16x32xf32> to vector<256x32xf32>
    %c8 = arith.constant 8 : index
    %c0_61 = arith.constant 0 : index
    %c0_62 = arith.constant 0 : index
    %47 = vector.load %arg2[%c8, %c0_61, %c0_62] : memref<9x32x128xf32, #tpu.memory_space<vmem>>, vector<1x32x128xf32>
    %48 = vector.shape_cast %47 : vector<1x32x128xf32> to vector<32x128xf32>
    %cst_63 = arith.constant dense<0.000000e+00> : vector<256x128xf32>
    %49 = tpu.matmul %46, %48, %cst_63 {dimension_numbers = #tpu.dot_dimension_numbers<[1], [0], [0], [1], [0, 0, 1, 1], [], []>} : vector<256x32xf32>, vector<32x128xf32>, vector<256x128xf32> -> vector<256x128xf32>
    %50 = arith.addf %9, %14 : vector<256x128xf32>
    %51 = arith.addf %19, %24 : vector<256x128xf32>
    %52 = arith.addf %29, %34 : vector<256x128xf32>
    %53 = arith.addf %39, %44 : vector<256x128xf32>
    %54 = arith.addf %50, %51 : vector<256x128xf32>
    %55 = arith.addf %52, %53 : vector<256x128xf32>
    %56 = arith.addf %54, %55 : vector<256x128xf32>
    %57 = arith.addf %56, %49 : vector<256x128xf32>
    %c0_64 = arith.constant 0 : index
    %c0_65 = arith.constant 0 : index
    %58 = vector.load %arg3[%c0_64, %c0_65] : memref<1x128xf32, #tpu.memory_space<vmem>>, vector<1x128xf32>
    %59 = vector.broadcast %58 : vector<1x128xf32> to vector<256x128xf32>
    %60 = arith.mulf %57, %59 : vector<256x128xf32>
    %c0_66 = arith.constant 0 : index
    %c0_67 = arith.constant 0 : index
    %61 = vector.load %arg4[%c0_66, %c0_67] : memref<1x128xf32, #tpu.memory_space<vmem>>, vector<1x128xf32>
    %62 = vector.broadcast %61 : vector<1x128xf32> to vector<256x128xf32>
    %63 = arith.addf %60, %62 : vector<256x128xf32>
    %cst_68 = arith.constant 0.000000e+00 : f32
    %64 = vector.broadcast %cst_68 : f32 to vector<256x128xf32>
    %65 = arith.maximumf %63, %64 : vector<256x128xf32>
    %cst_69 = arith.constant 0.000000e+00 : f32
    %66 = vector.broadcast %cst_69 : f32 to vector<18x18x128xf32>
    %c0_70 = arith.constant 0 : index
    %c0_71 = arith.constant 0 : index
    %c0_72 = arith.constant 0 : index
    %67 = vector.load %arg12[%c0_70, %c0_71, %c0_72] : memref<18x18x128xf32, #tpu.memory_space<vmem>>, vector<18x18x128xf32>
    tpu.vector_store %arg12[%c0_70, %c0_71, %c0_72], %66 {strides = array<i32>} : memref<18x18x128xf32, #tpu.memory_space<vmem>>, vector<18x18x128xf32>,
    %68 = vector.shape_cast %65 : vector<256x128xf32> to vector<16x16x128xf32>
    %c1_73 = arith.constant 1 : index
    %c1_74 = arith.constant 1 : index
    %c0_75 = arith.constant 0 : index
    %69 = vector.load %arg12[%c1_73, %c1_74, %c0_75] : memref<18x18x128xf32, #tpu.memory_space<vmem>>, vector<16x16x128xf32>
    tpu.vector_store %arg12[%c1_73, %c1_74, %c0_75], %68 {strides = array<i32>} : memref<18x18x128xf32, #tpu.memory_space<vmem>>, vector<16x16x128xf32>,
    %c0_76 = arith.constant 0 : index
    %c0_77 = arith.constant 0 : index
    %c0_78 = arith.constant 0 : index
    %70 = vector.load %arg12[%c0_76, %c0_77, %c0_78] : memref<18x18x128xf32, #tpu.memory_space<vmem>>, vector<16x16x128xf32>
    %71 = vector.shape_cast %70 : vector<16x16x128xf32> to vector<256x128xf32>
    %c0_79 = arith.constant 0 : index
    %c0_80 = arith.constant 0 : index
    %c0_81 = arith.constant 0 : index
    %72 = vector.load %arg5[%c0_79, %c0_80, %c0_81] : memref<9x128x128xf32, #tpu.memory_space<vmem>>, vector<1x128x128xf32>
    %73 = vector.shape_cast %72 : vector<1x128x128xf32> to vector<128x128xf32>
    %cst_82 = arith.constant dense<0.000000e+00> : vector<256x128xf32>
    %74 = tpu.matmul %71, %73, %cst_82 {dimension_numbers = #tpu.dot_dimension_numbers<[1], [0], [0], [1], [0, 0, 1, 1], [], []>} : vector<256x128xf32>, vector<128x128xf32>, vector<256x128xf32> -> vector<256x128xf32>
    %c0_83 = arith.constant 0 : index
    %c1_84 = arith.constant 1 : index
    %c0_85 = arith.constant 0 : index
    %75 = vector.load %arg12[%c0_83, %c1_84, %c0_85] : memref<18x18x128xf32, #tpu.memory_space<vmem>>, vector<16x16x128xf32>
    %76 = vector.shape_cast %75 : vector<16x16x128xf32> to vector<256x128xf32>
    %c1_86 = arith.constant 1 : index
    %c0_87 = arith.constant 0 : index
    %c0_88 = arith.constant 0 : index
    %77 = vector.load %arg5[%c1_86, %c0_87, %c0_88] : memref<9x128x128xf32, #tpu.memory_space<vmem>>, vector<1x128x128xf32>
    %78 = vector.shape_cast %77 : vector<1x128x128xf32> to vector<128x128xf32>
    %cst_89 = arith.constant dense<0.000000e+00> : vector<256x128xf32>
    %79 = tpu.matmul %76, %78, %cst_89 {dimension_numbers = #tpu.dot_dimension_numbers<[1], [0], [0], [1], [0, 0, 1, 1], [], []>} : vector<256x128xf32>, vector<128x128xf32>, vector<256x128xf32> -> vector<256x128xf32>
    %c0_90 = arith.constant 0 : index
    %c2_91 = arith.constant 2 : index
    %c0_92 = arith.constant 0 : index
    %80 = vector.load %arg12[%c0_90, %c2_91, %c0_92] : memref<18x18x128xf32, #tpu.memory_space<vmem>>, vector<16x16x128xf32>
    %81 = vector.shape_cast %80 : vector<16x16x128xf32> to vector<256x128xf32>
    %c2_93 = arith.constant 2 : index
    %c0_94 = arith.constant 0 : index
    %c0_95 = arith.constant 0 : index
    %82 = vector.load %arg5[%c2_93, %c0_94, %c0_95] : memref<9x128x128xf32, #tpu.memory_space<vmem>>, vector<1x128x128xf32>
    %83 = vector.shape_cast %82 : vector<1x128x128xf32> to vector<128x128xf32>
    %cst_96 = arith.constant dense<0.000000e+00> : vector<256x128xf32>
    %84 = tpu.matmul %81, %83, %cst_96 {dimension_numbers = #tpu.dot_dimension_numbers<[1], [0], [0], [1], [0, 0, 1, 1], [], []>} : vector<256x128xf32>, vector<128x128xf32>, vector<256x128xf32> -> vector<256x128xf32>
    %c1_97 = arith.constant 1 : index
    %c0_98 = arith.constant 0 : index
    %c0_99 = arith.constant 0 : index
    %85 = vector.load %arg12[%c1_97, %c0_98, %c0_99] : memref<18x18x128xf32, #tpu.memory_space<vmem>>, vector<16x16x128xf32>
    %86 = vector.shape_cast %85 : vector<16x16x128xf32> to vector<256x128xf32>
    %c3_100 = arith.constant 3 : index
    %c0_101 = arith.constant 0 : index
    %c0_102 = arith.constant 0 : index
    %87 = vector.load %arg5[%c3_100, %c0_101, %c0_102] : memref<9x128x128xf32, #tpu.memory_space<vmem>>, vector<1x128x128xf32>
    %88 = vector.shape_cast %87 : vector<1x128x128xf32> to vector<128x128xf32>
    %cst_103 = arith.constant dense<0.000000e+00> : vector<256x128xf32>
    %89 = tpu.matmul %86, %88, %cst_103 {dimension_numbers = #tpu.dot_dimension_numbers<[1], [0], [0], [1], [0, 0, 1, 1], [], []>} : vector<256x128xf32>, vector<128x128xf32>, vector<256x128xf32> -> vector<256x128xf32>
    %c1_104 = arith.constant 1 : index
    %c1_105 = arith.constant 1 : index
    %c0_106 = arith.constant 0 : index
    %90 = vector.load %arg12[%c1_104, %c1_105, %c0_106] : memref<18x18x128xf32, #tpu.memory_space<vmem>>, vector<16x16x128xf32>
    %91 = vector.shape_cast %90 : vector<16x16x128xf32> to vector<256x128xf32>
    %c4_107 = arith.constant 4 : index
    %c0_108 = arith.constant 0 : index
    %c0_109 = arith.constant 0 : index
    %92 = vector.load %arg5[%c4_107, %c0_108, %c0_109] : memref<9x128x128xf32, #tpu.memory_space<vmem>>, vector<1x128x128xf32>
    %93 = vector.shape_cast %92 : vector<1x128x128xf32> to vector<128x128xf32>
    %cst_110 = arith.constant dense<0.000000e+00> : vector<256x128xf32>
    %94 = tpu.matmul %91, %93, %cst_110 {dimension_numbers = #tpu.dot_dimension_numbers<[1], [0], [0], [1], [0, 0, 1, 1], [], []>} : vector<256x128xf32>, vector<128x128xf32>, vector<256x128xf32> -> vector<256x128xf32>
    %c1_111 = arith.constant 1 : index
    %c2_112 = arith.constant 2 : index
    %c0_113 = arith.constant 0 : index
    %95 = vector.load %arg12[%c1_111, %c2_112, %c0_113] : memref<18x18x128xf32, #tpu.memory_space<vmem>>, vector<16x16x128xf32>
    %96 = vector.shape_cast %95 : vector<16x16x128xf32> to vector<256x128xf32>
    %c5_114 = arith.constant 5 : index
    %c0_115 = arith.constant 0 : index
    %c0_116 = arith.constant 0 : index
    %97 = vector.load %arg5[%c5_114, %c0_115, %c0_116] : memref<9x128x128xf32, #tpu.memory_space<vmem>>, vector<1x128x128xf32>
    %98 = vector.shape_cast %97 : vector<1x128x128xf32> to vector<128x128xf32>
    %cst_117 = arith.constant dense<0.000000e+00> : vector<256x128xf32>
    %99 = tpu.matmul %96, %98, %cst_117 {dimension_numbers = #tpu.dot_dimension_numbers<[1], [0], [0], [1], [0, 0, 1, 1], [], []>} : vector<256x128xf32>, vector<128x128xf32>, vector<256x128xf32> -> vector<256x128xf32>
    %c2_118 = arith.constant 2 : index
    %c0_119 = arith.constant 0 : index
    %c0_120 = arith.constant 0 : index
    %100 = vector.load %arg12[%c2_118, %c0_119, %c0_120] : memref<18x18x128xf32, #tpu.memory_space<vmem>>, vector<16x16x128xf32>
    %101 = vector.shape_cast %100 : vector<16x16x128xf32> to vector<256x128xf32>
    %c6_121 = arith.constant 6 : index
    %c0_122 = arith.constant 0 : index
    %c0_123 = arith.constant 0 : index
    %102 = vector.load %arg5[%c6_121, %c0_122, %c0_123] : memref<9x128x128xf32, #tpu.memory_space<vmem>>, vector<1x128x128xf32>
    %103 = vector.shape_cast %102 : vector<1x128x128xf32> to vector<128x128xf32>
    %cst_124 = arith.constant dense<0.000000e+00> : vector<256x128xf32>
    %104 = tpu.matmul %101, %103, %cst_124 {dimension_numbers = #tpu.dot_dimension_numbers<[1], [0], [0], [1], [0, 0, 1, 1], [], []>} : vector<256x128xf32>, vector<128x128xf32>, vector<256x128xf32> -> vector<256x128xf32>
    %c2_125 = arith.constant 2 : index
    %c1_126 = arith.constant 1 : index
    %c0_127 = arith.constant 0 : index
    %105 = vector.load %arg12[%c2_125, %c1_126, %c0_127] : memref<18x18x128xf32, #tpu.memory_space<vmem>>, vector<16x16x128xf32>
    %106 = vector.shape_cast %105 : vector<16x16x128xf32> to vector<256x128xf32>
    %c7_128 = arith.constant 7 : index
    %c0_129 = arith.constant 0 : index
    %c0_130 = arith.constant 0 : index
    %107 = vector.load %arg5[%c7_128, %c0_129, %c0_130] : memref<9x128x128xf32, #tpu.memory_space<vmem>>, vector<1x128x128xf32>
    %108 = vector.shape_cast %107 : vector<1x128x128xf32> to vector<128x128xf32>
    %cst_131 = arith.constant dense<0.000000e+00> : vector<256x128xf32>
    %109 = tpu.matmul %106, %108, %cst_131 {dimension_numbers = #tpu.dot_dimension_numbers<[1], [0], [0], [1], [0, 0, 1, 1], [], []>} : vector<256x128xf32>, vector<128x128xf32>, vector<256x128xf32> -> vector<256x128xf32>
    %c2_132 = arith.constant 2 : index
    %c2_133 = arith.constant 2 : index
    %c0_134 = arith.constant 0 : index
    %110 = vector.load %arg12[%c2_132, %c2_133, %c0_134] : memref<18x18x128xf32, #tpu.memory_space<vmem>>, vector<16x16x128xf32>
    %111 = vector.shape_cast %110 : vector<16x16x128xf32> to vector<256x128xf32>
    %c8_135 = arith.constant 8 : index
    %c0_136 = arith.constant 0 : index
    %c0_137 = arith.constant 0 : index
    %112 = vector.load %arg5[%c8_135, %c0_136, %c0_137] : memref<9x128x128xf32, #tpu.memory_space<vmem>>, vector<1x128x128xf32>
    %113 = vector.shape_cast %112 : vector<1x128x128xf32> to vector<128x128xf32>
    %cst_138 = arith.constant dense<0.000000e+00> : vector<256x128xf32>
    %114 = tpu.matmul %111, %113, %cst_138 {dimension_numbers = #tpu.dot_dimension_numbers<[1], [0], [0], [1], [0, 0, 1, 1], [], []>} : vector<256x128xf32>, vector<128x128xf32>, vector<256x128xf32> -> vector<256x128xf32>
    %115 = arith.addf %74, %79 : vector<256x128xf32>
    %116 = arith.addf %84, %89 : vector<256x128xf32>
    %117 = arith.addf %94, %99 : vector<256x128xf32>
    %118 = arith.addf %104, %109 : vector<256x128xf32>
    %119 = arith.addf %115, %116 : vector<256x128xf32>
    %120 = arith.addf %117, %118 : vector<256x128xf32>
    %121 = arith.addf %119, %120 : vector<256x128xf32>
    %122 = arith.addf %121, %114 : vector<256x128xf32>
    %c0_139 = arith.constant 0 : index
    %c0_140 = arith.constant 0 : index
    %123 = vector.load %arg6[%c0_139, %c0_140] : memref<1x128xf32, #tpu.memory_space<vmem>>, vector<1x128xf32>
    %124 = vector.broadcast %123 : vector<1x128xf32> to vector<256x128xf32>
    %125 = arith.mulf %122, %124 : vector<256x128xf32>
    %c0_141 = arith.constant 0 : index
    %c0_142 = arith.constant 0 : index
    %126 = vector.load %arg7[%c0_141, %c0_142] : memref<1x128xf32, #tpu.memory_space<vmem>>, vector<1x128xf32>
    %127 = vector.broadcast %126 : vector<1x128xf32> to vector<256x128xf32>
    %128 = arith.addf %125, %127 : vector<256x128xf32>
    %cst_143 = arith.constant 0.000000e+00 : f32
    %129 = vector.broadcast %cst_143 : f32 to vector<256x128xf32>
    %130 = arith.maximumf %128, %129 : vector<256x128xf32>
    %c0_144 = arith.constant 0 : index
    %c0_145 = arith.constant 0 : index
    %131 = vector.load %arg8[%c0_144, %c0_145] : memref<128x128xf32, #tpu.memory_space<vmem>>, vector<128x128xf32>
    %cst_146 = arith.constant dense<0.000000e+00> : vector<256x128xf32>
    %132 = tpu.matmul %130, %131, %cst_146 {dimension_numbers = #tpu.dot_dimension_numbers<[1], [0], [0], [1], [0, 0, 1, 1], [], []>} : vector<256x128xf32>, vector<128x128xf32>, vector<256x128xf32> -> vector<256x128xf32>
    %c0_147 = arith.constant 0 : index
    %c0_148 = arith.constant 0 : index
    %133 = vector.load %arg9[%c0_147, %c0_148] : memref<1x128xf32, #tpu.memory_space<vmem>>, vector<1x128xf32>
    %134 = vector.broadcast %133 : vector<1x128xf32> to vector<256x128xf32>
    %135 = arith.addf %132, %134 : vector<256x128xf32>
    %c0_149 = arith.constant 0 : index
    %c0_150 = arith.constant 0 : index
    %c0_151 = arith.constant 0 : index
    %136 = vector.load %arg10[%c0_149, %c0_150, %c0_151] : memref<1x256x128xf32, #tpu.memory_space<vmem>>, vector<1x256x128xf32>
    %137 = vector.shape_cast %136 : vector<1x256x128xf32> to vector<256x128xf32>
    %138 = vector.shape_cast %135 : vector<256x128xf32> to vector<1x256x128xf32>
    tpu.vector_store %arg10[%c0_149, %c0_150, %c0_151], %138 {strides = array<i32>} : memref<1x256x128xf32, #tpu.memory_space<vmem>>, vector<1x256x128xf32>,
    return
  }
  func.func @transform_0(%arg0: i32) -> (i32, i32, i32, i32) {
    %c0_i32 = arith.constant 0 : i32
    %c0_i32_0 = arith.constant 0 : i32
    %c0_i32_1 = arith.constant 0 : i32
    %c0_i32_2 = arith.constant 0 : i32
    return %arg0, %c0_i32, %c0_i32_0, %c0_i32_1 : i32, i32, i32, i32
  }
  func.func @transform_1(%arg0: i32) -> (i32, i32, i32) {
    %c0_i32 = arith.constant 0 : i32
    %c0_i32_0 = arith.constant 0 : i32
    %c0_i32_1 = arith.constant 0 : i32
    %c0_i32_2 = arith.constant 0 : i32
    return %c0_i32, %c0_i32_0, %c0_i32_1 : i32, i32, i32
  }
  func.func @transform_2(%arg0: i32) -> (i32, i32) {
    %c0_i32 = arith.constant 0 : i32
    %c0_i32_0 = arith.constant 0 : i32
    %c0_i32_1 = arith.constant 0 : i32
    return %c0_i32, %c0_i32_0 : i32, i32
  }
  func.func @transform_3(%arg0: i32) -> (i32, i32) {
    %c0_i32 = arith.constant 0 : i32
    %c0_i32_0 = arith.constant 0 : i32
    %c0_i32_1 = arith.constant 0 : i32
    return %c0_i32, %c0_i32_0 : i32, i32
  }
  func.func @transform_4(%arg0: i32) -> (i32, i32, i32) {
    %c0_i32 = arith.constant 0 : i32
    %c0_i32_0 = arith.constant 0 : i32
    %c0_i32_1 = arith.constant 0 : i32
    %c0_i32_2 = arith.constant 0 : i32
    return %c0_i32, %c0_i32_0, %c0_i32_1 : i32, i32, i32
  }
  func.func @transform_5(%arg0: i32) -> (i32, i32) {
    %c0_i32 = arith.constant 0 : i32
    %c0_i32_0 = arith.constant 0 : i32
    %c0_i32_1 = arith.constant 0 : i32
    return %c0_i32, %c0_i32_0 : i32, i32
  }
  func.func @transform_6(%arg0: i32) -> (i32, i32) {
    %c0_i32 = arith.constant 0 : i32
    %c0_i32_0 = arith.constant 0 : i32
    %c0_i32_1 = arith.constant 0 : i32
    return %c0_i32, %c0_i32_0 : i32, i32
  }
  func.func @transform_7(%arg0: i32) -> (i32, i32) {
    %c0_i32 = arith.constant 0 : i32
    %c0_i32_0 = arith.constant 0 : i32
    %c0_i32_1 = arith.constant 0 : i32
    return %c0_i32, %c0_i32_0 : i32, i32
  }
  func.func @transform_8(%arg0: i32) -> (i32, i32) {
    %c0_i32 = arith.constant 0 : i32
    %c0_i32_0 = arith.constant 0 : i32
    %c0_i32_1 = arith.constant 0 : i32
    return %c0_i32, %c0_i32_0 : i32, i32
  }
  func.func @transform_9(%arg0: i32) -> (i32, i32, i32) {
    %c0_i32 = arith.constant 0 : i32
    %c0_i32_0 = arith.constant 0 : i32
    %c0_i32_1 = arith.constant 0 : i32
    return %arg0, %c0_i32, %c0_i32_0 : i32, i32, i32
  }
}

</mosaic_0001>

<llo_original>
// kernel: multitask_head_forward.1
$region0: #{multitask_head_forward.1}
  #allocation0 [shape = 'u32[]', space=smem, size = 0x4, offset = 0x4, fixed_abs, tag = 'smem constant byte address 0x4 - core index']
  #allocation1 [shape = 'u32[144,128]{1,0:T(1,128)}', space=vmem, size = 0x12000, scoped, tag = 'internal scratch']
  #allocation2 [shape = 'f32[18,18,32]{2,1,0:T(8,128)}', space=vmem, size = 0x36000, scoped, tag = 'scratch operand']
  #allocation3 [shape = 'f32[18,18,128]{2,1,0:T(8,128)}', space=vmem, size = 0x36000, scoped, tag = 'scratch operand']
  %s0 = inlined_call_operand.vmem [shape: f32[2,16,16,32], index: 0, kind: input, shape index: {}]
  %s1 = inlined_call_operand.vmem [shape: f32[9,32,128], index: 1, kind: input, shape index: {}]
  %s2 = inlined_call_operand.vmem [shape: f32[1,128], index: 2, kind: input, shape index: {}]
  %s3 = inlined_call_operand.vmem [shape: f32[1,128], index: 3, kind: input, shape index: {}]
  %s4 = inlined_call_operand.vmem [shape: f32[9,128,128], index: 4, kind: input, shape index: {}]
  %s5 = inlined_call_operand.vmem [shape: f32[1,128], index: 5, kind: input, shape index: {}]
  %s6 = inlined_call_operand.vmem [shape: f32[1,128], index: 6, kind: input, shape index: {}]
  %s7 = inlined_call_operand.vmem [shape: f32[128,128], index: 7, kind: input, shape index: {}]
  %s8 = inlined_call_operand.vmem [shape: f32[1,128], index: 8, kind: input, shape index: {}]
  %s9 = inlined_call_operand.vmem [shape: f32[2,256,128], index: 9, kind: output, shape index: {}]
  %s10 = sld [smem:[#allocation0]]
  $region69: #{multitask_head_forward.1} parent=0
    _
  %s12 = ssub.s32 1, %s10
  %s13 = scalar_select 0, %s12, %s10
  loop: start=0, step=1, limit=4
  $region2: #{multitask_head_forward.1} parent=0 // loop_pre_header
    _
  $region3: #{multitask_head_forward.1} parent=0 // loop_header
    %s15 = sphi 0, %s19
    %p16 = scmp.ge.s32.totalorder %s15, 4
    %s25 = sphi 0, %s27
    %s28 = sphi 0, %s25
    %s29 = sphi 0, %s28
    %s45 = sphi 0, %s29
    %s49 = sphi 0, %s49
    %s51 = sphi 0, %s49
    %s52 = sphi 0, %s51
    %s66 = sphi 0, %s52
    %s70 = sphi 0, %s70
    %s72 = sphi 0, %s70
    %s73 = sphi 0, %s72
    %s87 = sphi 0, %s73
    %s91 = sphi 0, %s91
    %s93 = sphi 0, %s91
    %s94 = sphi 0, %s93
    %s108 = sphi 0, %s94
    %s112 = sphi 0, %s112
    %s114 = sphi 0, %s112
    %s115 = sphi 0, %s114
    %s129 = sphi 0, %s115
    %s133 = sphi 0, %s133
    %s135 = sphi 0, %s133
    %s136 = sphi 0, %s135
    %s150 = sphi 0, %s136
    %s154 = sphi 0, %s154
    %s156 = sphi 0, %s154
    %s157 = sphi 0, %s156
    %s171 = sphi 0, %s157
    %s175 = sphi 0, %s175
    %s177 = sphi 0, %s175
    %s178 = sphi 0, %s177
    %s192 = sphi 0, %s178
    %s196 = sphi 0, %s196
    %s198 = sphi 0, %s196
    %s199 = sphi 0, %s198
    %s213 = sphi 0, %s199
    %s219 = sphi 0, %s221
    %s222 = sphi 0, %s219
    %s223 = sphi 0, %s222
    %s239 = sphi 0, %s223
  $region4: #{multitask_head_forward.1} parent=0 // loop_header_branch
    %18 = sbr.rel (%p16) target = $region8
  $region5: #{multitask_head_forward.1} parent=0 // loop_body
    %s20 = ssub.s32 %s15, 1
    %s21 = ssub.s32 %s15, 2
    %s22 = sadd.s32 %s15, 1
    %s23 = ssub.s32 %s15, %s22
    %p24 = scmp.eq.s32.totalorder %s23, 0
    %s26 = sadd.s32 %s25, 1
    %s27 = scalar_select %p24, %s25, %s26
    %p30 = pneg %p24
    %p31 = scmp.eq.s32.totalorder %s15, 1
    %p32 = por %p30, %p31
    %p33 = scmp.ne.s32.totalorder %s25, %s28
    %p34 = scmp.eq.s32.totalorder %s15, 0
    %p35 = por %p33, %p34
    %p36 = scmp.ne.s32.totalorder %s25, %s28
    %p37 = scmp.eq.s32.totalorder %s20, 1
    %p38 = por %p36, %p37
    %p39 = scmp.ne.s32.totalorder %s28, %s29
    %p40 = scmp.eq.s32.totalorder %s20, 0
    %p41 = por %p39, %p40
    %p42 = scmp.ne.s32.totalorder %s28, %s29
    %p43 = scmp.eq.s32.totalorder %s21, 1
    %p44 = por %p42, %p43
    %p46 = scmp.ne.s32.totalorder %s29, %s45
    %p47 = scmp.eq.s32.totalorder %s21, 0
    %p48 = por %p46, %p47
    %s50 = sadd.s32 %s49, 1
    %p53 = scmp.eq.s32.totalorder %s15, 1
    %p54 = scmp.ne.s32.totalorder %s49, %s51
    %p55 = scmp.eq.s32.totalorder %s15, 0
    %p56 = por %p54, %p55
    %p57 = scmp.ne.s32.totalorder %s49, %s51
    %p58 = scmp.eq.s32.totalorder %s20, 1
    %p59 = por %p57, %p58
    %p60 = scmp.ne.s32.totalorder %s51, %s52
    %p61 = scmp.eq.s32.totalorder %s20, 0
    %p62 = por %p60, %p61
    %p63 = scmp.ne.s32.totalorder %s51, %s52
    %p64 = scmp.eq.s32.totalorder %s21, 1
    %p65 = por %p63, %p64
    %p67 = scmp.ne.s32.totalorder %s52, %s66
    %p68 = scmp.eq.s32.totalorder %s21, 0
    %p69 = por %p67, %p68
    %s71 = sadd.s32 %s70, 1
    %p74 = scmp.eq.s32.totalorder %s15, 1
    %p75 = scmp.ne.s32.totalorder %s70, %s72
    %p76 = scmp.eq.s32.totalorder %s15, 0
    %p77 = por %p75, %p76
    %p78 = scmp.ne.s32.totalorder %s70, %s72
    %p79 = scmp.eq.s32.totalorder %s20, 1
    %p80 = por %p78, %p79
    %p81 = scmp.ne.s32.totalorder %s72, %s73
    %p82 = scmp.eq.s32.totalorder %s20, 0
    %p83 = por %p81, %p82
    %p84 = scmp.ne.s32.totalorder %s72, %s73
    %p85 = scmp.eq.s32.totalorder %s21, 1
    %p86 = por %p84, %p85
    %p88 = scmp.ne.s32.totalorder %s73, %s87
    %p89 = scmp.eq.s32.totalorder %s21, 0
    %p90 = por %p88, %p89
    %s92 = sadd.s32 %s91, 1
    %p95 = scmp.eq.s32.totalorder %s15, 1
    %p96 = scmp.ne.s32.totalorder %s91, %s93
    %p97 = scmp.eq.s32.totalorder %s15, 0
    %p98 = por %p96, %p97
    %p99 = scmp.ne.s32.totalorder %s91, %s93
    %p100 = scmp.eq.s32.totalorder %s20, 1
    %p101 = por %p99, %p100
    %p102 = scmp.ne.s32.totalorder %s93, %s94
    %p103 = scmp.eq.s32.totalorder %s20, 0
    %p104 = por %p102, %p103
    %p105 = scmp.ne.s32.totalorder %s93, %s94
    %p106 = scmp.eq.s32.totalorder %s21, 1
    %p107 = por %p105, %p106
    %p109 = scmp.ne.s32.totalorder %s94, %s108
    %p110 = scmp.eq.s32.totalorder %s21, 0
    %p111 = por %p109, %p110
    %s113 = sadd.s32 %s112, 1
    %p116 = scmp.eq.s32.totalorder %s15, 1
    %p117 = scmp.ne.s32.totalorder %s112, %s114
    %p118 = scmp.eq.s32.totalorder %s15, 0
    %p119 = por %p117, %p118
    %p120 = scmp.ne.s32.totalorder %s112, %s114
    %p121 = scmp.eq.s32.totalorder %s20, 1
    %p122 = por %p120, %p121
    %p123 = scmp.ne.s32.totalorder %s114, %s115
    %p124 = scmp.eq.s32.totalorder %s20, 0
    %p125 = por %p123, %p124
    %p126 = scmp.ne.s32.totalorder %s114, %s115
    %p127 = scmp.eq.s32.totalorder %s21, 1
    %p128 = por %p126, %p127
    %p130 = scmp.ne.s32.totalorder %s115, %s129
    %p131 = scmp.eq.s32.totalorder %s21, 0
    %p132 = por %p130, %p131
    %s134 = sadd.s32 %s133, 1
    %p137 = scmp.eq.s32.totalorder %s15, 1
    %p138 = scmp.ne.s32.totalorder %s133, %s135
    %p139 = scmp.eq.s32.totalorder %s15, 0
    %p140 = por %p138, %p139
    %p141 = scmp.ne.s32.totalorder %s133, %s135
    %p142 = scmp.eq.s32.totalorder %s20, 1
    %p143 = por %p141, %p142
    %p144 = scmp.ne.s32.totalorder %s135, %s136
    %p145 = scmp.eq.s32.totalorder %s20, 0
    %p146 = por %p144, %p145
    %p147 = scmp.ne.s32.totalorder %s135, %s136
    %p148 = scmp.eq.s32.totalorder %s21, 1
    %p149 = por %p147, %p148
    %p151 = scmp.ne.s32.totalorder %s136, %s150
    %p152 = scmp.eq.s32.totalorder %s21, 0
    %p153 = por %p151, %p152
    %s155 = sadd.s32 %s154, 1
    %p158 = scmp.eq.s32.totalorder %s15, 1
    %p159 = scmp.ne.s32.totalorder %s154, %s156
    %p160 = scmp.eq.s32.totalorder %s15, 0
    %p161 = por %p159, %p160
    %p162 = scmp.ne.s32.totalorder %s154, %s156
    %p163 = scmp.eq.s32.totalorder %s20, 1
    %p164 = por %p162, %p163
    %p165 = scmp.ne.s32.totalorder %s156, %s157
    %p166 = scmp.eq.s32.totalorder %s20, 0
    %p167 = por %p165, %p166
    %p168 = scmp.ne.s32.totalorder %s156, %s157
    %p169 = scmp.eq.s32.totalorder %s21, 1
    %p170 = por %p168, %p169
    %p172 = scmp.ne.s32.totalorder %s157, %s171
    %p173 = scmp.eq.s32.totalorder %s21, 0
    %p174 = por %p172, %p173
    %s176 = sadd.s32 %s175, 1
    %p179 = scmp.eq.s32.totalorder %s15, 1
    %p180 = scmp.ne.s32.totalorder %s175, %s177
    %p181 = scmp.eq.s32.totalorder %s15, 0
    %p182 = por %p180, %p181
    %p183 = scmp.ne.s32.totalorder %s175, %s177
    %p184 = scmp.eq.s32.totalorder %s20, 1
    %p185 = por %p183, %p184
    %p186 = scmp.ne.s32.totalorder %s177, %s178
    %p187 = scmp.eq.s32.totalorder %s20, 0
    %p188 = por %p186, %p187
    %p189 = scmp.ne.s32.totalorder %s177, %s178
    %p190 = scmp.eq.s32.totalorder %s21, 1
    %p191 = por %p189, %p190
    %p193 = scmp.ne.s32.totalorder %s178, %s192
    %p194 = scmp.eq.s32.totalorder %s21, 0
    %p195 = por %p193, %p194
    %s197 = sadd.s32 %s196, 1
    %p200 = scmp.eq.s32.totalorder %s15, 1
    %p201 = scmp.ne.s32.totalorder %s196, %s198
    %p202 = scmp.eq.s32.totalorder %s15, 0
    %p203 = por %p201, %p202
    %p204 = scmp.ne.s32.totalorder %s196, %s198
    %p205 = scmp.eq.s32.totalorder %s20, 1
    %p206 = por %p204, %p205
    %p207 = scmp.ne.s32.totalorder %s198, %s199
    %p208 = scmp.eq.s32.totalorder %s20, 0
    %p209 = por %p207, %p208
    %p210 = scmp.ne.s32.totalorder %s198, %s199
    %p211 = scmp.eq.s32.totalorder %s21, 1
    %p212 = por %p210, %p211
    %p214 = scmp.ne.s32.totalorder %s199, %s213
    %p215 = scmp.eq.s32.totalorder %s21, 0
    %p216 = por %p214, %p215
    %s217 = ssub.s32 %s15, %s22
    %p218 = scmp.eq.s32.totalorder %s217, 0
    %s220 = sadd.s32 %s219, 1
    %s221 = scalar_select %p218, %s219, %s220
    %p224 = pneg %p218
    %p225 = scmp.eq.s32.totalorder %s15, 1
    %p226 = por %p224, %p225
    %p227 = scmp.ne.s32.totalorder %s219, %s222
    %p228 = scmp.eq.s32.totalorder %s15, 0
    %p229 = por %p227, %p228
    %p230 = scmp.ne.s32.totalorder %s219, %s222
    %p231 = scmp.eq.s32.totalorder %s20, 1
    %p232 = por %p230, %p231
    %p233 = scmp.ne.s32.totalorder %s222, %s223
    %p234 = scmp.eq.s32.totalorder %s20, 0
    %p235 = por %p233, %p234
    %p236 = scmp.ne.s32.totalorder %s222, %s223
    %p237 = scmp.eq.s32.totalorder %s21, 1
    %p238 = por %p236, %p237
    %p240 = scmp.ne.s32.totalorder %s223, %s239
    %p241 = scmp.eq.s32.totalorder %s21, 0
    %p242 = por %p240, %p241
    %p243 = scmp.le.s32.totalorder 1, %s15
    %p244 = scmp.lt.s32.totalorder %s15, 3
    %p245 = pnand %p243, %p244
    %p246 = pneg %p245
    // Predicated region
    $region9: #{multitask_head_forward.1} parent=5 // pred_check
      _
    $region10: #{multitask_head_forward.1} parent=5 // pred_check_branch
      %248 = sbr.rel (%p245) target = $region12
    $region11: #{multitask_head_forward.1} parent=5 // pred_region
      %s249 = ssub.s32 %s15, 1
      // Predicated region
      $region13: #{multitask_head_forward.1} parent=11 // pred_check
        %p250 = pneg %p62
      $region14: #{multitask_head_forward.1} parent=11 // pred_check_branch
        %252 = sbr.rel (%p250) target = $region16
      $region15: #{multitask_head_forward.1} parent=11 // pred_region
        _
      $region16: #{multitask_head_forward.1} parent=11 // pred_fallthru
        _
      // Predicated region
      $region17: #{multitask_head_forward.1} parent=11 // pred_check
        %p253 = pneg %p83
      $region18: #{multitask_head_forward.1} parent=11 // pred_check_branch
        %255 = sbr.rel (%p253) target = $region20
      $region19: #{multitask_head_forward.1} parent=11 // pred_region
        _
      $region20: #{multitask_head_forward.1} parent=11 // pred_fallthru
        _
      // Predicated region
      $region21: #{multitask_head_forward.1} parent=11 // pred_check
        %p256 = pneg %p104
      $region22: #{multitask_head_forward.1} parent=11 // pred_check_branch
        %258 = sbr.rel (%p256) target = $region24
      $region23: #{multitask_head_forward.1} parent=11 // pred_region
        _
      $region24: #{multitask_head_forward.1} parent=11 // pred_fallthru
        _
      // Predicated region
      $region25: #{multitask_head_forward.1} parent=11 // pred_check
        %p259 = pneg %p125
      $region26: #{multitask_head_forward.1} parent=11 // pred_check_branch
        %261 = sbr.rel (%p259) target = $region28
      $region27: #{multitask_head_forward.1} parent=11 // pred_region
        _
      $region28: #{multitask_head_forward.1} parent=11 // pred_fallthru
        _
      // Predicated region
      $region29: #{multitask_head_forward.1} parent=11 // pred_check
        %p262 = pneg %p146
      $region30: #{multitask_head_forward.1} parent=11 // pred_check_branch
        %264 = sbr.rel (%p262) target = $region32
      $region31: #{multitask_head_forward.1} parent=11 // pred_region
        _
      $region32: #{multitask_head_forward.1} parent=11 // pred_fallthru
        _
      // Predicated region
      $region33: #{multitask_head_forward.1} parent=11 // pred_check
        %p265 = pneg %p167
      $region34: #{multitask_head_forward.1} parent=11 // pred_check_branch
        %267 = sbr.rel (%p265) target = $region36
      $region35: #{multitask_head_forward.1} parent=11 // pred_region
        _
      $region36: #{multitask_head_forward.1} parent=11 // pred_fallthru
        _
      // Predicated region
      $region37: #{multitask_head_forward.1} parent=11 // pred_check
        %p268 = pneg %p188
      $region38: #{multitask_head_forward.1} parent=11 // pred_check_branch
        %270 = sbr.rel (%p268) target = $region40
      $region39: #{multitask_head_forward.1} parent=11 // pred_region
        _
      $region40: #{multitask_head_forward.1} parent=11 // pred_fallthru
        _
      // Predicated region
      $region41: #{multitask_head_forward.1} parent=11 // pred_check
        %p271 = pneg %p209
      $region42: #{multitask_head_forward.1} parent=11 // pred_check_branch
        %273 = sbr.rel (%p271) target = $region44
      $region43: #{multitask_head_forward.1} parent=11 // pred_region
        _
      $region44: #{multitask_head_forward.1} parent=11 // pred_fallthru
        _
    $region12: #{multitask_head_forward.1} parent=5 // pred_fallthru
      _
    %p274 = scmp.lt.s32.totalorder %s15, 2
    // Predicated region
    $region45: #{multitask_head_forward.1} parent=5 // pred_check
      %p275 = pneg %p274
    $region46: #{multitask_head_forward.1} parent=5 // pred_check_branch
      %277 = sbr.rel (%p275) target = $region48
    $region47: #{multitask_head_forward.1} parent=5 // pred_region
      // Predicated region
      $region49: #{multitask_head_forward.1} parent=47 // pred_check
        %p278 = pneg %p35
      $region50: #{multitask_head_forward.1} parent=47 // pred_check_branch
        %280 = sbr.rel (%p278) target = $region52
      $region51: #{multitask_head_forward.1} parent=47 // pred_region
        %p281 = scmp.lt.s32.totalorder %s15, 1
        %s282 = scalar_select %p281, %s15, 1
        %s283 = smul.addr %s282, 32
        %s284 = smul.addr %s283, 8
        %s285 = scalar_lea.vmem %s0, %s284
      $region52: #{multitask_head_forward.1} parent=47 // pred_fallthru
        _
    $region48: #{multitask_head_forward.1} parent=5 // pred_fallthru
      _
    %p286 = scmp.le.s32.totalorder 1, %s15
    %p287 = scmp.lt.s32.totalorder %s15, 3
    %p288 = pnand %p286, %p287
    %p289 = pneg %p288
    // Predicated region
    $region53: #{multitask_head_forward.1} parent=5 // pred_check
      _
    $region54: #{multitask_head_forward.1} parent=5 // pred_check_branch
      %291 = sbr.rel (%p288) target = $region56
    $region55: #{multitask_head_forward.1} parent=5 // pred_region
      %s292 = ssub.s32 %s15, 1
      %p293 = scmp.lt.s32.totalorder %s20, 1
      %s294 = scalar_select %p293, %s20, 1
      %s295 = smul.addr %s294, 32
      %s296 = smul.addr %s295, 8
      %s297 = scalar_lea.vmem %s0, %s296
      %p298 = pneg %p41
      %p299 = pneg %p38
      %p300 = pneg %p62
      %p301 = pneg %p59
      %p302 = pneg %p83
      %p303 = pneg %p80
      %p304 = pneg %p104
      %p305 = pneg %p101
      %p306 = pneg %p125
      %p307 = pneg %p122
      %p308 = pneg %p146
      %p309 = pneg %p143
      %p310 = pneg %p167
      %p311 = pneg %p164
      %p312 = pneg %p188
      %p313 = pneg %p185
      %p314 = pneg %p209
      %p315 = pneg %p206
      %p316 = pneg %p235
      %p317 = pneg %p232
      %p318 = scmp.lt.s32.totalorder %s20, 1
      %s319 = scalar_select %p318, %s20, 1
      %s320 = smul.addr %s319, 32
      %s321 = smul.addr %s320, 8
      %s322 = scalar_lea.vmem %s9, %s321
      %p323 = scmp.lt.s32.totalorder %s20, 1
      %s324 = scalar_select %p323, %s20, 1
      %s325 = smul.addr %s324, 32
      %s326 = smul.addr %s325, 8
      %s327 = scalar_lea.vmem %s0, %s326
      %p328 = scmp.lt.s32.totalorder %s20, 1
      %s329 = scalar_select %p328, %s20, 1
      %s330 = smul.addr %s329, 32
      %s331 = smul.addr %s330, 8
      %s332 = scalar_lea.vmem %s9, %s331
      %vm333 = vcmask 261120
      %334 = vst.msk [vmem:[#allocation2] sm:$0xff] %vm333, 0.0
      %335 = vst.msk [vmem:[#allocation2 + $0x8] sm:$0xff] %vm333, 0.0
      %vm336 = vcmask 254976
      %337 = vst.msk [vmem:[#allocation2 + $0x10] sm:$0x3] %vm336, 0.0
      %338 = vst.msk [vmem:[#allocation2 + $0x18] sm:$0xff] %vm333, 0.0
      %339 = vst.msk [vmem:[#allocation2 + $0x20] sm:$0xff] %vm333, 0.0
      %340 = vst.msk [vmem:[#allocation2 + $0x28] sm:$0x3] %vm336, 0.0
      %341 = vst.msk [vmem:[#allocation2 + $0x30] sm:$0xff] %vm333, 0.0
      %342 = vst.msk [vmem:[#allocation2 + $0x38] sm:$0xff] %vm333, 0.0
      %343 = vst.msk [vmem:[#allocation2 + $0x40] sm:$0x3] %vm336, 0.0
      %344 = vst.msk [vmem:[#allocation2 + $0x48] sm:$0xff] %vm333, 0.0
      %345 = vst.msk [vmem:[#allocation2 + $0x50] sm:$0xff] %vm333, 0.0
      %346 = vst.msk [vmem:[#allocation2 + $0x58] sm:$0x3] %vm336, 0.0
      %347 = vst.msk [vmem:[#allocation2 + $0x60] sm:$0xff] %vm333, 0.0
      %348 = vst.msk [vmem:[#allocation2 + $0x68] sm:$0xff] %vm333, 0.0
      %349 = vst.msk [vmem:[#allocation2 + $0x70] sm:$0x3] %vm336, 0.0
      %350 = vst.msk [vmem:[#allocation2 + $0x78] sm:$0xff] %vm333, 0.0
      %351 = vst.msk [vmem:[#allocation2 + $0x80] sm:$0xff] %vm333, 0.0
      %352 = vst.msk [vmem:[#allocation2 + $0x88] sm:$0x3] %vm336, 0.0
      %353 = vst.msk [vmem:[#allocation2 + $0x90] sm:$0xff] %vm333, 0.0
      %354 = vst.msk [vmem:[#allocation2 + $0x98] sm:$0xff] %vm333, 0.0
      %355 = vst.msk [vmem:[#allocation2 + $0xa0] sm:$0x3] %vm336, 0.0
      %356 = vst.msk [vmem:[#allocation2 + $0xa8] sm:$0xff] %vm333, 0.0
      %357 = vst.msk [vmem:[#allocation2 + $0xb0] sm:$0xff] %vm333, 0.0
      %358 = vst.msk [vmem:[#allocation2 + $0xb8] sm:$0x3] %vm336, 0.0
      %359 = vst.msk [vmem:[#allocation2 + $0xc0] sm:$0xff] %vm333, 0.0
      %360 = vst.msk [vmem:[#allocation2 + $0xc8] sm:$0xff] %vm333, 0.0
      %361 = vst.msk [vmem:[#allocation2 + $0xd0] sm:$0x3] %vm336, 0.0
      %362 = vst.msk [vmem:[#allocation2 + $0xd8] sm:$0xff] %vm333, 0.0
      %363 = vst.msk [vmem:[#allocation2 + $0xe0] sm:$0xff] %vm333, 0.0
      %364 = vst.msk [vmem:[#allocation2 + $0xe8] sm:$0x3] %vm336, 0.0
      %365 = vst.msk [vmem:[#allocation2 + $0xf0] sm:$0xff] %vm333, 0.0
      %366 = vst.msk [vmem:[#allocation2 + $0xf8] sm:$0xff] %vm333, 0.0
      %367 = vst.msk [vmem:[#allocation2 + $0x100] sm:$0x3] %vm336, 0.0
      %368 = vst.msk [vmem:[#allocation2 + $0x108] sm:$0xff] %vm333, 0.0
      %369 = vst.msk [vmem:[#allocation2 + $0x110] sm:$0xff] %vm333, 0.0
      %370 = vst.msk [vmem:[#allocation2 + $0x118] sm:$0x3] %vm336, 0.0
      %371 = vst.msk [vmem:[#allocation2 + $0x120] sm:$0xff] %vm333, 0.0
      %372 = vst.msk [vmem:[#allocation2 + $0x128] sm:$0xff] %vm333, 0.0
      %373 = vst.msk [vmem:[#allocation2 + $0x130] sm:$0x3] %vm336, 0.0
      %374 = vst.msk [vmem:[#allocation2 + $0x138] sm:$0xff] %vm333, 0.0
      %375 = vst.msk [vmem:[#allocation2 + $0x140] sm:$0xff] %vm333, 0.0
      %376 = vst.msk [vmem:[#allocation2 + $0x148] sm:$0x3] %vm336, 0.0
      %377 = vst.msk [vmem:[#allocation2 + $0x150] sm:$0xff] %vm333, 0.0
      %378 = vst.msk [vmem:[#allocation2 + $0x158] sm:$0xff] %vm333, 0.0
      %379 = vst.msk [vmem:[#allocation2 + $0x160] sm:$0x3] %vm336, 0.0
      %380 = vst.msk [vmem:[#allocation2 + $0x168] sm:$0xff] %vm333, 0.0
      %381 = vst.msk [vmem:[#allocation2 + $0x170] sm:$0xff] %vm333, 0.0
      %382 = vst.msk [vmem:[#allocation2 + $0x178] sm:$0x3] %vm336, 0.0
      %383 = vst.msk [vmem:[#allocation2 + $0x180] sm:$0xff] %vm333, 0.0
      %384 = vst.msk [vmem:[#allocation2 + $0x188] sm:$0xff] %vm333, 0.0
      %385 = vst.msk [vmem:[#allocation2 + $0x190] sm:$0x3] %vm336, 0.0
      %386 = vst.msk [vmem:[#allocation2 + $0x198] sm:$0xff] %vm333, 0.0
      %387 = vst.msk [vmem:[#allocation2 + $0x1a0] sm:$0xff] %vm333, 0.0
      %388 = vst.msk [vmem:[#allocation2 + $0x1a8] sm:$0x3] %vm336, 0.0
      %v389 = vld [vmem:[%s327] sm:$0xff]
      %v390 = vld [vmem:[%s327 + $0x8] sm:$0xff]
      %v391 = vld [vmem:[%s327 + $0x10] sm:$0xff]
      %v392 = vld [vmem:[%s327 + $0x18] sm:$0xff]
      %v393 = vld [vmem:[%s327 + $0x20] sm:$0xff]
      %v394 = vld [vmem:[%s327 + $0x28] sm:$0xff]
      %v395 = vld [vmem:[%s327 + $0x30] sm:$0xff]
      %v396 = vld [vmem:[%s327 + $0x38] sm:$0xff]
      %v397 = vld [vmem:[%s327 + $0x40] sm:$0xff]
      %v398 = vld [vmem:[%s327 + $0x48] sm:$0xff]
      %v399 = vld [vmem:[%s327 + $0x50] sm:$0xff]
      %v400 = vld [vmem:[%s327 + $0x58] sm:$0xff]
      %v401 = vld [vmem:[%s327 + $0x60] sm:$0xff]
      %v402 = vld [vmem:[%s327 + $0x68] sm:$0xff]
      %v403 = vld [vmem:[%s327 + $0x70] sm:$0xff]
      %v404 = vld [vmem:[%s327 + $0x78] sm:$0xff]
      %v405 = vld [vmem:[%s327 + $0x80] sm:$0xff]
      %v406 = vld [vmem:[%s327 + $0x88] sm:$0xff]
      %v407 = vld [vmem:[%s327 + $0x90] sm:$0xff]
      %v408 = vld [vmem:[%s327 + $0x98] sm:$0xff]
      %v409 = vld [vmem:[%s327 + $0xa0] sm:$0xff]
      %v410 = vld [vmem:[%s327 + $0xa8] sm:$0xff]
      %v411 = vld [vmem:[%s327 + $0xb0] sm:$0xff]
      %v412 = vld [vmem:[%s327 + $0xb8] sm:$0xff]
      %v413 = vld [vmem:[%s327 + $0xc0] sm:$0xff]
      %v414 = vld [vmem:[%s327 + $0xc8] sm:$0xff]
      %v415 = vld [vmem:[%s327 + $0xd0] sm:$0xff]
      %v416 = vld [vmem:[%s327 + $0xd8] sm:$0xff]
      %v417 = vld [vmem:[%s327 + $0xe0] sm:$0xff]
      %v418 = vld [vmem:[%s327 + $0xe8] sm:$0xff]
      %v419 = vld [vmem:[%s327 + $0xf0] sm:$0xff]
      %v420 = vld [vmem:[%s327 + $0xf8] sm:$0xff]
      %s421 = scalar_lea.vmem [#allocation2], 24
      %422 = vst.msk [vmem:[%s421 + $0x1] sm:$0xff] %vm333, %v389
      %423 = vst.msk [vmem:[%s421 + $0x9] sm:$0xff] %vm333, %v390
      %424 = vst.msk [vmem:[%s421 + $0x19] sm:$0xff] %vm333, %v391
      %425 = vst.msk [vmem:[%s421 + $0x21] sm:$0xff] %vm333, %v392
      %426 = vst.msk [vmem:[%s421 + $0x31] sm:$0xff] %vm333, %v393
      %427 = vst.msk [vmem:[%s421 + $0x39] sm:$0xff] %vm333, %v394
      %428 = vst.msk [vmem:[%s421 + $0x49] sm:$0xff] %vm333, %v395
      %429 = vst.msk [vmem:[%s421 + $0x51] sm:$0xff] %vm333, %v396
      %430 = vst.msk [vmem:[%s421 + $0x61] sm:$0xff] %vm333, %v397
      %431 = vst.msk [vmem:[%s421 + $0x69] sm:$0xff] %vm333, %v398
      %432 = vst.msk [vmem:[%s421 + $0x79] sm:$0xff] %vm333, %v399
      %433 = vst.msk [vmem:[%s421 + $0x81] sm:$0xff] %vm333, %v400
      %434 = vst.msk [vmem:[%s421 + $0x91] sm:$0xff] %vm333, %v401
      %435 = vst.msk [vmem:[%s421 + $0x99] sm:$0xff] %vm333, %v402
      %436 = vst.msk [vmem:[%s421 + $0xa9] sm:$0xff] %vm333, %v403
      %437 = vst.msk [vmem:[%s421 + $0xb1] sm:$0xff] %vm333, %v404
      %438 = vst.msk [vmem:[%s421 + $0xc1] sm:$0xff] %vm333, %v405
      %439 = vst.msk [vmem:[%s421 + $0xc9] sm:$0xff] %vm333, %v406
      %440 = vst.msk [vmem:[%s421 + $0xd9] sm:$0xff] %vm333, %v407
      %441 = vst.msk [vmem:[%s421 + $0xe1] sm:$0xff] %vm333, %v408
      %442 = vst.msk [vmem:[%s421 + $0xf1] sm:$0xff] %vm333, %v409
      %443 = vst.msk [vmem:[%s421 + $0xf9] sm:$0xff] %vm333, %v410
      %444 = vst.msk [vmem:[%s421 + $0x109] sm:$0xff] %vm333, %v411
      %445 = vst.msk [vmem:[%s421 + $0x111] sm:$0xff] %vm333, %v412
      %446 = vst.msk [vmem:[%s421 + $0x121] sm:$0xff] %vm333, %v413
      %447 = vst.msk [vmem:[%s421 + $0x129] sm:$0xff] %vm333, %v414
      %448 = vst.msk [vmem:[%s421 + $0x139] sm:$0xff] %vm333, %v415
      %449 = vst.msk [vmem:[%s421 + $0x141] sm:$0xff] %vm333, %v416
      %450 = vst.msk [vmem:[%s421 + $0x151] sm:$0xff] %vm333, %v417
      %451 = vst.msk [vmem:[%s421 + $0x159] sm:$0xff] %vm333, %v418
      %452 = vst.msk [vmem:[%s421 + $0x169] sm:$0xff] %vm333, %v419
      %453 = vst.msk [vmem:[%s421 + $0x171] sm:$0xff] %vm333, %v420
      %v454 = vld [vmem:[#allocation2] sm:$0xff]
      %v455 = vld [vmem:[#allocation2 + $0x8] sm:$0xff]
      %v456 = vld [vmem:[#allocation2 + $0x18] sm:$0xff]
      %v457 = vld [vmem:[#allocation2 + $0x20] sm:$0xff]
      %v458 = vld [vmem:[#allocation2 + $0x30] sm:$0xff]
      %v459 = vld [vmem:[#allocation2 + $0x38] sm:$0xff]
      %v460 = vld [vmem:[#allocation2 + $0x48] sm:$0xff]
      %v461 = vld [vmem:[#allocation2 + $0x50] sm:$0xff]
      %v462 = vld [vmem:[#allocation2 + $0x60] sm:$0xff]
      %v463 = vld [vmem:[#allocation2 + $0x68] sm:$0xff]
      %v464 = vld [vmem:[#allocation2 + $0x78] sm:$0xff]
      %v465 = vld [vmem:[#allocation2 + $0x80] sm:$0xff]
      %v466 = vld [vmem:[#allocation2 + $0x90] sm:$0xff]
      %v467 = vld [vmem:[#allocation2 + $0x98] sm:$0xff]
      %v468 = vld [vmem:[#allocation2 + $0xa8] sm:$0xff]
      %v469 = vld [vmem:[#allocation2 + $0xb0] sm:$0xff]
      %v470 = vld [vmem:[#allocation2 + $0xc0] sm:$0xff]
      %v471 = vld [vmem:[#allocation2 + $0xc8] sm:$0xff]
      %v472 = vld [vmem:[#allocation2 + $0xd8] sm:$0xff]
      %v473 = vld [vmem:[#allocation2 + $0xe0] sm:$0xff]
      %v474 = vld [vmem:[#allocation2 + $0xf0] sm:$0xff]
      %v475 = vld [vmem:[#allocation2 + $0xf8] sm:$0xff]
      %v476 = vld [vmem:[#allocation2 + $0x108] sm:$0xff]
      %v477 = vld [vmem:[#allocation2 + $0x110] sm:$0xff]
      %v478 = vld [vmem:[#allocation2 + $0x120] sm:$0xff]
      %v479 = vld [vmem:[#allocation2 + $0x128] sm:$0xff]
      %v480 = vld [vmem:[#allocation2 + $0x138] sm:$0xff]
      %v481 = vld [vmem:[#allocation2 + $0x140] sm:$0xff]
      %v482 = vld [vmem:[#allocation2 + $0x150] sm:$0xff]
      %v483 = vld [vmem:[#allocation2 + $0x158] sm:$0xff]
      %v484 = vld [vmem:[#allocation2 + $0x168] sm:$0xff]
      %v485 = vld [vmem:[#allocation2 + $0x170] sm:$0xff]
      %v486 = vld [vmem:[%s1] sm:$0xff]
      %v487 = vld [vmem:[%s1 + $0x8] sm:$0xff]
      %v488 = vld [vmem:[%s1 + $0x10] sm:$0xff]
      %v489 = vld [vmem:[%s1 + $0x18] sm:$0xff]
      %v490 = vld [vmem:[#allocation2 + $0x1] sm:$0xff]
      %v491 = vld [vmem:[#allocation2 + $0x9] sm:$0xff]
      %v492 = vld [vmem:[#allocation2 + $0x19] sm:$0xff]
      %v493 = vld [vmem:[#allocation2 + $0x21] sm:$0xff]
      %v494 = vld [vmem:[#allocation2 + $0x31] sm:$0xff]
      %v495 = vld [vmem:[#allocation2 + $0x39] sm:$0xff]
      %v496 = vld [vmem:[#allocation2 + $0x49] sm:$0xff]
      %v497 = vld [vmem:[#allocation2 + $0x51] sm:$0xff]
      %v498 = vld [vmem:[#allocation2 + $0x61] sm:$0xff]
      %v499 = vld [vmem:[#allocation2 + $0x69] sm:$0xff]
      %v500 = vld [vmem:[#allocation2 + $0x79] sm:$0xff]
      %v501 = vld [vmem:[#allocation2 + $0x81] sm:$0xff]
      %v502 = vld [vmem:[#allocation2 + $0x91] sm:$0xff]
      %v503 = vld [vmem:[#allocation2 + $0x99] sm:$0xff]
      %v504 = vld [vmem:[#allocation2 + $0xa9] sm:$0xff]
      %v505 = vld [vmem:[#allocation2 + $0xb1] sm:$0xff]
      %v506 = vld [vmem:[#allocation2 + $0xc1] sm:$0xff]
      %v507 = vld [vmem:[#allocation2 + $0xc9] sm:$0xff]
      %v508 = vld [vmem:[#allocation2 + $0xd9] sm:$0xff]
      %v509 = vld [vmem:[#allocation2 + $0xe1] sm:$0xff]
      %v510 = vld [vmem:[#allocation2 + $0xf1] sm:$0xff]
      %v511 = vld [vmem:[#allocation2 + $0xf9] sm:$0xff]
      %v512 = vld [vmem:[#allocation2 + $0x109] sm:$0xff]
      %v513 = vld [vmem:[#allocation2 + $0x111] sm:$0xff]
      %v514 = vld [vmem:[#allocation2 + $0x121] sm:$0xff]
      %v515 = vld [vmem:[#allocation2 + $0x129] sm:$0xff]
      %v516 = vld [vmem:[#allocation2 + $0x139] sm:$0xff]
      %v517 = vld [vmem:[#allocation2 + $0x141] sm:$0xff]
      %v518 = vld [vmem:[#allocation2 + $0x151] sm:$0xff]
      %v519 = vld [vmem:[#allocation2 + $0x159] sm:$0xff]
      %v520 = vld [vmem:[#allocation2 + $0x169] sm:$0xff]
      %v521 = vld [vmem:[#allocation2 + $0x171] sm:$0xff]
      %s522 = scalar_lea.vmem %s1, 32
      %v523 = vld [vmem:[%s522] sm:$0xff]
      %v524 = vld [vmem:[%s522 + $0x8] sm:$0xff]
      %v525 = vld [vmem:[%s522 + $0x10] sm:$0xff]
      %v526 = vld [vmem:[%s522 + $0x18] sm:$0xff]
      %v528 = vsel %vm333, %v490, 0
      %v531 = vsel %vm333, %v491, 0
      %v534 = vsel %vm333, %v492, 0
      %v537 = vsel %vm333, %v493, 0
      %v540 = vsel %vm333, %v494, 0
      %v543 = vsel %vm333, %v495, 0
      %v546 = vsel %vm333, %v496, 0
      %v549 = vsel %vm333, %v497, 0
      %v552 = vsel %vm333, %v498, 0
      %v555 = vsel %vm333, %v499, 0
      %v558 = vsel %vm333, %v500, 0
      %v561 = vsel %vm333, %v501, 0
      %v564 = vsel %vm333, %v502, 0
      %v567 = vsel %vm333, %v503, 0
      %v570 = vsel %vm333, %v504, 0
      %v573 = vsel %vm333, %v505, 0
      %v576 = vsel %vm333, %v506, 0
      %v579 = vsel %vm333, %v507, 0
      %v582 = vsel %vm333, %v508, 0
      %v585 = vsel %vm333, %v509, 0
      %v588 = vsel %vm333, %v510, 0
      %v591 = vsel %vm333, %v511, 0
      %v594 = vsel %vm333, %v512, 0
      %v597 = vsel %vm333, %v513, 0
      %v600 = vsel %vm333, %v514, 0
      %v603 = vsel %vm333, %v515, 0
      %v606 = vsel %vm333, %v516, 0
      %v609 = vsel %vm333, %v517, 0
      %v612 = vsel %vm333, %v518, 0
      %v615 = vsel %vm333, %v519, 0
      %v618 = vsel %vm333, %v520, 0
      %v621 = vsel %vm333, %v521, 0
      %623 = vmatprep.subr.mxu0 0.0
      %624 = vmatpush1.msra.mxu0 %v523
      %625 = vmatprep.subr.mxu0 0.0
      %626 = vmatpush1.msra.mxu0 %v524
      %627 = vmatprep.subr.mxu0 0.0
      %628 = vmatpush1.msra.mxu0 %v525
      %629 = vmatprep.subr.mxu0 0.0
      %630 = vmatpush1.msra.mxu0 %v526
      %631 = vmatprep.subr.mxu0 0.0
      %632 = vmatpush1.msra.mxu0 0.0
      %633 = vmatprep.subr.mxu0 0.0
      %634 = vmatpush1.msra.mxu0 0.0
      %635 = vmatprep.subr.mxu0 0.0
      %636 = vmatpush1.msra.mxu0 0.0
      %637 = vmatprep.subr.mxu0 0.0
      %638 = vmatpush1.msra.mxu0 0.0
      %639 = vmatprep.subr.mxu0 0.0
      %640 = vmatpush1.msra.mxu0 0.0
      %641 = vmatprep.subr.mxu0 0.0
      %642 = vmatpush1.msra.mxu0 0.0
      %643 = vmatprep.subr.mxu0 0.0
      %644 = vmatpush1.msra.mxu0 0.0
      %645 = vmatprep.subr.mxu0 0.0
      %646 = vmatpush1.msra.mxu0 0.0
      %647 = vmatprep.subr.mxu0 0.0
      %648 = vmatpush1.msra.mxu0 0.0
      %649 = vmatprep.subr.mxu0 0.0
      %650 = vmatpush1.msra.mxu0 0.0
      %651 = vmatprep.subr.mxu0 0.0
      %652 = vmatpush1.msra.mxu0 0.0
      %653 = vmatprep.subr.mxu0 0.0
      %654 = vmatpush1.msra.mxu0 0.0
      %655 = vmatprep.subr.mxu0 0.0
      %656 = vmatpush1.msra.mxu0 0.0
      %657 = vmatprep.subr.mxu0 0.0
      %658 = vmatpush1.msra.mxu0 0.0
      %659 = vmatprep.subr.mxu0 0.0
      %660 = vmatpush1.msra.mxu0 0.0
      %661 = vmatprep.subr.mxu0 0.0
      %662 = vmatpush1.msra.mxu0 0.0
      %663 = vmatprep.subr.mxu0 0.0
      %664 = vmatpush1.msra.mxu0 0.0
      %665 = vmatprep.subr.mxu0 0.0
      %666 = vmatpush1.msra.mxu0 0.0
      %667 = vmatprep.subr.mxu0 0.0
      %668 = vmatpush1.msra.mxu0 0.0
      %669 = vmatprep.subr.mxu0 0.0
      %670 = vmatpush1.msra.mxu0 0.0
      %671 = vmatprep.subr.mxu0 0.0
      %672 = vmatpush1.msra.mxu0 0.0
      %673 = vmatprep.subr.mxu0 0.0
      %674 = vmatpush1.msra.mxu0 0.0
      %675 = vmatprep.subr.mxu0 0.0
      %676 = vmatpush1.msra.mxu0 0.0
      %677 = vmatprep.subr.mxu0 0.0
      %678 = vmatpush1.msra.mxu0 0.0
      %679 = vmatprep.subr.mxu0 0.0
      %680 = vmatpush1.msra.mxu0 0.0
      %681 = vmatprep.subr.mxu0 0.0
      %682 = vmatpush1.msra.mxu0 0.0
      %683 = vmatprep.subr.mxu0 0.0
      %684 = vmatpush1.msra.mxu0 0.0
      %685 = vmatprep.subr.mxu0 0.0
      %686 = vmatpush1.msra.mxu0 0.0
      %687 = vmatprep.mubr.f32.mxu0 0.0
      %688 = vmatmul.mubr.f32.gmra.mrb[0].mxu0 %v528
      %v689 = vpop.f32.mrb[0].mxu0
      %v690 = vadd.f32 0.0, %v689
      %v691 = vpop.f32.mrb[0].mxu0
      %692 = vmatprep.mubr.f32.mxu0 0.0
      %693 = vmatmul.mubr.f32.gmra.mrb[0].mxu0 %v531
      %v694 = vpop.f32.mrb[0].mxu0
      %v695 = vadd.f32 0.0, %v694
      %v696 = vpop.f32.mrb[0].mxu0
      %697 = vmatprep.mubr.f32.mxu0 0.0
      %698 = vmatmul.mubr.f32.gmra.mrb[0].mxu0 %v534
      %v699 = vpop.f32.mrb[0].mxu0
      %v700 = vadd.f32 0.0, %v699
      %v701 = vpop.f32.mrb[0].mxu0
      %702 = vmatprep.mubr.f32.mxu0 0.0
      %703 = vmatmul.mubr.f32.gmra.mrb[0].mxu0 %v537
      %v704 = vpop.f32.mrb[0].mxu0
      %v705 = vadd.f32 0.0, %v704
      %v706 = vpop.f32.mrb[0].mxu0
      %707 = vmatprep.mubr.f32.mxu0 0.0
      %708 = vmatmul.mubr.f32.gmra.mrb[0].mxu0 %v540
      %v709 = vpop.f32.mrb[0].mxu0
      %v710 = vadd.f32 0.0, %v709
      %v711 = vpop.f32.mrb[0].mxu0
      %712 = vmatprep.mubr.f32.mxu0 0.0
      %713 = vmatmul.mubr.f32.gmra.mrb[0].mxu0 %v543
      %v714 = vpop.f32.mrb[0].mxu0
      %v715 = vadd.f32 0.0, %v714
      %v716 = vpop.f32.mrb[0].mxu0
      %717 = vmatprep.mubr.f32.mxu0 0.0
      %718 = vmatmul.mubr.f32.gmra.mrb[0].mxu0 %v546
      %v719 = vpop.f32.mrb[0].mxu0
      %v720 = vadd.f32 0.0, %v719
      %v721 = vpop.f32.mrb[0].mxu0
      %722 = vmatprep.mubr.f32.mxu0 0.0
      %723 = vmatmul.mubr.f32.gmra.mrb[0].mxu0 %v549
      %v724 = vpop.f32.mrb[0].mxu0
      %v725 = vadd.f32 0.0, %v724
      %v726 = vpop.f32.mrb[0].mxu0
      %727 = vmatprep.mubr.f32.mxu0 0.0
      %728 = vmatmul.mubr.f32.gmra.mrb[0].mxu0 %v552
      %v729 = vpop.f32.mrb[0].mxu0
      %v730 = vadd.f32 0.0, %v729
      %v731 = vpop.f32.mrb[0].mxu0
      %732 = vmatprep.mubr.f32.mxu0 0.0
      %733 = vmatmul.mubr.f32.gmra.mrb[0].mxu0 %v555
      %v734 = vpop.f32.mrb[0].mxu0
      %v735 = vadd.f32 0.0, %v734
      %v736 = vpop.f32.mrb[0].mxu0
      %737 = vmatprep.mubr.f32.mxu0 0.0
      %738 = vmatmul.mubr.f32.gmra.mrb[0].mxu0 %v558
      %v739 = vpop.f32.mrb[0].mxu0
      %v740 = vadd.f32 0.0, %v739
      %v741 = vpop.f32.mrb[0].mxu0
      %742 = vmatprep.mubr.f32.mxu0 0.0
      %743 = vmatmul.mubr.f32.gmra.mrb[0].mxu0 %v561
      %v744 = vpop.f32.mrb[0].mxu0
      %v745 = vadd.f32 0.0, %v744
      %v746 = vpop.f32.mrb[0].mxu0
      %747 = vmatprep.mubr.f32.mxu0 0.0
      %748 = vmatmul.mubr.f32.gmra.mrb[0].mxu0 %v564
      %v749 = vpop.f32.mrb[0].mxu0
      %v750 = vadd.f32 0.0, %v749
      %v751 = vpop.f32.mrb[0].mxu0
      %752 = vmatprep.mubr.f32.mxu0 0.0
      %753 = vmatmul.mubr.f32.gmra.mrb[0].mxu0 %v567
      %v754 = vpop.f32.mrb[0].mxu0
      %v755 = vadd.f32 0.0, %v754
      %v756 = vpop.f32.mrb[0].mxu0
      %757 = vmatprep.mubr.f32.mxu0 0.0
      %758 = vmatmul.mubr.f32.gmra.mrb[0].mxu0 %v570
      %v759 = vpop.f32.mrb[0].mxu0
      %v760 = vadd.f32 0.0, %v759
      %v761 = vpop.f32.mrb[0].mxu0
      %762 = vmatprep.mubr.f32.mxu0 0.0
      %763 = vmatmul.mubr.f32.gmra.mrb[0].mxu0 %v573
      %v764 = vpop.f32.mrb[0].mxu0
      %v765 = vadd.f32 0.0, %v764
      %v766 = vpop.f32.mrb[0].mxu0
      %767 = vmatprep.mubr.f32.mxu0 0.0
      %768 = vmatmul.mubr.f32.gmra.mrb[0].mxu0 %v576
      %v769 = vpop.f32.mrb[0].mxu0
      %v770 = vadd.f32 0.0, %v769
      %v771 = vpop.f32.mrb[0].mxu0
      %772 = vmatprep.mubr.f32.mxu0 0.0
      %773 = vmatmul.mubr.f32.gmra.mrb[0].mxu0 %v579
      %v774 = vpop.f32.mrb[0].mxu0
      %v775 = vadd.f32 0.0, %v774
      %v776 = vpop.f32.mrb[0].mxu0
      %777 = vmatprep.mubr.f32.mxu0 0.0
      %778 = vmatmul.mubr.f32.gmra.mrb[0].mxu0 %v582
      %v779 = vpop.f32.mrb[0].mxu0
      %v780 = vadd.f32 0.0, %v779
      %v781 = vpop.f32.mrb[0].mxu0
      %782 = vmatprep.mubr.f32.mxu0 0.0
      %783 = vmatmul.mubr.f32.gmra.mrb[0].mxu0 %v585
      %v784 = vpop.f32.mrb[0].mxu0
      %v785 = vadd.f32 0.0, %v784
      %v786 = vpop.f32.mrb[0].mxu0
      %787 = vmatprep.mubr.f32.mxu0 0.0
      %788 = vmatmul.mubr.f32.gmra.mrb[0].mxu0 %v588
      %v789 = vpop.f32.mrb[0].mxu0
      %v790 = vadd.f32 0.0, %v789
      %v791 = vpop.f32.mrb[0].mxu0
      %792 = vmatprep.mubr.f32.mxu0 0.0
      %793 = vmatmul.mubr.f32.gmra.mrb[0].mxu0 %v591
      %v794 = vpop.f32.mrb[0].mxu0
      %v795 = vadd.f32 0.0, %v794
      %v796 = vpop.f32.mrb[0].mxu0
      %797 = vmatprep.mubr.f32.mxu0 0.0
      %798 = vmatmul.mubr.f32.gmra.mrb[0].mxu0 %v594
      %v799 = vpop.f32.mrb[0].mxu0
      %v800 = vadd.f32 0.0, %v799
      %v801 = vpop.f32.mrb[0].mxu0
      %802 = vmatprep.mubr.f32.mxu0 0.0
      %803 = vmatmul.mubr.f32.gmra.mrb[0].mxu0 %v597
      %v804 = vpop.f32.mrb[0].mxu0
      %v805 = vadd.f32 0.0, %v804
      %v806 = vpop.f32.mrb[0].mxu0
      %807 = vmatprep.mubr.f32.mxu0 0.0
      %808 = vmatmul.mubr.f32.gmra.mrb[0].mxu0 %v600
      %v809 = vpop.f32.mrb[0].mxu0
      %v810 = vadd.f32 0.0, %v809
      %v811 = vpop.f32.mrb[0].mxu0
      %812 = vmatprep.mubr.f32.mxu0 0.0
      %813 = vmatmul.mubr.f32.gmra.mrb[0].mxu0 %v603
      %v814 = vpop.f32.mrb[0].mxu0
      %v815 = vadd.f32 0.0, %v814
      %v816 = vpop.f32.mrb[0].mxu0
      %817 = vmatprep.mubr.f32.mxu0 0.0
      %818 = vmatmul.mubr.f32.gmra.mrb[0].mxu0 %v606
      %v819 = vpop.f32.mrb[0].mxu0
      %v820 = vadd.f32 0.0, %v819
      %v821 = vpop.f32.mrb[0].mxu0
      %822 = vmatprep.mubr.f32.mxu0 0.0
      %823 = vmatmul.mubr.f32.gmra.mrb[0].mxu0 %v609
      %v824 = vpop.f32.mrb[0].mxu0
      %v825 = vadd.f32 0.0, %v824
      %v826 = vpop.f32.mrb[0].mxu0
      %827 = vmatprep.mubr.f32.mxu0 0.0
      %828 = vmatmul.mubr.f32.gmra.mrb[0].mxu0 %v612
      %v829 = vpop.f32.mrb[0].mxu0
      %v830 = vadd.f32 0.0, %v829
      %v831 = vpop.f32.mrb[0].mxu0
      %832 = vmatprep.mubr.f32.mxu0 0.0
      %833 = vmatmul.mubr.f32.gmra.mrb[0].mxu0 %v615
      %v834 = vpop.f32.mrb[0].mxu0
      %v835 = vadd.f32 0.0, %v834
      %v836 = vpop.f32.mrb[0].mxu0
      %837 = vmatprep.mubr.f32.mxu0 0.0
      %838 = vmatmul.mubr.f32.gmra.mrb[0].mxu0 %v618
      %v839 = vpop.f32.mrb[0].mxu0
      %v840 = vadd.f32 0.0, %v839
      %v841 = vpop.f32.mrb[0].mxu0
      %842 = vmatprep.mubr.f32.mxu0 0.0
      %843 = vmatmul.mubr.f32.gmra.mrb[0].mxu0 %v621
      %v844 = vpop.f32.mrb[0].mxu0
      %v845 = vadd.f32 0.0, %v844
      %v846 = vpop.f32.mrb[0].mxu0
      %847 = vdwg.mxu0
      %v848 = vld [vmem:[#allocation2 + $0x2] sm:$0xff]
      %v849 = vld [vmem:[#allocation2 + $0xa] sm:$0xff]
      %v850 = vld [vmem:[#allocation2 + $0x1a] sm:$0xff]
      %v851 = vld [vmem:[#allocation2 + $0x22] sm:$0xff]
      %v852 = vld [vmem:[#allocation2 + $0x32] sm:$0xff]
      %v853 = vld [vmem:[#allocation2 + $0x3a] sm:$0xff]
      %v854 = vld [vmem:[#allocation2 + $0x4a] sm:$0xff]
      %v855 = vld [vmem:[#allocation2 + $0x52] sm:$0xff]
      %v856 = vld [vmem:[#allocation2 + $0x62] sm:$0xff]
      %v857 = vld [vmem:[#allocation2 + $0x6a] sm:$0xff]
      %v858 = vld [vmem:[#allocation2 + $0x7a] sm:$0xff]
      %v859 = vld [vmem:[#allocation2 + $0x82] sm:$0xff]
      %v860 = vld [vmem:[#allocation2 + $0x92] sm:$0xff]
      %v861 = vld [vmem:[#allocation2 + $0x9a] sm:$0xff]
      %v862 = vld [vmem:[#allocation2 + $0xaa] sm:$0xff]
      %v863 = vld [vmem:[#allocation2 + $0xb2] sm:$0xff]
      %v864 = vld [vmem:[#allocation2 + $0xc2] sm:$0xff]
      %v865 = vld [vmem:[#allocation2 + $0xca] sm:$0xff]
      %v866 = vld [vmem:[#allocation2 + $0xda] sm:$0xff]
      %v867 = vld [vmem:[#allocation2 + $0xe2] sm:$0xff]
      %v868 = vld [vmem:[#allocation2 + $0xf2] sm:$0xff]
      %v869 = vld [vmem:[#allocation2 + $0xfa] sm:$0xff]
      %v870 = vld [vmem:[#allocation2 + $0x10a] sm:$0xff]
      %v871 = vld [vmem:[#allocation2 + $0x112] sm:$0xff]
      %v872 = vld [vmem:[#allocation2 + $0x122] sm:$0xff]
      %v873 = vld [vmem:[#allocation2 + $0x12a] sm:$0xff]
      %v874 = vld [vmem:[#allocation2 + $0x13a] sm:$0xff]
      %v875 = vld [vmem:[#allocation2 + $0x142] sm:$0xff]
      %v876 = vld [vmem:[#allocation2 + $0x152] sm:$0xff]
      %v877 = vld [vmem:[#allocation2 + $0x15a] sm:$0xff]
      %v878 = vld [vmem:[#allocation2 + $0x16a] sm:$0xff]
      %v879 = vld [vmem:[#allocation2 + $0x172] sm:$0xff]
      %s880 = scalar_lea.vmem %s1, 64
      %v881 = vld [vmem:[%s880] sm:$0xff]
      %v882 = vld [vmem:[%s880 + $0x8] sm:$0xff]
      %v883 = vld [vmem:[%s880 + $0x10] sm:$0xff]
      %v884 = vld [vmem:[%s880 + $0x18] sm:$0xff]
      %v885 = vld [vmem:[%s421] sm:$0xff]
      %v886 = vld [vmem:[%s421 + $0x8] sm:$0xff]
      %v887 = vld [vmem:[%s421 + $0x18] sm:$0xff]
      %v888 = vld [vmem:[%s421 + $0x20] sm:$0xff]
      %v889 = vld [vmem:[%s421 + $0x30] sm:$0xff]
      %v890 = vld [vmem:[%s421 + $0x38] sm:$0xff]
      %v891 = vld [vmem:[%s421 + $0x48] sm:$0xff]
      %v892 = vld [vmem:[%s421 + $0x50] sm:$0xff]
      %v893 = vld [vmem:[%s421 + $0x60] sm:$0xff]
      %v894 = vld [vmem:[%s421 + $0x68] sm:$0xff]
      %v895 = vld [vmem:[%s421 + $0x78] sm:$0xff]
      %v896 = vld [vmem:[%s421 + $0x80] sm:$0xff]
      %v897 = vld [vmem:[%s421 + $0x90] sm:$0xff]
      %v898 = vld [vmem:[%s421 + $0x98] sm:$0xff]
      %v899 = vld [vmem:[%s421 + $0xa8] sm:$0xff]
      %v900 = vld [vmem:[%s421 + $0xb0] sm:$0xff]
      %v901 = vld [vmem:[%s421 + $0xc0] sm:$0xff]
      %v902 = vld [vmem:[%s421 + $0xc8] sm:$0xff]
      %v903 = vld [vmem:[%s421 + $0xd8] sm:$0xff]
      %v904 = vld [vmem:[%s421 + $0xe0] sm:$0xff]
      %v905 = vld [vmem:[%s421 + $0xf0] sm:$0xff]
      %v906 = vld [vmem:[%s421 + $0xf8] sm:$0xff]
      %v907 = vld [vmem:[%s421 + $0x108] sm:$0xff]
      %v908 = vld [vmem:[%s421 + $0x110] sm:$0xff]
      %v909 = vld [vmem:[%s421 + $0x120] sm:$0xff]
      %v910 = vld [vmem:[%s421 + $0x128] sm:$0xff]
      %v911 = vld [vmem:[%s421 + $0x138] sm:$0xff]
      %v912 = vld [vmem:[%s421 + $0x140] sm:$0xff]
      %v913 = vld [vmem:[%s421 + $0x150] sm:$0xff]
      %v914 = vld [vmem:[%s421 + $0x158] sm:$0xff]
      %v915 = vld [vmem:[%s421 + $0x168] sm:$0xff]
      %v916 = vld [vmem:[%s421 + $0x170] sm:$0xff]
      %s917 = scalar_lea.vmem %s1, 96
      %v918 = vld [vmem:[%s917] sm:$0xff]
      %v919 = vld [vmem:[%s917 + $0x8] sm:$0xff]
      %v920 = vld [vmem:[%s917 + $0x10] sm:$0xff]
      %v921 = vld [vmem:[%s917 + $0x18] sm:$0xff]
      %v923 = vsel %vm333, %v885, 0
      %v926 = vsel %vm333, %v886, 0
      %v929 = vsel %vm333, %v887, 0
      %v932 = vsel %vm333, %v888, 0
      %v935 = vsel %vm333, %v889, 0
      %v938 = vsel %vm333, %v890, 0
      %v941 = vsel %vm333, %v891, 0
      %v944 = vsel %vm333, %v892, 0
      %v947 = vsel %vm333, %v893, 0
      %v950 = vsel %vm333, %v894, 0
      %v953 = vsel %vm333, %v895, 0
      %v956 = vsel %vm333, %v896, 0
      %v959 = vsel %vm333, %v897, 0
      %v962 = vsel %vm333, %v898, 0
      %v965 = vsel %vm333, %v899, 0
      %v968 = vsel %vm333, %v900, 0
      %v971 = vsel %vm333, %v901, 0
      %v974 = vsel %vm333, %v902, 0
      %v977 = vsel %vm333, %v903, 0
      %v980 = vsel %vm333, %v904, 0
      %v983 = vsel %vm333, %v905, 0
      %v986 = vsel %vm333, %v906, 0
      %v989 = vsel %vm333, %v907, 0
      %v992 = vsel %vm333, %v908, 0
      %v995 = vsel %vm333, %v909, 0
      %v998 = vsel %vm333, %v910, 0
      %v1001 = vsel %vm333, %v911, 0
      %v1004 = vsel %vm333, %v912, 0
      %v1007 = vsel %vm333, %v913, 0
      %v1010 = vsel %vm333, %v914, 0
      %v1013 = vsel %vm333, %v915, 0
      %v1016 = vsel %vm333, %v916, 0
      %1018 = vmatprep.subr.mxu0 0.0
      %1019 = vmatpush1.msra.mxu0 %v918
      %1020 = vmatprep.subr.mxu0 0.0
      %1021 = vmatpush1.msra.mxu0 %v919
      %1022 = vmatprep.subr.mxu0 0.0
      %1023 = vmatpush1.msra.mxu0 %v920
      %1024 = vmatprep.subr.mxu0 0.0
      %1025 = vmatpush1.msra.mxu0 %v921
      %1026 = vmatprep.subr.mxu0 0.0
      %1027 = vmatpush1.msra.mxu0 0.0
      %1028 = vmatprep.subr.mxu0 0.0
      %1029 = vmatpush1.msra.mxu0 0.0
      %1030 = vmatprep.subr.mxu0 0.0
      %1031 = vmatpush1.msra.mxu0 0.0
      %1032 = vmatprep.subr.mxu0 0.0
      %1033 = vmatpush1.msra.mxu0 0.0
      %1034 = vmatprep.subr.mxu0 0.0
      %1035 = vmatpush1.msra.mxu0 0.0
      %1036 = vmatprep.subr.mxu0 0.0
      %1037 = vmatpush1.msra.mxu0 0.0
      %1038 = vmatprep.subr.mxu0 0.0
      %1039 = vmatpush1.msra.mxu0 0.0
      %1040 = vmatprep.subr.mxu0 0.0
      %1041 = vmatpush1.msra.mxu0 0.0
      %1042 = vmatprep.subr.mxu0 0.0
      %1043 = vmatpush1.msra.mxu0 0.0
      %1044 = vmatprep.subr.mxu0 0.0
      %1045 = vmatpush1.msra.mxu0 0.0
      %1046 = vmatprep.subr.mxu0 0.0
      %1047 = vmatpush1.msra.mxu0 0.0
      %1048 = vmatprep.subr.mxu0 0.0
      %1049 = vmatpush1.msra.mxu0 0.0
      %1050 = vmatprep.subr.mxu0 0.0
      %1051 = vmatpush1.msra.mxu0 0.0
      %1052 = vmatprep.subr.mxu0 0.0
      %1053 = vmatpush1.msra.mxu0 0.0
      %1054 = vmatprep.subr.mxu0 0.0
      %1055 = vmatpush1.msra.mxu0 0.0
      %1056 = vmatprep.subr.mxu0 0.0
      %1057 = vmatpush1.msra.mxu0 0.0
      %1058 = vmatprep.subr.mxu0 0.0
      %1059 = vmatpush1.msra.mxu0 0.0
      %1060 = vmatprep.subr.mxu0 0.0
      %1061 = vmatpush1.msra.mxu0 0.0
      %1062 = vmatprep.subr.mxu0 0.0
      %1063 = vmatpush1.msra.mxu0 0.0
      %1064 = vmatprep.subr.mxu0 0.0
      %1065 = vmatpush1.msra.mxu0 0.0
      %1066 = vmatprep.subr.mxu0 0.0
      %1067 = vmatpush1.msra.mxu0 0.0
      %1068 = vmatprep.subr.mxu0 0.0
      %1069 = vmatpush1.msra.mxu0 0.0
      %1070 = vmatprep.subr.mxu0 0.0
      %1071 = vmatpush1.msra.mxu0 0.0
      %1072 = vmatprep.subr.mxu0 0.0
      %1073 = vmatpush1.msra.mxu0 0.0
      %1074 = vmatprep.subr.mxu0 0.0
      %1075 = vmatpush1.msra.mxu0 0.0
      %1076 = vmatprep.subr.mxu0 0.0
      %1077 = vmatpush1.msra.mxu0 0.0
      %1078 = vmatprep.subr.mxu0 0.0
      %1079 = vmatpush1.msra.mxu0 0.0
      %1080 = vmatprep.subr.mxu0 0.0
      %1081 = vmatpush1.msra.mxu0 0.0
      %1082 = vmatprep.mubr.f32.mxu0 0.0
      %1083 = vmatmul.mubr.f32.gmra.mrb[0].mxu0 %v923
      %v1084 = vpop.f32.mrb[0].mxu0
      %v1085 = vadd.f32 0.0, %v1084
      %v1086 = vpop.f32.mrb[0].mxu0
      %1087 = vmatprep.mubr.f32.mxu0 0.0
      %1088 = vmatmul.mubr.f32.gmra.mrb[0].mxu0 %v926
      %v1089 = vpop.f32.mrb[0].mxu0
      %v1090 = vadd.f32 0.0, %v1089
      %v1091 = vpop.f32.mrb[0].mxu0
      %1092 = vmatprep.mubr.f32.mxu0 0.0
      %1093 = vmatmul.mubr.f32.gmra.mrb[0].mxu0 %v929
      %v1094 = vpop.f32.mrb[0].mxu0
      %v1095 = vadd.f32 0.0, %v1094
      %v1096 = vpop.f32.mrb[0].mxu0
      %1097 = vmatprep.mubr.f32.mxu0 0.0
      %1098 = vmatmul.mubr.f32.gmra.mrb[0].mxu0 %v932
      %v1099 = vpop.f32.mrb[0].mxu0
      %v1100 = vadd.f32 0.0, %v1099
      %v1101 = vpop.f32.mrb[0].mxu0
      %1102 = vmatprep.mubr.f32.mxu0 0.0
      %1103 = vmatmul.mubr.f32.gmra.mrb[0].mxu0 %v935
      %v1104 = vpop.f32.mrb[0].mxu0
      %v1105 = vadd.f32 0.0, %v1104
      %v1106 = vpop.f32.mrb[0].mxu0
      %1107 = vmatprep.mubr.f32.mxu0 0.0
      %1108 = vmatmul.mubr.f32.gmra.mrb[0].mxu0 %v938
      %v1109 = vpop.f32.mrb[0].mxu0
      %v1110 = vadd.f32 0.0, %v1109
      %v1111 = vpop.f32.mrb[0].mxu0
      %1112 = vmatprep.mubr.f32.mxu0 0.0
      %1113 = vmatmul.mubr.f32.gmra.mrb[0].mxu0 %v941
      %v1114 = vpop.f32.mrb[0].mxu0
      %v1115 = vadd.f32 0.0, %v1114
      %v1116 = vpop.f32.mrb[0].mxu0
      %1117 = vmatprep.mubr.f32.mxu0 0.0
      %1118 = vmatmul.mubr.f32.gmra.mrb[0].mxu0 %v944
      %v1119 = vpop.f32.mrb[0].mxu0
      %v1120 = vadd.f32 0.0, %v1119
      %v1121 = vpop.f32.mrb[0].mxu0
      %1122 = vmatprep.mubr.f32.mxu0 0.0
      %1123 = vmatmul.mubr.f32.gmra.mrb[0].mxu0 %v947
      %v1124 = vpop.f32.mrb[0].mxu0
      %v1125 = vadd.f32 0.0, %v1124
      %v1126 = vpop.f32.mrb[0].mxu0
      %1127 = vmatprep.mubr.f32.mxu0 0.0
      %1128 = vmatmul.mubr.f32.gmra.mrb[0].mxu0 %v950
      %v1129 = vpop.f32.mrb[0].mxu0
      %v1130 = vadd.f32 0.0, %v1129
      %v1131 = vpop.f32.mrb[0].mxu0
      %1132 = vmatprep.mubr.f32.mxu0 0.0
      %1133 = vmatmul.mubr.f32.gmra.mrb[0].mxu0 %v953
      %v1134 = vpop.f32.mrb[0].mxu0
      %v1135 = vadd.f32 0.0, %v1134
      %v1136 = vpop.f32.mrb[0].mxu0
      %1137 = vmatprep.mubr.f32.mxu0 0.0
      %1138 = vmatmul.mubr.f32.gmra.mrb[0].mxu0 %v956
      %v1139 = vpop.f32.mrb[0].mxu0
      %v1140 = vadd.f32 0.0, %v1139
      %v1141 = vpop.f32.mrb[0].mxu0
      %1142 = vmatprep.mubr.f32.mxu0 0.0
      %1143 = vmatmul.mubr.f32.gmra.mrb[0].mxu0 %v959
      %v1144 = vpop.f32.mrb[0].mxu0
      %v1145 = vadd.f32 0.0, %v1144
      %v1146 = vpop.f32.mrb[0].mxu0
      %1147 = vmatprep.mubr.f32.mxu0 0.0
      %1148 = vmatmul.mubr.f32.gmra.mrb[0].mxu0 %v962
      %v1149 = vpop.f32.mrb[0].mxu0
      %v1150 = vadd.f32 0.0, %v1149
      %v1151 = vpop.f32.mrb[0].mxu0
      %1152 = vmatprep.mubr.f32.mxu0 0.0
      %1153 = vmatmul.mubr.f32.gmra.mrb[0].mxu0 %v965
      %v1154 = vpop.f32.mrb[0].mxu0
      %v1155 = vadd.f32 0.0, %v1154
      %v1156 = vpop.f32.mrb[0].mxu0
      %1157 = vmatprep.mubr.f32.mxu0 0.0
      %1158 = vmatmul.mubr.f32.gmra.mrb[0].mxu0 %v968
      %v1159 = vpop.f32.mrb[0].mxu0
      %v1160 = vadd.f32 0.0, %v1159
      %v1161 = vpop.f32.mrb[0].mxu0
      %1162 = vmatprep.mubr.f32.mxu0 0.0
      %1163 = vmatmul.mubr.f32.gmra.mrb[0].mxu0 %v971
      %v1164 = vpop.f32.mrb[0].mxu0
      %v1165 = vadd.f32 0.0, %v1164
      %v1166 = vpop.f32.mrb[0].mxu0
      %1167 = vmatprep.mubr.f32.mxu0 0.0
      %1168 = vmatmul.mubr.f32.gmra.mrb[0].mxu0 %v974
      %v1169 = vpop.f32.mrb[0].mxu0
      %v1170 = vadd.f32 0.0, %v1169
      %v1171 = vpop.f32.mrb[0].mxu0
      %1172 = vmatprep.mubr.f32.mxu0 0.0
      %1173 = vmatmul.mubr.f32.gmra.mrb[0].mxu0 %v977
      %v1174 = vpop.f32.mrb[0].mxu0
      %v1175 = vadd.f32 0.0, %v1174
      %v1176 = vpop.f32.mrb[0].mxu0
      %1177 = vmatprep.mubr.f32.mxu0 0.0
      %1178 = vmatmul.mubr.f32.gmra.mrb[0].mxu0 %v980
      %v1179 = vpop.f32.mrb[0].mxu0
      %v1180 = vadd.f32 0.0, %v1179
      %v1181 = vpop.f32.mrb[0].mxu0
      %1182 = vmatprep.mubr.f32.mxu0 0.0
      %1183 = vmatmul.mubr.f32.gmra.mrb[0].mxu0 %v983
      %v1184 = vpop.f32.mrb[0].mxu0
      %v1185 = vadd.f32 0.0, %v1184
      %v1186 = vpop.f32.mrb[0].mxu0
      %1187 = vmatprep.mubr.f32.mxu0 0.0
      %1188 = vmatmul.mubr.f32.gmra.mrb[0].mxu0 %v986
      %v1189 = vpop.f32.mrb[0].mxu0
      %v1190 = vadd.f32 0.0, %v1189
      %v1191 = vpop.f32.mrb[0].mxu0
      %1192 = vmatprep.mubr.f32.mxu0 0.0
      %1193 = vmatmul.mubr.f32.gmra.mrb[0].mxu0 %v989
      %v1194 = vpop.f32.mrb[0].mxu0
      %v1195 = vadd.f32 0.0, %v1194
      %v1196 = vpop.f32.mrb[0].mxu0
      %1197 = vmatprep.mubr.f32.mxu0 0.0
      %1198 = vmatmul.mubr.f32.gmra.mrb[0].mxu0 %v992
      %v1199 = vpop.f32.mrb[0].mxu0
      %v1200 = vadd.f32 0.0, %v1199
      %v1201 = vpop.f32.mrb[0].mxu0
      %1202 = vmatprep.mubr.f32.mxu0 0.0
      %1203 = vmatmul.mubr.f32.gmra.mrb[0].mxu0 %v995
      %v1204 = vpop.f32.mrb[0].mxu0
      %v1205 = vadd.f32 0.0, %v1204
      %v1206 = vpop.f32.mrb[0].mxu0
      %1207 = vmatprep.mubr.f32.mxu0 0.0
      %1208 = vmatmul.mubr.f32.gmra.mrb[0].mxu0 %v998
      %v1209 = vpop.f32.mrb[0].mxu0
      %v1210 = vadd.f32 0.0, %v1209
      %v1211 = vpop.f32.mrb[0].mxu0
      %1212 = vmatprep.mubr.f32.mxu0 0.0
      %1213 = vmatmul.mubr.f32.gmra.mrb[0].mxu0 %v1001
      %v1214 = vpop.f32.mrb[0].mxu0
      %v1215 = vadd.f32 0.0, %v1214
      %v1216 = vpop.f32.mrb[0].mxu0
      %1217 = vmatprep.mubr.f32.mxu0 0.0
      %1218 = vmatmul.mubr.f32.gmra.mrb[0].mxu0 %v1004
      %v1219 = vpop.f32.mrb[0].mxu0
      %v1220 = vadd.f32 0.0, %v1219
      %v1221 = vpop.f32.mrb[0].mxu0
      %1222 = vmatprep.mubr.f32.mxu0 0.0
      %1223 = vmatmul.mubr.f32.gmra.mrb[0].mxu0 %v1007
      %v1224 = vpop.f32.mrb[0].mxu0
      %v1225 = vadd.f32 0.0, %v1224
      %v1226 = vpop.f32.mrb[0].mxu0
      %1227 = vmatprep.mubr.f32.mxu0 0.0
      %1228 = vmatmul.mubr.f32.gmra.mrb[0].mxu0 %v1010
      %v1229 = vpop.f32.mrb[0].mxu0
      %v1230 = vadd.f32 0.0, %v1229
      %v1231 = vpop.f32.mrb[0].mxu0
      %1232 = vmatprep.mubr.f32.mxu0 0.0
      %1233 = vmatmul.mubr.f32.gmra.mrb[0].mxu0 %v1013
      %v1234 = vpop.f32.mrb[0].mxu0
      %v1235 = vadd.f32 0.0, %v1234
      %v1236 = vpop.f32.mrb[0].mxu0
      %1237 = vmatprep.mubr.f32.mxu0 0.0
      %1238 = vmatmul.mubr.f32.gmra.mrb[0].mxu0 %v1016
      %v1239 = vpop.f32.mrb[0].mxu0
      %v1240 = vadd.f32 0.0, %v1239
      %v1241 = vpop.f32.mrb[0].mxu0
      %1242 = vdwg.mxu0
      %v1243 = vld [vmem:[%s421 + $0x1] sm:$0xff]
      %v1244 = vld [vmem:[%s421 + $0x9] sm:$0xff]
      %v1245 = vld [vmem:[%s421 + $0x19] sm:$0xff]
      %v1246 = vld [vmem:[%s421 + $0x21] sm:$0xff]
      %v1247 = vld [vmem:[%s421 + $0x31] sm:$0xff]
      %v1248 = vld [vmem:[%s421 + $0x39] sm:$0xff]
      %v1249 = vld [vmem:[%s421 + $0x49] sm:$0xff]
      %v1250 = vld [vmem:[%s421 + $0x51] sm:$0xff]
      %v1251 = vld [vmem:[%s421 + $0x61] sm:$0xff]
      %v1252 = vld [vmem:[%s421 + $0x69] sm:$0xff]
      %v1253 = vld [vmem:[%s421 + $0x79] sm:$0xff]
      %v1254 = vld [vmem:[%s421 + $0x81] sm:$0xff]
      %v1255 = vld [vmem:[%s421 + $0x91] sm:$0xff]
      %v1256 = vld [vmem:[%s421 + $0x99] sm:$0xff]
      %v1257 = vld [vmem:[%s421 + $0xa9] sm:$0xff]
      %v1258 = vld [vmem:[%s421 + $0xb1] sm:$0xff]
      %v1259 = vld [vmem:[%s421 + $0xc1] sm:$0xff]
      %v1260 = vld [vmem:[%s421 + $0xc9] sm:$0xff]
      %v1261 = vld [vmem:[%s421 + $0xd9] sm:$0xff]
      %v1262 = vld [vmem:[%s421 + $0xe1] sm:$0xff]
      %v1263 = vld [vmem:[%s421 + $0xf1] sm:$0xff]
      %v1264 = vld [vmem:[%s421 + $0xf9] sm:$0xff]
      %v1265 = vld [vmem:[%s421 + $0x109] sm:$0xff]
      %v1266 = vld [vmem:[%s421 + $0x111] sm:$0xff]
      %v1267 = vld [vmem:[%s421 + $0x121] sm:$0xff]
      %v1268 = vld [vmem:[%s421 + $0x129] sm:$0xff]
      %v1269 = vld [vmem:[%s421 + $0x139] sm:$0xff]
      %v1270 = vld [vmem:[%s421 + $0x141] sm:$0xff]
      %v1271 = vld [vmem:[%s421 + $0x151] sm:$0xff]
      %v1272 = vld [vmem:[%s421 + $0x159] sm:$0xff]
      %v1273 = vld [vmem:[%s421 + $0x169] sm:$0xff]
      %v1274 = vld [vmem:[%s421 + $0x171] sm:$0xff]
      %s1275 = scalar_lea.vmem %s1, 128
      %v1276 = vld [vmem:[%s1275] sm:$0xff]
      %v1277 = vld [vmem:[%s1275 + $0x8] sm:$0xff]
      %v1278 = vld [vmem:[%s1275 + $0x10] sm:$0xff]
      %v1279 = vld [vmem:[%s1275 + $0x18] sm:$0xff]
      %v1280 = vld [vmem:[%s421 + $0x2] sm:$0xff]
      %v1281 = vld [vmem:[%s421 + $0xa] sm:$0xff]
      %v1282 = vld [vmem:[%s421 + $0x1a] sm:$0xff]
      %v1283 = vld [vmem:[%s421 + $0x22] sm:$0xff]
      %v1284 = vld [vmem:[%s421 + $0x32] sm:$0xff]
      %v1285 = vld [vmem:[%s421 + $0x3a] sm:$0xff]
      %v1286 = vld [vmem:[%s421 + $0x4a] sm:$0xff]
      %v1287 = vld [vmem:[%s421 + $0x52] sm:$0xff]
      %v1288 = vld [vmem:[%s421 + $0x62] sm:$0xff]
      %v1289 = vld [vmem:[%s421 + $0x6a] sm:$0xff]
      %v1290 = vld [vmem:[%s421 + $0x7a] sm:$0xff]
      %v1291 = vld [vmem:[%s421 + $0x82] sm:$0xff]
      %v1292 = vld [vmem:[%s421 + $0x92] sm:$0xff]
      %v1293 = vld [vmem:[%s421 + $0x9a] sm:$0xff]
      %v1294 = vld [vmem:[%s421 + $0xaa] sm:$0xff]
      %v1295 = vld [vmem:[%s421 + $0xb2] sm:$0xff]
      %v1296 = vld [vmem:[%s421 + $0xc2] sm:$0xff]
      %v1297 = vld [vmem:[%s421 + $0xca] sm:$0xff]
      %v1298 = vld [vmem:[%s421 + $0xda] sm:$0xff]
      %v1299 = vld [vmem:[%s421 + $0xe2] sm:$0xff]
      %v1300 = vld [vmem:[%s421 + $0xf2] sm:$0xff]
      %v1301 = vld [vmem:[%s421 + $0xfa] sm:$0xff]
      %v1302 = vld [vmem:[%s421 + $0x10a] sm:$0xff]
      %v1303 = vld [vmem:[%s421 + $0x112] sm:$0xff]
      %v1304 = vld [vmem:[%s421 + $0x122] sm:$0xff]
      %v1305 = vld [vmem:[%s421 + $0x12a] sm:$0xff]
      %v1306 = vld [vmem:[%s421 + $0x13a] sm:$0xff]
      %v1307 = vld [vmem:[%s421 + $0x142] sm:$0xff]
      %v1308 = vld [vmem:[%s421 + $0x152] sm:$0xff]
      %v1309 = vld [vmem:[%s421 + $0x15a] sm:$0xff]
      %v1310 = vld [vmem:[%s421 + $0x16a] sm:$0xff]
      %v1311 = vld [vmem:[%s421 + $0x172] sm:$0xff]
      %s1312 = scalar_lea.vmem %s1, 160
      %v1313 = vld [vmem:[%s1312] sm:$0xff]
      %v1314 = vld [vmem:[%s1312 + $0x8] sm:$0xff]
      %v1315 = vld [vmem:[%s1312 + $0x10] sm:$0xff]
      %v1316 = vld [vmem:[%s1312 + $0x18] sm:$0xff]
      %v1318 = vsel %vm333, %v1280, 0
      %v1321 = vsel %vm333, %v1281, 0
      %v1324 = vsel %vm333, %v1282, 0
      %v1327 = vsel %vm333, %v1283, 0
      %v1330 = vsel %vm333, %v1284, 0
      %v1333 = vsel %vm333, %v1285, 0
      %v1336 = vsel %vm333, %v1286, 0
      %v1339 = vsel %vm333, %v1287, 0
      %v1342 = vsel %vm333, %v1288, 0
      %v1345 = vsel %vm333, %v1289, 0
      %v1348 = vsel %vm333, %v1290, 0
      %v1351 = vsel %vm333, %v1291, 0
      %v1354 = vsel %vm333, %v1292, 0
      %v1357 = vsel %vm333, %v1293, 0
      %v1360 = vsel %vm333, %v1294, 0
      %v1363 = vsel %vm333, %v1295, 0
      %v1366 = vsel %vm333, %v1296, 0
      %v1369 = vsel %vm333, %v1297, 0
      %v1372 = vsel %vm333, %v1298, 0
      %v1375 = vsel %vm333, %v1299, 0
      %v1378 = vsel %vm333, %v1300, 0
      %v1381 = vsel %vm333, %v1301, 0
      %v1384 = vsel %vm333, %v1302, 0
      %v1387 = vsel %vm333, %v1303, 0
      %v1390 = vsel %vm333, %v1304, 0
      %v1393 = vsel %vm333, %v1305, 0
      %v1396 = vsel %vm333, %v1306, 0
      %v1399 = vsel %vm333, %v1307, 0
      %v1402 = vsel %vm333, %v1308, 0
      %v1405 = vsel %vm333, %v1309, 0
      %v1408 = vsel %vm333, %v1310, 0
      %v1411 = vsel %vm333, %v1311, 0
      %1413 = vmatprep.subr.mxu0 0.0
      %1414 = vmatpush1.msra.mxu0 %v1313
      %1415 = vmatprep.subr.mxu0 0.0
      %1416 = vmatpush1.msra.mxu0 %v1314
      %1417 = vmatprep.subr.mxu0 0.0
      %1418 = vmatpush1.msra.mxu0 %v1315
      %1419 = vmatprep.subr.mxu0 0.0
      %1420 = vmatpush1.msra.mxu0 %v1316
      %1421 = vmatprep.subr.mxu0 0.0
      %1422 = vmatpush1.msra.mxu0 0.0
      %1423 = vmatprep.subr.mxu0 0.0
      %1424 = vmatpush1.msra.mxu0 0.0
      %1425 = vmatprep.subr.mxu0 0.0
      %1426 = vmatpush1.msra.mxu0 0.0
      %1427 = vmatprep.subr.mxu0 0.0
      %1428 = vmatpush1.msra.mxu0 0.0
      %1429 = vmatprep.subr.mxu0 0.0
      %1430 = vmatpush1.msra.mxu0 0.0
      %1431 = vmatprep.subr.mxu0 0.0
      %1432 = vmatpush1.msra.mxu0 0.0
      %1433 = vmatprep.subr.mxu0 0.0
      %1434 = vmatpush1.msra.mxu0 0.0
      %1435 = vmatprep.subr.mxu0 0.0
      %1436 = vmatpush1.msra.mxu0 0.0
      %1437 = vmatprep.subr.mxu0 0.0
      %1438 = vmatpush1.msra.mxu0 0.0
      %1439 = vmatprep.subr.mxu0 0.0
      %1440 = vmatpush1.msra.mxu0 0.0
      %1441 = vmatprep.subr.mxu0 0.0
      %1442 = vmatpush1.msra.mxu0 0.0
      %1443 = vmatprep.subr.mxu0 0.0
      %1444 = vmatpush1.msra.mxu0 0.0
      %1445 = vmatprep.subr.mxu0 0.0
      %1446 = vmatpush1.msra.mxu0 0.0
      %1447 = vmatprep.subr.mxu0 0.0
      %1448 = vmatpush1.msra.mxu0 0.0
      %1449 = vmatprep.subr.mxu0 0.0
      %1450 = vmatpush1.msra.mxu0 0.0
      %1451 = vmatprep.subr.mxu0 0.0
      %1452 = vmatpush1.msra.mxu0 0.0
      %1453 = vmatprep.subr.mxu0 0.0
      %1454 = vmatpush1.msra.mxu0 0.0
      %1455 = vmatprep.subr.mxu0 0.0
      %1456 = vmatpush1.msra.mxu0 0.0
      %1457 = vmatprep.subr.mxu0 0.0
      %1458 = vmatpush1.msra.mxu0 0.0
      %1459 = vmatprep.subr.mxu0 0.0
      %1460 = vmatpush1.msra.mxu0 0.0
      %1461 = vmatprep.subr.mxu0 0.0
      %1462 = vmatpush1.msra.mxu0 0.0
      %1463 = vmatprep.subr.mxu0 0.0
      %1464 = vmatpush1.msra.mxu0 0.0
      %1465 = vmatprep.subr.mxu0 0.0
      %1466 = vmatpush1.msra.mxu0 0.0
      %1467 = vmatprep.subr.mxu0 0.0
      %1468 = vmatpush1.msra.mxu0 0.0
      %1469 = vmatprep.subr.mxu0 0.0
      %1470 = vmatpush1.msra.mxu0 0.0
      %1471 = vmatprep.subr.mxu0 0.0
      %1472 = vmatpush1.msra.mxu0 0.0
      %1473 = vmatprep.subr.mxu0 0.0
      %1474 = vmatpush1.msra.mxu0 0.0
      %1475 = vmatprep.subr.mxu0 0.0
      %1476 = vmatpush1.msra.mxu0 0.0
      %1477 = vmatprep.mubr.f32.mxu0 0.0
      %1478 = vmatmul.mubr.f32.gmra.mrb[0].mxu0 %v1318
      %v1479 = vpop.f32.mrb[0].mxu0
      %v1480 = vadd.f32 0.0, %v1479
      %v1481 = vpop.f32.mrb[0].mxu0
      %1482 = vmatprep.mubr.f32.mxu0 0.0
      %1483 = vmatmul.mubr.f32.gmra.mrb[0].mxu0 %v1321
      %v1484 = vpop.f32.mrb[0].mxu0
      %v1485 = vadd.f32 0.0, %v1484
      %v1486 = vpop.f32.mrb[0].mxu0
      %1487 = vmatprep.mubr.f32.mxu0 0.0
      %1488 = vmatmul.mubr.f32.gmra.mrb[0].mxu0 %v1324
      %v1489 = vpop.f32.mrb[0].mxu0
      %v1490 = vadd.f32 0.0, %v1489
      %v1491 = vpop.f32.mrb[0].mxu0
      %1492 = vmatprep.mubr.f32.mxu0 0.0
      %1493 = vmatmul.mubr.f32.gmra.mrb[0].mxu0 %v1327
      %v1494 = vpop.f32.mrb[0].mxu0
      %v1495 = vadd.f32 0.0, %v1494
      %v1496 = vpop.f32.mrb[0].mxu0
      %1497 = vmatprep.mubr.f32.mxu0 0.0
      %1498 = vmatmul.mubr.f32.gmra.mrb[0].mxu0 %v1330
      %v1499 = vpop.f32.mrb[0].mxu0
      %v1500 = vadd.f32 0.0, %v1499
      %v1501 = vpop.f32.mrb[0].mxu0
      %1502 = vmatprep.mubr.f32.mxu0 0.0
      %1503 = vmatmul.mubr.f32.gmra.mrb[0].mxu0 %v1333
      %v1504 = vpop.f32.mrb[0].mxu0
      %v1505 = vadd.f32 0.0, %v1504
      %v1506 = vpop.f32.mrb[0].mxu0
      %1507 = vmatprep.mubr.f32.mxu0 0.0
      %1508 = vmatmul.mubr.f32.gmra.mrb[0].mxu0 %v1336
      %v1509 = vpop.f32.mrb[0].mxu0
      %v1510 = vadd.f32 0.0, %v1509
      %v1511 = vpop.f32.mrb[0].mxu0
      %1512 = vmatprep.mubr.f32.mxu0 0.0
      %1513 = vmatmul.mubr.f32.gmra.mrb[0].mxu0 %v1339
      %v1514 = vpop.f32.mrb[0].mxu0
      %v1515 = vadd.f32 0.0, %v1514
      %v1516 = vpop.f32.mrb[0].mxu0
      %1517 = vmatprep.mubr.f32.mxu0 0.0
      %1518 = vmatmul.mubr.f32.gmra.mrb[0].mxu0 %v1342
      %v1519 = vpop.f32.mrb[0].mxu0
      %v1520 = vadd.f32 0.0, %v1519
      %v1521 = vpop.f32.mrb[0].mxu0
      %1522 = vmatprep.mubr.f32.mxu0 0.0
      %1523 = vmatmul.mubr.f32.gmra.mrb[0].mxu0 %v1345
      %v1524 = vpop.f32.mrb[0].mxu0
      %v1525 = vadd.f32 0.0, %v1524
      %v1526 = vpop.f32.mrb[0].mxu0
      %1527 = vmatprep.mubr.f32.mxu0 0.0
      %1528 = vmatmul.mubr.f32.gmra.mrb[0].mxu0 %v1348
      %v1529 = vpop.f32.mrb[0].mxu0
      %v1530 = vadd.f32 0.0, %v1529
      %v1531 = vpop.f32.mrb[0].mxu0
      %1532 = vmatprep.mubr.f32.mxu0 0.0
      %1533 = vmatmul.mubr.f32.gmra.mrb[0].mxu0 %v1351
      %v1534 = vpop.f32.mrb[0].mxu0
      %v1535 = vadd.f32 0.0, %v1534
      %v1536 = vpop.f32.mrb[0].mxu0
      %1537 = vmatprep.mubr.f32.mxu0 0.0
      %1538 = vmatmul.mubr.f32.gmra.mrb[0].mxu0 %v1354
      %v1539 = vpop.f32.mrb[0].mxu0
      %v1540 = vadd.f32 0.0, %v1539
      %v1541 = vpop.f32.mrb[0].mxu0
      %1542 = vmatprep.mubr.f32.mxu0 0.0
      %1543 = vmatmul.mubr.f32.gmra.mrb[0].mxu0 %v1357
      %v1544 = vpop.f32.mrb[0].mxu0
      %v1545 = vadd.f32 0.0, %v1544
      %v1546 = vpop.f32.mrb[0].mxu0
      %1547 = vmatprep.mubr.f32.mxu0 0.0
      %1548 = vmatmul.mubr.f32.gmra.mrb[0].mxu0 %v1360
      %v1549 = vpop.f32.mrb[0].mxu0
      %v1550 = vadd.f32 0.0, %v1549
      %v1551 = vpop.f32.mrb[0].mxu0
      %1552 = vmatprep.mubr.f32.mxu0 0.0
      %1553 = vmatmul.mubr.f32.gmra.mrb[0].mxu0 %v1363
      %v1554 = vpop.f32.mrb[0].mxu0
      %v1555 = vadd.f32 0.0, %v1554
      %v1556 = vpop.f32.mrb[0].mxu0
      %1557 = vmatprep.mubr.f32.mxu0 0.0
      %1558 = vmatmul.mubr.f32.gmra.mrb[0].mxu0 %v1366
      %v1559 = vpop.f32.mrb[0].mxu0
      %v1560 = vadd.f32 0.0, %v1559
      %v1561 = vpop.f32.mrb[0].mxu0
      %1562 = vmatprep.mubr.f32.mxu0 0.0
      %1563 = vmatmul.mubr.f32.gmra.mrb[0].mxu0 %v1369
      %v1564 = vpop.f32.mrb[0].mxu0
      %v1565 = vadd.f32 0.0, %v1564
      %v1566 = vpop.f32.mrb[0].mxu0
      %1567 = vmatprep.mubr.f32.mxu0 0.0
      %1568 = vmatmul.mubr.f32.gmra.mrb[0].mxu0 %v1372
      %v1569 = vpop.f32.mrb[0].mxu0
      %v1570 = vadd.f32 0.0, %v1569
      %v1571 = vpop.f32.mrb[0].mxu0
      %1572 = vmatprep.mubr.f32.mxu0 0.0
      %1573 = vmatmul.mubr.f32.gmra.mrb[0].mxu0 %v1375
      %v1574 = vpop.f32.mrb[0].mxu0
      %v1575 = vadd.f32 0.0, %v1574
      %v1576 = vpop.f32.mrb[0].mxu0
      %1577 = vmatprep.mubr.f32.mxu0 0.0
      %1578 = vmatmul.mubr.f32.gmra.mrb[0].mxu0 %v1378
      %v1579 = vpop.f32.mrb[0].mxu0
      %v1580 = vadd.f32 0.0, %v1579
      %v1581 = vpop.f32.mrb[0].mxu0
      %1582 = vmatprep.mubr.f32.mxu0 0.0
      %1583 = vmatmul.mubr.f32.gmra.mrb[0].mxu0 %v1381
      %v1584 = vpop.f32.mrb[0].mxu0
      %v1585 = vadd.f32 0.0, %v1584
      %v1586 = vpop.f32.mrb[0].mxu0
      %1587 = vmatprep.mubr.f32.mxu0 0.0
      %1588 = vmatmul.mubr.f32.gmra.mrb[0].mxu0 %v1384
      %v1589 = vpop.f32.mrb[0].mxu0
      %v1590 = vadd.f32 0.0, %v1589
      %v1591 = vpop.f32.mrb[0].mxu0
      %1592 = vmatprep.mubr.f32.mxu0 0.0
      %1593 = vmatmul.mubr.f32.gmra.mrb[0].mxu0 %v1387
      %v1594 = vpop.f32.mrb[0].mxu0
      %v1595 = vadd.f32 0.0, %v1594
      %v1596 = vpop.f32.mrb[0].mxu0
      %1597 = vmatprep.mubr.f32.mxu0 0.0
      %1598 = vmatmul.mubr.f32.gmra.mrb[0].mxu0 %v1390
      %v1599 = vpop.f32.mrb[0].mxu0
      %v1600 = vadd.f32 0.0, %v1599
      %v1601 = vpop.f32.mrb[0].mxu0
      %1602 = vmatprep.mubr.f32.mxu0 0.0
      %1603 = vmatmul.mubr.f32.gmra.mrb[0].mxu0 %v1393
      %v1604 = vpop.f32.mrb[0].mxu0
      %v1605 = vadd.f32 0.0, %v1604
      %v1606 = vpop.f32.mrb[0].mxu0
      %1607 = vmatprep.mubr.f32.mxu0 0.0
      %1608 = vmatmul.mubr.f32.gmra.mrb[0].mxu0 %v1396
      %v1609 = vpop.f32.mrb[0].mxu0
      %v1610 = vadd.f32 0.0, %v1609
      %v1611 = vpop.f32.mrb[0].mxu0
      %1612 = vmatprep.mubr.f32.mxu0 0.0
      %1613 = vmatmul.mubr.f32.gmra.mrb[0].mxu0 %v1399
      %v1614 = vpop.f32.mrb[0].mxu0
      %v1615 = vadd.f32 0.0, %v1614
      %v1616 = vpop.f32.mrb[0].mxu0
      %1617 = vmatprep.mubr.f32.mxu0 0.0
      %1618 = vmatmul.mubr.f32.gmra.mrb[0].mxu0 %v1402
      %v1619 = vpop.f32.mrb[0].mxu0
      %v1620 = vadd.f32 0.0, %v1619
      %v1621 = vpop.f32.mrb[0].mxu0
      %1622 = vmatprep.mubr.f32.mxu0 0.0
      %1623 = vmatmul.mubr.f32.gmra.mrb[0].mxu0 %v1405
      %v1624 = vpop.f32.mrb[0].mxu0
      %v1625 = vadd.f32 0.0, %v1624
      %v1626 = vpop.f32.mrb[0].mxu0
      %1627 = vmatprep.mubr.f32.mxu0 0.0
      %1628 = vmatmul.mubr.f32.gmra.mrb[0].mxu0 %v1408
      %v1629 = vpop.f32.mrb[0].mxu0
      %v1630 = vadd.f32 0.0, %v1629
      %v1631 = vpop.f32.mrb[0].mxu0
      %1632 = vmatprep.mubr.f32.mxu0 0.0
      %1633 = vmatmul.mubr.f32.gmra.mrb[0].mxu0 %v1411
      %v1634 = vpop.f32.mrb[0].mxu0
      %v1635 = vadd.f32 0.0, %v1634
      %v1636 = vpop.f32.mrb[0].mxu0
      %1637 = vdwg.mxu0
      %s1638 = scalar_lea.vmem [#allocation2], 48
      %v1639 = vld [vmem:[%s1638] sm:$0xff]
      %v1640 = vld [vmem:[%s1638 + $0x8] sm:$0xff]
      %v1641 = vld [vmem:[%s1638 + $0x18] sm:$0xff]
      %v1642 = vld [vmem:[%s1638 + $0x20] sm:$0xff]
      %v1643 = vld [vmem:[%s1638 + $0x30] sm:$0xff]
      %v1644 = vld [vmem:[%s1638 + $0x38] sm:$0xff]
      %v1645 = vld [vmem:[%s1638 + $0x48] sm:$0xff]
      %v1646 = vld [vmem:[%s1638 + $0x50] sm:$0xff]
      %v1647 = vld [vmem:[%s1638 + $0x60] sm:$0xff]
      %v1648 = vld [vmem:[%s1638 + $0x68] sm:$0xff]
      %v1649 = vld [vmem:[%s1638 + $0x78] sm:$0xff]
      %v1650 = vld [vmem:[%s1638 + $0x80] sm:$0xff]
      %v1651 = vld [vmem:[%s1638 + $0x90] sm:$0xff]
      %v1652 = vld [vmem:[%s1638 + $0x98] sm:$0xff]
      %v1653 = vld [vmem:[%s1638 + $0xa8] sm:$0xff]
      %v1654 = vld [vmem:[%s1638 + $0xb0] sm:$0xff]
      %v1655 = vld [vmem:[%s1638 + $0xc0] sm:$0xff]
      %v1656 = vld [vmem:[%s1638 + $0xc8] sm:$0xff]
      %v1657 = vld [vmem:[%s1638 + $0xd8] sm:$0xff]
      %v1658 = vld [vmem:[%s1638 + $0xe0] sm:$0xff]
      %v1659 = vld [vmem:[%s1638 + $0xf0] sm:$0xff]
      %v1660 = vld [vmem:[%s1638 + $0xf8] sm:$0xff]
      %v1661 = vld [vmem:[%s1638 + $0x108] sm:$0xff]
      %v1662 = vld [vmem:[%s1638 + $0x110] sm:$0xff]
      %v1663 = vld [vmem:[%s1638 + $0x120] sm:$0xff]
      %v1664 = vld [vmem:[%s1638 + $0x128] sm:$0xff]
      %v1665 = vld [vmem:[%s1638 + $0x138] sm:$0xff]
      %v1666 = vld [vmem:[%s1638 + $0x140] sm:$0xff]
      %v1667 = vld [vmem:[%s1638 + $0x150] sm:$0xff]
      %v1668 = vld [vmem:[%s1638 + $0x158] sm:$0xff]
      %v1669 = vld [vmem:[%s1638 + $0x168] sm:$0xff]
      %v1670 = vld [vmem:[%s1638 + $0x170] sm:$0xff]
      %s1671 = scalar_lea.vmem %s1, 192
      %v1672 = vld [vmem:[%s1671] sm:$0xff]
      %v1673 = vld [vmem:[%s1671 + $0x8] sm:$0xff]
      %v1674 = vld [vmem:[%s1671 + $0x10] sm:$0xff]
      %v1675 = vld [vmem:[%s1671 + $0x18] sm:$0xff]
      %v1676 = vld [vmem:[%s1638 + $0x1] sm:$0xff]
      %v1677 = vld [vmem:[%s1638 + $0x9] sm:$0xff]
      %v1678 = vld [vmem:[%s1638 + $0x19] sm:$0xff]
      %v1679 = vld [vmem:[%s1638 + $0x21] sm:$0xff]
      %v1680 = vld [vmem:[%s1638 + $0x31] sm:$0xff]
      %v1681 = vld [vmem:[%s1638 + $0x39] sm:$0xff]
      %v1682 = vld [vmem:[%s1638 + $0x49] sm:$0xff]
      %v1683 = vld [vmem:[%s1638 + $0x51] sm:$0xff]
      %v1684 = vld [vmem:[%s1638 + $0x61] sm:$0xff]
      %v1685 = vld [vmem:[%s1638 + $0x69] sm:$0xff]
      %v1686 = vld [vmem:[%s1638 + $0x79] sm:$0xff]
      %v1687 = vld [vmem:[%s1638 + $0x81] sm:$0xff]
      %v1688 = vld [vmem:[%s1638 + $0x91] sm:$0xff]
      %v1689 = vld [vmem:[%s1638 + $0x99] sm:$0xff]
      %v1690 = vld [vmem:[%s1638 + $0xa9] sm:$0xff]
      %v1691 = vld [vmem:[%s1638 + $0xb1] sm:$0xff]
      %v1692 = vld [vmem:[%s1638 + $0xc1] sm:$0xff]
      %v1693 = vld [vmem:[%s1638 + $0xc9] sm:$0xff]
      %v1694 = vld [vmem:[%s1638 + $0xd9] sm:$0xff]
      %v1695 = vld [vmem:[%s1638 + $0xe1] sm:$0xff]
      %v1696 = vld [vmem:[%s1638 + $0xf1] sm:$0xff]
      %v1697 = vld [vmem:[%s1638 + $0xf9] sm:$0xff]
      %v1698 = vld [vmem:[%s1638 + $0x109] sm:$0xff]
      %v1699 = vld [vmem:[%s1638 + $0x111] sm:$0xff]
      %v1700 = vld [vmem:[%s1638 + $0x121] sm:$0xff]
      %v1701 = vld [vmem:[%s1638 + $0x129] sm:$0xff]
      %v1702 = vld [vmem:[%s1638 + $0x139] sm:$0xff]
      %v1703 = vld [vmem:[%s1638 + $0x141] sm:$0xff]
      %v1704 = vld [vmem:[%s1638 + $0x151] sm:$0xff]
      %v1705 = vld [vmem:[%s1638 + $0x159] sm:$0xff]
      %v1706 = vld [vmem:[%s1638 + $0x169] sm:$0xff]
      %v1707 = vld [vmem:[%s1638 + $0x171] sm:$0xff]
      %s1708 = scalar_lea.vmem %s1, 224
      %v1709 = vld [vmem:[%s1708] sm:$0xff]
      %v1710 = vld [vmem:[%s1708 + $0x8] sm:$0xff]
      %v1711 = vld [vmem:[%s1708 + $0x10] sm:$0xff]
      %v1712 = vld [vmem:[%s1708 + $0x18] sm:$0xff]
      %v1714 = vsel %vm333, %v1676, 0
      %v1717 = vsel %vm333, %v1677, 0
      %v1720 = vsel %vm333, %v1678, 0
      %v1723 = vsel %vm333, %v1679, 0
      %v1726 = vsel %vm333, %v1680, 0
      %v1729 = vsel %vm333, %v1681, 0
      %v1732 = vsel %vm333, %v1682, 0
      %v1735 = vsel %vm333, %v1683, 0
      %v1738 = vsel %vm333, %v1684, 0
      %v1741 = vsel %vm333, %v1685, 0
      %v1744 = vsel %vm333, %v1686, 0
      %v1747 = vsel %vm333, %v1687, 0
      %v1750 = vsel %vm333, %v1688, 0
      %v1753 = vsel %vm333, %v1689, 0
      %v1756 = vsel %vm333, %v1690, 0
      %v1759 = vsel %vm333, %v1691, 0
      %v1762 = vsel %vm333, %v1692, 0
      %v1765 = vsel %vm333, %v1693, 0
      %v1768 = vsel %vm333, %v1694, 0
      %v1771 = vsel %vm333, %v1695, 0
      %v1774 = vsel %vm333, %v1696, 0
      %v1777 = vsel %vm333, %v1697, 0
      %v1780 = vsel %vm333, %v1698, 0
      %v1783 = vsel %vm333, %v1699, 0
      %v1786 = vsel %vm333, %v1700, 0
      %v1789 = vsel %vm333, %v1701, 0
      %v1792 = vsel %vm333, %v1702, 0
      %v1795 = vsel %vm333, %v1703, 0
      %v1798 = vsel %vm333, %v1704, 0
      %v1801 = vsel %vm333, %v1705, 0
      %v1804 = vsel %vm333, %v1706, 0
      %v1807 = vsel %vm333, %v1707, 0
      %1809 = vmatprep.subr.mxu0 0.0
      %1810 = vmatpush1.msra.mxu0 %v1709
      %1811 = vmatprep.subr.mxu0 0.0
      %1812 = vmatpush1.msra.mxu0 %v1710
      %1813 = vmatprep.subr.mxu0 0.0
      %1814 = vmatpush1.msra.mxu0 %v1711
      %1815 = vmatprep.subr.mxu0 0.0
      %1816 = vmatpush1.msra.mxu0 %v1712
      %1817 = vmatprep.subr.mxu0 0.0
      %1818 = vmatpush1.msra.mxu0 0.0
      %1819 = vmatprep.subr.mxu0 0.0
      %1820 = vmatpush1.msra.mxu0 0.0
      %1821 = vmatprep.subr.mxu0 0.0
      %1822 = vmatpush1.msra.mxu0 0.0
      %1823 = vmatprep.subr.mxu0 0.0
      %1824 = vmatpush1.msra.mxu0 0.0
      %1825 = vmatprep.subr.mxu0 0.0
      %1826 = vmatpush1.msra.mxu0 0.0
      %1827 = vmatprep.subr.mxu0 0.0
      %1828 = vmatpush1.msra.mxu0 0.0
      %1829 = vmatprep.subr.mxu0 0.0
      %1830 = vmatpush1.msra.mxu0 0.0
      %1831 = vmatprep.subr.mxu0 0.0
      %1832 = vmatpush1.msra.mxu0 0.0
      %1833 = vmatprep.subr.mxu0 0.0
      %1834 = vmatpush1.msra.mxu0 0.0
      %1835 = vmatprep.subr.mxu0 0.0
      %1836 = vmatpush1.msra.mxu0 0.0
      %1837 = vmatprep.subr.mxu0 0.0
      %1838 = vmatpush1.msra.mxu0 0.0
      %1839 = vmatprep.subr.mxu0 0.0
      %1840 = vmatpush1.msra.mxu0 0.0
      %1841 = vmatprep.subr.mxu0 0.0
      %1842 = vmatpush1.msra.mxu0 0.0
      %1843 = vmatprep.subr.mxu0 0.0
      %1844 = vmatpush1.msra.mxu0 0.0
      %1845 = vmatprep.subr.mxu0 0.0
      %1846 = vmatpush1.msra.mxu0 0.0
      %1847 = vmatprep.subr.mxu0 0.0
      %1848 = vmatpush1.msra.mxu0 0.0
      %1849 = vmatprep.subr.mxu0 0.0
      %1850 = vmatpush1.msra.mxu0 0.0
      %1851 = vmatprep.subr.mxu0 0.0
      %1852 = vmatpush1.msra.mxu0 0.0
      %1853 = vmatprep.subr.mxu0 0.0
      %1854 = vmatpush1.msra.mxu0 0.0
      %1855 = vmatprep.subr.mxu0 0.0
      %1856 = vmatpush1.msra.mxu0 0.0
      %1857 = vmatprep.subr.mxu0 0.0
      %1858 = vmatpush1.msra.mxu0 0.0
      %1859 = vmatprep.subr.mxu0 0.0
      %1860 = vmatpush1.msra.mxu0 0.0
      %1861 = vmatprep.subr.mxu0 0.0
      %1862 = vmatpush1.msra.mxu0 0.0
      %1863 = vmatprep.subr.mxu0 0.0
      %1864 = vmatpush1.msra.mxu0 0.0
      %1865 = vmatprep.subr.mxu0 0.0
      %1866 = vmatpush1.msra.mxu0 0.0
      %1867 = vmatprep.subr.mxu0 0.0
      %1868 = vmatpush1.msra.mxu0 0.0
      %1869 = vmatprep.subr.mxu0 0.0
      %1870 = vmatpush1.msra.mxu0 0.0
      %1871 = vmatprep.subr.mxu0 0.0
      %1872 = vmatpush1.msra.mxu0 0.0
      %1873 = vmatprep.mubr.f32.mxu0 0.0
      %1874 = vmatmul.mubr.f32.gmra.mrb[0].mxu0 %v1714
      %v1875 = vpop.f32.mrb[0].mxu0
      %v1876 = vadd.f32 0.0, %v1875
      %v1877 = vpop.f32.mrb[0].mxu0
      %1878 = vmatprep.mubr.f32.mxu0 0.0
      %1879 = vmatmul.mubr.f32.gmra.mrb[0].mxu0 %v1717
      %v1880 = vpop.f32.mrb[0].mxu0
      %v1881 = vadd.f32 0.0, %v1880
      %v1882 = vpop.f32.mrb[0].mxu0
      %1883 = vmatprep.mubr.f32.mxu0 0.0
      %1884 = vmatmul.mubr.f32.gmra.mrb[0].mxu0 %v1720
      %v1885 = vpop.f32.mrb[0].mxu0
      %v1886 = vadd.f32 0.0, %v1885
      %v1887 = vpop.f32.mrb[0].mxu0
      %1888 = vmatprep.mubr.f32.mxu0 0.0
      %1889 = vmatmul.mubr.f32.gmra.mrb[0].mxu0 %v1723
      %v1890 = vpop.f32.mrb[0].mxu0
      %v1891 = vadd.f32 0.0, %v1890
      %v1892 = vpop.f32.mrb[0].mxu0
      %1893 = vmatprep.mubr.f32.mxu0 0.0
      %1894 = vmatmul.mubr.f32.gmra.mrb[0].mxu0 %v1726
      %v1895 = vpop.f32.mrb[0].mxu0
      %v1896 = vadd.f32 0.0, %v1895
      %v1897 = vpop.f32.mrb[0].mxu0
      %1898 = vmatprep.mubr.f32.mxu0 0.0
      %1899 = vmatmul.mubr.f32.gmra.mrb[0].mxu0 %v1729
      %v1900 = vpop.f32.mrb[0].mxu0
      %v1901 = vadd.f32 0.0, %v1900
      %v1902 = vpop.f32.mrb[0].mxu0
      %1903 = vmatprep.mubr.f32.mxu0 0.0
      %1904 = vmatmul.mubr.f32.gmra.mrb[0].mxu0 %v1732
      %v1905 = vpop.f32.mrb[0].mxu0
      %v1906 = vadd.f32 0.0, %v1905
      %v1907 = vpop.f32.mrb[0].mxu0
      %1908 = vmatprep.mubr.f32.mxu0 0.0
      %1909 = vmatmul.mubr.f32.gmra.mrb[0].mxu0 %v1735
      %v1910 = vpop.f32.mrb[0].mxu0
      %v1911 = vadd.f32 0.0, %v1910
      %v1912 = vpop.f32.mrb[0].mxu0
      %1913 = vmatprep.mubr.f32.mxu0 0.0
      %1914 = vmatmul.mubr.f32.gmra.mrb[0].mxu0 %v1738
      %v1915 = vpop.f32.mrb[0].mxu0
      %v1916 = vadd.f32 0.0, %v1915
      %v1917 = vpop.f32.mrb[0].mxu0
      %1918 = vmatprep.mubr.f32.mxu0 0.0
      %1919 = vmatmul.mubr.f32.gmra.mrb[0].mxu0 %v1741
      %v1920 = vpop.f32.mrb[0].mxu0
      %v1921 = vadd.f32 0.0, %v1920
      %v1922 = vpop.f32.mrb[0].mxu0
      %1923 = vmatprep.mubr.f32.mxu0 0.0
      %1924 = vmatmul.mubr.f32.gmra.mrb[0].mxu0 %v1744
      %v1925 = vpop.f32.mrb[0].mxu0
      %v1926 = vadd.f32 0.0, %v1925
      %v1927 = vpop.f32.mrb[0].mxu0
      %1928 = vmatprep.mubr.f32.mxu0 0.0
      %1929 = vmatmul.mubr.f32.gmra.mrb[0].mxu0 %v1747
      %v1930 = vpop.f32.mrb[0].mxu0
      %v1931 = vadd.f32 0.0, %v1930
      %v1932 = vpop.f32.mrb[0].mxu0
      %1933 = vmatprep.mubr.f32.mxu0 0.0
      %1934 = vmatmul.mubr.f32.gmra.mrb[0].mxu0 %v1750
      %v1935 = vpop.f32.mrb[0].mxu0
      %v1936 = vadd.f32 0.0, %v1935
      %v1937 = vpop.f32.mrb[0].mxu0
      %1938 = vmatprep.mubr.f32.mxu0 0.0
      %1939 = vmatmul.mubr.f32.gmra.mrb[0].mxu0 %v1753
      %v1940 = vpop.f32.mrb[0].mxu0
      %v1941 = vadd.f32 0.0, %v1940
      %v1942 = vpop.f32.mrb[0].mxu0
      %1943 = vmatprep.mubr.f32.mxu0 0.0
      %1944 = vmatmul.mubr.f32.gmra.mrb[0].mxu0 %v1756
      %v1945 = vpop.f32.mrb[0].mxu0
      %v1946 = vadd.f32 0.0, %v1945
      %v1947 = vpop.f32.mrb[0].mxu0
      %1948 = vmatprep.mubr.f32.mxu0 0.0
      %1949 = vmatmul.mubr.f32.gmra.mrb[0].mxu0 %v1759
      %v1950 = vpop.f32.mrb[0].mxu0
      %v1951 = vadd.f32 0.0, %v1950
      %v1952 = vpop.f32.mrb[0].mxu0
      %1953 = vmatprep.mubr.f32.mxu0 0.0
      %1954 = vmatmul.mubr.f32.gmra.mrb[0].mxu0 %v1762
      %v1955 = vpop.f32.mrb[0].mxu0
      %v1956 = vadd.f32 0.0, %v1955
      %v1957 = vpop.f32.mrb[0].mxu0
      %1958 = vmatprep.mubr.f32.mxu0 0.0
      %1959 = vmatmul.mubr.f32.gmra.mrb[0].mxu0 %v1765
      %v1960 = vpop.f32.mrb[0].mxu0
      %v1961 = vadd.f32 0.0, %v1960
      %v1962 = vpop.f32.mrb[0].mxu0
      %1963 = vmatprep.mubr.f32.mxu0 0.0
      %1964 = vmatmul.mubr.f32.gmra.mrb[0].mxu0 %v1768
      %v1965 = vpop.f32.mrb[0].mxu0
      %v1966 = vadd.f32 0.0, %v1965
      %v1967 = vpop.f32.mrb[0].mxu0
      %1968 = vmatprep.mubr.f32.mxu0 0.0
      %1969 = vmatmul.mubr.f32.gmra.mrb[0].mxu0 %v1771
      %v1970 = vpop.f32.mrb[0].mxu0
      %v1971 = vadd.f32 0.0, %v1970
      %v1972 = vpop.f32.mrb[0].mxu0
      %1973 = vmatprep.mubr.f32.mxu0 0.0
      %1974 = vmatmul.mubr.f32.gmra.mrb[0].mxu0 %v1774
      %v1975 = vpop.f32.mrb[0].mxu0
      %v1976 = vadd.f32 0.0, %v1975
      %v1977 = vpop.f32.mrb[0].mxu0
      %1978 = vmatprep.mubr.f32.mxu0 0.0
      %1979 = vmatmul.mubr.f32.gmra.mrb[0].mxu0 %v1777
      %v1980 = vpop.f32.mrb[0].mxu0
      %v1981 = vadd.f32 0.0, %v1980
      %v1982 = vpop.f32.mrb[0].mxu0
      %1983 = vmatprep.mubr.f32.mxu0 0.0
      %1984 = vmatmul.mubr.f32.gmra.mrb[0].mxu0 %v1780
      %v1985 = vpop.f32.mrb[0].mxu0
      %v1986 = vadd.f32 0.0, %v1985
      %v1987 = vpop.f32.mrb[0].mxu0
      %1988 = vmatprep.mubr.f32.mxu0 0.0
      %1989 = vmatmul.mubr.f32.gmra.mrb[0].mxu0 %v1783
      %v1990 = vpop.f32.mrb[0].mxu0
      %v1991 = vadd.f32 0.0, %v1990
      %v1992 = vpop.f32.mrb[0].mxu0
      %1993 = vmatprep.mubr.f32.mxu0 0.0
      %1994 = vmatmul.mubr.f32.gmra.mrb[0].mxu0 %v1786
      %v1995 = vpop.f32.mrb[0].mxu0
      %v1996 = vadd.f32 0.0, %v1995
      %v1997 = vpop.f32.mrb[0].mxu0
      %1998 = vmatprep.mubr.f32.mxu0 0.0
      %1999 = vmatmul.mubr.f32.gmra.mrb[0].mxu0 %v1789
      %v2000 = vpop.f32.mrb[0].mxu0
      %v2001 = vadd.f32 0.0, %v2000
      %v2002 = vpop.f32.mrb[0].mxu0
      %2003 = vmatprep.mubr.f32.mxu0 0.0
      %2004 = vmatmul.mubr.f32.gmra.mrb[0].mxu0 %v1792
      %v2005 = vpop.f32.mrb[0].mxu0
      %v2006 = vadd.f32 0.0, %v2005
      %v2007 = vpop.f32.mrb[0].mxu0
      %2008 = vmatprep.mubr.f32.mxu0 0.0
      %2009 = vmatmul.mubr.f32.gmra.mrb[0].mxu0 %v1795
      %v2010 = vpop.f32.mrb[0].mxu0
      %v2011 = vadd.f32 0.0, %v2010
      %v2012 = vpop.f32.mrb[0].mxu0
      %2013 = vmatprep.mubr.f32.mxu0 0.0
      %2014 = vmatmul.mubr.f32.gmra.mrb[0].mxu0 %v1798
      %v2015 = vpop.f32.mrb[0].mxu0
      %v2016 = vadd.f32 0.0, %v2015
      %v2017 = vpop.f32.mrb[0].mxu0
      %2018 = vmatprep.mubr.f32.mxu0 0.0
      %2019 = vmatmul.mubr.f32.gmra.mrb[0].mxu0 %v1801
      %v2020 = vpop.f32.mrb[0].mxu0
      %v2021 = vadd.f32 0.0, %v2020
      %v2022 = vpop.f32.mrb[0].mxu0
      %2023 = vmatprep.mubr.f32.mxu0 0.0
      %2024 = vmatmul.mubr.f32.gmra.mrb[0].mxu0 %v1804
      %v2025 = vpop.f32.mrb[0].mxu0
      %v2026 = vadd.f32 0.0, %v2025
      %v2027 = vpop.f32.mrb[0].mxu0
      %2028 = vmatprep.mubr.f32.mxu0 0.0
      %2029 = vmatmul.mubr.f32.gmra.mrb[0].mxu0 %v1807
      %v2030 = vpop.f32.mrb[0].mxu0
      %v2031 = vadd.f32 0.0, %v2030
      %v2032 = vpop.f32.mrb[0].mxu0
      %2033 = vdwg.mxu0
      %v2034 = vld [vmem:[%s1638 + $0x2] sm:$0xff]
      %v2035 = vld [vmem:[%s1638 + $0xa] sm:$0xff]
      %v2036 = vld [vmem:[%s1638 + $0x1a] sm:$0xff]
      %v2037 = vld [vmem:[%s1638 + $0x22] sm:$0xff]
      %v2038 = vld [vmem:[%s1638 + $0x32] sm:$0xff]
      %v2039 = vld [vmem:[%s1638 + $0x3a] sm:$0xff]
      %v2040 = vld [vmem:[%s1638 + $0x4a] sm:$0xff]
      %v2041 = vld [vmem:[%s1638 + $0x52] sm:$0xff]
      %v2042 = vld [vmem:[%s1638 + $0x62] sm:$0xff]
      %v2043 = vld [vmem:[%s1638 + $0x6a] sm:$0xff]
      %v2044 = vld [vmem:[%s1638 + $0x7a] sm:$0xff]
      %v2045 = vld [vmem:[%s1638 + $0x82] sm:$0xff]
      %v2046 = vld [vmem:[%s1638 + $0x92] sm:$0xff]
      %v2047 = vld [vmem:[%s1638 + $0x9a] sm:$0xff]
      %v2048 = vld [vmem:[%s1638 + $0xaa] sm:$0xff]
      %v2049 = vld [vmem:[%s1638 + $0xb2] sm:$0xff]
      %v2050 = vld [vmem:[%s1638 + $0xc2] sm:$0xff]
      %v2051 = vld [vmem:[%s1638 + $0xca] sm:$0xff]
      %v2052 = vld [vmem:[%s1638 + $0xda] sm:$0xff]
      %v2053 = vld [vmem:[%s1638 + $0xe2] sm:$0xff]
      %v2054 = vld [vmem:[%s1638 + $0xf2] sm:$0xff]
      %v2055 = vld [vmem:[%s1638 + $0xfa] sm:$0xff]
      %v2056 = vld [vmem:[%s1638 + $0x10a] sm:$0xff]
      %v2057 = vld [vmem:[%s1638 + $0x112] sm:$0xff]
      %v2058 = vld [vmem:[%s1638 + $0x122] sm:$0xff]
      %v2059 = vld [vmem:[%s1638 + $0x12a] sm:$0xff]
      %v2060 = vld [vmem:[%s1638 + $0x13a] sm:$0xff]
      %v2061 = vld [vmem:[%s1638 + $0x142] sm:$0xff]
      %v2062 = vld [vmem:[%s1638 + $0x152] sm:$0xff]
      %v2063 = vld [vmem:[%s1638 + $0x15a] sm:$0xff]
      %v2064 = vld [vmem:[%s1638 + $0x16a] sm:$0xff]
      %v2065 = vld [vmem:[%s1638 + $0x172] sm:$0xff]
      %s2066 = scalar_lea.vmem %s1, 256
      %v2067 = vld [vmem:[%s2066] sm:$0xff]
      %v2068 = vld [vmem:[%s2066 + $0x8] sm:$0xff]
      %v2069 = vld [vmem:[%s2066 + $0x10] sm:$0xff]
      %v2070 = vld [vmem:[%s2066 + $0x18] sm:$0xff]
      %v2072 = vsel %vm333, %v2034, 0
      %v2075 = vsel %vm333, %v2035, 0
      %v2078 = vsel %vm333, %v2036, 0
      %v2081 = vsel %vm333, %v2037, 0
      %v2084 = vsel %vm333, %v2038, 0
      %v2087 = vsel %vm333, %v2039, 0
      %v2090 = vsel %vm333, %v2040, 0
      %v2093 = vsel %vm333, %v2041, 0
      %v2096 = vsel %vm333, %v2042, 0
      %v2099 = vsel %vm333, %v2043, 0
      %v2102 = vsel %vm333, %v2044, 0
      %v2105 = vsel %vm333, %v2045, 0
      %v2108 = vsel %vm333, %v2046, 0
      %v2111 = vsel %vm333, %v2047, 0
      %v2114 = vsel %vm333, %v2048, 0
      %v2117 = vsel %vm333, %v2049, 0
      %v2120 = vsel %vm333, %v2050, 0
      %v2123 = vsel %vm333, %v2051, 0
      %v2126 = vsel %vm333, %v2052, 0
      %v2129 = vsel %vm333, %v2053, 0
      %v2132 = vsel %vm333, %v2054, 0
      %v2135 = vsel %vm333, %v2055, 0
      %v2138 = vsel %vm333, %v2056, 0
      %v2141 = vsel %vm333, %v2057, 0
      %v2144 = vsel %vm333, %v2058, 0
      %v2147 = vsel %vm333, %v2059, 0
      %v2150 = vsel %vm333, %v2060, 0
      %v2153 = vsel %vm333, %v2061, 0
      %v2156 = vsel %vm333, %v2062, 0
      %v2159 = vsel %vm333, %v2063, 0
      %v2162 = vsel %vm333, %v2064, 0
      %v2165 = vsel %vm333, %v2065, 0
      %2167 = vmatprep.subr.mxu0 0.0
      %2168 = vmatpush1.msra.mxu0 %v2067
      %2169 = vmatprep.subr.mxu0 0.0
      %2170 = vmatpush1.msra.mxu0 %v2068
      %2171 = vmatprep.subr.mxu0 0.0
      %2172 = vmatpush1.msra.mxu0 %v2069
      %2173 = vmatprep.subr.mxu0 0.0
      %2174 = vmatpush1.msra.mxu0 %v2070
      %2175 = vmatprep.subr.mxu0 0.0
      %2176 = vmatpush1.msra.mxu0 0.0
      %2177 = vmatprep.subr.mxu0 0.0
      %2178 = vmatpush1.msra.mxu0 0.0
      %2179 = vmatprep.subr.mxu0 0.0
      %2180 = vmatpush1.msra.mxu0 0.0
      %2181 = vmatprep.subr.mxu0 0.0
      %2182 = vmatpush1.msra.mxu0 0.0
      %2183 = vmatprep.subr.mxu0 0.0
      %2184 = vmatpush1.msra.mxu0 0.0
      %2185 = vmatprep.subr.mxu0 0.0
      %2186 = vmatpush1.msra.mxu0 0.0
      %2187 = vmatprep.subr.mxu0 0.0
      %2188 = vmatpush1.msra.mxu0 0.0
      %2189 = vmatprep.subr.mxu0 0.0
      %2190 = vmatpush1.msra.mxu0 0.0
      %2191 = vmatprep.subr.mxu0 0.0
      %2192 = vmatpush1.msra.mxu0 0.0
      %2193 = vmatprep.subr.mxu0 0.0
      %2194 = vmatpush1.msra.mxu0 0.0
      %2195 = vmatprep.subr.mxu0 0.0
      %2196 = vmatpush1.msra.mxu0 0.0
      %2197 = vmatprep.subr.mxu0 0.0
      %2198 = vmatpush1.msra.mxu0 0.0
      %2199 = vmatprep.subr.mxu0 0.0
      %2200 = vmatpush1.msra.mxu0 0.0
      %2201 = vmatprep.subr.mxu0 0.0
      %2202 = vmatpush1.msra.mxu0 0.0
      %2203 = vmatprep.subr.mxu0 0.0
      %2204 = vmatpush1.msra.mxu0 0.0
      %2205 = vmatprep.subr.mxu0 0.0
      %2206 = vmatpush1.msra.mxu0 0.0
      %2207 = vmatprep.subr.mxu0 0.0
      %2208 = vmatpush1.msra.mxu0 0.0
      %2209 = vmatprep.subr.mxu0 0.0
      %2210 = vmatpush1.msra.mxu0 0.0
      %2211 = vmatprep.subr.mxu0 0.0
      %2212 = vmatpush1.msra.mxu0 0.0
      %2213 = vmatprep.subr.mxu0 0.0
      %2214 = vmatpush1.msra.mxu0 0.0
      %2215 = vmatprep.subr.mxu0 0.0
      %2216 = vmatpush1.msra.mxu0 0.0
      %2217 = vmatprep.subr.mxu0 0.0
      %2218 = vmatpush1.msra.mxu0 0.0
      %2219 = vmatprep.subr.mxu0 0.0
      %2220 = vmatpush1.msra.mxu0 0.0
      %2221 = vmatprep.subr.mxu0 0.0
      %2222 = vmatpush1.msra.mxu0 0.0
      %2223 = vmatprep.subr.mxu0 0.0
      %2224 = vmatpush1.msra.mxu0 0.0
      %2225 = vmatprep.subr.mxu0 0.0
      %2226 = vmatpush1.msra.mxu0 0.0
      %2227 = vmatprep.subr.mxu0 0.0
      %2228 = vmatpush1.msra.mxu0 0.0
      %2229 = vmatprep.subr.mxu0 0.0
      %2230 = vmatpush1.msra.mxu0 0.0
      %2231 = vmatprep.mubr.f32.mxu0 0.0
      %2232 = vmatmul.mubr.f32.gmra.mrb[0].mxu0 %v2072
      %v2233 = vpop.f32.mrb[0].mxu0
      %v2234 = vadd.f32 0.0, %v2233
      %v2235 = vpop.f32.mrb[0].mxu0
      %2236 = vmatprep.mubr.f32.mxu0 0.0
      %2237 = vmatmul.mubr.f32.gmra.mrb[0].mxu0 %v2075
      %v2238 = vpop.f32.mrb[0].mxu0
      %v2239 = vadd.f32 0.0, %v2238
      %v2240 = vpop.f32.mrb[0].mxu0
      %2241 = vmatprep.mubr.f32.mxu0 0.0
      %2242 = vmatmul.mubr.f32.gmra.mrb[0].mxu0 %v2078
      %v2243 = vpop.f32.mrb[0].mxu0
      %v2244 = vadd.f32 0.0, %v2243
      %v2245 = vpop.f32.mrb[0].mxu0
      %2246 = vmatprep.mubr.f32.mxu0 0.0
      %2247 = vmatmul.mubr.f32.gmra.mrb[0].mxu0 %v2081
      %v2248 = vpop.f32.mrb[0].mxu0
      %v2249 = vadd.f32 0.0, %v2248
      %v2250 = vpop.f32.mrb[0].mxu0
      %2251 = vmatprep.mubr.f32.mxu0 0.0
      %2252 = vmatmul.mubr.f32.gmra.mrb[0].mxu0 %v2084
      %v2253 = vpop.f32.mrb[0].mxu0
      %v2254 = vadd.f32 0.0, %v2253
      %v2255 = vpop.f32.mrb[0].mxu0
      %2256 = vmatprep.mubr.f32.mxu0 0.0
      %2257 = vmatmul.mubr.f32.gmra.mrb[0].mxu0 %v2087
      %v2258 = vpop.f32.mrb[0].mxu0
      %v2259 = vadd.f32 0.0, %v2258
      %v2260 = vpop.f32.mrb[0].mxu0
      %2261 = vmatprep.mubr.f32.mxu0 0.0
      %2262 = vmatmul.mubr.f32.gmra.mrb[0].mxu0 %v2090
      %v2263 = vpop.f32.mrb[0].mxu0
      %v2264 = vadd.f32 0.0, %v2263
      %v2265 = vpop.f32.mrb[0].mxu0
      %2266 = vmatprep.mubr.f32.mxu0 0.0
      %2267 = vmatmul.mubr.f32.gmra.mrb[0].mxu0 %v2093
      %v2268 = vpop.f32.mrb[0].mxu0
      %v2269 = vadd.f32 0.0, %v2268
      %v2270 = vpop.f32.mrb[0].mxu0
      %2271 = vmatprep.mubr.f32.mxu0 0.0
      %2272 = vmatmul.mubr.f32.gmra.mrb[0].mxu0 %v2096
      %v2273 = vpop.f32.mrb[0].mxu0
      %v2274 = vadd.f32 0.0, %v2273
      %v2275 = vpop.f32.mrb[0].mxu0
      %2276 = vmatprep.mubr.f32.mxu0 0.0
      %2277 = vmatmul.mubr.f32.gmra.mrb[0].mxu0 %v2099
      %v2278 = vpop.f32.mrb[0].mxu0
      %v2279 = vadd.f32 0.0, %v2278
      %v2280 = vpop.f32.mrb[0].mxu0
      %2281 = vmatprep.mubr.f32.mxu0 0.0
      %2282 = vmatmul.mubr.f32.gmra.mrb[0].mxu0 %v2102
      %v2283 = vpop.f32.mrb[0].mxu0
      %v2284 = vadd.f32 0.0, %v2283
      %v2285 = vpop.f32.mrb[0].mxu0
      %2286 = vmatprep.mubr.f32.mxu0 0.0
      %2287 = vmatmul.mubr.f32.gmra.mrb[0].mxu0 %v2105
      %v2288 = vpop.f32.mrb[0].mxu0
      %v2289 = vadd.f32 0.0, %v2288
      %v2290 = vpop.f32.mrb[0].mxu0
      %2291 = vmatprep.mubr.f32.mxu0 0.0
      %2292 = vmatmul.mubr.f32.gmra.mrb[0].mxu0 %v2108
      %v2293 = vpop.f32.mrb[0].mxu0
      %v2294 = vadd.f32 0.0, %v2293
      %v2295 = vpop.f32.mrb[0].mxu0
      %2296 = vmatprep.mubr.f32.mxu0 0.0
      %2297 = vmatmul.mubr.f32.gmra.mrb[0].mxu0 %v2111
      %v2298 = vpop.f32.mrb[0].mxu0
      %v2299 = vadd.f32 0.0, %v2298
      %v2300 = vpop.f32.mrb[0].mxu0
      %2301 = vmatprep.mubr.f32.mxu0 0.0
      %2302 = vmatmul.mubr.f32.gmra.mrb[0].mxu0 %v2114
      %v2303 = vpop.f32.mrb[0].mxu0
      %v2304 = vadd.f32 0.0, %v2303
      %v2305 = vpop.f32.mrb[0].mxu0
      %2306 = vmatprep.mubr.f32.mxu0 0.0
      %2307 = vmatmul.mubr.f32.gmra.mrb[0].mxu0 %v2117
      %v2308 = vpop.f32.mrb[0].mxu0
      %v2309 = vadd.f32 0.0, %v2308
      %v2310 = vpop.f32.mrb[0].mxu0
      %2311 = vmatprep.mubr.f32.mxu0 0.0
      %2312 = vmatmul.mubr.f32.gmra.mrb[0].mxu0 %v2120
      %v2313 = vpop.f32.mrb[0].mxu0
      %v2314 = vadd.f32 0.0, %v2313
      %v2315 = vpop.f32.mrb[0].mxu0
      %2316 = vmatprep.mubr.f32.mxu0 0.0
      %2317 = vmatmul.mubr.f32.gmra.mrb[0].mxu0 %v2123
      %v2318 = vpop.f32.mrb[0].mxu0
      %v2319 = vadd.f32 0.0, %v2318
      %v2320 = vpop.f32.mrb[0].mxu0
      %2321 = vmatprep.mubr.f32.mxu0 0.0
      %2322 = vmatmul.mubr.f32.gmra.mrb[0].mxu0 %v2126
      %v2323 = vpop.f32.mrb[0].mxu0
      %v2324 = vadd.f32 0.0, %v2323
      %v2325 = vpop.f32.mrb[0].mxu0
      %2326 = vmatprep.mubr.f32.mxu0 0.0
      %2327 = vmatmul.mubr.f32.gmra.mrb[0].mxu0 %v2129
      %v2328 = vpop.f32.mrb[0].mxu0
      %v2329 = vadd.f32 0.0, %v2328
      %v2330 = vpop.f32.mrb[0].mxu0
      %2331 = vmatprep.mubr.f32.mxu0 0.0
      %2332 = vmatmul.mubr.f32.gmra.mrb[0].mxu0 %v2132
      %v2333 = vpop.f32.mrb[0].mxu0
      %v2334 = vadd.f32 0.0, %v2333
      %v2335 = vpop.f32.mrb[0].mxu0
      %2336 = vmatprep.mubr.f32.mxu0 0.0
      %2337 = vmatmul.mubr.f32.gmra.mrb[0].mxu0 %v2135
      %v2338 = vpop.f32.mrb[0].mxu0
      %v2339 = vadd.f32 0.0, %v2338
      %v2340 = vpop.f32.mrb[0].mxu0
      %2341 = vmatprep.mubr.f32.mxu0 0.0
      %2342 = vmatmul.mubr.f32.gmra.mrb[0].mxu0 %v2138
      %v2343 = vpop.f32.mrb[0].mxu0
      %v2344 = vadd.f32 0.0, %v2343
      %v2345 = vpop.f32.mrb[0].mxu0
      %2346 = vmatprep.mubr.f32.mxu0 0.0
      %2347 = vmatmul.mubr.f32.gmra.mrb[0].mxu0 %v2141
      %v2348 = vpop.f32.mrb[0].mxu0
      %v2349 = vadd.f32 0.0, %v2348
      %v2350 = vpop.f32.mrb[0].mxu0
      %2351 = vmatprep.mubr.f32.mxu0 0.0
      %2352 = vmatmul.mubr.f32.gmra.mrb[0].mxu0 %v2144
      %v2353 = vpop.f32.mrb[0].mxu0
      %v2354 = vadd.f32 0.0, %v2353
      %v2355 = vpop.f32.mrb[0].mxu0
      %2356 = vmatprep.mubr.f32.mxu0 0.0
      %2357 = vmatmul.mubr.f32.gmra.mrb[0].mxu0 %v2147
      %v2358 = vpop.f32.mrb[0].mxu0
      %v2359 = vadd.f32 0.0, %v2358
      %v2360 = vpop.f32.mrb[0].mxu0
      %2361 = vmatprep.mubr.f32.mxu0 0.0
      %2362 = vmatmul.mubr.f32.gmra.mrb[0].mxu0 %v2150
      %v2363 = vpop.f32.mrb[0].mxu0
      %v2364 = vadd.f32 0.0, %v2363
      %v2365 = vpop.f32.mrb[0].mxu0
      %2366 = vmatprep.mubr.f32.mxu0 0.0
      %2367 = vmatmul.mubr.f32.gmra.mrb[0].mxu0 %v2153
      %v2368 = vpop.f32.mrb[0].mxu0
      %v2369 = vadd.f32 0.0, %v2368
      %v2370 = vpop.f32.mrb[0].mxu0
      %2371 = vmatprep.mubr.f32.mxu0 0.0
      %2372 = vmatmul.mubr.f32.gmra.mrb[0].mxu0 %v2156
      %v2373 = vpop.f32.mrb[0].mxu0
      %v2374 = vadd.f32 0.0, %v2373
      %v2375 = vpop.f32.mrb[0].mxu0
      %2376 = vmatprep.mubr.f32.mxu0 0.0
      %2377 = vmatmul.mubr.f32.gmra.mrb[0].mxu0 %v2159
      %v2378 = vpop.f32.mrb[0].mxu0
      %v2379 = vadd.f32 0.0, %v2378
      %v2380 = vpop.f32.mrb[0].mxu0
      %2381 = vmatprep.mubr.f32.mxu0 0.0
      %2382 = vmatmul.mubr.f32.gmra.mrb[0].mxu0 %v2162
      %v2383 = vpop.f32.mrb[0].mxu0
      %v2384 = vadd.f32 0.0, %v2383
      %v2385 = vpop.f32.mrb[0].mxu0
      %2386 = vmatprep.mubr.f32.mxu0 0.0
      %2387 = vmatmul.mubr.f32.gmra.mrb[0].mxu0 %v2165
      %v2388 = vpop.f32.mrb[0].mxu0
      %v2389 = vadd.f32 0.0, %v2388
      %v2390 = vpop.f32.mrb[0].mxu0
      %2391 = vdwg.mxu0
      %v2393 = vsel %vm333, %v454, 0
      %v2396 = vsel %vm333, %v455, 0
      %v2399 = vsel %vm333, %v456, 0
      %v2402 = vsel %vm333, %v457, 0
      %v2405 = vsel %vm333, %v458, 0
      %v2408 = vsel %vm333, %v459, 0
      %v2411 = vsel %vm333, %v460, 0
      %v2414 = vsel %vm333, %v461, 0
      %v2417 = vsel %vm333, %v462, 0
      %v2420 = vsel %vm333, %v463, 0
      %v2423 = vsel %vm333, %v464, 0
      %v2426 = vsel %vm333, %v465, 0
      %v2429 = vsel %vm333, %v466, 0
      %v2432 = vsel %vm333, %v467, 0
      %v2435 = vsel %vm333, %v468, 0
      %v2438 = vsel %vm333, %v469, 0
      %v2441 = vsel %vm333, %v470, 0
      %v2444 = vsel %vm333, %v471, 0
      %v2447 = vsel %vm333, %v472, 0
      %v2450 = vsel %vm333, %v473, 0
      %v2453 = vsel %vm333, %v474, 0
      %v2456 = vsel %vm333, %v475, 0
      %v2459 = vsel %vm333, %v476, 0
      %v2462 = vsel %vm333, %v477, 0
      %v2465 = vsel %vm333, %v478, 0
      %v2468 = vsel %vm333, %v479, 0
      %v2471 = vsel %vm333, %v480, 0
      %v2474 = vsel %vm333, %v481, 0
      %v2477 = vsel %vm333, %v482, 0
      %v2480 = vsel %vm333, %v483, 0
      %v2483 = vsel %vm333, %v484, 0
      %v2486 = vsel %vm333, %v485, 0
      %2488 = vmatprep.subr.mxu0 0.0
      %2489 = vmatpush1.msra.mxu0 %v486
      %2490 = vmatprep.subr.mxu0 0.0
      %2491 = vmatpush1.msra.mxu0 %v487
      %2492 = vmatprep.subr.mxu0 0.0
      %2493 = vmatpush1.msra.mxu0 %v488
      %2494 = vmatprep.subr.mxu0 0.0
      %2495 = vmatpush1.msra.mxu0 %v489
      %2496 = vmatprep.subr.mxu0 0.0
      %2497 = vmatpush1.msra.mxu0 0.0
      %2498 = vmatprep.subr.mxu0 0.0
      %2499 = vmatpush1.msra.mxu0 0.0
      %2500 = vmatprep.subr.mxu0 0.0
      %2501 = vmatpush1.msra.mxu0 0.0
      %2502 = vmatprep.subr.mxu0 0.0
      %2503 = vmatpush1.msra.mxu0 0.0
      %2504 = vmatprep.subr.mxu0 0.0
      %2505 = vmatpush1.msra.mxu0 0.0
      %2506 = vmatprep.subr.mxu0 0.0
      %2507 = vmatpush1.msra.mxu0 0.0
      %2508 = vmatprep.subr.mxu0 0.0
      %2509 = vmatpush1.msra.mxu0 0.0
      %2510 = vmatprep.subr.mxu0 0.0
      %2511 = vmatpush1.msra.mxu0 0.0
      %2512 = vmatprep.subr.mxu0 0.0
      %2513 = vmatpush1.msra.mxu0 0.0
      %2514 = vmatprep.subr.mxu0 0.0
      %2515 = vmatpush1.msra.mxu0 0.0
      %2516 = vmatprep.subr.mxu0 0.0
      %2517 = vmatpush1.msra.mxu0 0.0
      %2518 = vmatprep.subr.mxu0 0.0
      %2519 = vmatpush1.msra.mxu0 0.0
      %2520 = vmatprep.subr.mxu0 0.0
      %2521 = vmatpush1.msra.mxu0 0.0
      %2522 = vmatprep.subr.mxu0 0.0
      %2523 = vmatpush1.msra.mxu0 0.0
      %2524 = vmatprep.subr.mxu0 0.0
      %2525 = vmatpush1.msra.mxu0 0.0
      %2526 = vmatprep.subr.mxu0 0.0
      %2527 = vmatpush1.msra.mxu0 0.0
      %2528 = vmatprep.subr.mxu0 0.0
      %2529 = vmatpush1.msra.mxu0 0.0
      %2530 = vmatprep.subr.mxu0 0.0
      %2531 = vmatpush1.msra.mxu0 0.0
      %2532 = vmatprep.subr.mxu0 0.0
      %2533 = vmatpush1.msra.mxu0 0.0
      %2534 = vmatprep.subr.mxu0 0.0
      %2535 = vmatpush1.msra.mxu0 0.0
      %2536 = vmatprep.subr.mxu0 0.0
      %2537 = vmatpush1.msra.mxu0 0.0
      %2538 = vmatprep.subr.mxu0 0.0
      %2539 = vmatpush1.msra.mxu0 0.0
      %2540 = vmatprep.subr.mxu0 0.0
      %2541 = vmatpush1.msra.mxu0 0.0
      %2542 = vmatprep.subr.mxu0 0.0
      %2543 = vmatpush1.msra.mxu0 0.0
      %2544 = vmatprep.subr.mxu0 0.0
      %2545 = vmatpush1.msra.mxu0 0.0
      %2546 = vmatprep.subr.mxu0 0.0
      %2547 = vmatpush1.msra.mxu0 0.0
      %2548 = vmatprep.subr.mxu0 0.0
      %2549 = vmatpush1.msra.mxu0 0.0
      %2550 = vmatprep.subr.mxu0 0.0
      %2551 = vmatpush1.msra.mxu0 0.0
      %2552 = vmatprep.mubr.f32.mxu0 0.0
      %2553 = vmatmul.mubr.f32.gmra.mrb[0].mxu0 %v2393
      %v2554 = vpop.f32.mrb[0].mxu0
      %v2555 = vadd.f32 %v690, %v2554
      %v2556 = vpop.f32.mrb[0].mxu0
      %2557 = vmatprep.mubr.f32.mxu0 0.0
      %2558 = vmatmul.mubr.f32.gmra.mrb[0].mxu0 %v2396
      %v2559 = vpop.f32.mrb[0].mxu0
      %v2560 = vadd.f32 %v695, %v2559
      %v2561 = vpop.f32.mrb[0].mxu0
      %2562 = vmatprep.mubr.f32.mxu0 0.0
      %2563 = vmatmul.mubr.f32.gmra.mrb[0].mxu0 %v2399
      %v2564 = vpop.f32.mrb[0].mxu0
      %v2565 = vadd.f32 %v700, %v2564
      %v2566 = vpop.f32.mrb[0].mxu0
      %2567 = vmatprep.mubr.f32.mxu0 0.0
      %2568 = vmatmul.mubr.f32.gmra.mrb[0].mxu0 %v2402
      %v2569 = vpop.f32.mrb[0].mxu0
      %v2570 = vadd.f32 %v705, %v2569
      %v2571 = vpop.f32.mrb[0].mxu0
      %2572 = vmatprep.mubr.f32.mxu0 0.0
      %2573 = vmatmul.mubr.f32.gmra.mrb[0].mxu0 %v2405
      %v2574 = vpop.f32.mrb[0].mxu0
      %v2575 = vadd.f32 %v710, %v2574
      %v2576 = vpop.f32.mrb[0].mxu0
      %2577 = vmatprep.mubr.f32.mxu0 0.0
      %2578 = vmatmul.mubr.f32.gmra.mrb[0].mxu0 %v2408
      %v2579 = vpop.f32.mrb[0].mxu0
      %v2580 = vadd.f32 %v715, %v2579
      %v2581 = vpop.f32.mrb[0].mxu0
      %2582 = vmatprep.mubr.f32.mxu0 0.0
      %2583 = vmatmul.mubr.f32.gmra.mrb[0].mxu0 %v2411
      %v2584 = vpop.f32.mrb[0].mxu0
      %v2585 = vadd.f32 %v720, %v2584
      %v2586 = vpop.f32.mrb[0].mxu0
      %2587 = vmatprep.mubr.f32.mxu0 0.0
      %2588 = vmatmul.mubr.f32.gmra.mrb[0].mxu0 %v2414
      %v2589 = vpop.f32.mrb[0].mxu0
      %v2590 = vadd.f32 %v725, %v2589
      %v2591 = vpop.f32.mrb[0].mxu0
      %2592 = vmatprep.mubr.f32.mxu0 0.0
      %2593 = vmatmul.mubr.f32.gmra.mrb[0].mxu0 %v2417
      %v2594 = vpop.f32.mrb[0].mxu0
      %v2595 = vadd.f32 %v730, %v2594
      %v2596 = vpop.f32.mrb[0].mxu0
      %2597 = vmatprep.mubr.f32.mxu0 0.0
      %2598 = vmatmul.mubr.f32.gmra.mrb[0].mxu0 %v2420
      %v2599 = vpop.f32.mrb[0].mxu0
      %v2600 = vadd.f32 %v735, %v2599
      %v2601 = vpop.f32.mrb[0].mxu0
      %2602 = vmatprep.mubr.f32.mxu0 0.0
      %2603 = vmatmul.mubr.f32.gmra.mrb[0].mxu0 %v2423
      %v2604 = vpop.f32.mrb[0].mxu0
      %v2605 = vadd.f32 %v740, %v2604
      %v2606 = vpop.f32.mrb[0].mxu0
      %2607 = vmatprep.mubr.f32.mxu0 0.0
      %2608 = vmatmul.mubr.f32.gmra.mrb[0].mxu0 %v2426
      %v2609 = vpop.f32.mrb[0].mxu0
      %v2610 = vadd.f32 %v745, %v2609
      %v2611 = vpop.f32.mrb[0].mxu0
      %2612 = vmatprep.mubr.f32.mxu0 0.0
      %2613 = vmatmul.mubr.f32.gmra.mrb[0].mxu0 %v2429
      %v2614 = vpop.f32.mrb[0].mxu0
      %v2615 = vadd.f32 %v750, %v2614
      %v2616 = vpop.f32.mrb[0].mxu0
      %2617 = vmatprep.mubr.f32.mxu0 0.0
      %2618 = vmatmul.mubr.f32.gmra.mrb[0].mxu0 %v2432
      %v2619 = vpop.f32.mrb[0].mxu0
      %v2620 = vadd.f32 %v755, %v2619
      %v2621 = vpop.f32.mrb[0].mxu0
      %2622 = vmatprep.mubr.f32.mxu0 0.0
      %2623 = vmatmul.mubr.f32.gmra.mrb[0].mxu0 %v2435
      %v2624 = vpop.f32.mrb[0].mxu0
      %v2625 = vadd.f32 %v760, %v2624
      %v2626 = vpop.f32.mrb[0].mxu0
      %2627 = vmatprep.mubr.f32.mxu0 0.0
      %2628 = vmatmul.mubr.f32.gmra.mrb[0].mxu0 %v2438
      %v2629 = vpop.f32.mrb[0].mxu0
      %v2630 = vadd.f32 %v765, %v2629
      %v2631 = vpop.f32.mrb[0].mxu0
      %2632 = vmatprep.mubr.f32.mxu0 0.0
      %2633 = vmatmul.mubr.f32.gmra.mrb[0].mxu0 %v2441
      %v2634 = vpop.f32.mrb[0].mxu0
      %v2635 = vadd.f32 %v770, %v2634
      %v2636 = vpop.f32.mrb[0].mxu0
      %2637 = vmatprep.mubr.f32.mxu0 0.0
      %2638 = vmatmul.mubr.f32.gmra.mrb[0].mxu0 %v2444
      %v2639 = vpop.f32.mrb[0].mxu0
      %v2640 = vadd.f32 %v775, %v2639
      %v2641 = vpop.f32.mrb[0].mxu0
      %2642 = vmatprep.mubr.f32.mxu0 0.0
      %2643 = vmatmul.mubr.f32.gmra.mrb[0].mxu0 %v2447
      %v2644 = vpop.f32.mrb[0].mxu0
      %v2645 = vadd.f32 %v780, %v2644
      %v2646 = vpop.f32.mrb[0].mxu0
      %2647 = vmatprep.mubr.f32.mxu0 0.0
      %2648 = vmatmul.mubr.f32.gmra.mrb[0].mxu0 %v2450
      %v2649 = vpop.f32.mrb[0].mxu0
      %v2650 = vadd.f32 %v785, %v2649
      %v2651 = vpop.f32.mrb[0].mxu0
      %2652 = vmatprep.mubr.f32.mxu0 0.0
      %2653 = vmatmul.mubr.f32.gmra.mrb[0].mxu0 %v2453
      %v2654 = vpop.f32.mrb[0].mxu0
      %v2655 = vadd.f32 %v790, %v2654
      %v2656 = vpop.f32.mrb[0].mxu0
      %2657 = vmatprep.mubr.f32.mxu0 0.0
      %2658 = vmatmul.mubr.f32.gmra.mrb[0].mxu0 %v2456
      %v2659 = vpop.f32.mrb[0].mxu0
      %v2660 = vadd.f32 %v795, %v2659
      %v2661 = vpop.f32.mrb[0].mxu0
      %2662 = vmatprep.mubr.f32.mxu0 0.0
      %2663 = vmatmul.mubr.f32.gmra.mrb[0].mxu0 %v2459
      %v2664 = vpop.f32.mrb[0].mxu0
      %v2665 = vadd.f32 %v800, %v2664
      %v2666 = vpop.f32.mrb[0].mxu0
      %2667 = vmatprep.mubr.f32.mxu0 0.0
      %2668 = vmatmul.mubr.f32.gmra.mrb[0].mxu0 %v2462
      %v2669 = vpop.f32.mrb[0].mxu0
      %v2670 = vadd.f32 %v805, %v2669
      %v2671 = vpop.f32.mrb[0].mxu0
      %2672 = vmatprep.mubr.f32.mxu0 0.0
      %2673 = vmatmul.mubr.f32.gmra.mrb[0].mxu0 %v2465
      %v2674 = vpop.f32.mrb[0].mxu0
      %v2675 = vadd.f32 %v810, %v2674
      %v2676 = vpop.f32.mrb[0].mxu0
      %2677 = vmatprep.mubr.f32.mxu0 0.0
      %2678 = vmatmul.mubr.f32.gmra.mrb[0].mxu0 %v2468
      %v2679 = vpop.f32.mrb[0].mxu0
      %v2680 = vadd.f32 %v815, %v2679
      %v2681 = vpop.f32.mrb[0].mxu0
      %2682 = vmatprep.mubr.f32.mxu0 0.0
      %2683 = vmatmul.mubr.f32.gmra.mrb[0].mxu0 %v2471
      %v2684 = vpop.f32.mrb[0].mxu0
      %v2685 = vadd.f32 %v820, %v2684
      %v2686 = vpop.f32.mrb[0].mxu0
      %2687 = vmatprep.mubr.f32.mxu0 0.0
      %2688 = vmatmul.mubr.f32.gmra.mrb[0].mxu0 %v2474
      %v2689 = vpop.f32.mrb[0].mxu0
      %v2690 = vadd.f32 %v825, %v2689
      %v2691 = vpop.f32.mrb[0].mxu0
      %2692 = vmatprep.mubr.f32.mxu0 0.0
      %2693 = vmatmul.mubr.f32.gmra.mrb[0].mxu0 %v2477
      %v2694 = vpop.f32.mrb[0].mxu0
      %v2695 = vadd.f32 %v830, %v2694
      %v2696 = vpop.f32.mrb[0].mxu0
      %2697 = vmatprep.mubr.f32.mxu0 0.0
      %2698 = vmatmul.mubr.f32.gmra.mrb[0].mxu0 %v2480
      %v2699 = vpop.f32.mrb[0].mxu0
      %v2700 = vadd.f32 %v835, %v2699
      %v2701 = vpop.f32.mrb[0].mxu0
      %2702 = vmatprep.mubr.f32.mxu0 0.0
      %2703 = vmatmul.mubr.f32.gmra.mrb[0].mxu0 %v2483
      %v2704 = vpop.f32.mrb[0].mxu0
      %v2705 = vadd.f32 %v840, %v2704
      %v2706 = vpop.f32.mrb[0].mxu0
      %2707 = vmatprep.mubr.f32.mxu0 0.0
      %2708 = vmatmul.mubr.f32.gmra.mrb[0].mxu0 %v2486
      %v2709 = vpop.f32.mrb[0].mxu0
      %v2710 = vadd.f32 %v845, %v2709
      %v2711 = vpop.f32.mrb[0].mxu0
      %2712 = vdwg.mxu0
      %v2714 = vsel %vm333, %v848, 0
      %v2717 = vsel %vm333, %v849, 0
      %v2720 = vsel %vm333, %v850, 0
      %v2723 = vsel %vm333, %v851, 0
      %v2726 = vsel %vm333, %v852, 0
      %v2729 = vsel %vm333, %v853, 0
      %v2732 = vsel %vm333, %v854, 0
      %v2735 = vsel %vm333, %v855, 0
      %v2738 = vsel %vm333, %v856, 0
      %v2741 = vsel %vm333, %v857, 0
      %v2744 = vsel %vm333, %v858, 0
      %v2747 = vsel %vm333, %v859, 0
      %v2750 = vsel %vm333, %v860, 0
      %v2753 = vsel %vm333, %v861, 0
      %v2756 = vsel %vm333, %v862, 0
      %v2759 = vsel %vm333, %v863, 0
      %v2762 = vsel %vm333, %v864, 0
      %v2765 = vsel %vm333, %v865, 0
      %v2768 = vsel %vm333, %v866, 0
      %v2771 = vsel %vm333, %v867, 0
      %v2774 = vsel %vm333, %v868, 0
      %v2777 = vsel %vm333, %v869, 0
      %v2780 = vsel %vm333, %v870, 0
      %v2783 = vsel %vm333, %v871, 0
      %v2786 = vsel %vm333, %v872, 0
      %v2789 = vsel %vm333, %v873, 0
      %v2792 = vsel %vm333, %v874, 0
      %v2795 = vsel %vm333, %v875, 0
      %v2798 = vsel %vm333, %v876, 0
      %v2801 = vsel %vm333, %v877, 0
      %v2804 = vsel %vm333, %v878, 0
      %v2807 = vsel %vm333, %v879, 0
      %2809 = vmatprep.subr.mxu0 0.0
      %2810 = vmatpush1.msra.mxu0 %v881
      %2811 = vmatprep.subr.mxu0 0.0
      %2812 = vmatpush1.msra.mxu0 %v882
      %2813 = vmatprep.subr.mxu0 0.0
      %2814 = vmatpush1.msra.mxu0 %v883
      %2815 = vmatprep.subr.mxu0 0.0
      %2816 = vmatpush1.msra.mxu0 %v884
      %2817 = vmatprep.subr.mxu0 0.0
      %2818 = vmatpush1.msra.mxu0 0.0
      %2819 = vmatprep.subr.mxu0 0.0
      %2820 = vmatpush1.msra.mxu0 0.0
      %2821 = vmatprep.subr.mxu0 0.0
      %2822 = vmatpush1.msra.mxu0 0.0
      %2823 = vmatprep.subr.mxu0 0.0
      %2824 = vmatpush1.msra.mxu0 0.0
      %2825 = vmatprep.subr.mxu0 0.0
      %2826 = vmatpush1.msra.mxu0 0.0
      %2827 = vmatprep.subr.mxu0 0.0
      %2828 = vmatpush1.msra.mxu0 0.0
      %2829 = vmatprep.subr.mxu0 0.0
      %2830 = vmatpush1.msra.mxu0 0.0
      %2831 = vmatprep.subr.mxu0 0.0
      %2832 = vmatpush1.msra.mxu0 0.0
      %2833 = vmatprep.subr.mxu0 0.0
      %2834 = vmatpush1.msra.mxu0 0.0
      %2835 = vmatprep.subr.mxu0 0.0
      %2836 = vmatpush1.msra.mxu0 0.0
      %2837 = vmatprep.subr.mxu0 0.0
      %2838 = vmatpush1.msra.mxu0 0.0
      %2839 = vmatprep.subr.mxu0 0.0
      %2840 = vmatpush1.msra.mxu0 0.0
      %2841 = vmatprep.subr.mxu0 0.0
      %2842 = vmatpush1.msra.mxu0 0.0
      %2843 = vmatprep.subr.mxu0 0.0
      %2844 = vmatpush1.msra.mxu0 0.0
      %2845 = vmatprep.subr.mxu0 0.0
      %2846 = vmatpush1.msra.mxu0 0.0
      %2847 = vmatprep.subr.mxu0 0.0
      %2848 = vmatpush1.msra.mxu0 0.0
      %2849 = vmatprep.subr.mxu0 0.0
      %2850 = vmatpush1.msra.mxu0 0.0
      %2851 = vmatprep.subr.mxu0 0.0
      %2852 = vmatpush1.msra.mxu0 0.0
      %2853 = vmatprep.subr.mxu0 0.0
      %2854 = vmatpush1.msra.mxu0 0.0
      %2855 = vmatprep.subr.mxu0 0.0
      %2856 = vmatpush1.msra.mxu0 0.0
      %2857 = vmatprep.subr.mxu0 0.0
      %2858 = vmatpush1.msra.mxu0 0.0
      %2859 = vmatprep.subr.mxu0 0.0
      %2860 = vmatpush1.msra.mxu0 0.0
      %2861 = vmatprep.subr.mxu0 0.0
      %2862 = vmatpush1.msra.mxu0 0.0
      %2863 = vmatprep.subr.mxu0 0.0
      %2864 = vmatpush1.msra.mxu0 0.0
      %2865 = vmatprep.subr.mxu0 0.0
      %2866 = vmatpush1.msra.mxu0 0.0
      %2867 = vmatprep.subr.mxu0 0.0
      %2868 = vmatpush1.msra.mxu0 0.0
      %2869 = vmatprep.subr.mxu0 0.0
      %2870 = vmatpush1.msra.mxu0 0.0
      %2871 = vmatprep.subr.mxu0 0.0
      %2872 = vmatpush1.msra.mxu0 0.0
      %2873 = vmatprep.mubr.f32.mxu0 0.0
      %2874 = vmatmul.mubr.f32.gmra.mrb[0].mxu0 %v2714
      %v2875 = vpop.f32.mrb[0].mxu0
      %v2876 = vadd.f32 %v1085, %v2875
      %v2877 = vpop.f32.mrb[0].mxu0
      %2878 = vmatprep.mubr.f32.mxu0 0.0
      %2879 = vmatmul.mubr.f32.gmra.mrb[0].mxu0 %v2717
      %v2880 = vpop.f32.mrb[0].mxu0
      %v2881 = vadd.f32 %v1090, %v2880
      %v2882 = vpop.f32.mrb[0].mxu0
      %2883 = vmatprep.mubr.f32.mxu0 0.0
      %2884 = vmatmul.mubr.f32.gmra.mrb[0].mxu0 %v2720
      %v2885 = vpop.f32.mrb[0].mxu0
      %v2886 = vadd.f32 %v1095, %v2885
      %v2887 = vpop.f32.mrb[0].mxu0
      %2888 = vmatprep.mubr.f32.mxu0 0.0
      %2889 = vmatmul.mubr.f32.gmra.mrb[0].mxu0 %v2723
      %v2890 = vpop.f32.mrb[0].mxu0
      %v2891 = vadd.f32 %v1100, %v2890
      %v2892 = vpop.f32.mrb[0].mxu0
      %2893 = vmatprep.mubr.f32.mxu0 0.0
      %2894 = vmatmul.mubr.f32.gmra.mrb[0].mxu0 %v2726
      %v2895 = vpop.f32.mrb[0].mxu0
      %v2896 = vadd.f32 %v1105, %v2895
      %v2897 = vpop.f32.mrb[0].mxu0
      %2898 = vmatprep.mubr.f32.mxu0 0.0
      %2899 = vmatmul.mubr.f32.gmra.mrb[0].mxu0 %v2729
      %v2900 = vpop.f32.mrb[0].mxu0
      %v2901 = vadd.f32 %v1110, %v2900
      %v2902 = vpop.f32.mrb[0].mxu0
      %2903 = vmatprep.mubr.f32.mxu0 0.0
      %2904 = vmatmul.mubr.f32.gmra.mrb[0].mxu0 %v2732
      %v2905 = vpop.f32.mrb[0].mxu0
      %v2906 = vadd.f32 %v1115, %v2905
      %v2907 = vpop.f32.mrb[0].mxu0
      %2908 = vmatprep.mubr.f32.mxu0 0.0
      %2909 = vmatmul.mubr.f32.gmra.mrb[0].mxu0 %v2735
      %v2910 = vpop.f32.mrb[0].mxu0
      %v2911 = vadd.f32 %v1120, %v2910
      %v2912 = vpop.f32.mrb[0].mxu0
      %2913 = vmatprep.mubr.f32.mxu0 0.0
      %2914 = vmatmul.mubr.f32.gmra.mrb[0].mxu0 %v2738
      %v2915 = vpop.f32.mrb[0].mxu0
      %v2916 = vadd.f32 %v1125, %v2915
      %v2917 = vpop.f32.mrb[0].mxu0
      %2918 = vmatprep.mubr.f32.mxu0 0.0
      %2919 = vmatmul.mubr.f32.gmra.mrb[0].mxu0 %v2741
      %v2920 = vpop.f32.mrb[0].mxu0
      %v2921 = vadd.f32 %v1130, %v2920
      %v2922 = vpop.f32.mrb[0].mxu0
      %2923 = vmatprep.mubr.f32.mxu0 0.0
      %2924 = vmatmul.mubr.f32.gmra.mrb[0].mxu0 %v2744
      %v2925 = vpop.f32.mrb[0].mxu0
      %v2926 = vadd.f32 %v1135, %v2925
      %v2927 = vpop.f32.mrb[0].mxu0
      %2928 = vmatprep.mubr.f32.mxu0 0.0
      %2929 = vmatmul.mubr.f32.gmra.mrb[0].mxu0 %v2747
      %v2930 = vpop.f32.mrb[0].mxu0
      %v2931 = vadd.f32 %v1140, %v2930
      %v2932 = vpop.f32.mrb[0].mxu0
      %2933 = vmatprep.mubr.f32.mxu0 0.0
      %2934 = vmatmul.mubr.f32.gmra.mrb[0].mxu0 %v2750
      %v2935 = vpop.f32.mrb[0].mxu0
      %v2936 = vadd.f32 %v1145, %v2935
      %v2937 = vpop.f32.mrb[0].mxu0
      %2938 = vmatprep.mubr.f32.mxu0 0.0
      %2939 = vmatmul.mubr.f32.gmra.mrb[0].mxu0 %v2753
      %v2940 = vpop.f32.mrb[0].mxu0
      %v2941 = vadd.f32 %v1150, %v2940
      %v2942 = vpop.f32.mrb[0].mxu0
      %2943 = vmatprep.mubr.f32.mxu0 0.0
      %2944 = vmatmul.mubr.f32.gmra.mrb[0].mxu0 %v2756
      %v2945 = vpop.f32.mrb[0].mxu0
      %v2946 = vadd.f32 %v1155, %v2945
      %v2947 = vpop.f32.mrb[0].mxu0
      %2948 = vmatprep.mubr.f32.mxu0 0.0
      %2949 = vmatmul.mubr.f32.gmra.mrb[0].mxu0 %v2759
      %v2950 = vpop.f32.mrb[0].mxu0
      %v2951 = vadd.f32 %v1160, %v2950
      %v2952 = vpop.f32.mrb[0].mxu0
      %2953 = vmatprep.mubr.f32.mxu0 0.0
      %2954 = vmatmul.mubr.f32.gmra.mrb[0].mxu0 %v2762
      %v2955 = vpop.f32.mrb[0].mxu0
      %v2956 = vadd.f32 %v1165, %v2955
      %v2957 = vpop.f32.mrb[0].mxu0
      %2958 = vmatprep.mubr.f32.mxu0 0.0
      %2959 = vmatmul.mubr.f32.gmra.mrb[0].mxu0 %v2765
      %v2960 = vpop.f32.mrb[0].mxu0
      %v2961 = vadd.f32 %v1170, %v2960
      %v2962 = vpop.f32.mrb[0].mxu0
      %2963 = vmatprep.mubr.f32.mxu0 0.0
      %2964 = vmatmul.mubr.f32.gmra.mrb[0].mxu0 %v2768
      %v2965 = vpop.f32.mrb[0].mxu0
      %v2966 = vadd.f32 %v1175, %v2965
      %v2967 = vpop.f32.mrb[0].mxu0
      %2968 = vmatprep.mubr.f32.mxu0 0.0
      %2969 = vmatmul.mubr.f32.gmra.mrb[0].mxu0 %v2771
      %v2970 = vpop.f32.mrb[0].mxu0
      %v2971 = vadd.f32 %v1180, %v2970
      %v2972 = vpop.f32.mrb[0].mxu0
      %2973 = vmatprep.mubr.f32.mxu0 0.0
      %2974 = vmatmul.mubr.f32.gmra.mrb[0].mxu0 %v2774
      %v2975 = vpop.f32.mrb[0].mxu0
      %v2976 = vadd.f32 %v1185, %v2975
      %v2977 = vpop.f32.mrb[0].mxu0
      %2978 = vmatprep.mubr.f32.mxu0 0.0
      %2979 = vmatmul.mubr.f32.gmra.mrb[0].mxu0 %v2777
      %v2980 = vpop.f32.mrb[0].mxu0
      %v2981 = vadd.f32 %v1190, %v2980
      %v2982 = vpop.f32.mrb[0].mxu0
      %2983 = vmatprep.mubr.f32.mxu0 0.0
      %2984 = vmatmul.mubr.f32.gmra.mrb[0].mxu0 %v2780
      %v2985 = vpop.f32.mrb[0].mxu0
      %v2986 = vadd.f32 %v1195, %v2985
      %v2987 = vpop.f32.mrb[0].mxu0
      %2988 = vmatprep.mubr.f32.mxu0 0.0
      %2989 = vmatmul.mubr.f32.gmra.mrb[0].mxu0 %v2783
      %v2990 = vpop.f32.mrb[0].mxu0
      %v2991 = vadd.f32 %v1200, %v2990
      %v2992 = vpop.f32.mrb[0].mxu0
      %2993 = vmatprep.mubr.f32.mxu0 0.0
      %2994 = vmatmul.mubr.f32.gmra.mrb[0].mxu0 %v2786
      %v2995 = vpop.f32.mrb[0].mxu0
      %v2996 = vadd.f32 %v1205, %v2995
      %v2997 = vpop.f32.mrb[0].mxu0
      %2998 = vmatprep.mubr.f32.mxu0 0.0
      %2999 = vmatmul.mubr.f32.gmra.mrb[0].mxu0 %v2789
      %v3000 = vpop.f32.mrb[0].mxu0
      %v3001 = vadd.f32 %v1210, %v3000
      %v3002 = vpop.f32.mrb[0].mxu0
      %3003 = vmatprep.mubr.f32.mxu0 0.0
      %3004 = vmatmul.mubr.f32.gmra.mrb[0].mxu0 %v2792
      %v3005 = vpop.f32.mrb[0].mxu0
      %v3006 = vadd.f32 %v1215, %v3005
      %v3007 = vpop.f32.mrb[0].mxu0
      %3008 = vmatprep.mubr.f32.mxu0 0.0
      %3009 = vmatmul.mubr.f32.gmra.mrb[0].mxu0 %v2795
      %v3010 = vpop.f32.mrb[0].mxu0
      %v3011 = vadd.f32 %v1220, %v3010
      %v3012 = vpop.f32.mrb[0].mxu0
      %3013 = vmatprep.mubr.f32.mxu0 0.0
      %3014 = vmatmul.mubr.f32.gmra.mrb[0].mxu0 %v2798
      %v3015 = vpop.f32.mrb[0].mxu0
      %v3016 = vadd.f32 %v1225, %v3015
      %v3017 = vpop.f32.mrb[0].mxu0
      %3018 = vmatprep.mubr.f32.mxu0 0.0
      %3019 = vmatmul.mubr.f32.gmra.mrb[0].mxu0 %v2801
      %v3020 = vpop.f32.mrb[0].mxu0
      %v3021 = vadd.f32 %v1230, %v3020
      %v3022 = vpop.f32.mrb[0].mxu0
      %3023 = vmatprep.mubr.f32.mxu0 0.0
      %3024 = vmatmul.mubr.f32.gmra.mrb[0].mxu0 %v2804
      %v3025 = vpop.f32.mrb[0].mxu0
      %v3026 = vadd.f32 %v1235, %v3025
      %v3027 = vpop.f32.mrb[0].mxu0
      %3028 = vmatprep.mubr.f32.mxu0 0.0
      %3029 = vmatmul.mubr.f32.gmra.mrb[0].mxu0 %v2807
      %v3030 = vpop.f32.mrb[0].mxu0
      %v3031 = vadd.f32 %v1240, %v3030
      %v3032 = vpop.f32.mrb[0].mxu0
      %3033 = vdwg.mxu0
      %v3035 = vsel %vm333, %v1243, 0
      %v3038 = vsel %vm333, %v1244, 0
      %v3041 = vsel %vm333, %v1245, 0
      %v3044 = vsel %vm333, %v1246, 0
      %v3047 = vsel %vm333, %v1247, 0
      %v3050 = vsel %vm333, %v1248, 0
      %v3053 = vsel %vm333, %v1249, 0
      %v3056 = vsel %vm333, %v1250, 0
      %v3059 = vsel %vm333, %v1251, 0
      %v3062 = vsel %vm333, %v1252, 0
      %v3065 = vsel %vm333, %v1253, 0
      %v3068 = vsel %vm333, %v1254, 0
      %v3071 = vsel %vm333, %v1255, 0
      %v3074 = vsel %vm333, %v1256, 0
      %v3077 = vsel %vm333, %v1257, 0
      %v3080 = vsel %vm333, %v1258, 0
      %v3083 = vsel %vm333, %v1259, 0
      %v3086 = vsel %vm333, %v1260, 0
      %v3089 = vsel %vm333, %v1261, 0
      %v3092 = vsel %vm333, %v1262, 0
      %v3095 = vsel %vm333, %v1263, 0
      %v3098 = vsel %vm333, %v1264, 0
      %v3101 = vsel %vm333, %v1265, 0
      %v3104 = vsel %vm333, %v1266, 0
      %v3107 = vsel %vm333, %v1267, 0
      %v3110 = vsel %vm333, %v1268, 0
      %v3113 = vsel %vm333, %v1269, 0
      %v3116 = vsel %vm333, %v1270, 0
      %v3119 = vsel %vm333, %v1271, 0
      %v3122 = vsel %vm333, %v1272, 0
      %v3125 = vsel %vm333, %v1273, 0
      %v3128 = vsel %vm333, %v1274, 0
      %3130 = vmatprep.subr.mxu0 0.0
      %3131 = vmatpush1.msra.mxu0 %v1276
      %3132 = vmatprep.subr.mxu0 0.0
      %3133 = vmatpush1.msra.mxu0 %v1277
      %3134 = vmatprep.subr.mxu0 0.0
      %3135 = vmatpush1.msra.mxu0 %v1278
      %3136 = vmatprep.subr.mxu0 0.0
      %3137 = vmatpush1.msra.mxu0 %v1279
      %3138 = vmatprep.subr.mxu0 0.0
      %3139 = vmatpush1.msra.mxu0 0.0
      %3140 = vmatprep.subr.mxu0 0.0
      %3141 = vmatpush1.msra.mxu0 0.0
      %3142 = vmatprep.subr.mxu0 0.0
      %3143 = vmatpush1.msra.mxu0 0.0
      %3144 = vmatprep.subr.mxu0 0.0
      %3145 = vmatpush1.msra.mxu0 0.0
      %3146 = vmatprep.subr.mxu0 0.0
      %3147 = vmatpush1.msra.mxu0 0.0
      %3148 = vmatprep.subr.mxu0 0.0
      %3149 = vmatpush1.msra.mxu0 0.0
      %3150 = vmatprep.subr.mxu0 0.0
      %3151 = vmatpush1.msra.mxu0 0.0
      %3152 = vmatprep.subr.mxu0 0.0
      %3153 = vmatpush1.msra.mxu0 0.0
      %3154 = vmatprep.subr.mxu0 0.0
      %3155 = vmatpush1.msra.mxu0 0.0
      %3156 = vmatprep.subr.mxu0 0.0
      %3157 = vmatpush1.msra.mxu0 0.0
      %3158 = vmatprep.subr.mxu0 0.0
      %3159 = vmatpush1.msra.mxu0 0.0
      %3160 = vmatprep.subr.mxu0 0.0
      %3161 = vmatpush1.msra.mxu0 0.0
      %3162 = vmatprep.subr.mxu0 0.0
      %3163 = vmatpush1.msra.mxu0 0.0
      %3164 = vmatprep.subr.mxu0 0.0
      %3165 = vmatpush1.msra.mxu0 0.0
      %3166 = vmatprep.subr.mxu0 0.0
      %3167 = vmatpush1.msra.mxu0 0.0
      %3168 = vmatprep.subr.mxu0 0.0
      %3169 = vmatpush1.msra.mxu0 0.0
      %3170 = vmatprep.subr.mxu0 0.0
      %3171 = vmatpush1.msra.mxu0 0.0
      %3172 = vmatprep.subr.mxu0 0.0
      %3173 = vmatpush1.msra.mxu0 0.0
      %3174 = vmatprep.subr.mxu0 0.0
      %3175 = vmatpush1.msra.mxu0 0.0
      %3176 = vmatprep.subr.mxu0 0.0
      %3177 = vmatpush1.msra.mxu0 0.0
      %3178 = vmatprep.subr.mxu0 0.0
      %3179 = vmatpush1.msra.mxu0 0.0
      %3180 = vmatprep.subr.mxu0 0.0
      %3181 = vmatpush1.msra.mxu0 0.0
      %3182 = vmatprep.subr.mxu0 0.0
      %3183 = vmatpush1.msra.mxu0 0.0
      %3184 = vmatprep.subr.mxu0 0.0
      %3185 = vmatpush1.msra.mxu0 0.0
      %3186 = vmatprep.subr.mxu0 0.0
      %3187 = vmatpush1.msra.mxu0 0.0
      %3188 = vmatprep.subr.mxu0 0.0
      %3189 = vmatpush1.msra.mxu0 0.0
      %3190 = vmatprep.subr.mxu0 0.0
      %3191 = vmatpush1.msra.mxu0 0.0
      %3192 = vmatprep.subr.mxu0 0.0
      %3193 = vmatpush1.msra.mxu0 0.0
      %3194 = vmatprep.mubr.f32.mxu0 0.0
      %3195 = vmatmul.mubr.f32.gmra.mrb[0].mxu0 %v3035
      %v3196 = vpop.f32.mrb[0].mxu0
      %v3197 = vadd.f32 %v1480, %v3196
      %v3198 = vpop.f32.mrb[0].mxu0
      %3199 = vmatprep.mubr.f32.mxu0 0.0
      %3200 = vmatmul.mubr.f32.gmra.mrb[0].mxu0 %v3038
      %v3201 = vpop.f32.mrb[0].mxu0
      %v3202 = vadd.f32 %v1485, %v3201
      %v3203 = vpop.f32.mrb[0].mxu0
      %3204 = vmatprep.mubr.f32.mxu0 0.0
      %3205 = vmatmul.mubr.f32.gmra.mrb[0].mxu0 %v3041
      %v3206 = vpop.f32.mrb[0].mxu0
      %v3207 = vadd.f32 %v1490, %v3206
      %v3208 = vpop.f32.mrb[0].mxu0
      %3209 = vmatprep.mubr.f32.mxu0 0.0
      %3210 = vmatmul.mubr.f32.gmra.mrb[0].mxu0 %v3044
      %v3211 = vpop.f32.mrb[0].mxu0
      %v3212 = vadd.f32 %v1495, %v3211
      %v3213 = vpop.f32.mrb[0].mxu0
      %3214 = vmatprep.mubr.f32.mxu0 0.0
      %3215 = vmatmul.mubr.f32.gmra.mrb[0].mxu0 %v3047
      %v3216 = vpop.f32.mrb[0].mxu0
      %v3217 = vadd.f32 %v1500, %v3216
      %v3218 = vpop.f32.mrb[0].mxu0
      %3219 = vmatprep.mubr.f32.mxu0 0.0
      %3220 = vmatmul.mubr.f32.gmra.mrb[0].mxu0 %v3050
      %v3221 = vpop.f32.mrb[0].mxu0
      %v3222 = vadd.f32 %v1505, %v3221
      %v3223 = vpop.f32.mrb[0].mxu0
      %3224 = vmatprep.mubr.f32.mxu0 0.0
      %3225 = vmatmul.mubr.f32.gmra.mrb[0].mxu0 %v3053
      %v3226 = vpop.f32.mrb[0].mxu0
      %v3227 = vadd.f32 %v1510, %v3226
      %v3228 = vpop.f32.mrb[0].mxu0
      %3229 = vmatprep.mubr.f32.mxu0 0.0
      %3230 = vmatmul.mubr.f32.gmra.mrb[0].mxu0 %v3056
      %v3231 = vpop.f32.mrb[0].mxu0
      %v3232 = vadd.f32 %v1515, %v3231
      %v3233 = vpop.f32.mrb[0].mxu0
      %3234 = vmatprep.mubr.f32.mxu0 0.0
      %3235 = vmatmul.mubr.f32.gmra.mrb[0].mxu0 %v3059
      %v3236 = vpop.f32.mrb[0].mxu0
      %v3237 = vadd.f32 %v1520, %v3236
      %v3238 = vpop.f32.mrb[0].mxu0
      %3239 = vmatprep.mubr.f32.mxu0 0.0
      %3240 = vmatmul.mubr.f32.gmra.mrb[0].mxu0 %v3062
      %v3241 = vpop.f32.mrb[0].mxu0
      %v3242 = vadd.f32 %v1525, %v3241
      %v3243 = vpop.f32.mrb[0].mxu0
      %3244 = vmatprep.mubr.f32.mxu0 0.0
      %3245 = vmatmul.mubr.f32.gmra.mrb[0].mxu0 %v3065
      %v3246 = vpop.f32.mrb[0].mxu0
      %v3247 = vadd.f32 %v1530, %v3246
      %v3248 = vpop.f32.mrb[0].mxu0
      %3249 = vmatprep.mubr.f32.mxu0 0.0
      %3250 = vmatmul.mubr.f32.gmra.mrb[0].mxu0 %v3068
      %v3251 = vpop.f32.mrb[0].mxu0
      %v3252 = vadd.f32 %v1535, %v3251
      %v3253 = vpop.f32.mrb[0].mxu0
      %3254 = vmatprep.mubr.f32.mxu0 0.0
      %3255 = vmatmul.mubr.f32.gmra.mrb[0].mxu0 %v3071
      %v3256 = vpop.f32.mrb[0].mxu0
      %v3257 = vadd.f32 %v1540, %v3256
      %v3258 = vpop.f32.mrb[0].mxu0
      %3259 = vmatprep.mubr.f32.mxu0 0.0
      %3260 = vmatmul.mubr.f32.gmra.mrb[0].mxu0 %v3074
      %v3261 = vpop.f32.mrb[0].mxu0
      %v3262 = vadd.f32 %v1545, %v3261
      %v3263 = vpop.f32.mrb[0].mxu0
      %3264 = vmatprep.mubr.f32.mxu0 0.0
      %3265 = vmatmul.mubr.f32.gmra.mrb[0].mxu0 %v3077
      %v3266 = vpop.f32.mrb[0].mxu0
      %v3267 = vadd.f32 %v1550, %v3266
      %v3268 = vpop.f32.mrb[0].mxu0
      %3269 = vmatprep.mubr.f32.mxu0 0.0
      %3270 = vmatmul.mubr.f32.gmra.mrb[0].mxu0 %v3080
      %v3271 = vpop.f32.mrb[0].mxu0
      %v3272 = vadd.f32 %v1555, %v3271
      %v3273 = vpop.f32.mrb[0].mxu0
      %3274 = vmatprep.mubr.f32.mxu0 0.0
      %3275 = vmatmul.mubr.f32.gmra.mrb[0].mxu0 %v3083
      %v3276 = vpop.f32.mrb[0].mxu0
      %v3277 = vadd.f32 %v1560, %v3276
      %v3278 = vpop.f32.mrb[0].mxu0
      %3279 = vmatprep.mubr.f32.mxu0 0.0
      %3280 = vmatmul.mubr.f32.gmra.mrb[0].mxu0 %v3086
      %v3281 = vpop.f32.mrb[0].mxu0
      %v3282 = vadd.f32 %v1565, %v3281
      %v3283 = vpop.f32.mrb[0].mxu0
      %3284 = vmatprep.mubr.f32.mxu0 0.0
      %3285 = vmatmul.mubr.f32.gmra.mrb[0].mxu0 %v3089
      %v3286 = vpop.f32.mrb[0].mxu0
      %v3287 = vadd.f32 %v1570, %v3286
      %v3288 = vpop.f32.mrb[0].mxu0
      %3289 = vmatprep.mubr.f32.mxu0 0.0
      %3290 = vmatmul.mubr.f32.gmra.mrb[0].mxu0 %v3092
      %v3291 = vpop.f32.mrb[0].mxu0
      %v3292 = vadd.f32 %v1575, %v3291
      %v3293 = vpop.f32.mrb[0].mxu0
      %3294 = vmatprep.mubr.f32.mxu0 0.0
      %3295 = vmatmul.mubr.f32.gmra.mrb[0].mxu0 %v3095
      %v3296 = vpop.f32.mrb[0].mxu0
      %v3297 = vadd.f32 %v1580, %v3296
      %v3298 = vpop.f32.mrb[0].mxu0
      %3299 = vmatprep.mubr.f32.mxu0 0.0
      %3300 = vmatmul.mubr.f32.gmra.mrb[0].mxu0 %v3098
      %v3301 = vpop.f32.mrb[0].mxu0
      %v3302 = vadd.f32 %v1585, %v3301
      %v3303 = vpop.f32.mrb[0].mxu0
      %3304 = vmatprep.mubr.f32.mxu0 0.0
      %3305 = vmatmul.mubr.f32.gmra.mrb[0].mxu0 %v3101
      %v3306 = vpop.f32.mrb[0].mxu0
      %v3307 = vadd.f32 %v1590, %v3306
      %v3308 = vpop.f32.mrb[0].mxu0
      %3309 = vmatprep.mubr.f32.mxu0 0.0
      %3310 = vmatmul.mubr.f32.gmra.mrb[0].mxu0 %v3104
      %v3311 = vpop.f32.mrb[0].mxu0
      %v3312 = vadd.f32 %v1595, %v3311
      %v3313 = vpop.f32.mrb[0].mxu0
      %3314 = vmatprep.mubr.f32.mxu0 0.0
      %3315 = vmatmul.mubr.f32.gmra.mrb[0].mxu0 %v3107
      %v3316 = vpop.f32.mrb[0].mxu0
      %v3317 = vadd.f32 %v1600, %v3316
      %v3318 = vpop.f32.mrb[0].mxu0
      %3319 = vmatprep.mubr.f32.mxu0 0.0
      %3320 = vmatmul.mubr.f32.gmra.mrb[0].mxu0 %v3110
      %v3321 = vpop.f32.mrb[0].mxu0
      %v3322 = vadd.f32 %v1605, %v3321
      %v3323 = vpop.f32.mrb[0].mxu0
      %3324 = vmatprep.mubr.f32.mxu0 0.0
      %3325 = vmatmul.mubr.f32.gmra.mrb[0].mxu0 %v3113
      %v3326 = vpop.f32.mrb[0].mxu0
      %v3327 = vadd.f32 %v1610, %v3326
      %v3328 = vpop.f32.mrb[0].mxu0
      %3329 = vmatprep.mubr.f32.mxu0 0.0
      %3330 = vmatmul.mubr.f32.gmra.mrb[0].mxu0 %v3116
      %v3331 = vpop.f32.mrb[0].mxu0
      %v3332 = vadd.f32 %v1615, %v3331
      %v3333 = vpop.f32.mrb[0].mxu0
      %3334 = vmatprep.mubr.f32.mxu0 0.0
      %3335 = vmatmul.mubr.f32.gmra.mrb[0].mxu0 %v3119
      %v3336 = vpop.f32.mrb[0].mxu0
      %v3337 = vadd.f32 %v1620, %v3336
      %v3338 = vpop.f32.mrb[0].mxu0
      %3339 = vmatprep.mubr.f32.mxu0 0.0
      %3340 = vmatmul.mubr.f32.gmra.mrb[0].mxu0 %v3122
      %v3341 = vpop.f32.mrb[0].mxu0
      %v3342 = vadd.f32 %v1625, %v3341
      %v3343 = vpop.f32.mrb[0].mxu0
      %3344 = vmatprep.mubr.f32.mxu0 0.0
      %3345 = vmatmul.mubr.f32.gmra.mrb[0].mxu0 %v3125
      %v3346 = vpop.f32.mrb[0].mxu0
      %v3347 = vadd.f32 %v1630, %v3346
      %v3348 = vpop.f32.mrb[0].mxu0
      %3349 = vmatprep.mubr.f32.mxu0 0.0
      %3350 = vmatmul.mubr.f32.gmra.mrb[0].mxu0 %v3128
      %v3351 = vpop.f32.mrb[0].mxu0
      %v3352 = vadd.f32 %v1635, %v3351
      %v3353 = vpop.f32.mrb[0].mxu0
      %3354 = vdwg.mxu0
      %v3356 = vsel %vm333, %v1639, 0
      %v3359 = vsel %vm333, %v1640, 0
      %v3362 = vsel %vm333, %v1641, 0
      %v3365 = vsel %vm333, %v1642, 0
      %v3368 = vsel %vm333, %v1643, 0
      %v3371 = vsel %vm333, %v1644, 0
      %v3374 = vsel %vm333, %v1645, 0
      %v3377 = vsel %vm333, %v1646, 0
      %v3380 = vsel %vm333, %v1647, 0
      %v3383 = vsel %vm333, %v1648, 0
      %v3386 = vsel %vm333, %v1649, 0
      %v3389 = vsel %vm333, %v1650, 0
      %v3392 = vsel %vm333, %v1651, 0
      %v3395 = vsel %vm333, %v1652, 0
      %v3398 = vsel %vm333, %v1653, 0
      %v3401 = vsel %vm333, %v1654, 0
      %v3404 = vsel %vm333, %v1655, 0
      %v3407 = vsel %vm333, %v1656, 0
      %v3410 = vsel %vm333, %v1657, 0
      %v3413 = vsel %vm333, %v1658, 0
      %v3416 = vsel %vm333, %v1659, 0
      %v3419 = vsel %vm333, %v1660, 0
      %v3422 = vsel %vm333, %v1661, 0
      %v3425 = vsel %vm333, %v1662, 0
      %v3428 = vsel %vm333, %v1663, 0
      %v3431 = vsel %vm333, %v1664, 0
      %v3434 = vsel %vm333, %v1665, 0
      %v3437 = vsel %vm333, %v1666, 0
      %v3440 = vsel %vm333, %v1667, 0
      %v3443 = vsel %vm333, %v1668, 0
      %v3446 = vsel %vm333, %v1669, 0
      %v3449 = vsel %vm333, %v1670, 0
      %3451 = vmatprep.subr.mxu0 0.0
      %3452 = vmatpush1.msra.mxu0 %v1672
      %3453 = vmatprep.subr.mxu0 0.0
      %3454 = vmatpush1.msra.mxu0 %v1673
      %3455 = vmatprep.subr.mxu0 0.0
      %3456 = vmatpush1.msra.mxu0 %v1674
      %3457 = vmatprep.subr.mxu0 0.0
      %3458 = vmatpush1.msra.mxu0 %v1675
      %3459 = vmatprep.subr.mxu0 0.0
      %3460 = vmatpush1.msra.mxu0 0.0
      %3461 = vmatprep.subr.mxu0 0.0
      %3462 = vmatpush1.msra.mxu0 0.0
      %3463 = vmatprep.subr.mxu0 0.0
      %3464 = vmatpush1.msra.mxu0 0.0
      %3465 = vmatprep.subr.mxu0 0.0
      %3466 = vmatpush1.msra.mxu0 0.0
      %3467 = vmatprep.subr.mxu0 0.0
      %3468 = vmatpush1.msra.mxu0 0.0
      %3469 = vmatprep.subr.mxu0 0.0
      %3470 = vmatpush1.msra.mxu0 0.0
      %3471 = vmatprep.subr.mxu0 0.0
      %3472 = vmatpush1.msra.mxu0 0.0
      %3473 = vmatprep.subr.mxu0 0.0
      %3474 = vmatpush1.msra.mxu0 0.0
      %3475 = vmatprep.subr.mxu0 0.0
      %3476 = vmatpush1.msra.mxu0 0.0
      %3477 = vmatprep.subr.mxu0 0.0
      %3478 = vmatpush1.msra.mxu0 0.0
      %3479 = vmatprep.subr.mxu0 0.0
      %3480 = vmatpush1.msra.mxu0 0.0
      %3481 = vmatprep.subr.mxu0 0.0
      %3482 = vmatpush1.msra.mxu0 0.0
      %3483 = vmatprep.subr.mxu0 0.0
      %3484 = vmatpush1.msra.mxu0 0.0
      %3485 = vmatprep.subr.mxu0 0.0
      %3486 = vmatpush1.msra.mxu0 0.0
      %3487 = vmatprep.subr.mxu0 0.0
      %3488 = vmatpush1.msra.mxu0 0.0
      %3489 = vmatprep.subr.mxu0 0.0
      %3490 = vmatpush1.msra.mxu0 0.0
      %3491 = vmatprep.subr.mxu0 0.0
      %3492 = vmatpush1.msra.mxu0 0.0
      %3493 = vmatprep.subr.mxu0 0.0
      %3494 = vmatpush1.msra.mxu0 0.0
      %3495 = vmatprep.subr.mxu0 0.0
      %3496 = vmatpush1.msra.mxu0 0.0
      %3497 = vmatprep.subr.mxu0 0.0
      %3498 = vmatpush1.msra.mxu0 0.0
      %3499 = vmatprep.subr.mxu0 0.0
      %3500 = vmatpush1.msra.mxu0 0.0
      %3501 = vmatprep.subr.mxu0 0.0
      %3502 = vmatpush1.msra.mxu0 0.0
      %3503 = vmatprep.subr.mxu0 0.0
      %3504 = vmatpush1.msra.mxu0 0.0
      %3505 = vmatprep.subr.mxu0 0.0
      %3506 = vmatpush1.msra.mxu0 0.0
      %3507 = vmatprep.subr.mxu0 0.0
      %3508 = vmatpush1.msra.mxu0 0.0
      %3509 = vmatprep.subr.mxu0 0.0
      %3510 = vmatpush1.msra.mxu0 0.0
      %3511 = vmatprep.subr.mxu0 0.0
      %3512 = vmatpush1.msra.mxu0 0.0
      %3513 = vmatprep.subr.mxu0 0.0
      %3514 = vmatpush1.msra.mxu0 0.0
      %3515 = vmatprep.mubr.f32.mxu0 0.0
      %3516 = vmatmul.mubr.f32.gmra.mrb[0].mxu0 %v3356
      %v3517 = vpop.f32.mrb[0].mxu0
      %v3518 = vadd.f32 %v1876, %v3517
      %v3519 = vpop.f32.mrb[0].mxu0
      %3520 = vmatprep.mubr.f32.mxu0 0.0
      %3521 = vmatmul.mubr.f32.gmra.mrb[0].mxu0 %v3359
      %v3522 = vpop.f32.mrb[0].mxu0
      %v3523 = vadd.f32 %v1881, %v3522
      %v3524 = vpop.f32.mrb[0].mxu0
      %3525 = vmatprep.mubr.f32.mxu0 0.0
      %3526 = vmatmul.mubr.f32.gmra.mrb[0].mxu0 %v3362
      %v3527 = vpop.f32.mrb[0].mxu0
      %v3528 = vadd.f32 %v1886, %v3527
      %v3529 = vpop.f32.mrb[0].mxu0
      %3530 = vmatprep.mubr.f32.mxu0 0.0
      %3531 = vmatmul.mubr.f32.gmra.mrb[0].mxu0 %v3365
      %v3532 = vpop.f32.mrb[0].mxu0
      %v3533 = vadd.f32 %v1891, %v3532
      %v3534 = vpop.f32.mrb[0].mxu0
      %3535 = vmatprep.mubr.f32.mxu0 0.0
      %3536 = vmatmul.mubr.f32.gmra.mrb[0].mxu0 %v3368
      %v3537 = vpop.f32.mrb[0].mxu0
      %v3538 = vadd.f32 %v1896, %v3537
      %v3539 = vpop.f32.mrb[0].mxu0
      %3540 = vmatprep.mubr.f32.mxu0 0.0
      %3541 = vmatmul.mubr.f32.gmra.mrb[0].mxu0 %v3371
      %v3542 = vpop.f32.mrb[0].mxu0
      %v3543 = vadd.f32 %v1901, %v3542
      %v3544 = vpop.f32.mrb[0].mxu0
      %3545 = vmatprep.mubr.f32.mxu0 0.0
      %3546 = vmatmul.mubr.f32.gmra.mrb[0].mxu0 %v3374
      %v3547 = vpop.f32.mrb[0].mxu0
      %v3548 = vadd.f32 %v1906, %v3547
      %v3549 = vpop.f32.mrb[0].mxu0
      %3550 = vmatprep.mubr.f32.mxu0 0.0
      %3551 = vmatmul.mubr.f32.gmra.mrb[0].mxu0 %v3377
      %v3552 = vpop.f32.mrb[0].mxu0
      %v3553 = vadd.f32 %v1911, %v3552
      %v3554 = vpop.f32.mrb[0].mxu0
      %3555 = vmatprep.mubr.f32.mxu0 0.0
      %3556 = vmatmul.mubr.f32.gmra.mrb[0].mxu0 %v3380
      %v3557 = vpop.f32.mrb[0].mxu0
      %v3558 = vadd.f32 %v1916, %v3557
      %v3559 = vpop.f32.mrb[0].mxu0
      %3560 = vmatprep.mubr.f32.mxu0 0.0
      %3561 = vmatmul.mubr.f32.gmra.mrb[0].mxu0 %v3383
      %v3562 = vpop.f32.mrb[0].mxu0
      %v3563 = vadd.f32 %v1921, %v3562
      %v3564 = vpop.f32.mrb[0].mxu0
      %3565 = vmatprep.mubr.f32.mxu0 0.0
      %3566 = vmatmul.mubr.f32.gmra.mrb[0].mxu0 %v3386
      %v3567 = vpop.f32.mrb[0].mxu0
      %v3568 = vadd.f32 %v1926, %v3567
      %v3569 = vpop.f32.mrb[0].mxu0
      %3570 = vmatprep.mubr.f32.mxu0 0.0
      %3571 = vmatmul.mubr.f32.gmra.mrb[0].mxu0 %v3389
      %v3572 = vpop.f32.mrb[0].mxu0
      %v3573 = vadd.f32 %v1931, %v3572
      %v3574 = vpop.f32.mrb[0].mxu0
      %3575 = vmatprep.mubr.f32.mxu0 0.0
      %3576 = vmatmul.mubr.f32.gmra.mrb[0].mxu0 %v3392
      %v3577 = vpop.f32.mrb[0].mxu0
      %v3578 = vadd.f32 %v1936, %v3577
      %v3579 = vpop.f32.mrb[0].mxu0
      %3580 = vmatprep.mubr.f32.mxu0 0.0
      %3581 = vmatmul.mubr.f32.gmra.mrb[0].mxu0 %v3395
      %v3582 = vpop.f32.mrb[0].mxu0
      %v3583 = vadd.f32 %v1941, %v3582
      %v3584 = vpop.f32.mrb[0].mxu0
      %3585 = vmatprep.mubr.f32.mxu0 0.0
      %3586 = vmatmul.mubr.f32.gmra.mrb[0].mxu0 %v3398
      %v3587 = vpop.f32.mrb[0].mxu0
      %v3588 = vadd.f32 %v1946, %v3587
      %v3589 = vpop.f32.mrb[0].mxu0
      %3590 = vmatprep.mubr.f32.mxu0 0.0
      %3591 = vmatmul.mubr.f32.gmra.mrb[0].mxu0 %v3401
      %v3592 = vpop.f32.mrb[0].mxu0
      %v3593 = vadd.f32 %v1951, %v3592
      %v3594 = vpop.f32.mrb[0].mxu0
      %3595 = vmatprep.mubr.f32.mxu0 0.0
      %3596 = vmatmul.mubr.f32.gmra.mrb[0].mxu0 %v3404
      %v3597 = vpop.f32.mrb[0].mxu0
      %v3598 = vadd.f32 %v1956, %v3597
      %v3599 = vpop.f32.mrb[0].mxu0
      %3600 = vmatprep.mubr.f32.mxu0 0.0
      %3601 = vmatmul.mubr.f32.gmra.mrb[0].mxu0 %v3407
      %v3602 = vpop.f32.mrb[0].mxu0
      %v3603 = vadd.f32 %v1961, %v3602
      %v3604 = vpop.f32.mrb[0].mxu0
      %3605 = vmatprep.mubr.f32.mxu0 0.0
      %3606 = vmatmul.mubr.f32.gmra.mrb[0].mxu0 %v3410
      %v3607 = vpop.f32.mrb[0].mxu0
      %v3608 = vadd.f32 %v1966, %v3607
      %v3609 = vpop.f32.mrb[0].mxu0
      %3610 = vmatprep.mubr.f32.mxu0 0.0
      %3611 = vmatmul.mubr.f32.gmra.mrb[0].mxu0 %v3413
      %v3612 = vpop.f32.mrb[0].mxu0
      %v3613 = vadd.f32 %v1971, %v3612
      %v3614 = vpop.f32.mrb[0].mxu0
      %3615 = vmatprep.mubr.f32.mxu0 0.0
      %3616 = vmatmul.mubr.f32.gmra.mrb[0].mxu0 %v3416
      %v3617 = vpop.f32.mrb[0].mxu0
      %v3618 = vadd.f32 %v1976, %v3617
      %v3619 = vpop.f32.mrb[0].mxu0
      %3620 = vmatprep.mubr.f32.mxu0 0.0
      %3621 = vmatmul.mubr.f32.gmra.mrb[0].mxu0 %v3419
      %v3622 = vpop.f32.mrb[0].mxu0
      %v3623 = vadd.f32 %v1981, %v3622
      %v3624 = vpop.f32.mrb[0].mxu0
      %3625 = vmatprep.mubr.f32.mxu0 0.0
      %3626 = vmatmul.mubr.f32.gmra.mrb[0].mxu0 %v3422
      %v3627 = vpop.f32.mrb[0].mxu0
      %v3628 = vadd.f32 %v1986, %v3627
      %v3629 = vpop.f32.mrb[0].mxu0
      %3630 = vmatprep.mubr.f32.mxu0 0.0
      %3631 = vmatmul.mubr.f32.gmra.mrb[0].mxu0 %v3425
      %v3632 = vpop.f32.mrb[0].mxu0
      %v3633 = vadd.f32 %v1991, %v3632
      %v3634 = vpop.f32.mrb[0].mxu0
      %3635 = vmatprep.mubr.f32.mxu0 0.0
      %3636 = vmatmul.mubr.f32.gmra.mrb[0].mxu0 %v3428
      %v3637 = vpop.f32.mrb[0].mxu0
      %v3638 = vadd.f32 %v1996, %v3637
      %v3639 = vpop.f32.mrb[0].mxu0
      %3640 = vmatprep.mubr.f32.mxu0 0.0
      %3641 = vmatmul.mubr.f32.gmra.mrb[0].mxu0 %v3431
      %v3642 = vpop.f32.mrb[0].mxu0
      %v3643 = vadd.f32 %v2001, %v3642
      %v3644 = vpop.f32.mrb[0].mxu0
      %3645 = vmatprep.mubr.f32.mxu0 0.0
      %3646 = vmatmul.mubr.f32.gmra.mrb[0].mxu0 %v3434
      %v3647 = vpop.f32.mrb[0].mxu0
      %v3648 = vadd.f32 %v2006, %v3647
      %v3649 = vpop.f32.mrb[0].mxu0
      %3650 = vmatprep.mubr.f32.mxu0 0.0
      %3651 = vmatmul.mubr.f32.gmra.mrb[0].mxu0 %v3437
      %v3652 = vpop.f32.mrb[0].mxu0
      %v3653 = vadd.f32 %v2011, %v3652
      %v3654 = vpop.f32.mrb[0].mxu0
      %3655 = vmatprep.mubr.f32.mxu0 0.0
      %3656 = vmatmul.mubr.f32.gmra.mrb[0].mxu0 %v3440
      %v3657 = vpop.f32.mrb[0].mxu0
      %v3658 = vadd.f32 %v2016, %v3657
      %v3659 = vpop.f32.mrb[0].mxu0
      %3660 = vmatprep.mubr.f32.mxu0 0.0
      %3661 = vmatmul.mubr.f32.gmra.mrb[0].mxu0 %v3443
      %v3662 = vpop.f32.mrb[0].mxu0
      %v3663 = vadd.f32 %v2021, %v3662
      %v3664 = vpop.f32.mrb[0].mxu0
      %3665 = vmatprep.mubr.f32.mxu0 0.0
      %3666 = vmatmul.mubr.f32.gmra.mrb[0].mxu0 %v3446
      %v3667 = vpop.f32.mrb[0].mxu0
      %v3668 = vadd.f32 %v2026, %v3667
      %v3669 = vpop.f32.mrb[0].mxu0
      %3670 = vmatprep.mubr.f32.mxu0 0.0
      %3671 = vmatmul.mubr.f32.gmra.mrb[0].mxu0 %v3449
      %v3672 = vpop.f32.mrb[0].mxu0
      %v3673 = vadd.f32 %v2031, %v3672
      %v3674 = vpop.f32.mrb[0].mxu0
      %3675 = vdwg.mxu0
      %v3676 = vadd.f32 %v2555, %v2876
      %v3677 = vadd.f32 %v2560, %v2881
      %v3678 = vadd.f32 %v2565, %v2886
      %v3679 = vadd.f32 %v2570, %v2891
      %v3680 = vadd.f32 %v2575, %v2896
      %v3681 = vadd.f32 %v2580, %v2901
      %v3682 = vadd.f32 %v2585, %v2906
      %v3683 = vadd.f32 %v2590, %v2911
      %v3684 = vadd.f32 %v2595, %v2916
      %v3685 = vadd.f32 %v2600, %v2921
      %v3686 = vadd.f32 %v2605, %v2926
      %v3687 = vadd.f32 %v2610, %v2931
      %v3688 = vadd.f32 %v2615, %v2936
      %v3689 = vadd.f32 %v2620, %v2941
      %v3690 = vadd.f32 %v2625, %v2946
      %v3691 = vadd.f32 %v2630, %v2951
      %v3692 = vadd.f32 %v2635, %v2956
      %v3693 = vadd.f32 %v2640, %v2961
      %v3694 = vadd.f32 %v2645, %v2966
      %v3695 = vadd.f32 %v2650, %v2971
      %v3696 = vadd.f32 %v2655, %v2976
      %v3697 = vadd.f32 %v2660, %v2981
      %v3698 = vadd.f32 %v2665, %v2986
      %v3699 = vadd.f32 %v2670, %v2991
      %v3700 = vadd.f32 %v2675, %v2996
      %v3701 = vadd.f32 %v2680, %v3001
      %v3702 = vadd.f32 %v2685, %v3006
      %v3703 = vadd.f32 %v2690, %v3011
      %v3704 = vadd.f32 %v2695, %v3016
      %v3705 = vadd.f32 %v2700, %v3021
      %v3706 = vadd.f32 %v2705, %v3026
      %v3707 = vadd.f32 %v2710, %v3031
      %v3708 = vadd.f32 %v3197, %v3518
      %v3709 = vadd.f32 %v3202, %v3523
      %v3710 = vadd.f32 %v3207, %v3528
      %v3711 = vadd.f32 %v3212, %v3533
      %v3712 = vadd.f32 %v3217, %v3538
      %v3713 = vadd.f32 %v3222, %v3543
      %v3714 = vadd.f32 %v3227, %v3548
      %v3715 = vadd.f32 %v3232, %v3553
      %v3716 = vadd.f32 %v3237, %v3558
      %v3717 = vadd.f32 %v3242, %v3563
      %v3718 = vadd.f32 %v3247, %v3568
      %v3719 = vadd.f32 %v3252, %v3573
      %v3720 = vadd.f32 %v3257, %v3578
      %v3721 = vadd.f32 %v3262, %v3583
      %v3722 = vadd.f32 %v3267, %v3588
      %v3723 = vadd.f32 %v3272, %v3593
      %v3724 = vadd.f32 %v3277, %v3598
      %v3725 = vadd.f32 %v3282, %v3603
      %v3726 = vadd.f32 %v3287, %v3608
      %v3727 = vadd.f32 %v3292, %v3613
      %v3728 = vadd.f32 %v3297, %v3618
      %v3729 = vadd.f32 %v3302, %v3623
      %v3730 = vadd.f32 %v3307, %v3628
      %v3731 = vadd.f32 %v3312, %v3633
      %v3732 = vadd.f32 %v3317, %v3638
      %v3733 = vadd.f32 %v3322, %v3643
      %v3734 = vadd.f32 %v3327, %v3648
      %v3735 = vadd.f32 %v3332, %v3653
      %v3736 = vadd.f32 %v3337, %v3658
      %v3737 = vadd.f32 %v3342, %v3663
      %v3738 = vadd.f32 %v3347, %v3668
      %v3739 = vadd.f32 %v3352, %v3673
      %v3740 = vadd.f32 %v3676, %v3708
      %v3741 = vadd.f32 %v3677, %v3709
      %v3742 = vadd.f32 %v3678, %v3710
      %v3743 = vadd.f32 %v3679, %v3711
      %v3744 = vadd.f32 %v3680, %v3712
      %v3745 = vadd.f32 %v3681, %v3713
      %v3746 = vadd.f32 %v3682, %v3714
      %v3747 = vadd.f32 %v3683, %v3715
      %v3748 = vadd.f32 %v3684, %v3716
      %v3749 = vadd.f32 %v3685, %v3717
      %v3750 = vadd.f32 %v3686, %v3718
      %v3751 = vadd.f32 %v3687, %v3719
      %v3752 = vadd.f32 %v3688, %v3720
      %v3753 = vadd.f32 %v3689, %v3721
      %v3754 = vadd.f32 %v3690, %v3722
      %v3755 = vadd.f32 %v3691, %v3723
      %v3756 = vadd.f32 %v3692, %v3724
      %v3757 = vadd.f32 %v3693, %v3725
      %v3758 = vadd.f32 %v3694, %v3726
      %v3759 = vadd.f32 %v3695, %v3727
      %v3760 = vadd.f32 %v3696, %v3728
      %v3761 = vadd.f32 %v3697, %v3729
      %v3762 = vadd.f32 %v3698, %v3730
      %v3763 = vadd.f32 %v3699, %v3731
      %v3764 = vadd.f32 %v3700, %v3732
      %v3765 = vadd.f32 %v3701, %v3733
      %v3766 = vadd.f32 %v3702, %v3734
      %v3767 = vadd.f32 %v3703, %v3735
      %v3768 = vadd.f32 %v3704, %v3736
      %v3769 = vadd.f32 %v3705, %v3737
      %v3770 = vadd.f32 %v3706, %v3738
      %v3771 = vadd.f32 %v3707, %v3739
      %v3772 = vadd.f32 %v3740, %v2234
      %v3773 = vadd.f32 %v3741, %v2239
      %v3774 = vadd.f32 %v3742, %v2244
      %v3775 = vadd.f32 %v3743, %v2249
      %v3776 = vadd.f32 %v3744, %v2254
      %v3777 = vadd.f32 %v3745, %v2259
      %v3778 = vadd.f32 %v3746, %v2264
      %v3779 = vadd.f32 %v3747, %v2269
      %v3780 = vadd.f32 %v3748, %v2274
      %v3781 = vadd.f32 %v3749, %v2279
      %v3782 = vadd.f32 %v3750, %v2284
      %v3783 = vadd.f32 %v3751, %v2289
      %v3784 = vadd.f32 %v3752, %v2294
      %v3785 = vadd.f32 %v3753, %v2299
      %v3786 = vadd.f32 %v3754, %v2304
      %v3787 = vadd.f32 %v3755, %v2309
      %v3788 = vadd.f32 %v3756, %v2314
      %v3789 = vadd.f32 %v3757, %v2319
      %v3790 = vadd.f32 %v3758, %v2324
      %v3791 = vadd.f32 %v3759, %v2329
      %v3792 = vadd.f32 %v3760, %v2334
      %v3793 = vadd.f32 %v3761, %v2339
      %v3794 = vadd.f32 %v3762, %v2344
      %v3795 = vadd.f32 %v3763, %v2349
      %v3796 = vadd.f32 %v3764, %v2354
      %v3797 = vadd.f32 %v3765, %v2359
      %v3798 = vadd.f32 %v3766, %v2364
      %v3799 = vadd.f32 %v3767, %v2369
      %v3800 = vadd.f32 %v3768, %v2374
      %v3801 = vadd.f32 %v3769, %v2379
      %v3802 = vadd.f32 %v3770, %v2384
      %v3803 = vadd.f32 %v3771, %v2389
      %v3804 = vld [vmem:[%s2] sm:$0x1]
      %v3806 = vlaneseq
      %v3807 = vshrl.u32 %v3806, 7
      %v3808 = vsub.s32 0, %v3807
      %v3809 = vrot.slane %v3804, %v3808
      %v3811 = vmul.f32 %v3772, %v3809
      %v3812 = vmul.f32 %v3773, %v3809
      %v3813 = vmul.f32 %v3774, %v3809
      %v3814 = vmul.f32 %v3775, %v3809
      %v3815 = vmul.f32 %v3776, %v3809
      %v3816 = vmul.f32 %v3777, %v3809
      %v3817 = vmul.f32 %v3778, %v3809
      %v3818 = vmul.f32 %v3779, %v3809
      %v3819 = vmul.f32 %v3780, %v3809
      %v3820 = vmul.f32 %v3781, %v3809
      %v3821 = vmul.f32 %v3782, %v3809
      %v3822 = vmul.f32 %v3783, %v3809
      %v3823 = vmul.f32 %v3784, %v3809
      %v3824 = vmul.f32 %v3785, %v3809
      %v3825 = vmul.f32 %v3786, %v3809
      %v3826 = vmul.f32 %v3787, %v3809
      %v3827 = vmul.f32 %v3788, %v3809
      %v3828 = vmul.f32 %v3789, %v3809
      %v3829 = vmul.f32 %v3790, %v3809
      %v3830 = vmul.f32 %v3791, %v3809
      %v3831 = vmul.f32 %v3792, %v3809
      %v3832 = vmul.f32 %v3793, %v3809
      %v3833 = vmul.f32 %v3794, %v3809
      %v3834 = vmul.f32 %v3795, %v3809
      %v3835 = vmul.f32 %v3796, %v3809
      %v3836 = vmul.f32 %v3797, %v3809
      %v3837 = vmul.f32 %v3798, %v3809
      %v3838 = vmul.f32 %v3799, %v3809
      %v3839 = vmul.f32 %v3800, %v3809
      %v3840 = vmul.f32 %v3801, %v3809
      %v3841 = vmul.f32 %v3802, %v3809
      %v3842 = vmul.f32 %v3803, %v3809
      %v3843 = vld [vmem:[%s3] sm:$0x1]
      %v3845 = vlaneseq
      %v3846 = vshrl.u32 %v3845, 7
      %v3847 = vsub.s32 0, %v3846
      %v3848 = vrot.slane %v3843, %v3847
      %v3850 = vadd.f32 %v3811, %v3848
      %v3851 = vadd.f32 %v3812, %v3848
      %v3852 = vadd.f32 %v3813, %v3848
      %v3853 = vadd.f32 %v3814, %v3848
      %v3854 = vadd.f32 %v3815, %v3848
      %v3855 = vadd.f32 %v3816, %v3848
      %v3856 = vadd.f32 %v3817, %v3848
      %v3857 = vadd.f32 %v3818, %v3848
      %v3858 = vadd.f32 %v3819, %v3848
      %v3859 = vadd.f32 %v3820, %v3848
      %v3860 = vadd.f32 %v3821, %v3848
      %v3861 = vadd.f32 %v3822, %v3848
      %v3862 = vadd.f32 %v3823, %v3848
      %v3863 = vadd.f32 %v3824, %v3848
      %v3864 = vadd.f32 %v3825, %v3848
      %v3865 = vadd.f32 %v3826, %v3848
      %v3866 = vadd.f32 %v3827, %v3848
      %v3867 = vadd.f32 %v3828, %v3848
      %v3868 = vadd.f32 %v3829, %v3848
      %v3869 = vadd.f32 %v3830, %v3848
      %v3870 = vadd.f32 %v3831, %v3848
      %v3871 = vadd.f32 %v3832, %v3848
      %v3872 = vadd.f32 %v3833, %v3848
      %v3873 = vadd.f32 %v3834, %v3848
      %v3874 = vadd.f32 %v3835, %v3848
      %v3875 = vadd.f32 %v3836, %v3848
      %v3876 = vadd.f32 %v3837, %v3848
      %v3877 = vadd.f32 %v3838, %v3848
      %v3878 = vadd.f32 %v3839, %v3848
      %v3879 = vadd.f32 %v3840, %v3848
      %v3880 = vadd.f32 %v3841, %v3848
      %v3881 = vadd.f32 %v3842, %v3848
      %v3882 = vmax.f32 %v3850, 0.0
      %v3883 = vmax.f32 %v3851, 0.0
      %v3884 = vmax.f32 %v3852, 0.0
      %v3885 = vmax.f32 %v3853, 0.0
      %v3886 = vmax.f32 %v3854, 0.0
      %v3887 = vmax.f32 %v3855, 0.0
      %v3888 = vmax.f32 %v3856, 0.0
      %v3889 = vmax.f32 %v3857, 0.0
      %v3890 = vmax.f32 %v3858, 0.0
      %v3891 = vmax.f32 %v3859, 0.0
      %v3892 = vmax.f32 %v3860, 0.0
      %v3893 = vmax.f32 %v3861, 0.0
      %v3894 = vmax.f32 %v3862, 0.0
      %v3895 = vmax.f32 %v3863, 0.0
      %v3896 = vmax.f32 %v3864, 0.0
      %v3897 = vmax.f32 %v3865, 0.0
      %v3898 = vmax.f32 %v3866, 0.0
      %v3899 = vmax.f32 %v3867, 0.0
      %v3900 = vmax.f32 %v3868, 0.0
      %v3901 = vmax.f32 %v3869, 0.0
      %v3902 = vmax.f32 %v3870, 0.0
      %v3903 = vmax.f32 %v3871, 0.0
      %v3904 = vmax.f32 %v3872, 0.0
      %v3905 = vmax.f32 %v3873, 0.0
      %v3906 = vmax.f32 %v3874, 0.0
      %v3907 = vmax.f32 %v3875, 0.0
      %v3908 = vmax.f32 %v3876, 0.0
      %v3909 = vmax.f32 %v3877, 0.0
      %v3910 = vmax.f32 %v3878, 0.0
      %v3911 = vmax.f32 %v3879, 0.0
      %v3912 = vmax.f32 %v3880, 0.0
      %v3913 = vmax.f32 %v3881, 0.0
      %3914 = vst [vmem:[#allocation3] sm:$0xff] 0.0
      %3915 = vst [vmem:[#allocation3 + $0x8] sm:$0xff] 0.0
      %3916 = vst [vmem:[#allocation3 + $0x10] sm:$0x3] 0.0
      %3917 = vst [vmem:[#allocation3 + $0x18] sm:$0xff] 0.0
      %3918 = vst [vmem:[#allocation3 + $0x20] sm:$0xff] 0.0
      %3919 = vst [vmem:[#allocation3 + $0x28] sm:$0x3] 0.0
      %3920 = vst [vmem:[#allocation3 + $0x30] sm:$0xff] 0.0
      %3921 = vst [vmem:[#allocation3 + $0x38] sm:$0xff] 0.0
      %3922 = vst [vmem:[#allocation3 + $0x40] sm:$0x3] 0.0
      %3923 = vst [vmem:[#allocation3 + $0x48] sm:$0xff] 0.0
      %3924 = vst [vmem:[#allocation3 + $0x50] sm:$0xff] 0.0
      %3925 = vst [vmem:[#allocation3 + $0x58] sm:$0x3] 0.0
      %3926 = vst [vmem:[#allocation3 + $0x60] sm:$0xff] 0.0
      %3927 = vst [vmem:[#allocation3 + $0x68] sm:$0xff] 0.0
      %3928 = vst [vmem:[#allocation3 + $0x70] sm:$0x3] 0.0
      %3929 = vst [vmem:[#allocation3 + $0x78] sm:$0xff] 0.0
      %3930 = vst [vmem:[#allocation3 + $0x80] sm:$0xff] 0.0
      %3931 = vst [vmem:[#allocation3 + $0x88] sm:$0x3] 0.0
      %3932 = vst [vmem:[#allocation3 + $0x90] sm:$0xff] 0.0
      %3933 = vst [vmem:[#allocation3 + $0x98] sm:$0xff] 0.0
      %3934 = vst [vmem:[#allocation3 + $0xa0] sm:$0x3] 0.0
      %3935 = vst [vmem:[#allocation3 + $0xa8] sm:$0xff] 0.0
      %3936 = vst [vmem:[#allocation3 + $0xb0] sm:$0xff] 0.0
      %3937 = vst [vmem:[#allocation3 + $0xb8] sm:$0x3] 0.0
      %3938 = vst [vmem:[#allocation3 + $0xc0] sm:$0xff] 0.0
      %3939 = vst [vmem:[#allocation3 + $0xc8] sm:$0xff] 0.0
      %3940 = vst [vmem:[#allocation3 + $0xd0] sm:$0x3] 0.0
      %3941 = vst [vmem:[#allocation3 + $0xd8] sm:$0xff] 0.0
      %3942 = vst [vmem:[#allocation3 + $0xe0] sm:$0xff] 0.0
      %3943 = vst [vmem:[#allocation3 + $0xe8] sm:$0x3] 0.0
      %3944 = vst [vmem:[#allocation3 + $0xf0] sm:$0xff] 0.0
      %3945 = vst [vmem:[#allocation3 + $0xf8] sm:$0xff] 0.0
      %3946 = vst [vmem:[#allocation3 + $0x100] sm:$0x3] 0.0
      %3947 = vst [vmem:[#allocation3 + $0x108] sm:$0xff] 0.0
      %3948 = vst [vmem:[#allocation3 + $0x110] sm:$0xff] 0.0
      %3949 = vst [vmem:[#allocation3 + $0x118] sm:$0x3] 0.0
      %3950 = vst [vmem:[#allocation3 + $0x120] sm:$0xff] 0.0
      %3951 = vst [vmem:[#allocation3 + $0x128] sm:$0xff] 0.0
      %3952 = vst [vmem:[#allocation3 + $0x130] sm:$0x3] 0.0
      %3953 = vst [vmem:[#allocation3 + $0x138] sm:$0xff] 0.0
      %3954 = vst [vmem:[#allocation3 + $0x140] sm:$0xff] 0.0
      %3955 = vst [vmem:[#allocation3 + $0x148] sm:$0x3] 0.0
      %3956 = vst [vmem:[#allocation3 + $0x150] sm:$0xff] 0.0
      %3957 = vst [vmem:[#allocation3 + $0x158] sm:$0xff] 0.0
      %3958 = vst [vmem:[#allocation3 + $0x160] sm:$0x3] 0.0
      %3959 = vst [vmem:[#allocation3 + $0x168] sm:$0xff] 0.0
      %3960 = vst [vmem:[#allocation3 + $0x170] sm:$0xff] 0.0
      %3961 = vst [vmem:[#allocation3 + $0x178] sm:$0x3] 0.0
      %3962 = vst [vmem:[#allocation3 + $0x180] sm:$0xff] 0.0
      %3963 = vst [vmem:[#allocation3 + $0x188] sm:$0xff] 0.0
      %3964 = vst [vmem:[#allocation3 + $0x190] sm:$0x3] 0.0
      %3965 = vst [vmem:[#allocation3 + $0x198] sm:$0xff] 0.0
      %3966 = vst [vmem:[#allocation3 + $0x1a0] sm:$0xff] 0.0
      %3967 = vst [vmem:[#allocation3 + $0x1a8] sm:$0x3] 0.0
      %s3968 = scalar_lea.vmem [#allocation3], 24
      %3969 = vst [vmem:[%s3968 + $0x1] sm:$0xff] %v3882
      %3970 = vst [vmem:[%s3968 + $0x9] sm:$0xff] %v3883
      %3971 = vst [vmem:[%s3968 + $0x19] sm:$0xff] %v3884
      %3972 = vst [vmem:[%s3968 + $0x21] sm:$0xff] %v3885
      %3973 = vst [vmem:[%s3968 + $0x31] sm:$0xff] %v3886
      %3974 = vst [vmem:[%s3968 + $0x39] sm:$0xff] %v3887
      %3975 = vst [vmem:[%s3968 + $0x49] sm:$0xff] %v3888
      %3976 = vst [vmem:[%s3968 + $0x51] sm:$0xff] %v3889
      %3977 = vst [vmem:[%s3968 + $0x61] sm:$0xff] %v3890
      %3978 = vst [vmem:[%s3968 + $0x69] sm:$0xff] %v3891
      %3979 = vst [vmem:[%s3968 + $0x79] sm:$0xff] %v3892
      %3980 = vst [vmem:[%s3968 + $0x81] sm:$0xff] %v3893
      %3981 = vst [vmem:[%s3968 + $0x91] sm:$0xff] %v3894
      %3982 = vst [vmem:[%s3968 + $0x99] sm:$0xff] %v3895
      %3983 = vst [vmem:[%s3968 + $0xa9] sm:$0xff] %v3896
      %3984 = vst [vmem:[%s3968 + $0xb1] sm:$0xff] %v3897
      %3985 = vst [vmem:[%s3968 + $0xc1] sm:$0xff] %v3898
      %3986 = vst [vmem:[%s3968 + $0xc9] sm:$0xff] %v3899
      %3987 = vst [vmem:[%s3968 + $0xd9] sm:$0xff] %v3900
      %3988 = vst [vmem:[%s3968 + $0xe1] sm:$0xff] %v3901
      %3989 = vst [vmem:[%s3968 + $0xf1] sm:$0xff] %v3902
      %3990 = vst [vmem:[%s3968 + $0xf9] sm:$0xff] %v3903
      %3991 = vst [vmem:[%s3968 + $0x109] sm:$0xff] %v3904
      %3992 = vst [vmem:[%s3968 + $0x111] sm:$0xff] %v3905
      %3993 = vst [vmem:[%s3968 + $0x121] sm:$0xff] %v3906
      %3994 = vst [vmem:[%s3968 + $0x129] sm:$0xff] %v3907
      %3995 = vst [vmem:[%s3968 + $0x139] sm:$0xff] %v3908
      %3996 = vst [vmem:[%s3968 + $0x141] sm:$0xff] %v3909
      %3997 = vst [vmem:[%s3968 + $0x151] sm:$0xff] %v3910
      %3998 = vst [vmem:[%s3968 + $0x159] sm:$0xff] %v3911
      %3999 = vst [vmem:[%s3968 + $0x169] sm:$0xff] %v3912
      %4000 = vst [vmem:[%s3968 + $0x171] sm:$0xff] %v3913
      %v4001 = vld [vmem:[#allocation3] sm:$0xff]
      %v4002 = vld [vmem:[#allocation3 + $0x8] sm:$0xff]
      %v4003 = vld [vmem:[#allocation3 + $0x18] sm:$0xff]
      %v4004 = vld [vmem:[#allocation3 + $0x20] sm:$0xff]
      %v4005 = vld [vmem:[#allocation3 + $0x30] sm:$0xff]
      %v4006 = vld [vmem:[#allocation3 + $0x38] sm:$0xff]
      %v4007 = vld [vmem:[#allocation3 + $0x48] sm:$0xff]
      %v4008 = vld [vmem:[#allocation3 + $0x50] sm:$0xff]
      %v4009 = vld [vmem:[#allocation3 + $0x60] sm:$0xff]
      %v4010 = vld [vmem:[#allocation3 + $0x68] sm:$0xff]
      %v4011 = vld [vmem:[#allocation3 + $0x78] sm:$0xff]
      %v4012 = vld [vmem:[#allocation3 + $0x80] sm:$0xff]
      %v4013 = vld [vmem:[#allocation3 + $0x90] sm:$0xff]
      %v4014 = vld [vmem:[#allocation3 + $0x98] sm:$0xff]
      %v4015 = vld [vmem:[#allocation3 + $0xa8] sm:$0xff]
      %v4016 = vld [vmem:[#allocation3 + $0xb0] sm:$0xff]
      %v4017 = vld [vmem:[#allocation3 + $0xc0] sm:$0xff]
      %v4018 = vld [vmem:[#allocation3 + $0xc8] sm:$0xff]
      %v4019 = vld [vmem:[#allocation3 + $0xd8] sm:$0xff]
      %v4020 = vld [vmem:[#allocation3 + $0xe0] sm:$0xff]
      %v4021 = vld [vmem:[#allocation3 + $0xf0] sm:$0xff]
      %v4022 = vld [vmem:[#allocation3 + $0xf8] sm:$0xff]
      %v4023 = vld [vmem:[#allocation3 + $0x108] sm:$0xff]
      %v4024 = vld [vmem:[#allocation3 + $0x110] sm:$0xff]
      %v4025 = vld [vmem:[#allocation3 + $0x120] sm:$0xff]
      %v4026 = vld [vmem:[#allocation3 + $0x128] sm:$0xff]
      %v4027 = vld [vmem:[#allocation3 + $0x138] sm:$0xff]
      %v4028 = vld [vmem:[#allocation3 + $0x140] sm:$0xff]
      %v4029 = vld [vmem:[#allocation3 + $0x150] sm:$0xff]
      %v4030 = vld [vmem:[#allocation3 + $0x158] sm:$0xff]
      %v4031 = vld [vmem:[#allocation3 + $0x168] sm:$0xff]
      %v4032 = vld [vmem:[#allocation3 + $0x170] sm:$0xff]
      %v4033 = vld [vmem:[%s4] sm:$0xff]
      %v4034 = vld [vmem:[%s4 + $0x8] sm:$0xff]
      %v4035 = vld [vmem:[%s4 + $0x10] sm:$0xff]
      %v4036 = vld [vmem:[%s4 + $0x18] sm:$0xff]
      %v4037 = vld [vmem:[%s4 + $0x20] sm:$0xff]
      %v4038 = vld [vmem:[%s4 + $0x28] sm:$0xff]
      %v4039 = vld [vmem:[%s4 + $0x30] sm:$0xff]
      %v4040 = vld [vmem:[%s4 + $0x38] sm:$0xff]
      %v4041 = vld [vmem:[%s4 + $0x40] sm:$0xff]
      %v4042 = vld [vmem:[%s4 + $0x48] sm:$0xff]
      %v4043 = vld [vmem:[%s4 + $0x50] sm:$0xff]
      %v4044 = vld [vmem:[%s4 + $0x58] sm:$0xff]
      %v4045 = vld [vmem:[%s4 + $0x60] sm:$0xff]
      %v4046 = vld [vmem:[%s4 + $0x68] sm:$0xff]
      %v4047 = vld [vmem:[%s4 + $0x70] sm:$0xff]
      %v4048 = vld [vmem:[%s4 + $0x78] sm:$0xff]
      %v4049 = vld [vmem:[#allocation3 + $0x1] sm:$0xff]
      %v4050 = vld [vmem:[#allocation3 + $0x9] sm:$0xff]
      %v4051 = vld [vmem:[#allocation3 + $0x19] sm:$0xff]
      %v4052 = vld [vmem:[#allocation3 + $0x21] sm:$0xff]
      %v4053 = vld [vmem:[#allocation3 + $0x31] sm:$0xff]
      %v4054 = vld [vmem:[#allocation3 + $0x39] sm:$0xff]
      %v4055 = vld [vmem:[#allocation3 + $0x49] sm:$0xff]
      %v4056 = vld [vmem:[#allocation3 + $0x51] sm:$0xff]
      %v4057 = vld [vmem:[#allocation3 + $0x61] sm:$0xff]
      %v4058 = vld [vmem:[#allocation3 + $0x69] sm:$0xff]
      %v4059 = vld [vmem:[#allocation3 + $0x79] sm:$0xff]
      %v4060 = vld [vmem:[#allocation3 + $0x81] sm:$0xff]
      %v4061 = vld [vmem:[#allocation3 + $0x91] sm:$0xff]
      %v4062 = vld [vmem:[#allocation3 + $0x99] sm:$0xff]
      %v4063 = vld [vmem:[#allocation3 + $0xa9] sm:$0xff]
      %v4064 = vld [vmem:[#allocation3 + $0xb1] sm:$0xff]
      %v4065 = vld [vmem:[#allocation3 + $0xc1] sm:$0xff]
      %v4066 = vld [vmem:[#allocation3 + $0xc9] sm:$0xff]
      %v4067 = vld [vmem:[#allocation3 + $0xd9] sm:$0xff]
      %v4068 = vld [vmem:[#allocation3 + $0xe1] sm:$0xff]
      %v4069 = vld [vmem:[#allocation3 + $0xf1] sm:$0xff]
      %v4070 = vld [vmem:[#allocation3 + $0xf9] sm:$0xff]
      %v4071 = vld [vmem:[#allocation3 + $0x109] sm:$0xff]
      %v4072 = vld [vmem:[#allocation3 + $0x111] sm:$0xff]
      %v4073 = vld [vmem:[#allocation3 + $0x121] sm:$0xff]
      %v4074 = vld [vmem:[#allocation3 + $0x129] sm:$0xff]
      %v4075 = vld [vmem:[#allocation3 + $0x139] sm:$0xff]
      %v4076 = vld [vmem:[#allocation3 + $0x141] sm:$0xff]
      %v4077 = vld [vmem:[#allocation3 + $0x151] sm:$0xff]
      %v4078 = vld [vmem:[#allocation3 + $0x159] sm:$0xff]
      %v4079 = vld [vmem:[#allocation3 + $0x169] sm:$0xff]
      %v4080 = vld [vmem:[#allocation3 + $0x171] sm:$0xff]
      %s4081 = scalar_lea.vmem %s4, 128
      %v4082 = vld [vmem:[%s4081] sm:$0xff]
      %v4083 = vld [vmem:[%s4081 + $0x8] sm:$0xff]
      %v4084 = vld [vmem:[%s4081 + $0x10] sm:$0xff]
      %v4085 = vld [vmem:[%s4081 + $0x18] sm:$0xff]
      %v4086 = vld [vmem:[%s4081 + $0x20] sm:$0xff]
      %v4087 = vld [vmem:[%s4081 + $0x28] sm:$0xff]
      %v4088 = vld [vmem:[%s4081 + $0x30] sm:$0xff]
      %v4089 = vld [vmem:[%s4081 + $0x38] sm:$0xff]
      %v4090 = vld [vmem:[%s4081 + $0x40] sm:$0xff]
      %v4091 = vld [vmem:[%s4081 + $0x48] sm:$0xff]
      %v4092 = vld [vmem:[%s4081 + $0x50] sm:$0xff]
      %v4093 = vld [vmem:[%s4081 + $0x58] sm:$0xff]
      %v4094 = vld [vmem:[%s4081 + $0x60] sm:$0xff]
      %v4095 = vld [vmem:[%s4081 + $0x68] sm:$0xff]
      %v4096 = vld [vmem:[%s4081 + $0x70] sm:$0xff]
      %v4097 = vld [vmem:[%s4081 + $0x78] sm:$0xff]
      %4098 = vmatprep.subr.mxu0 0.0
      %4099 = vmatpush1.msra.mxu0 %v4082
      %4100 = vmatprep.subr.mxu0 0.0
      %4101 = vmatpush1.msra.mxu0 %v4083
      %4102 = vmatprep.subr.mxu0 0.0
      %4103 = vmatpush1.msra.mxu0 %v4084
      %4104 = vmatprep.subr.mxu0 0.0
      %4105 = vmatpush1.msra.mxu0 %v4085
      %4106 = vmatprep.subr.mxu0 0.0
      %4107 = vmatpush1.msra.mxu0 %v4086
      %4108 = vmatprep.subr.mxu0 0.0
      %4109 = vmatpush1.msra.mxu0 %v4087
      %4110 = vmatprep.subr.mxu0 0.0
      %4111 = vmatpush1.msra.mxu0 %v4088
      %4112 = vmatprep.subr.mxu0 0.0
      %4113 = vmatpush1.msra.mxu0 %v4089
      %4114 = vmatprep.subr.mxu0 0.0
      %4115 = vmatpush1.msra.mxu0 %v4090
      %4116 = vmatprep.subr.mxu0 0.0
      %4117 = vmatpush1.msra.mxu0 %v4091
      %4118 = vmatprep.subr.mxu0 0.0
      %4119 = vmatpush1.msra.mxu0 %v4092
      %4120 = vmatprep.subr.mxu0 0.0
      %4121 = vmatpush1.msra.mxu0 %v4093
      %4122 = vmatprep.subr.mxu0 0.0
      %4123 = vmatpush1.msra.mxu0 %v4094
      %4124 = vmatprep.subr.mxu0 0.0
      %4125 = vmatpush1.msra.mxu0 %v4095
      %4126 = vmatprep.subr.mxu0 0.0
      %4127 = vmatpush1.msra.mxu0 %v4096
      %4128 = vmatprep.subr.mxu0 0.0
      %4129 = vmatpush1.msra.mxu0 %v4097
      %4130 = vmatprep.subr.mxu0 0.0
      %4131 = vmatpush1.msra.mxu0 0.0
      %4132 = vmatprep.subr.mxu0 0.0
      %4133 = vmatpush1.msra.mxu0 0.0
      %4134 = vmatprep.subr.mxu0 0.0
      %4135 = vmatpush1.msra.mxu0 0.0
      %4136 = vmatprep.subr.mxu0 0.0
      %4137 = vmatpush1.msra.mxu0 0.0
      %4138 = vmatprep.subr.mxu0 0.0
      %4139 = vmatpush1.msra.mxu0 0.0
      %4140 = vmatprep.subr.mxu0 0.0
      %4141 = vmatpush1.msra.mxu0 0.0
      %4142 = vmatprep.subr.mxu0 0.0
      %4143 = vmatpush1.msra.mxu0 0.0
      %4144 = vmatprep.subr.mxu0 0.0
      %4145 = vmatpush1.msra.mxu0 0.0
      %4146 = vmatprep.subr.mxu0 0.0
      %4147 = vmatpush1.msra.mxu0 0.0
      %4148 = vmatprep.subr.mxu0 0.0
      %4149 = vmatpush1.msra.mxu0 0.0
      %4150 = vmatprep.subr.mxu0 0.0
      %4151 = vmatpush1.msra.mxu0 0.0
      %4152 = vmatprep.subr.mxu0 0.0
      %4153 = vmatpush1.msra.mxu0 0.0
      %4154 = vmatprep.subr.mxu0 0.0
      %4155 = vmatpush1.msra.mxu0 0.0
      %4156 = vmatprep.subr.mxu0 0.0
      %4157 = vmatpush1.msra.mxu0 0.0
      %4158 = vmatprep.subr.mxu0 0.0
      %4159 = vmatpush1.msra.mxu0 0.0
      %4160 = vmatprep.subr.mxu0 0.0
      %4161 = vmatpush1.msra.mxu0 0.0
      %4162 = vmatprep.mubr.f32.mxu0 0.0
      %4163 = vmatmul.mubr.f32.gmra.mrb[0].mxu0 %v4049
      %v4164 = vpop.f32.mrb[0].mxu0
      %v4165 = vadd.f32 0.0, %v4164
      %v4166 = vpop.f32.mrb[0].mxu0
      %4167 = vmatprep.mubr.f32.mxu0 0.0
      %4168 = vmatmul.mubr.f32.gmra.mrb[0].mxu0 %v4050
      %v4169 = vpop.f32.mrb[0].mxu0
      %v4170 = vadd.f32 0.0, %v4169
      %v4171 = vpop.f32.mrb[0].mxu0
      %4172 = vmatprep.mubr.f32.mxu0 0.0
      %4173 = vmatmul.mubr.f32.gmra.mrb[0].mxu0 %v4051
      %v4174 = vpop.f32.mrb[0].mxu0
      %v4175 = vadd.f32 0.0, %v4174
      %v4176 = vpop.f32.mrb[0].mxu0
      %4177 = vmatprep.mubr.f32.mxu0 0.0
      %4178 = vmatmul.mubr.f32.gmra.mrb[0].mxu0 %v4052
      %v4179 = vpop.f32.mrb[0].mxu0
      %v4180 = vadd.f32 0.0, %v4179
      %v4181 = vpop.f32.mrb[0].mxu0
      %4182 = vmatprep.mubr.f32.mxu0 0.0
      %4183 = vmatmul.mubr.f32.gmra.mrb[0].mxu0 %v4053
      %v4184 = vpop.f32.mrb[0].mxu0
      %v4185 = vadd.f32 0.0, %v4184
      %v4186 = vpop.f32.mrb[0].mxu0
      %4187 = vmatprep.mubr.f32.mxu0 0.0
      %4188 = vmatmul.mubr.f32.gmra.mrb[0].mxu0 %v4054
      %v4189 = vpop.f32.mrb[0].mxu0
      %v4190 = vadd.f32 0.0, %v4189
      %v4191 = vpop.f32.mrb[0].mxu0
      %4192 = vmatprep.mubr.f32.mxu0 0.0
      %4193 = vmatmul.mubr.f32.gmra.mrb[0].mxu0 %v4055
      %v4194 = vpop.f32.mrb[0].mxu0
      %v4195 = vadd.f32 0.0, %v4194
      %v4196 = vpop.f32.mrb[0].mxu0
      %4197 = vmatprep.mubr.f32.mxu0 0.0
      %4198 = vmatmul.mubr.f32.gmra.mrb[0].mxu0 %v4056
      %v4199 = vpop.f32.mrb[0].mxu0
      %v4200 = vadd.f32 0.0, %v4199
      %v4201 = vpop.f32.mrb[0].mxu0
      %4202 = vmatprep.mubr.f32.mxu0 0.0
      %4203 = vmatmul.mubr.f32.gmra.mrb[0].mxu0 %v4057
      %v4204 = vpop.f32.mrb[0].mxu0
      %v4205 = vadd.f32 0.0, %v4204
      %v4206 = vpop.f32.mrb[0].mxu0
      %4207 = vmatprep.mubr.f32.mxu0 0.0
      %4208 = vmatmul.mubr.f32.gmra.mrb[0].mxu0 %v4058
      %v4209 = vpop.f32.mrb[0].mxu0
      %v4210 = vadd.f32 0.0, %v4209
      %v4211 = vpop.f32.mrb[0].mxu0
      %4212 = vmatprep.mubr.f32.mxu0 0.0
      %4213 = vmatmul.mubr.f32.gmra.mrb[0].mxu0 %v4059
      %v4214 = vpop.f32.mrb[0].mxu0
      %v4215 = vadd.f32 0.0, %v4214
      %v4216 = vpop.f32.mrb[0].mxu0
      %4217 = vmatprep.mubr.f32.mxu0 0.0
      %4218 = vmatmul.mubr.f32.gmra.mrb[0].mxu0 %v4060
      %v4219 = vpop.f32.mrb[0].mxu0
      %v4220 = vadd.f32 0.0, %v4219
      %v4221 = vpop.f32.mrb[0].mxu0
      %4222 = vmatprep.mubr.f32.mxu0 0.0
      %4223 = vmatmul.mubr.f32.gmra.mrb[0].mxu0 %v4061
      %v4224 = vpop.f32.mrb[0].mxu0
      %v4225 = vadd.f32 0.0, %v4224
      %v4226 = vpop.f32.mrb[0].mxu0
      %4227 = vmatprep.mubr.f32.mxu0 0.0
      %4228 = vmatmul.mubr.f32.gmra.mrb[0].mxu0 %v4062
      %v4229 = vpop.f32.mrb[0].mxu0
      %v4230 = vadd.f32 0.0, %v4229
      %v4231 = vpop.f32.mrb[0].mxu0
      %4232 = vmatprep.mubr.f32.mxu0 0.0
      %4233 = vmatmul.mubr.f32.gmra.mrb[0].mxu0 %v4063
      %v4234 = vpop.f32.mrb[0].mxu0
      %v4235 = vadd.f32 0.0, %v4234
      %v4236 = vpop.f32.mrb[0].mxu0
      %4237 = vmatprep.mubr.f32.mxu0 0.0
      %4238 = vmatmul.mubr.f32.gmra.mrb[0].mxu0 %v4064
      %v4239 = vpop.f32.mrb[0].mxu0
      %v4240 = vadd.f32 0.0, %v4239
      %v4241 = vpop.f32.mrb[0].mxu0
      %4242 = vmatprep.mubr.f32.mxu0 0.0
      %4243 = vmatmul.mubr.f32.gmra.mrb[0].mxu0 %v4065
      %v4244 = vpop.f32.mrb[0].mxu0
      %v4245 = vadd.f32 0.0, %v4244
      %v4246 = vpop.f32.mrb[0].mxu0
      %4247 = vmatprep.mubr.f32.mxu0 0.0
      %4248 = vmatmul.mubr.f32.gmra.mrb[0].mxu0 %v4066
      %v4249 = vpop.f32.mrb[0].mxu0
      %v4250 = vadd.f32 0.0, %v4249
      %v4251 = vpop.f32.mrb[0].mxu0
      %4252 = vmatprep.mubr.f32.mxu0 0.0
      %4253 = vmatmul.mubr.f32.gmra.mrb[0].mxu0 %v4067
      %v4254 = vpop.f32.mrb[0].mxu0
      %v4255 = vadd.f32 0.0, %v4254
      %v4256 = vpop.f32.mrb[0].mxu0
      %4257 = vmatprep.mubr.f32.mxu0 0.0
      %4258 = vmatmul.mubr.f32.gmra.mrb[0].mxu0 %v4068
      %v4259 = vpop.f32.mrb[0].mxu0
      %v4260 = vadd.f32 0.0, %v4259
      %v4261 = vpop.f32.mrb[0].mxu0
      %4262 = vmatprep.mubr.f32.mxu0 0.0
      %4263 = vmatmul.mubr.f32.gmra.mrb[0].mxu0 %v4069
      %v4264 = vpop.f32.mrb[0].mxu0
      %v4265 = vadd.f32 0.0, %v4264
      %v4266 = vpop.f32.mrb[0].mxu0
      %4267 = vmatprep.mubr.f32.mxu0 0.0
      %4268 = vmatmul.mubr.f32.gmra.mrb[0].mxu0 %v4070
      %v4269 = vpop.f32.mrb[0].mxu0
      %v4270 = vadd.f32 0.0, %v4269
      %v4271 = vpop.f32.mrb[0].mxu0
      %4272 = vmatprep.mubr.f32.mxu0 0.0
      %4273 = vmatmul.mubr.f32.gmra.mrb[0].mxu0 %v4071
      %v4274 = vpop.f32.mrb[0].mxu0
      %v4275 = vadd.f32 0.0, %v4274
      %v4276 = vpop.f32.mrb[0].mxu0
      %4277 = vmatprep.mubr.f32.mxu0 0.0
      %4278 = vmatmul.mubr.f32.gmra.mrb[0].mxu0 %v4072
      %v4279 = vpop.f32.mrb[0].mxu0
      %v4280 = vadd.f32 0.0, %v4279
      %v4281 = vpop.f32.mrb[0].mxu0
      %4282 = vmatprep.mubr.f32.mxu0 0.0
      %4283 = vmatmul.mubr.f32.gmra.mrb[0].mxu0 %v4073
      %v4284 = vpop.f32.mrb[0].mxu0
      %v4285 = vadd.f32 0.0, %v4284
      %v4286 = vpop.f32.mrb[0].mxu0
      %4287 = vmatprep.mubr.f32.mxu0 0.0
      %4288 = vmatmul.mubr.f32.gmra.mrb[0].mxu0 %v4074
      %v4289 = vpop.f32.mrb[0].mxu0
      %v4290 = vadd.f32 0.0, %v4289
      %v4291 = vpop.f32.mrb[0].mxu0
      %4292 = vmatprep.mubr.f32.mxu0 0.0
      %4293 = vmatmul.mubr.f32.gmra.mrb[0].mxu0 %v4075
      %v4294 = vpop.f32.mrb[0].mxu0
      %v4295 = vadd.f32 0.0, %v4294
      %v4296 = vpop.f32.mrb[0].mxu0
      %4297 = vmatprep.mubr.f32.mxu0 0.0
      %4298 = vmatmul.mubr.f32.gmra.mrb[0].mxu0 %v4076
      %v4299 = vpop.f32.mrb[0].mxu0
      %v4300 = vadd.f32 0.0, %v4299
      %v4301 = vpop.f32.mrb[0].mxu0
      %4302 = vmatprep.mubr.f32.mxu0 0.0
      %4303 = vmatmul.mubr.f32.gmra.mrb[0].mxu0 %v4077
      %v4304 = vpop.f32.mrb[0].mxu0
      %v4305 = vadd.f32 0.0, %v4304
      %v4306 = vpop.f32.mrb[0].mxu0
      %4307 = vmatprep.mubr.f32.mxu0 0.0
      %4308 = vmatmul.mubr.f32.gmra.mrb[0].mxu0 %v4078
      %v4309 = vpop.f32.mrb[0].mxu0
      %v4310 = vadd.f32 0.0, %v4309
      %v4311 = vpop.f32.mrb[0].mxu0
      %4312 = vmatprep.mubr.f32.mxu0 0.0
      %4313 = vmatmul.mubr.f32.gmra.mrb[0].mxu0 %v4079
      %v4314 = vpop.f32.mrb[0].mxu0
      %v4315 = vadd.f32 0.0, %v4314
      %v4316 = vpop.f32.mrb[0].mxu0
      %4317 = vmatprep.mubr.f32.mxu0 0.0
      %4318 = vmatmul.mubr.f32.gmra.mrb[0].mxu0 %v4080
      %v4319 = vpop.f32.mrb[0].mxu0
      %v4320 = vadd.f32 0.0, %v4319
      %v4321 = vpop.f32.mrb[0].mxu0
      %4322 = vdwg.mxu0
      %v4323 = vld [vmem:[#allocation3 + $0x2] sm:$0xff]
      %v4324 = vld [vmem:[#allocation3 + $0xa] sm:$0xff]
      %v4325 = vld [vmem:[#allocation3 + $0x1a] sm:$0xff]
      %v4326 = vld [vmem:[#allocation3 + $0x22] sm:$0xff]
      %v4327 = vld [vmem:[#allocation3 + $0x32] sm:$0xff]
      %v4328 = vld [vmem:[#allocation3 + $0x3a] sm:$0xff]
      %v4329 = vld [vmem:[#allocation3 + $0x4a] sm:$0xff]
      %v4330 = vld [vmem:[#allocation3 + $0x52] sm:$0xff]
      %v4331 = vld [vmem:[#allocation3 + $0x62] sm:$0xff]
      %v4332 = vld [vmem:[#allocation3 + $0x6a] sm:$0xff]
      %v4333 = vld [vmem:[#allocation3 + $0x7a] sm:$0xff]
      %v4334 = vld [vmem:[#allocation3 + $0x82] sm:$0xff]
      %v4335 = vld [vmem:[#allocation3 + $0x92] sm:$0xff]
      %v4336 = vld [vmem:[#allocation3 + $0x9a] sm:$0xff]
      %v4337 = vld [vmem:[#allocation3 + $0xaa] sm:$0xff]
      %v4338 = vld [vmem:[#allocation3 + $0xb2] sm:$0xff]
      %v4339 = vld [vmem:[#allocation3 + $0xc2] sm:$0xff]
      %v4340 = vld [vmem:[#allocation3 + $0xca] sm:$0xff]
      %v4341 = vld [vmem:[#allocation3 + $0xda] sm:$0xff]
      %v4342 = vld [vmem:[#allocation3 + $0xe2] sm:$0xff]
      %v4343 = vld [vmem:[#allocation3 + $0xf2] sm:$0xff]
      %v4344 = vld [vmem:[#allocation3 + $0xfa] sm:$0xff]
      %v4345 = vld [vmem:[#allocation3 + $0x10a] sm:$0xff]
      %v4346 = vld [vmem:[#allocation3 + $0x112] sm:$0xff]
      %v4347 = vld [vmem:[#allocation3 + $0x122] sm:$0xff]
      %v4348 = vld [vmem:[#allocation3 + $0x12a] sm:$0xff]
      %v4349 = vld [vmem:[#allocation3 + $0x13a] sm:$0xff]
      %v4350 = vld [vmem:[#allocation3 + $0x142] sm:$0xff]
      %v4351 = vld [vmem:[#allocation3 + $0x152] sm:$0xff]
      %v4352 = vld [vmem:[#allocation3 + $0x15a] sm:$0xff]
      %v4353 = vld [vmem:[#allocation3 + $0x16a] sm:$0xff]
      %v4354 = vld [vmem:[#allocation3 + $0x172] sm:$0xff]
      %s4355 = scalar_lea.vmem %s4, 256
      %v4356 = vld [vmem:[%s4355] sm:$0xff]
      %v4357 = vld [vmem:[%s4355 + $0x8] sm:$0xff]
      %v4358 = vld [vmem:[%s4355 + $0x10] sm:$0xff]
      %v4359 = vld [vmem:[%s4355 + $0x18] sm:$0xff]
      %v4360 = vld [vmem:[%s4355 + $0x20] sm:$0xff]
      %v4361 = vld [vmem:[%s4355 + $0x28] sm:$0xff]
      %v4362 = vld [vmem:[%s4355 + $0x30] sm:$0xff]
      %v4363 = vld [vmem:[%s4355 + $0x38] sm:$0xff]
      %v4364 = vld [vmem:[%s4355 + $0x40] sm:$0xff]
      %v4365 = vld [vmem:[%s4355 + $0x48] sm:$0xff]
      %v4366 = vld [vmem:[%s4355 + $0x50] sm:$0xff]
      %v4367 = vld [vmem:[%s4355 + $0x58] sm:$0xff]
      %v4368 = vld [vmem:[%s4355 + $0x60] sm:$0xff]
      %v4369 = vld [vmem:[%s4355 + $0x68] sm:$0xff]
      %v4370 = vld [vmem:[%s4355 + $0x70] sm:$0xff]
      %v4371 = vld [vmem:[%s4355 + $0x78] sm:$0xff]
      %v4372 = vld [vmem:[%s3968] sm:$0xff]
      %v4373 = vld [vmem:[%s3968 + $0x8] sm:$0xff]
      %v4374 = vld [vmem:[%s3968 + $0x18] sm:$0xff]
      %v4375 = vld [vmem:[%s3968 + $0x20] sm:$0xff]
      %v4376 = vld [vmem:[%s3968 + $0x30] sm:$0xff]
      %v4377 = vld [vmem:[%s3968 + $0x38] sm:$0xff]
      %v4378 = vld [vmem:[%s3968 + $0x48] sm:$0xff]
      %v4379 = vld [vmem:[%s3968 + $0x50] sm:$0xff]
      %v4380 = vld [vmem:[%s3968 + $0x60] sm:$0xff]
      %v4381 = vld [vmem:[%s3968 + $0x68] sm:$0xff]
      %v4382 = vld [vmem:[%s3968 + $0x78] sm:$0xff]
      %v4383 = vld [vmem:[%s3968 + $0x80] sm:$0xff]
      %v4384 = vld [vmem:[%s3968 + $0x90] sm:$0xff]
      %v4385 = vld [vmem:[%s3968 + $0x98] sm:$0xff]
      %v4386 = vld [vmem:[%s3968 + $0xa8] sm:$0xff]
      %v4387 = vld [vmem:[%s3968 + $0xb0] sm:$0xff]
      %v4388 = vld [vmem:[%s3968 + $0xc0] sm:$0xff]
      %v4389 = vld [vmem:[%s3968 + $0xc8] sm:$0xff]
      %v4390 = vld [vmem:[%s3968 + $0xd8] sm:$0xff]
      %v4391 = vld [vmem:[%s3968 + $0xe0] sm:$0xff]
      %v4392 = vld [vmem:[%s3968 + $0xf0] sm:$0xff]
      %v4393 = vld [vmem:[%s3968 + $0xf8] sm:$0xff]
      %v4394 = vld [vmem:[%s3968 + $0x108] sm:$0xff]
      %v4395 = vld [vmem:[%s3968 + $0x110] sm:$0xff]
      %v4396 = vld [vmem:[%s3968 + $0x120] sm:$0xff]
      %v4397 = vld [vmem:[%s3968 + $0x128] sm:$0xff]
      %v4398 = vld [vmem:[%s3968 + $0x138] sm:$0xff]
      %v4399 = vld [vmem:[%s3968 + $0x140] sm:$0xff]
      %v4400 = vld [vmem:[%s3968 + $0x150] sm:$0xff]
      %v4401 = vld [vmem:[%s3968 + $0x158] sm:$0xff]
      %v4402 = vld [vmem:[%s3968 + $0x168] sm:$0xff]
      %v4403 = vld [vmem:[%s3968 + $0x170] sm:$0xff]
      %s4404 = scalar_lea.vmem %s4, 384
      %v4405 = vld [vmem:[%s4404] sm:$0xff]
      %v4406 = vld [vmem:[%s4404 + $0x8] sm:$0xff]
      %v4407 = vld [vmem:[%s4404 + $0x10] sm:$0xff]
      %v4408 = vld [vmem:[%s4404 + $0x18] sm:$0xff]
      %v4409 = vld [vmem:[%s4404 + $0x20] sm:$0xff]
      %v4410 = vld [vmem:[%s4404 + $0x28] sm:$0xff]
      %v4411 = vld [vmem:[%s4404 + $0x30] sm:$0xff]
      %v4412 = vld [vmem:[%s4404 + $0x38] sm:$0xff]
      %v4413 = vld [vmem:[%s4404 + $0x40] sm:$0xff]
      %v4414 = vld [vmem:[%s4404 + $0x48] sm:$0xff]
      %v4415 = vld [vmem:[%s4404 + $0x50] sm:$0xff]
      %v4416 = vld [vmem:[%s4404 + $0x58] sm:$0xff]
      %v4417 = vld [vmem:[%s4404 + $0x60] sm:$0xff]
      %v4418 = vld [vmem:[%s4404 + $0x68] sm:$0xff]
      %v4419 = vld [vmem:[%s4404 + $0x70] sm:$0xff]
      %v4420 = vld [vmem:[%s4404 + $0x78] sm:$0xff]
      %4421 = vmatprep.subr.mxu0 0.0
      %4422 = vmatpush1.msra.mxu0 %v4405
      %4423 = vmatprep.subr.mxu0 0.0
      %4424 = vmatpush1.msra.mxu0 %v4406
      %4425 = vmatprep.subr.mxu0 0.0
      %4426 = vmatpush1.msra.mxu0 %v4407
      %4427 = vmatprep.subr.mxu0 0.0
      %4428 = vmatpush1.msra.mxu0 %v4408
      %4429 = vmatprep.subr.mxu0 0.0
      %4430 = vmatpush1.msra.mxu0 %v4409
      %4431 = vmatprep.subr.mxu0 0.0
      %4432 = vmatpush1.msra.mxu0 %v4410
      %4433 = vmatprep.subr.mxu0 0.0
      %4434 = vmatpush1.msra.mxu0 %v4411
      %4435 = vmatprep.subr.mxu0 0.0
      %4436 = vmatpush1.msra.mxu0 %v4412
      %4437 = vmatprep.subr.mxu0 0.0
      %4438 = vmatpush1.msra.mxu0 %v4413
      %4439 = vmatprep.subr.mxu0 0.0
      %4440 = vmatpush1.msra.mxu0 %v4414
      %4441 = vmatprep.subr.mxu0 0.0
      %4442 = vmatpush1.msra.mxu0 %v4415
      %4443 = vmatprep.subr.mxu0 0.0
      %4444 = vmatpush1.msra.mxu0 %v4416
      %4445 = vmatprep.subr.mxu0 0.0
      %4446 = vmatpush1.msra.mxu0 %v4417
      %4447 = vmatprep.subr.mxu0 0.0
      %4448 = vmatpush1.msra.mxu0 %v4418
      %4449 = vmatprep.subr.mxu0 0.0
      %4450 = vmatpush1.msra.mxu0 %v4419
      %4451 = vmatprep.subr.mxu0 0.0
      %4452 = vmatpush1.msra.mxu0 %v4420
      %4453 = vmatprep.subr.mxu0 0.0
      %4454 = vmatpush1.msra.mxu0 0.0
      %4455 = vmatprep.subr.mxu0 0.0
      %4456 = vmatpush1.msra.mxu0 0.0
      %4457 = vmatprep.subr.mxu0 0.0
      %4458 = vmatpush1.msra.mxu0 0.0
      %4459 = vmatprep.subr.mxu0 0.0
      %4460 = vmatpush1.msra.mxu0 0.0
      %4461 = vmatprep.subr.mxu0 0.0
      %4462 = vmatpush1.msra.mxu0 0.0
      %4463 = vmatprep.subr.mxu0 0.0
      %4464 = vmatpush1.msra.mxu0 0.0
      %4465 = vmatprep.subr.mxu0 0.0
      %4466 = vmatpush1.msra.mxu0 0.0
      %4467 = vmatprep.subr.mxu0 0.0
      %4468 = vmatpush1.msra.mxu0 0.0
      %4469 = vmatprep.subr.mxu0 0.0
      %4470 = vmatpush1.msra.mxu0 0.0
      %4471 = vmatprep.subr.mxu0 0.0
      %4472 = vmatpush1.msra.mxu0 0.0
      %4473 = vmatprep.subr.mxu0 0.0
      %4474 = vmatpush1.msra.mxu0 0.0
      %4475 = vmatprep.subr.mxu0 0.0
      %4476 = vmatpush1.msra.mxu0 0.0
      %4477 = vmatprep.subr.mxu0 0.0
      %4478 = vmatpush1.msra.mxu0 0.0
      %4479 = vmatprep.subr.mxu0 0.0
      %4480 = vmatpush1.msra.mxu0 0.0
      %4481 = vmatprep.subr.mxu0 0.0
      %4482 = vmatpush1.msra.mxu0 0.0
      %4483 = vmatprep.subr.mxu0 0.0
      %4484 = vmatpush1.msra.mxu0 0.0
      %4485 = vmatprep.mubr.f32.mxu0 0.0
      %4486 = vmatmul.mubr.f32.gmra.mrb[0].mxu0 %v4372
      %v4487 = vpop.f32.mrb[0].mxu0
      %v4488 = vadd.f32 0.0, %v4487
      %v4489 = vpop.f32.mrb[0].mxu0
      %4490 = vmatprep.mubr.f32.mxu0 0.0
      %4491 = vmatmul.mubr.f32.gmra.mrb[0].mxu0 %v4373
      %v4492 = vpop.f32.mrb[0].mxu0
      %v4493 = vadd.f32 0.0, %v4492
      %v4494 = vpop.f32.mrb[0].mxu0
      %4495 = vmatprep.mubr.f32.mxu0 0.0
      %4496 = vmatmul.mubr.f32.gmra.mrb[0].mxu0 %v4374
      %v4497 = vpop.f32.mrb[0].mxu0
      %v4498 = vadd.f32 0.0, %v4497
      %v4499 = vpop.f32.mrb[0].mxu0
      %4500 = vmatprep.mubr.f32.mxu0 0.0
      %4501 = vmatmul.mubr.f32.gmra.mrb[0].mxu0 %v4375
      %v4502 = vpop.f32.mrb[0].mxu0
      %v4503 = vadd.f32 0.0, %v4502
      %v4504 = vpop.f32.mrb[0].mxu0
      %4505 = vmatprep.mubr.f32.mxu0 0.0
      %4506 = vmatmul.mubr.f32.gmra.mrb[0].mxu0 %v4376
      %v4507 = vpop.f32.mrb[0].mxu0
      %v4508 = vadd.f32 0.0, %v4507
      %v4509 = vpop.f32.mrb[0].mxu0
      %4510 = vmatprep.mubr.f32.mxu0 0.0
      %4511 = vmatmul.mubr.f32.gmra.mrb[0].mxu0 %v4377
      %v4512 = vpop.f32.mrb[0].mxu0
      %v4513 = vadd.f32 0.0, %v4512
      %v4514 = vpop.f32.mrb[0].mxu0
      %4515 = vmatprep.mubr.f32.mxu0 0.0
      %4516 = vmatmul.mubr.f32.gmra.mrb[0].mxu0 %v4378
      %v4517 = vpop.f32.mrb[0].mxu0
      %v4518 = vadd.f32 0.0, %v4517
      %v4519 = vpop.f32.mrb[0].mxu0
      %4520 = vmatprep.mubr.f32.mxu0 0.0
      %4521 = vmatmul.mubr.f32.gmra.mrb[0].mxu0 %v4379
      %v4522 = vpop.f32.mrb[0].mxu0
      %v4523 = vadd.f32 0.0, %v4522
      %v4524 = vpop.f32.mrb[0].mxu0
      %4525 = vmatprep.mubr.f32.mxu0 0.0
      %4526 = vmatmul.mubr.f32.gmra.mrb[0].mxu0 %v4380
      %v4527 = vpop.f32.mrb[0].mxu0
      %v4528 = vadd.f32 0.0, %v4527
      %v4529 = vpop.f32.mrb[0].mxu0
      %4530 = vmatprep.mubr.f32.mxu0 0.0
      %4531 = vmatmul.mubr.f32.gmra.mrb[0].mxu0 %v4381
      %v4532 = vpop.f32.mrb[0].mxu0
      %v4533 = vadd.f32 0.0, %v4532
      %v4534 = vpop.f32.mrb[0].mxu0
      %4535 = vmatprep.mubr.f32.mxu0 0.0
      %4536 = vmatmul.mubr.f32.gmra.mrb[0].mxu0 %v4382
      %v4537 = vpop.f32.mrb[0].mxu0
      %v4538 = vadd.f32 0.0, %v4537
      %v4539 = vpop.f32.mrb[0].mxu0
      %4540 = vmatprep.mubr.f32.mxu0 0.0
      %4541 = vmatmul.mubr.f32.gmra.mrb[0].mxu0 %v4383
      %v4542 = vpop.f32.mrb[0].mxu0
      %v4543 = vadd.f32 0.0, %v4542
      %v4544 = vpop.f32.mrb[0].mxu0
      %4545 = vmatprep.mubr.f32.mxu0 0.0
      %4546 = vmatmul.mubr.f32.gmra.mrb[0].mxu0 %v4384
      %v4547 = vpop.f32.mrb[0].mxu0
      %v4548 = vadd.f32 0.0, %v4547
      %v4549 = vpop.f32.mrb[0].mxu0
      %4550 = vmatprep.mubr.f32.mxu0 0.0
      %4551 = vmatmul.mubr.f32.gmra.mrb[0].mxu0 %v4385
      %v4552 = vpop.f32.mrb[0].mxu0
      %v4553 = vadd.f32 0.0, %v4552
      %v4554 = vpop.f32.mrb[0].mxu0
      %4555 = vmatprep.mubr.f32.mxu0 0.0
      %4556 = vmatmul.mubr.f32.gmra.mrb[0].mxu0 %v4386
      %v4557 = vpop.f32.mrb[0].mxu0
      %v4558 = vadd.f32 0.0, %v4557
      %v4559 = vpop.f32.mrb[0].mxu0
      %4560 = vmatprep.mubr.f32.mxu0 0.0
      %4561 = vmatmul.mubr.f32.gmra.mrb[0].mxu0 %v4387
      %v4562 = vpop.f32.mrb[0].mxu0
      %v4563 = vadd.f32 0.0, %v4562
      %v4564 = vpop.f32.mrb[0].mxu0
      %4565 = vmatprep.mubr.f32.mxu0 0.0
      %4566 = vmatmul.mubr.f32.gmra.mrb[0].mxu0 %v4388
      %v4567 = vpop.f32.mrb[0].mxu0
      %v4568 = vadd.f32 0.0, %v4567
      %v4569 = vpop.f32.mrb[0].mxu0
      %4570 = vmatprep.mubr.f32.mxu0 0.0
      %4571 = vmatmul.mubr.f32.gmra.mrb[0].mxu0 %v4389
      %v4572 = vpop.f32.mrb[0].mxu0
      %v4573 = vadd.f32 0.0, %v4572
      %v4574 = vpop.f32.mrb[0].mxu0
      %4575 = vmatprep.mubr.f32.mxu0 0.0
      %4576 = vmatmul.mubr.f32.gmra.mrb[0].mxu0 %v4390
      %v4577 = vpop.f32.mrb[0].mxu0
      %v4578 = vadd.f32 0.0, %v4577
      %v4579 = vpop.f32.mrb[0].mxu0
      %4580 = vmatprep.mubr.f32.mxu0 0.0
      %4581 = vmatmul.mubr.f32.gmra.mrb[0].mxu0 %v4391
      %v4582 = vpop.f32.mrb[0].mxu0
      %v4583 = vadd.f32 0.0, %v4582
      %v4584 = vpop.f32.mrb[0].mxu0
      %4585 = vmatprep.mubr.f32.mxu0 0.0
      %4586 = vmatmul.mubr.f32.gmra.mrb[0].mxu0 %v4392
      %v4587 = vpop.f32.mrb[0].mxu0
      %v4588 = vadd.f32 0.0, %v4587
      %v4589 = vpop.f32.mrb[0].mxu0
      %4590 = vmatprep.mubr.f32.mxu0 0.0
      %4591 = vmatmul.mubr.f32.gmra.mrb[0].mxu0 %v4393
      %v4592 = vpop.f32.mrb[0].mxu0
      %v4593 = vadd.f32 0.0, %v4592
      %v4594 = vpop.f32.mrb[0].mxu0
      %4595 = vmatprep.mubr.f32.mxu0 0.0
      %4596 = vmatmul.mubr.f32.gmra.mrb[0].mxu0 %v4394
      %v4597 = vpop.f32.mrb[0].mxu0
      %v4598 = vadd.f32 0.0, %v4597
      %v4599 = vpop.f32.mrb[0].mxu0
      %4600 = vmatprep.mubr.f32.mxu0 0.0
      %4601 = vmatmul.mubr.f32.gmra.mrb[0].mxu0 %v4395
      %v4602 = vpop.f32.mrb[0].mxu0
      %v4603 = vadd.f32 0.0, %v4602
      %v4604 = vpop.f32.mrb[0].mxu0
      %4605 = vmatprep.mubr.f32.mxu0 0.0
      %4606 = vmatmul.mubr.f32.gmra.mrb[0].mxu0 %v4396
      %v4607 = vpop.f32.mrb[0].mxu0
      %v4608 = vadd.f32 0.0, %v4607
      %v4609 = vpop.f32.mrb[0].mxu0
      %4610 = vmatprep.mubr.f32.mxu0 0.0
      %4611 = vmatmul.mubr.f32.gmra.mrb[0].mxu0 %v4397
      %v4612 = vpop.f32.mrb[0].mxu0
      %v4613 = vadd.f32 0.0, %v4612
      %v4614 = vpop.f32.mrb[0].mxu0
      %4615 = vmatprep.mubr.f32.mxu0 0.0
      %4616 = vmatmul.mubr.f32.gmra.mrb[0].mxu0 %v4398
      %v4617 = vpop.f32.mrb[0].mxu0
      %v4618 = vadd.f32 0.0, %v4617
      %v4619 = vpop.f32.mrb[0].mxu0
      %4620 = vmatprep.mubr.f32.mxu0 0.0
      %4621 = vmatmul.mubr.f32.gmra.mrb[0].mxu0 %v4399
      %v4622 = vpop.f32.mrb[0].mxu0
      %v4623 = vadd.f32 0.0, %v4622
      %v4624 = vpop.f32.mrb[0].mxu0
      %4625 = vmatprep.mubr.f32.mxu0 0.0
      %4626 = vmatmul.mubr.f32.gmra.mrb[0].mxu0 %v4400
      %v4627 = vpop.f32.mrb[0].mxu0
      %v4628 = vadd.f32 0.0, %v4627
      %v4629 = vpop.f32.mrb[0].mxu0
      %4630 = vmatprep.mubr.f32.mxu0 0.0
      %4631 = vmatmul.mubr.f32.gmra.mrb[0].mxu0 %v4401
      %v4632 = vpop.f32.mrb[0].mxu0
      %v4633 = vadd.f32 0.0, %v4632
      %v4634 = vpop.f32.mrb[0].mxu0
      %4635 = vmatprep.mubr.f32.mxu0 0.0
      %4636 = vmatmul.mubr.f32.gmra.mrb[0].mxu0 %v4402
      %v4637 = vpop.f32.mrb[0].mxu0
      %v4638 = vadd.f32 0.0, %v4637
      %v4639 = vpop.f32.mrb[0].mxu0
      %4640 = vmatprep.mubr.f32.mxu0 0.0
      %4641 = vmatmul.mubr.f32.gmra.mrb[0].mxu0 %v4403
      %v4642 = vpop.f32.mrb[0].mxu0
      %v4643 = vadd.f32 0.0, %v4642
      %v4644 = vpop.f32.mrb[0].mxu0
      %4645 = vdwg.mxu0
      %v4646 = vld [vmem:[%s3968 + $0x1] sm:$0xff]
      %v4647 = vld [vmem:[%s3968 + $0x9] sm:$0xff]
      %v4648 = vld [vmem:[%s3968 + $0x19] sm:$0xff]
      %v4649 = vld [vmem:[%s3968 + $0x21] sm:$0xff]
      %v4650 = vld [vmem:[%s3968 + $0x31] sm:$0xff]
      %v4651 = vld [vmem:[%s3968 + $0x39] sm:$0xff]
      %v4652 = vld [vmem:[%s3968 + $0x49] sm:$0xff]
      %v4653 = vld [vmem:[%s3968 + $0x51] sm:$0xff]
      %v4654 = vld [vmem:[%s3968 + $0x61] sm:$0xff]
      %v4655 = vld [vmem:[%s3968 + $0x69] sm:$0xff]
      %v4656 = vld [vmem:[%s3968 + $0x79] sm:$0xff]
      %v4657 = vld [vmem:[%s3968 + $0x81] sm:$0xff]
      %v4658 = vld [vmem:[%s3968 + $0x91] sm:$0xff]
      %v4659 = vld [vmem:[%s3968 + $0x99] sm:$0xff]
      %v4660 = vld [vmem:[%s3968 + $0xa9] sm:$0xff]
      %v4661 = vld [vmem:[%s3968 + $0xb1] sm:$0xff]
      %v4662 = vld [vmem:[%s3968 + $0xc1] sm:$0xff]
      %v4663 = vld [vmem:[%s3968 + $0xc9] sm:$0xff]
      %v4664 = vld [vmem:[%s3968 + $0xd9] sm:$0xff]
      %v4665 = vld [vmem:[%s3968 + $0xe1] sm:$0xff]
      %v4666 = vld [vmem:[%s3968 + $0xf1] sm:$0xff]
      %v4667 = vld [vmem:[%s3968 + $0xf9] sm:$0xff]
      %v4668 = vld [vmem:[%s3968 + $0x109] sm:$0xff]
      %v4669 = vld [vmem:[%s3968 + $0x111] sm:$0xff]
      %v4670 = vld [vmem:[%s3968 + $0x121] sm:$0xff]
      %v4671 = vld [vmem:[%s3968 + $0x129] sm:$0xff]
      %v4672 = vld [vmem:[%s3968 + $0x139] sm:$0xff]
      %v4673 = vld [vmem:[%s3968 + $0x141] sm:$0xff]
      %v4674 = vld [vmem:[%s3968 + $0x151] sm:$0xff]
      %v4675 = vld [vmem:[%s3968 + $0x159] sm:$0xff]
      %v4676 = vld [vmem:[%s3968 + $0x169] sm:$0xff]
      %v4677 = vld [vmem:[%s3968 + $0x171] sm:$0xff]
      %s4678 = scalar_lea.vmem %s4, 512
      %v4679 = vld [vmem:[%s4678] sm:$0xff]
      %v4680 = vld [vmem:[%s4678 + $0x8] sm:$0xff]
      %v4681 = vld [vmem:[%s4678 + $0x10] sm:$0xff]
      %v4682 = vld [vmem:[%s4678 + $0x18] sm:$0xff]
      %v4683 = vld [vmem:[%s4678 + $0x20] sm:$0xff]
      %v4684 = vld [vmem:[%s4678 + $0x28] sm:$0xff]
      %v4685 = vld [vmem:[%s4678 + $0x30] sm:$0xff]
      %v4686 = vld [vmem:[%s4678 + $0x38] sm:$0xff]
      %v4687 = vld [vmem:[%s4678 + $0x40] sm:$0xff]
      %v4688 = vld [vmem:[%s4678 + $0x48] sm:$0xff]
      %v4689 = vld [vmem:[%s4678 + $0x50] sm:$0xff]
      %v4690 = vld [vmem:[%s4678 + $0x58] sm:$0xff]
      %v4691 = vld [vmem:[%s4678 + $0x60] sm:$0xff]
      %v4692 = vld [vmem:[%s4678 + $0x68] sm:$0xff]
      %v4693 = vld [vmem:[%s4678 + $0x70] sm:$0xff]
      %v4694 = vld [vmem:[%s4678 + $0x78] sm:$0xff]
      %v4695 = vld [vmem:[%s3968 + $0x2] sm:$0xff]
      %v4696 = vld [vmem:[%s3968 + $0xa] sm:$0xff]
      %v4697 = vld [vmem:[%s3968 + $0x1a] sm:$0xff]
      %v4698 = vld [vmem:[%s3968 + $0x22] sm:$0xff]
      %v4699 = vld [vmem:[%s3968 + $0x32] sm:$0xff]
      %v4700 = vld [vmem:[%s3968 + $0x3a] sm:$0xff]
      %v4701 = vld [vmem:[%s3968 + $0x4a] sm:$0xff]
      %v4702 = vld [vmem:[%s3968 + $0x52] sm:$0xff]
      %v4703 = vld [vmem:[%s3968 + $0x62] sm:$0xff]
      %v4704 = vld [vmem:[%s3968 + $0x6a] sm:$0xff]
      %v4705 = vld [vmem:[%s3968 + $0x7a] sm:$0xff]
      %v4706 = vld [vmem:[%s3968 + $0x82] sm:$0xff]
      %v4707 = vld [vmem:[%s3968 + $0x92] sm:$0xff]
      %v4708 = vld [vmem:[%s3968 + $0x9a] sm:$0xff]
      %v4709 = vld [vmem:[%s3968 + $0xaa] sm:$0xff]
      %v4710 = vld [vmem:[%s3968 + $0xb2] sm:$0xff]
      %v4711 = vld [vmem:[%s3968 + $0xc2] sm:$0xff]
      %v4712 = vld [vmem:[%s3968 + $0xca] sm:$0xff]
      %v4713 = vld [vmem:[%s3968 + $0xda] sm:$0xff]
      %v4714 = vld [vmem:[%s3968 + $0xe2] sm:$0xff]
      %v4715 = vld [vmem:[%s3968 + $0xf2] sm:$0xff]
      %v4716 = vld [vmem:[%s3968 + $0xfa] sm:$0xff]
      %v4717 = vld [vmem:[%s3968 + $0x10a] sm:$0xff]
      %v4718 = vld [vmem:[%s3968 + $0x112] sm:$0xff]
      %v4719 = vld [vmem:[%s3968 + $0x122] sm:$0xff]
      %v4720 = vld [vmem:[%s3968 + $0x12a] sm:$0xff]
      %v4721 = vld [vmem:[%s3968 + $0x13a] sm:$0xff]
      %v4722 = vld [vmem:[%s3968 + $0x142] sm:$0xff]
      %v4723 = vld [vmem:[%s3968 + $0x152] sm:$0xff]
      %v4724 = vld [vmem:[%s3968 + $0x15a] sm:$0xff]
      %v4725 = vld [vmem:[%s3968 + $0x16a] sm:$0xff]
      %v4726 = vld [vmem:[%s3968 + $0x172] sm:$0xff]
      %s4727 = scalar_lea.vmem %s4, 640
      %v4728 = vld [vmem:[%s4727] sm:$0xff]
      %v4729 = vld [vmem:[%s4727 + $0x8] sm:$0xff]
      %v4730 = vld [vmem:[%s4727 + $0x10] sm:$0xff]
      %v4731 = vld [vmem:[%s4727 + $0x18] sm:$0xff]
      %v4732 = vld [vmem:[%s4727 + $0x20] sm:$0xff]
      %v4733 = vld [vmem:[%s4727 + $0x28] sm:$0xff]
      %v4734 = vld [vmem:[%s4727 + $0x30] sm:$0xff]
      %v4735 = vld [vmem:[%s4727 + $0x38] sm:$0xff]
      %v4736 = vld [vmem:[%s4727 + $0x40] sm:$0xff]
      %v4737 = vld [vmem:[%s4727 + $0x48] sm:$0xff]
      %v4738 = vld [vmem:[%s4727 + $0x50] sm:$0xff]
      %v4739 = vld [vmem:[%s4727 + $0x58] sm:$0xff]
      %v4740 = vld [vmem:[%s4727 + $0x60] sm:$0xff]
      %v4741 = vld [vmem:[%s4727 + $0x68] sm:$0xff]
      %v4742 = vld [vmem:[%s4727 + $0x70] sm:$0xff]
      %v4743 = vld [vmem:[%s4727 + $0x78] sm:$0xff]
      %4744 = vmatprep.subr.mxu0 0.0
      %4745 = vmatpush1.msra.mxu0 %v4728
      %4746 = vmatprep.subr.mxu0 0.0
      %4747 = vmatpush1.msra.mxu0 %v4729
      %4748 = vmatprep.subr.mxu0 0.0
      %4749 = vmatpush1.msra.mxu0 %v4730
      %4750 = vmatprep.subr.mxu0 0.0
      %4751 = vmatpush1.msra.mxu0 %v4731
      %4752 = vmatprep.subr.mxu0 0.0
      %4753 = vmatpush1.msra.mxu0 %v4732
      %4754 = vmatprep.subr.mxu0 0.0
      %4755 = vmatpush1.msra.mxu0 %v4733
      %4756 = vmatprep.subr.mxu0 0.0
      %4757 = vmatpush1.msra.mxu0 %v4734
      %4758 = vmatprep.subr.mxu0 0.0
      %4759 = vmatpush1.msra.mxu0 %v4735
      %4760 = vmatprep.subr.mxu0 0.0
      %4761 = vmatpush1.msra.mxu0 %v4736
      %4762 = vmatprep.subr.mxu0 0.0
      %4763 = vmatpush1.msra.mxu0 %v4737
      %4764 = vmatprep.subr.mxu0 0.0
      %4765 = vmatpush1.msra.mxu0 %v4738
      %4766 = vmatprep.subr.mxu0 0.0
      %4767 = vmatpush1.msra.mxu0 %v4739
      %4768 = vmatprep.subr.mxu0 0.0
      %4769 = vmatpush1.msra.mxu0 %v4740
      %4770 = vmatprep.subr.mxu0 0.0
      %4771 = vmatpush1.msra.mxu0 %v4741
      %4772 = vmatprep.subr.mxu0 0.0
      %4773 = vmatpush1.msra.mxu0 %v4742
      %4774 = vmatprep.subr.mxu0 0.0
      %4775 = vmatpush1.msra.mxu0 %v4743
      %4776 = vmatprep.subr.mxu0 0.0
      %4777 = vmatpush1.msra.mxu0 0.0
      %4778 = vmatprep.subr.mxu0 0.0
      %4779 = vmatpush1.msra.mxu0 0.0
      %4780 = vmatprep.subr.mxu0 0.0
      %4781 = vmatpush1.msra.mxu0 0.0
      %4782 = vmatprep.subr.mxu0 0.0
      %4783 = vmatpush1.msra.mxu0 0.0
      %4784 = vmatprep.subr.mxu0 0.0
      %4785 = vmatpush1.msra.mxu0 0.0
      %4786 = vmatprep.subr.mxu0 0.0
      %4787 = vmatpush1.msra.mxu0 0.0
      %4788 = vmatprep.subr.mxu0 0.0
      %4789 = vmatpush1.msra.mxu0 0.0
      %4790 = vmatprep.subr.mxu0 0.0
      %4791 = vmatpush1.msra.mxu0 0.0
      %4792 = vmatprep.subr.mxu0 0.0
      %4793 = vmatpush1.msra.mxu0 0.0
      %4794 = vmatprep.subr.mxu0 0.0
      %4795 = vmatpush1.msra.mxu0 0.0
      %4796 = vmatprep.subr.mxu0 0.0
      %4797 = vmatpush1.msra.mxu0 0.0
      %4798 = vmatprep.subr.mxu0 0.0
      %4799 = vmatpush1.msra.mxu0 0.0
      %4800 = vmatprep.subr.mxu0 0.0
      %4801 = vmatpush1.msra.mxu0 0.0
      %4802 = vmatprep.subr.mxu0 0.0
      %4803 = vmatpush1.msra.mxu0 0.0
      %4804 = vmatprep.subr.mxu0 0.0
      %4805 = vmatpush1.msra.mxu0 0.0
      %4806 = vmatprep.subr.mxu0 0.0
      %4807 = vmatpush1.msra.mxu0 0.0
      %4808 = vmatprep.mubr.f32.mxu0 0.0
      %4809 = vmatmul.mubr.f32.gmra.mrb[0].mxu0 %v4695
      %v4810 = vpop.f32.mrb[0].mxu0
      %v4811 = vadd.f32 0.0, %v4810
      %v4812 = vpop.f32.mrb[0].mxu0
      %4813 = vmatprep.mubr.f32.mxu0 0.0
      %4814 = vmatmul.mubr.f32.gmra.mrb[0].mxu0 %v4696
      %v4815 = vpop.f32.mrb[0].mxu0
      %v4816 = vadd.f32 0.0, %v4815
      %v4817 = vpop.f32.mrb[0].mxu0
      %4818 = vmatprep.mubr.f32.mxu0 0.0
      %4819 = vmatmul.mubr.f32.gmra.mrb[0].mxu0 %v4697
      %v4820 = vpop.f32.mrb[0].mxu0
      %v4821 = vadd.f32 0.0, %v4820
      %v4822 = vpop.f32.mrb[0].mxu0
      %4823 = vmatprep.mubr.f32.mxu0 0.0
      %4824 = vmatmul.mubr.f32.gmra.mrb[0].mxu0 %v4698
      %v4825 = vpop.f32.mrb[0].mxu0
      %v4826 = vadd.f32 0.0, %v4825
      %v4827 = vpop.f32.mrb[0].mxu0
      %4828 = vmatprep.mubr.f32.mxu0 0.0
      %4829 = vmatmul.mubr.f32.gmra.mrb[0].mxu0 %v4699
      %v4830 = vpop.f32.mrb[0].mxu0
      %v4831 = vadd.f32 0.0, %v4830
      %v4832 = vpop.f32.mrb[0].mxu0
      %4833 = vmatprep.mubr.f32.mxu0 0.0
      %4834 = vmatmul.mubr.f32.gmra.mrb[0].mxu0 %v4700
      %v4835 = vpop.f32.mrb[0].mxu0
      %v4836 = vadd.f32 0.0, %v4835
      %v4837 = vpop.f32.mrb[0].mxu0
      %4838 = vmatprep.mubr.f32.mxu0 0.0
      %4839 = vmatmul.mubr.f32.gmra.mrb[0].mxu0 %v4701
      %v4840 = vpop.f32.mrb[0].mxu0
      %v4841 = vadd.f32 0.0, %v4840
      %v4842 = vpop.f32.mrb[0].mxu0
      %4843 = vmatprep.mubr.f32.mxu0 0.0
      %4844 = vmatmul.mubr.f32.gmra.mrb[0].mxu0 %v4702
      %v4845 = vpop.f32.mrb[0].mxu0
      %v4846 = vadd.f32 0.0, %v4845
      %v4847 = vpop.f32.mrb[0].mxu0
      %4848 = vmatprep.mubr.f32.mxu0 0.0
      %4849 = vmatmul.mubr.f32.gmra.mrb[0].mxu0 %v4703
      %v4850 = vpop.f32.mrb[0].mxu0
      %v4851 = vadd.f32 0.0, %v4850
      %v4852 = vpop.f32.mrb[0].mxu0
      %4853 = vmatprep.mubr.f32.mxu0 0.0
      %4854 = vmatmul.mubr.f32.gmra.mrb[0].mxu0 %v4704
      %v4855 = vpop.f32.mrb[0].mxu0
      %v4856 = vadd.f32 0.0, %v4855
      %v4857 = vpop.f32.mrb[0].mxu0
      %4858 = vmatprep.mubr.f32.mxu0 0.0
      %4859 = vmatmul.mubr.f32.gmra.mrb[0].mxu0 %v4705
      %v4860 = vpop.f32.mrb[0].mxu0
      %v4861 = vadd.f32 0.0, %v4860
      %v4862 = vpop.f32.mrb[0].mxu0
      %4863 = vmatprep.mubr.f32.mxu0 0.0
      %4864 = vmatmul.mubr.f32.gmra.mrb[0].mxu0 %v4706
      %v4865 = vpop.f32.mrb[0].mxu0
      %v4866 = vadd.f32 0.0, %v4865
      %v4867 = vpop.f32.mrb[0].mxu0
      %4868 = vmatprep.mubr.f32.mxu0 0.0
      %4869 = vmatmul.mubr.f32.gmra.mrb[0].mxu0 %v4707
      %v4870 = vpop.f32.mrb[0].mxu0
      %v4871 = vadd.f32 0.0, %v4870
      %v4872 = vpop.f32.mrb[0].mxu0
      %4873 = vmatprep.mubr.f32.mxu0 0.0
      %4874 = vmatmul.mubr.f32.gmra.mrb[0].mxu0 %v4708
      %v4875 = vpop.f32.mrb[0].mxu0
      %v4876 = vadd.f32 0.0, %v4875
      %v4877 = vpop.f32.mrb[0].mxu0
      %4878 = vmatprep.mubr.f32.mxu0 0.0
      %4879 = vmatmul.mubr.f32.gmra.mrb[0].mxu0 %v4709
      %v4880 = vpop.f32.mrb[0].mxu0
      %v4881 = vadd.f32 0.0, %v4880
      %v4882 = vpop.f32.mrb[0].mxu0
      %4883 = vmatprep.mubr.f32.mxu0 0.0
      %4884 = vmatmul.mubr.f32.gmra.mrb[0].mxu0 %v4710
      %v4885 = vpop.f32.mrb[0].mxu0
      %v4886 = vadd.f32 0.0, %v4885
      %v4887 = vpop.f32.mrb[0].mxu0
      %4888 = vmatprep.mubr.f32.mxu0 0.0
      %4889 = vmatmul.mubr.f32.gmra.mrb[0].mxu0 %v4711
      %v4890 = vpop.f32.mrb[0].mxu0
      %v4891 = vadd.f32 0.0, %v4890
      %v4892 = vpop.f32.mrb[0].mxu0
      %4893 = vmatprep.mubr.f32.mxu0 0.0
      %4894 = vmatmul.mubr.f32.gmra.mrb[0].mxu0 %v4712
      %v4895 = vpop.f32.mrb[0].mxu0
      %v4896 = vadd.f32 0.0, %v4895
      %v4897 = vpop.f32.mrb[0].mxu0
      %4898 = vmatprep.mubr.f32.mxu0 0.0
      %4899 = vmatmul.mubr.f32.gmra.mrb[0].mxu0 %v4713
      %v4900 = vpop.f32.mrb[0].mxu0
      %v4901 = vadd.f32 0.0, %v4900
      %v4902 = vpop.f32.mrb[0].mxu0
      %4903 = vmatprep.mubr.f32.mxu0 0.0
      %4904 = vmatmul.mubr.f32.gmra.mrb[0].mxu0 %v4714
      %v4905 = vpop.f32.mrb[0].mxu0
      %v4906 = vadd.f32 0.0, %v4905
      %v4907 = vpop.f32.mrb[0].mxu0
      %4908 = vmatprep.mubr.f32.mxu0 0.0
      %4909 = vmatmul.mubr.f32.gmra.mrb[0].mxu0 %v4715
      %v4910 = vpop.f32.mrb[0].mxu0
      %v4911 = vadd.f32 0.0, %v4910
      %v4912 = vpop.f32.mrb[0].mxu0
      %4913 = vmatprep.mubr.f32.mxu0 0.0
      %4914 = vmatmul.mubr.f32.gmra.mrb[0].mxu0 %v4716
      %v4915 = vpop.f32.mrb[0].mxu0
      %v4916 = vadd.f32 0.0, %v4915
      %v4917 = vpop.f32.mrb[0].mxu0
      %4918 = vmatprep.mubr.f32.mxu0 0.0
      %4919 = vmatmul.mubr.f32.gmra.mrb[0].mxu0 %v4717
      %v4920 = vpop.f32.mrb[0].mxu0
      %v4921 = vadd.f32 0.0, %v4920
      %v4922 = vpop.f32.mrb[0].mxu0
      %4923 = vmatprep.mubr.f32.mxu0 0.0
      %4924 = vmatmul.mubr.f32.gmra.mrb[0].mxu0 %v4718
      %v4925 = vpop.f32.mrb[0].mxu0
      %v4926 = vadd.f32 0.0, %v4925
      %v4927 = vpop.f32.mrb[0].mxu0
      %4928 = vmatprep.mubr.f32.mxu0 0.0
      %4929 = vmatmul.mubr.f32.gmra.mrb[0].mxu0 %v4719
      %v4930 = vpop.f32.mrb[0].mxu0
      %v4931 = vadd.f32 0.0, %v4930
      %v4932 = vpop.f32.mrb[0].mxu0
      %4933 = vmatprep.mubr.f32.mxu0 0.0
      %4934 = vmatmul.mubr.f32.gmra.mrb[0].mxu0 %v4720
      %v4935 = vpop.f32.mrb[0].mxu0
      %v4936 = vadd.f32 0.0, %v4935
      %v4937 = vpop.f32.mrb[0].mxu0
      %4938 = vmatprep.mubr.f32.mxu0 0.0
      %4939 = vmatmul.mubr.f32.gmra.mrb[0].mxu0 %v4721
      %v4940 = vpop.f32.mrb[0].mxu0
      %v4941 = vadd.f32 0.0, %v4940
      %v4942 = vpop.f32.mrb[0].mxu0
      %4943 = vmatprep.mubr.f32.mxu0 0.0
      %4944 = vmatmul.mubr.f32.gmra.mrb[0].mxu0 %v4722
      %v4945 = vpop.f32.mrb[0].mxu0
      %v4946 = vadd.f32 0.0, %v4945
      %v4947 = vpop.f32.mrb[0].mxu0
      %4948 = vmatprep.mubr.f32.mxu0 0.0
      %4949 = vmatmul.mubr.f32.gmra.mrb[0].mxu0 %v4723
      %v4950 = vpop.f32.mrb[0].mxu0
      %v4951 = vadd.f32 0.0, %v4950
      %v4952 = vpop.f32.mrb[0].mxu0
      %4953 = vmatprep.mubr.f32.mxu0 0.0
      %4954 = vmatmul.mubr.f32.gmra.mrb[0].mxu0 %v4724
      %v4955 = vpop.f32.mrb[0].mxu0
      %v4956 = vadd.f32 0.0, %v4955
      %v4957 = vpop.f32.mrb[0].mxu0
      %4958 = vmatprep.mubr.f32.mxu0 0.0
      %4959 = vmatmul.mubr.f32.gmra.mrb[0].mxu0 %v4725
      %v4960 = vpop.f32.mrb[0].mxu0
      %v4961 = vadd.f32 0.0, %v4960
      %v4962 = vpop.f32.mrb[0].mxu0
      %4963 = vmatprep.mubr.f32.mxu0 0.0
      %4964 = vmatmul.mubr.f32.gmra.mrb[0].mxu0 %v4726
      %v4965 = vpop.f32.mrb[0].mxu0
      %v4966 = vadd.f32 0.0, %v4965
      %v4967 = vpop.f32.mrb[0].mxu0
      %4968 = vdwg.mxu0
      %s4969 = scalar_lea.vmem [#allocation3], 48
      %v4970 = vld [vmem:[%s4969] sm:$0xff]
      %v4971 = vld [vmem:[%s4969 + $0x8] sm:$0xff]
      %v4972 = vld [vmem:[%s4969 + $0x18] sm:$0xff]
      %v4973 = vld [vmem:[%s4969 + $0x20] sm:$0xff]
      %v4974 = vld [vmem:[%s4969 + $0x30] sm:$0xff]
      %v4975 = vld [vmem:[%s4969 + $0x38] sm:$0xff]
      %v4976 = vld [vmem:[%s4969 + $0x48] sm:$0xff]
      %v4977 = vld [vmem:[%s4969 + $0x50] sm:$0xff]
      %v4978 = vld [vmem:[%s4969 + $0x60] sm:$0xff]
      %v4979 = vld [vmem:[%s4969 + $0x68] sm:$0xff]
      %v4980 = vld [vmem:[%s4969 + $0x78] sm:$0xff]
      %v4981 = vld [vmem:[%s4969 + $0x80] sm:$0xff]
      %v4982 = vld [vmem:[%s4969 + $0x90] sm:$0xff]
      %v4983 = vld [vmem:[%s4969 + $0x98] sm:$0xff]
      %v4984 = vld [vmem:[%s4969 + $0xa8] sm:$0xff]
      %v4985 = vld [vmem:[%s4969 + $0xb0] sm:$0xff]
      %v4986 = vld [vmem:[%s4969 + $0xc0] sm:$0xff]
      %v4987 = vld [vmem:[%s4969 + $0xc8] sm:$0xff]
      %v4988 = vld [vmem:[%s4969 + $0xd8] sm:$0xff]
      %v4989 = vld [vmem:[%s4969 + $0xe0] sm:$0xff]
      %v4990 = vld [vmem:[%s4969 + $0xf0] sm:$0xff]
      %v4991 = vld [vmem:[%s4969 + $0xf8] sm:$0xff]
      %v4992 = vld [vmem:[%s4969 + $0x108] sm:$0xff]
      %v4993 = vld [vmem:[%s4969 + $0x110] sm:$0xff]
      %v4994 = vld [vmem:[%s4969 + $0x120] sm:$0xff]
      %v4995 = vld [vmem:[%s4969 + $0x128] sm:$0xff]
      %v4996 = vld [vmem:[%s4969 + $0x138] sm:$0xff]
      %v4997 = vld [vmem:[%s4969 + $0x140] sm:$0xff]
      %v4998 = vld [vmem:[%s4969 + $0x150] sm:$0xff]
      %v4999 = vld [vmem:[%s4969 + $0x158] sm:$0xff]
      %v5000 = vld [vmem:[%s4969 + $0x168] sm:$0xff]
      %v5001 = vld [vmem:[%s4969 + $0x170] sm:$0xff]
      %s5002 = scalar_lea.vmem %s4, 768
      %v5003 = vld [vmem:[%s5002] sm:$0xff]
      %v5004 = vld [vmem:[%s5002 + $0x8] sm:$0xff]
      %v5005 = vld [vmem:[%s5002 + $0x10] sm:$0xff]
      %v5006 = vld [vmem:[%s5002 + $0x18] sm:$0xff]
      %v5007 = vld [vmem:[%s5002 + $0x20] sm:$0xff]
      %v5008 = vld [vmem:[%s5002 + $0x28] sm:$0xff]
      %v5009 = vld [vmem:[%s5002 + $0x30] sm:$0xff]
      %v5010 = vld [vmem:[%s5002 + $0x38] sm:$0xff]
      %v5011 = vld [vmem:[%s5002 + $0x40] sm:$0xff]
      %v5012 = vld [vmem:[%s5002 + $0x48] sm:$0xff]
      %v5013 = vld [vmem:[%s5002 + $0x50] sm:$0xff]
      %v5014 = vld [vmem:[%s5002 + $0x58] sm:$0xff]
      %v5015 = vld [vmem:[%s5002 + $0x60] sm:$0xff]
      %v5016 = vld [vmem:[%s5002 + $0x68] sm:$0xff]
      %v5017 = vld [vmem:[%s5002 + $0x70] sm:$0xff]
      %v5018 = vld [vmem:[%s5002 + $0x78] sm:$0xff]
      %v5019 = vld [vmem:[%s4969 + $0x1] sm:$0xff]
      %v5020 = vld [vmem:[%s4969 + $0x9] sm:$0xff]
      %v5021 = vld [vmem:[%s4969 + $0x19] sm:$0xff]
      %v5022 = vld [vmem:[%s4969 + $0x21] sm:$0xff]
      %v5023 = vld [vmem:[%s4969 + $0x31] sm:$0xff]
      %v5024 = vld [vmem:[%s4969 + $0x39] sm:$0xff]
      %v5025 = vld [vmem:[%s4969 + $0x49] sm:$0xff]
      %v5026 = vld [vmem:[%s4969 + $0x51] sm:$0xff]
      %v5027 = vld [vmem:[%s4969 + $0x61] sm:$0xff]
      %v5028 = vld [vmem:[%s4969 + $0x69] sm:$0xff]
      %v5029 = vld [vmem:[%s4969 + $0x79] sm:$0xff]
      %v5030 = vld [vmem:[%s4969 + $0x81] sm:$0xff]
      %v5031 = vld [vmem:[%s4969 + $0x91] sm:$0xff]
      %v5032 = vld [vmem:[%s4969 + $0x99] sm:$0xff]
      %v5033 = vld [vmem:[%s4969 + $0xa9] sm:$0xff]
      %v5034 = vld [vmem:[%s4969 + $0xb1] sm:$0xff]
      %v5035 = vld [vmem:[%s4969 + $0xc1] sm:$0xff]
      %v5036 = vld [vmem:[%s4969 + $0xc9] sm:$0xff]
      %v5037 = vld [vmem:[%s4969 + $0xd9] sm:$0xff]
      %v5038 = vld [vmem:[%s4969 + $0xe1] sm:$0xff]
      %v5039 = vld [vmem:[%s4969 + $0xf1] sm:$0xff]
      %v5040 = vld [vmem:[%s4969 + $0xf9] sm:$0xff]
      %v5041 = vld [vmem:[%s4969 + $0x109] sm:$0xff]
      %v5042 = vld [vmem:[%s4969 + $0x111] sm:$0xff]
      %v5043 = vld [vmem:[%s4969 + $0x121] sm:$0xff]
      %v5044 = vld [vmem:[%s4969 + $0x129] sm:$0xff]
      %v5045 = vld [vmem:[%s4969 + $0x139] sm:$0xff]
      %v5046 = vld [vmem:[%s4969 + $0x141] sm:$0xff]
      %v5047 = vld [vmem:[%s4969 + $0x151] sm:$0xff]
      %v5048 = vld [vmem:[%s4969 + $0x159] sm:$0xff]
      %v5049 = vld [vmem:[%s4969 + $0x169] sm:$0xff]
      %v5050 = vld [vmem:[%s4969 + $0x171] sm:$0xff]
      %s5051 = scalar_lea.vmem %s4, 896
      %v5052 = vld [vmem:[%s5051] sm:$0xff]
      %v5053 = vld [vmem:[%s5051 + $0x8] sm:$0xff]
      %v5054 = vld [vmem:[%s5051 + $0x10] sm:$0xff]
      %v5055 = vld [vmem:[%s5051 + $0x18] sm:$0xff]
      %v5056 = vld [vmem:[%s5051 + $0x20] sm:$0xff]
      %v5057 = vld [vmem:[%s5051 + $0x28] sm:$0xff]
      %v5058 = vld [vmem:[%s5051 + $0x30] sm:$0xff]
      %v5059 = vld [vmem:[%s5051 + $0x38] sm:$0xff]
      %v5060 = vld [vmem:[%s5051 + $0x40] sm:$0xff]
      %v5061 = vld [vmem:[%s5051 + $0x48] sm:$0xff]
      %v5062 = vld [vmem:[%s5051 + $0x50] sm:$0xff]
      %v5063 = vld [vmem:[%s5051 + $0x58] sm:$0xff]
      %v5064 = vld [vmem:[%s5051 + $0x60] sm:$0xff]
      %v5065 = vld [vmem:[%s5051 + $0x68] sm:$0xff]
      %v5066 = vld [vmem:[%s5051 + $0x70] sm:$0xff]
      %v5067 = vld [vmem:[%s5051 + $0x78] sm:$0xff]
      %5068 = vmatprep.subr.mxu0 0.0
      %5069 = vmatpush1.msra.mxu0 %v5052
      %5070 = vmatprep.subr.mxu0 0.0
      %5071 = vmatpush1.msra.mxu0 %v5053
      %5072 = vmatprep.subr.mxu0 0.0
      %5073 = vmatpush1.msra.mxu0 %v5054
      %5074 = vmatprep.subr.mxu0 0.0
      %5075 = vmatpush1.msra.mxu0 %v5055
      %5076 = vmatprep.subr.mxu0 0.0
      %5077 = vmatpush1.msra.mxu0 %v5056
      %5078 = vmatprep.subr.mxu0 0.0
      %5079 = vmatpush1.msra.mxu0 %v5057
      %5080 = vmatprep.subr.mxu0 0.0
      %5081 = vmatpush1.msra.mxu0 %v5058
      %5082 = vmatprep.subr.mxu0 0.0
      %5083 = vmatpush1.msra.mxu0 %v5059
      %5084 = vmatprep.subr.mxu0 0.0
      %5085 = vmatpush1.msra.mxu0 %v5060
      %5086 = vmatprep.subr.mxu0 0.0
      %5087 = vmatpush1.msra.mxu0 %v5061
      %5088 = vmatprep.subr.mxu0 0.0
      %5089 = vmatpush1.msra.mxu0 %v5062
      %5090 = vmatprep.subr.mxu0 0.0
      %5091 = vmatpush1.msra.mxu0 %v5063
      %5092 = vmatprep.subr.mxu0 0.0
      %5093 = vmatpush1.msra.mxu0 %v5064
      %5094 = vmatprep.subr.mxu0 0.0
      %5095 = vmatpush1.msra.mxu0 %v5065
      %5096 = vmatprep.subr.mxu0 0.0
      %5097 = vmatpush1.msra.mxu0 %v5066
      %5098 = vmatprep.subr.mxu0 0.0
      %5099 = vmatpush1.msra.mxu0 %v5067
      %5100 = vmatprep.subr.mxu0 0.0
      %5101 = vmatpush1.msra.mxu0 0.0
      %5102 = vmatprep.subr.mxu0 0.0
      %5103 = vmatpush1.msra.mxu0 0.0
      %5104 = vmatprep.subr.mxu0 0.0
      %5105 = vmatpush1.msra.mxu0 0.0
      %5106 = vmatprep.subr.mxu0 0.0
      %5107 = vmatpush1.msra.mxu0 0.0
      %5108 = vmatprep.subr.mxu0 0.0
      %5109 = vmatpush1.msra.mxu0 0.0
      %5110 = vmatprep.subr.mxu0 0.0
      %5111 = vmatpush1.msra.mxu0 0.0
      %5112 = vmatprep.subr.mxu0 0.0
      %5113 = vmatpush1.msra.mxu0 0.0
      %5114 = vmatprep.subr.mxu0 0.0
      %5115 = vmatpush1.msra.mxu0 0.0
      %5116 = vmatprep.subr.mxu0 0.0
      %5117 = vmatpush1.msra.mxu0 0.0
      %5118 = vmatprep.subr.mxu0 0.0
      %5119 = vmatpush1.msra.mxu0 0.0
      %5120 = vmatprep.subr.mxu0 0.0
      %5121 = vmatpush1.msra.mxu0 0.0
      %5122 = vmatprep.subr.mxu0 0.0
      %5123 = vmatpush1.msra.mxu0 0.0
      %5124 = vmatprep.subr.mxu0 0.0
      %5125 = vmatpush1.msra.mxu0 0.0
      %5126 = vmatprep.subr.mxu0 0.0
      %5127 = vmatpush1.msra.mxu0 0.0
      %5128 = vmatprep.subr.mxu0 0.0
      %5129 = vmatpush1.msra.mxu0 0.0
      %5130 = vmatprep.subr.mxu0 0.0
      %5131 = vmatpush1.msra.mxu0 0.0
      %5132 = vmatprep.mubr.f32.mxu0 0.0
      %5133 = vmatmul.mubr.f32.gmra.mrb[0].mxu0 %v5019
      %v5134 = vpop.f32.mrb[0].mxu0
      %v5135 = vadd.f32 0.0, %v5134
      %v5136 = vpop.f32.mrb[0].mxu0
      %5137 = vmatprep.mubr.f32.mxu0 0.0
      %5138 = vmatmul.mubr.f32.gmra.mrb[0].mxu0 %v5020
      %v5139 = vpop.f32.mrb[0].mxu0
      %v5140 = vadd.f32 0.0, %v5139
      %v5141 = vpop.f32.mrb[0].mxu0
      %5142 = vmatprep.mubr.f32.mxu0 0.0
      %5143 = vmatmul.mubr.f32.gmra.mrb[0].mxu0 %v5021
      %v5144 = vpop.f32.mrb[0].mxu0
      %v5145 = vadd.f32 0.0, %v5144
      %v5146 = vpop.f32.mrb[0].mxu0
      %5147 = vmatprep.mubr.f32.mxu0 0.0
      %5148 = vmatmul.mubr.f32.gmra.mrb[0].mxu0 %v5022
      %v5149 = vpop.f32.mrb[0].mxu0
      %v5150 = vadd.f32 0.0, %v5149
      %v5151 = vpop.f32.mrb[0].mxu0
      %5152 = vmatprep.mubr.f32.mxu0 0.0
      %5153 = vmatmul.mubr.f32.gmra.mrb[0].mxu0 %v5023
      %v5154 = vpop.f32.mrb[0].mxu0
      %v5155 = vadd.f32 0.0, %v5154
      %v5156 = vpop.f32.mrb[0].mxu0
      %5157 = vmatprep.mubr.f32.mxu0 0.0
      %5158 = vmatmul.mubr.f32.gmra.mrb[0].mxu0 %v5024
      %v5159 = vpop.f32.mrb[0].mxu0
      %v5160 = vadd.f32 0.0, %v5159
      %v5161 = vpop.f32.mrb[0].mxu0
      %5162 = vmatprep.mubr.f32.mxu0 0.0
      %5163 = vmatmul.mubr.f32.gmra.mrb[0].mxu0 %v5025
      %v5164 = vpop.f32.mrb[0].mxu0
      %v5165 = vadd.f32 0.0, %v5164
      %v5166 = vpop.f32.mrb[0].mxu0
      %5167 = vmatprep.mubr.f32.mxu0 0.0
      %5168 = vmatmul.mubr.f32.gmra.mrb[0].mxu0 %v5026
      %v5169 = vpop.f32.mrb[0].mxu0
      %v5170 = vadd.f32 0.0, %v5169
      %v5171 = vpop.f32.mrb[0].mxu0
      %5172 = vmatprep.mubr.f32.mxu0 0.0
      %5173 = vmatmul.mubr.f32.gmra.mrb[0].mxu0 %v5027
      %v5174 = vpop.f32.mrb[0].mxu0
      %v5175 = vadd.f32 0.0, %v5174
      %v5176 = vpop.f32.mrb[0].mxu0
      %5177 = vmatprep.mubr.f32.mxu0 0.0
      %5178 = vmatmul.mubr.f32.gmra.mrb[0].mxu0 %v5028
      %v5179 = vpop.f32.mrb[0].mxu0
      %v5180 = vadd.f32 0.0, %v5179
      %v5181 = vpop.f32.mrb[0].mxu0
      %5182 = vmatprep.mubr.f32.mxu0 0.0
      %5183 = vmatmul.mubr.f32.gmra.mrb[0].mxu0 %v5029
      %v5184 = vpop.f32.mrb[0].mxu0
      %v5185 = vadd.f32 0.0, %v5184
      %v5186 = vpop.f32.mrb[0].mxu0
      %5187 = vmatprep.mubr.f32.mxu0 0.0
      %5188 = vmatmul.mubr.f32.gmra.mrb[0].mxu0 %v5030
      %v5189 = vpop.f32.mrb[0].mxu0
      %v5190 = vadd.f32 0.0, %v5189
      %v5191 = vpop.f32.mrb[0].mxu0
      %5192 = vmatprep.mubr.f32.mxu0 0.0
      %5193 = vmatmul.mubr.f32.gmra.mrb[0].mxu0 %v5031
      %v5194 = vpop.f32.mrb[0].mxu0
      %v5195 = vadd.f32 0.0, %v5194
      %v5196 = vpop.f32.mrb[0].mxu0
      %5197 = vmatprep.mubr.f32.mxu0 0.0
      %5198 = vmatmul.mubr.f32.gmra.mrb[0].mxu0 %v5032
      %v5199 = vpop.f32.mrb[0].mxu0
      %v5200 = vadd.f32 0.0, %v5199
      %v5201 = vpop.f32.mrb[0].mxu0
      %5202 = vmatprep.mubr.f32.mxu0 0.0
      %5203 = vmatmul.mubr.f32.gmra.mrb[0].mxu0 %v5033
      %v5204 = vpop.f32.mrb[0].mxu0
      %v5205 = vadd.f32 0.0, %v5204
      %v5206 = vpop.f32.mrb[0].mxu0
      %5207 = vmatprep.mubr.f32.mxu0 0.0
      %5208 = vmatmul.mubr.f32.gmra.mrb[0].mxu0 %v5034
      %v5209 = vpop.f32.mrb[0].mxu0
      %v5210 = vadd.f32 0.0, %v5209
      %v5211 = vpop.f32.mrb[0].mxu0
      %5212 = vmatprep.mubr.f32.mxu0 0.0
      %5213 = vmatmul.mubr.f32.gmra.mrb[0].mxu0 %v5035
      %v5214 = vpop.f32.mrb[0].mxu0
      %v5215 = vadd.f32 0.0, %v5214
      %v5216 = vpop.f32.mrb[0].mxu0
      %5217 = vmatprep.mubr.f32.mxu0 0.0
      %5218 = vmatmul.mubr.f32.gmra.mrb[0].mxu0 %v5036
      %v5219 = vpop.f32.mrb[0].mxu0
      %v5220 = vadd.f32 0.0, %v5219
      %v5221 = vpop.f32.mrb[0].mxu0
      %5222 = vmatprep.mubr.f32.mxu0 0.0
      %5223 = vmatmul.mubr.f32.gmra.mrb[0].mxu0 %v5037
      %v5224 = vpop.f32.mrb[0].mxu0
      %v5225 = vadd.f32 0.0, %v5224
      %v5226 = vpop.f32.mrb[0].mxu0
      %5227 = vmatprep.mubr.f32.mxu0 0.0
      %5228 = vmatmul.mubr.f32.gmra.mrb[0].mxu0 %v5038
      %v5229 = vpop.f32.mrb[0].mxu0
      %v5230 = vadd.f32 0.0, %v5229
      %v5231 = vpop.f32.mrb[0].mxu0
      %5232 = vmatprep.mubr.f32.mxu0 0.0
      %5233 = vmatmul.mubr.f32.gmra.mrb[0].mxu0 %v5039
      %v5234 = vpop.f32.mrb[0].mxu0
      %v5235 = vadd.f32 0.0, %v5234
      %v5236 = vpop.f32.mrb[0].mxu0
      %5237 = vmatprep.mubr.f32.mxu0 0.0
      %5238 = vmatmul.mubr.f32.gmra.mrb[0].mxu0 %v5040
      %v5239 = vpop.f32.mrb[0].mxu0
      %v5240 = vadd.f32 0.0, %v5239
      %v5241 = vpop.f32.mrb[0].mxu0
      %5242 = vmatprep.mubr.f32.mxu0 0.0
      %5243 = vmatmul.mubr.f32.gmra.mrb[0].mxu0 %v5041
      %v5244 = vpop.f32.mrb[0].mxu0
      %v5245 = vadd.f32 0.0, %v5244
      %v5246 = vpop.f32.mrb[0].mxu0
      %5247 = vmatprep.mubr.f32.mxu0 0.0
      %5248 = vmatmul.mubr.f32.gmra.mrb[0].mxu0 %v5042
      %v5249 = vpop.f32.mrb[0].mxu0
      %v5250 = vadd.f32 0.0, %v5249
      %v5251 = vpop.f32.mrb[0].mxu0
      %5252 = vmatprep.mubr.f32.mxu0 0.0
      %5253 = vmatmul.mubr.f32.gmra.mrb[0].mxu0 %v5043
      %v5254 = vpop.f32.mrb[0].mxu0
      %v5255 = vadd.f32 0.0, %v5254
      %v5256 = vpop.f32.mrb[0].mxu0
      %5257 = vmatprep.mubr.f32.mxu0 0.0
      %5258 = vmatmul.mubr.f32.gmra.mrb[0].mxu0 %v5044
      %v5259 = vpop.f32.mrb[0].mxu0
      %v5260 = vadd.f32 0.0, %v5259
      %v5261 = vpop.f32.mrb[0].mxu0
      %5262 = vmatprep.mubr.f32.mxu0 0.0
      %5263 = vmatmul.mubr.f32.gmra.mrb[0].mxu0 %v5045
      %v5264 = vpop.f32.mrb[0].mxu0
      %v5265 = vadd.f32 0.0, %v5264
      %v5266 = vpop.f32.mrb[0].mxu0
      %5267 = vmatprep.mubr.f32.mxu0 0.0
      %5268 = vmatmul.mubr.f32.gmra.mrb[0].mxu0 %v5046
      %v5269 = vpop.f32.mrb[0].mxu0
      %v5270 = vadd.f32 0.0, %v5269
      %v5271 = vpop.f32.mrb[0].mxu0
      %5272 = vmatprep.mubr.f32.mxu0 0.0
      %5273 = vmatmul.mubr.f32.gmra.mrb[0].mxu0 %v5047
      %v5274 = vpop.f32.mrb[0].mxu0
      %v5275 = vadd.f32 0.0, %v5274
      %v5276 = vpop.f32.mrb[0].mxu0
      %5277 = vmatprep.mubr.f32.mxu0 0.0
      %5278 = vmatmul.mubr.f32.gmra.mrb[0].mxu0 %v5048
      %v5279 = vpop.f32.mrb[0].mxu0
      %v5280 = vadd.f32 0.0, %v5279
      %v5281 = vpop.f32.mrb[0].mxu0
      %5282 = vmatprep.mubr.f32.mxu0 0.0
      %5283 = vmatmul.mubr.f32.gmra.mrb[0].mxu0 %v5049
      %v5284 = vpop.f32.mrb[0].mxu0
      %v5285 = vadd.f32 0.0, %v5284
      %v5286 = vpop.f32.mrb[0].mxu0
      %5287 = vmatprep.mubr.f32.mxu0 0.0
      %5288 = vmatmul.mubr.f32.gmra.mrb[0].mxu0 %v5050
      %v5289 = vpop.f32.mrb[0].mxu0
      %v5290 = vadd.f32 0.0, %v5289
      %v5291 = vpop.f32.mrb[0].mxu0
      %5292 = vdwg.mxu0
      %v5293 = vld [vmem:[%s4969 + $0x2] sm:$0xff]
      %v5294 = vld [vmem:[%s4969 + $0xa] sm:$0xff]
      %v5295 = vld [vmem:[%s4969 + $0x1a] sm:$0xff]
      %v5296 = vld [vmem:[%s4969 + $0x22] sm:$0xff]
      %v5297 = vld [vmem:[%s4969 + $0x32] sm:$0xff]
      %v5298 = vld [vmem:[%s4969 + $0x3a] sm:$0xff]
      %v5299 = vld [vmem:[%s4969 + $0x4a] sm:$0xff]
      %v5300 = vld [vmem:[%s4969 + $0x52] sm:$0xff]
      %v5301 = vld [vmem:[%s4969 + $0x62] sm:$0xff]
      %v5302 = vld [vmem:[%s4969 + $0x6a] sm:$0xff]
      %v5303 = vld [vmem:[%s4969 + $0x7a] sm:$0xff]
      %v5304 = vld [vmem:[%s4969 + $0x82] sm:$0xff]
      %v5305 = vld [vmem:[%s4969 + $0x92] sm:$0xff]
      %v5306 = vld [vmem:[%s4969 + $0x9a] sm:$0xff]
      %v5307 = vld [vmem:[%s4969 + $0xaa] sm:$0xff]
      %v5308 = vld [vmem:[%s4969 + $0xb2] sm:$0xff]
      %v5309 = vld [vmem:[%s4969 + $0xc2] sm:$0xff]
      %v5310 = vld [vmem:[%s4969 + $0xca] sm:$0xff]
      %v5311 = vld [vmem:[%s4969 + $0xda] sm:$0xff]
      %v5312 = vld [vmem:[%s4969 + $0xe2] sm:$0xff]
      %v5313 = vld [vmem:[%s4969 + $0xf2] sm:$0xff]
      %v5314 = vld [vmem:[%s4969 + $0xfa] sm:$0xff]
      %v5315 = vld [vmem:[%s4969 + $0x10a] sm:$0xff]
      %v5316 = vld [vmem:[%s4969 + $0x112] sm:$0xff]
      %v5317 = vld [vmem:[%s4969 + $0x122] sm:$0xff]
      %v5318 = vld [vmem:[%s4969 + $0x12a] sm:$0xff]
      %v5319 = vld [vmem:[%s4969 + $0x13a] sm:$0xff]
      %v5320 = vld [vmem:[%s4969 + $0x142] sm:$0xff]
      %v5321 = vld [vmem:[%s4969 + $0x152] sm:$0xff]
      %v5322 = vld [vmem:[%s4969 + $0x15a] sm:$0xff]
      %v5323 = vld [vmem:[%s4969 + $0x16a] sm:$0xff]
      %v5324 = vld [vmem:[%s4969 + $0x172] sm:$0xff]
      %s5325 = scalar_lea.vmem %s4, 1024
      %v5326 = vld [vmem:[%s5325] sm:$0xff]
      %v5327 = vld [vmem:[%s5325 + $0x8] sm:$0xff]
      %v5328 = vld [vmem:[%s5325 + $0x10] sm:$0xff]
      %v5329 = vld [vmem:[%s5325 + $0x18] sm:$0xff]
      %v5330 = vld [vmem:[%s5325 + $0x20] sm:$0xff]
      %v5331 = vld [vmem:[%s5325 + $0x28] sm:$0xff]
      %v5332 = vld [vmem:[%s5325 + $0x30] sm:$0xff]
      %v5333 = vld [vmem:[%s5325 + $0x38] sm:$0xff]
      %v5334 = vld [vmem:[%s5325 + $0x40] sm:$0xff]
      %v5335 = vld [vmem:[%s5325 + $0x48] sm:$0xff]
      %v5336 = vld [vmem:[%s5325 + $0x50] sm:$0xff]
      %v5337 = vld [vmem:[%s5325 + $0x58] sm:$0xff]
      %v5338 = vld [vmem:[%s5325 + $0x60] sm:$0xff]
      %v5339 = vld [vmem:[%s5325 + $0x68] sm:$0xff]
      %v5340 = vld [vmem:[%s5325 + $0x70] sm:$0xff]
      %v5341 = vld [vmem:[%s5325 + $0x78] sm:$0xff]
      %5342 = vmatprep.subr.mxu0 0.0
      %5343 = vmatpush1.msra.mxu0 %v5326
      %5344 = vmatprep.subr.mxu0 0.0
      %5345 = vmatpush1.msra.mxu0 %v5327
      %5346 = vmatprep.subr.mxu0 0.0
      %5347 = vmatpush1.msra.mxu0 %v5328
      %5348 = vmatprep.subr.mxu0 0.0
      %5349 = vmatpush1.msra.mxu0 %v5329
      %5350 = vmatprep.subr.mxu0 0.0
      %5351 = vmatpush1.msra.mxu0 %v5330
      %5352 = vmatprep.subr.mxu0 0.0
      %5353 = vmatpush1.msra.mxu0 %v5331
      %5354 = vmatprep.subr.mxu0 0.0
      %5355 = vmatpush1.msra.mxu0 %v5332
      %5356 = vmatprep.subr.mxu0 0.0
      %5357 = vmatpush1.msra.mxu0 %v5333
      %5358 = vmatprep.subr.mxu0 0.0
      %5359 = vmatpush1.msra.mxu0 %v5334
      %5360 = vmatprep.subr.mxu0 0.0
      %5361 = vmatpush1.msra.mxu0 %v5335
      %5362 = vmatprep.subr.mxu0 0.0
      %5363 = vmatpush1.msra.mxu0 %v5336
      %5364 = vmatprep.subr.mxu0 0.0
      %5365 = vmatpush1.msra.mxu0 %v5337
      %5366 = vmatprep.subr.mxu0 0.0
      %5367 = vmatpush1.msra.mxu0 %v5338
      %5368 = vmatprep.subr.mxu0 0.0
      %5369 = vmatpush1.msra.mxu0 %v5339
      %5370 = vmatprep.subr.mxu0 0.0
      %5371 = vmatpush1.msra.mxu0 %v5340
      %5372 = vmatprep.subr.mxu0 0.0
      %5373 = vmatpush1.msra.mxu0 %v5341
      %5374 = vmatprep.subr.mxu0 0.0
      %5375 = vmatpush1.msra.mxu0 0.0
      %5376 = vmatprep.subr.mxu0 0.0
      %5377 = vmatpush1.msra.mxu0 0.0
      %5378 = vmatprep.subr.mxu0 0.0
      %5379 = vmatpush1.msra.mxu0 0.0
      %5380 = vmatprep.subr.mxu0 0.0
      %5381 = vmatpush1.msra.mxu0 0.0
      %5382 = vmatprep.subr.mxu0 0.0
      %5383 = vmatpush1.msra.mxu0 0.0
      %5384 = vmatprep.subr.mxu0 0.0
      %5385 = vmatpush1.msra.mxu0 0.0
      %5386 = vmatprep.subr.mxu0 0.0
      %5387 = vmatpush1.msra.mxu0 0.0
      %5388 = vmatprep.subr.mxu0 0.0
      %5389 = vmatpush1.msra.mxu0 0.0
      %5390 = vmatprep.subr.mxu0 0.0
      %5391 = vmatpush1.msra.mxu0 0.0
      %5392 = vmatprep.subr.mxu0 0.0
      %5393 = vmatpush1.msra.mxu0 0.0
      %5394 = vmatprep.subr.mxu0 0.0
      %5395 = vmatpush1.msra.mxu0 0.0
      %5396 = vmatprep.subr.mxu0 0.0
      %5397 = vmatpush1.msra.mxu0 0.0
      %5398 = vmatprep.subr.mxu0 0.0
      %5399 = vmatpush1.msra.mxu0 0.0
      %5400 = vmatprep.subr.mxu0 0.0
      %5401 = vmatpush1.msra.mxu0 0.0
      %5402 = vmatprep.subr.mxu0 0.0
      %5403 = vmatpush1.msra.mxu0 0.0
      %5404 = vmatprep.subr.mxu0 0.0
      %5405 = vmatpush1.msra.mxu0 0.0
      %5406 = vmatprep.mubr.f32.mxu0 0.0
      %5407 = vmatmul.mubr.f32.gmra.mrb[0].mxu0 %v5293
      %v5408 = vpop.f32.mrb[0].mxu0
      %v5409 = vadd.f32 0.0, %v5408
      %v5410 = vpop.f32.mrb[0].mxu0
      %5411 = vmatprep.mubr.f32.mxu0 0.0
      %5412 = vmatmul.mubr.f32.gmra.mrb[0].mxu0 %v5294
      %v5413 = vpop.f32.mrb[0].mxu0
      %v5414 = vadd.f32 0.0, %v5413
      %v5415 = vpop.f32.mrb[0].mxu0
      %5416 = vmatprep.mubr.f32.mxu0 0.0
      %5417 = vmatmul.mubr.f32.gmra.mrb[0].mxu0 %v5295
      %v5418 = vpop.f32.mrb[0].mxu0
      %v5419 = vadd.f32 0.0, %v5418
      %v5420 = vpop.f32.mrb[0].mxu0
      %5421 = vmatprep.mubr.f32.mxu0 0.0
      %5422 = vmatmul.mubr.f32.gmra.mrb[0].mxu0 %v5296
      %v5423 = vpop.f32.mrb[0].mxu0
      %v5424 = vadd.f32 0.0, %v5423
      %v5425 = vpop.f32.mrb[0].mxu0
      %5426 = vmatprep.mubr.f32.mxu0 0.0
      %5427 = vmatmul.mubr.f32.gmra.mrb[0].mxu0 %v5297
      %v5428 = vpop.f32.mrb[0].mxu0
      %v5429 = vadd.f32 0.0, %v5428
      %v5430 = vpop.f32.mrb[0].mxu0
      %5431 = vmatprep.mubr.f32.mxu0 0.0
      %5432 = vmatmul.mubr.f32.gmra.mrb[0].mxu0 %v5298
      %v5433 = vpop.f32.mrb[0].mxu0
      %v5434 = vadd.f32 0.0, %v5433
      %v5435 = vpop.f32.mrb[0].mxu0
      %5436 = vmatprep.mubr.f32.mxu0 0.0
      %5437 = vmatmul.mubr.f32.gmra.mrb[0].mxu0 %v5299
      %v5438 = vpop.f32.mrb[0].mxu0
      %v5439 = vadd.f32 0.0, %v5438
      %v5440 = vpop.f32.mrb[0].mxu0
      %5441 = vmatprep.mubr.f32.mxu0 0.0
      %5442 = vmatmul.mubr.f32.gmra.mrb[0].mxu0 %v5300
      %v5443 = vpop.f32.mrb[0].mxu0
      %v5444 = vadd.f32 0.0, %v5443
      %v5445 = vpop.f32.mrb[0].mxu0
      %5446 = vmatprep.mubr.f32.mxu0 0.0
      %5447 = vmatmul.mubr.f32.gmra.mrb[0].mxu0 %v5301
      %v5448 = vpop.f32.mrb[0].mxu0
      %v5449 = vadd.f32 0.0, %v5448
      %v5450 = vpop.f32.mrb[0].mxu0
      %5451 = vmatprep.mubr.f32.mxu0 0.0
      %5452 = vmatmul.mubr.f32.gmra.mrb[0].mxu0 %v5302
      %v5453 = vpop.f32.mrb[0].mxu0
      %v5454 = vadd.f32 0.0, %v5453
      %v5455 = vpop.f32.mrb[0].mxu0
      %5456 = vmatprep.mubr.f32.mxu0 0.0
      %5457 = vmatmul.mubr.f32.gmra.mrb[0].mxu0 %v5303
      %v5458 = vpop.f32.mrb[0].mxu0
      %v5459 = vadd.f32 0.0, %v5458
      %v5460 = vpop.f32.mrb[0].mxu0
      %5461 = vmatprep.mubr.f32.mxu0 0.0
      %5462 = vmatmul.mubr.f32.gmra.mrb[0].mxu0 %v5304
      %v5463 = vpop.f32.mrb[0].mxu0
      %v5464 = vadd.f32 0.0, %v5463
      %v5465 = vpop.f32.mrb[0].mxu0
      %5466 = vmatprep.mubr.f32.mxu0 0.0
      %5467 = vmatmul.mubr.f32.gmra.mrb[0].mxu0 %v5305
      %v5468 = vpop.f32.mrb[0].mxu0
      %v5469 = vadd.f32 0.0, %v5468
      %v5470 = vpop.f32.mrb[0].mxu0
      %5471 = vmatprep.mubr.f32.mxu0 0.0
      %5472 = vmatmul.mubr.f32.gmra.mrb[0].mxu0 %v5306
      %v5473 = vpop.f32.mrb[0].mxu0
      %v5474 = vadd.f32 0.0, %v5473
      %v5475 = vpop.f32.mrb[0].mxu0
      %5476 = vmatprep.mubr.f32.mxu0 0.0
      %5477 = vmatmul.mubr.f32.gmra.mrb[0].mxu0 %v5307
      %v5478 = vpop.f32.mrb[0].mxu0
      %v5479 = vadd.f32 0.0, %v5478
      %v5480 = vpop.f32.mrb[0].mxu0
      %5481 = vmatprep.mubr.f32.mxu0 0.0
      %5482 = vmatmul.mubr.f32.gmra.mrb[0].mxu0 %v5308
      %v5483 = vpop.f32.mrb[0].mxu0
      %v5484 = vadd.f32 0.0, %v5483
      %v5485 = vpop.f32.mrb[0].mxu0
      %5486 = vmatprep.mubr.f32.mxu0 0.0
      %5487 = vmatmul.mubr.f32.gmra.mrb[0].mxu0 %v5309
      %v5488 = vpop.f32.mrb[0].mxu0
      %v5489 = vadd.f32 0.0, %v5488
      %v5490 = vpop.f32.mrb[0].mxu0
      %5491 = vmatprep.mubr.f32.mxu0 0.0
      %5492 = vmatmul.mubr.f32.gmra.mrb[0].mxu0 %v5310
      %v5493 = vpop.f32.mrb[0].mxu0
      %v5494 = vadd.f32 0.0, %v5493
      %v5495 = vpop.f32.mrb[0].mxu0
      %5496 = vmatprep.mubr.f32.mxu0 0.0
      %5497 = vmatmul.mubr.f32.gmra.mrb[0].mxu0 %v5311
      %v5498 = vpop.f32.mrb[0].mxu0
      %v5499 = vadd.f32 0.0, %v5498
      %v5500 = vpop.f32.mrb[0].mxu0
      %5501 = vmatprep.mubr.f32.mxu0 0.0
      %5502 = vmatmul.mubr.f32.gmra.mrb[0].mxu0 %v5312
      %v5503 = vpop.f32.mrb[0].mxu0
      %v5504 = vadd.f32 0.0, %v5503
      %v5505 = vpop.f32.mrb[0].mxu0
      %5506 = vmatprep.mubr.f32.mxu0 0.0
      %5507 = vmatmul.mubr.f32.gmra.mrb[0].mxu0 %v5313
      %v5508 = vpop.f32.mrb[0].mxu0
      %v5509 = vadd.f32 0.0, %v5508
      %v5510 = vpop.f32.mrb[0].mxu0
      %5511 = vmatprep.mubr.f32.mxu0 0.0
      %5512 = vmatmul.mubr.f32.gmra.mrb[0].mxu0 %v5314
      %v5513 = vpop.f32.mrb[0].mxu0
      %v5514 = vadd.f32 0.0, %v5513
      %v5515 = vpop.f32.mrb[0].mxu0
      %5516 = vmatprep.mubr.f32.mxu0 0.0
      %5517 = vmatmul.mubr.f32.gmra.mrb[0].mxu0 %v5315
      %v5518 = vpop.f32.mrb[0].mxu0
      %v5519 = vadd.f32 0.0, %v5518
      %v5520 = vpop.f32.mrb[0].mxu0
      %5521 = vmatprep.mubr.f32.mxu0 0.0
      %5522 = vmatmul.mubr.f32.gmra.mrb[0].mxu0 %v5316
      %v5523 = vpop.f32.mrb[0].mxu0
      %v5524 = vadd.f32 0.0, %v5523
      %v5525 = vpop.f32.mrb[0].mxu0
      %5526 = vmatprep.mubr.f32.mxu0 0.0
      %5527 = vmatmul.mubr.f32.gmra.mrb[0].mxu0 %v5317
      %v5528 = vpop.f32.mrb[0].mxu0
      %v5529 = vadd.f32 0.0, %v5528
      %v5530 = vpop.f32.mrb[0].mxu0
      %5531 = vmatprep.mubr.f32.mxu0 0.0
      %5532 = vmatmul.mubr.f32.gmra.mrb[0].mxu0 %v5318
      %v5533 = vpop.f32.mrb[0].mxu0
      %v5534 = vadd.f32 0.0, %v5533
      %v5535 = vpop.f32.mrb[0].mxu0
      %5536 = vmatprep.mubr.f32.mxu0 0.0
      %5537 = vmatmul.mubr.f32.gmra.mrb[0].mxu0 %v5319
      %v5538 = vpop.f32.mrb[0].mxu0
      %v5539 = vadd.f32 0.0, %v5538
      %v5540 = vpop.f32.mrb[0].mxu0
      %5541 = vmatprep.mubr.f32.mxu0 0.0
      %5542 = vmatmul.mubr.f32.gmra.mrb[0].mxu0 %v5320
      %v5543 = vpop.f32.mrb[0].mxu0
      %v5544 = vadd.f32 0.0, %v5543
      %v5545 = vpop.f32.mrb[0].mxu0
      %5546 = vmatprep.mubr.f32.mxu0 0.0
      %5547 = vmatmul.mubr.f32.gmra.mrb[0].mxu0 %v5321
      %v5548 = vpop.f32.mrb[0].mxu0
      %v5549 = vadd.f32 0.0, %v5548
      %v5550 = vpop.f32.mrb[0].mxu0
      %5551 = vmatprep.mubr.f32.mxu0 0.0
      %5552 = vmatmul.mubr.f32.gmra.mrb[0].mxu0 %v5322
      %v5553 = vpop.f32.mrb[0].mxu0
      %v5554 = vadd.f32 0.0, %v5553
      %v5555 = vpop.f32.mrb[0].mxu0
      %5556 = vmatprep.mubr.f32.mxu0 0.0
      %5557 = vmatmul.mubr.f32.gmra.mrb[0].mxu0 %v5323
      %v5558 = vpop.f32.mrb[0].mxu0
      %v5559 = vadd.f32 0.0, %v5558
      %v5560 = vpop.f32.mrb[0].mxu0
      %5561 = vmatprep.mubr.f32.mxu0 0.0
      %5562 = vmatmul.mubr.f32.gmra.mrb[0].mxu0 %v5324
      %v5563 = vpop.f32.mrb[0].mxu0
      %v5564 = vadd.f32 0.0, %v5563
      %v5565 = vpop.f32.mrb[0].mxu0
      %5566 = vdwg.mxu0
      %5567 = vmatprep.subr.mxu0 0.0
      %5568 = vmatpush1.msra.mxu0 %v4033
      %5569 = vmatprep.subr.mxu0 0.0
      %5570 = vmatpush1.msra.mxu0 %v4034
      %5571 = vmatprep.subr.mxu0 0.0
      %5572 = vmatpush1.msra.mxu0 %v4035
      %5573 = vmatprep.subr.mxu0 0.0
      %5574 = vmatpush1.msra.mxu0 %v4036
      %5575 = vmatprep.subr.mxu0 0.0
      %5576 = vmatpush1.msra.mxu0 %v4037
      %5577 = vmatprep.subr.mxu0 0.0
      %5578 = vmatpush1.msra.mxu0 %v4038
      %5579 = vmatprep.subr.mxu0 0.0
      %5580 = vmatpush1.msra.mxu0 %v4039
      %5581 = vmatprep.subr.mxu0 0.0
      %5582 = vmatpush1.msra.mxu0 %v4040
      %5583 = vmatprep.subr.mxu0 0.0
      %5584 = vmatpush1.msra.mxu0 %v4041
      %5585 = vmatprep.subr.mxu0 0.0
      %5586 = vmatpush1.msra.mxu0 %v4042
      %5587 = vmatprep.subr.mxu0 0.0
      %5588 = vmatpush1.msra.mxu0 %v4043
      %5589 = vmatprep.subr.mxu0 0.0
      %5590 = vmatpush1.msra.mxu0 %v4044
      %5591 = vmatprep.subr.mxu0 0.0
      %5592 = vmatpush1.msra.mxu0 %v4045
      %5593 = vmatprep.subr.mxu0 0.0
      %5594 = vmatpush1.msra.mxu0 %v4046
      %5595 = vmatprep.subr.mxu0 0.0
      %5596 = vmatpush1.msra.mxu0 %v4047
      %5597 = vmatprep.subr.mxu0 0.0
      %5598 = vmatpush1.msra.mxu0 %v4048
      %5599 = vmatprep.subr.mxu0 0.0
      %5600 = vmatpush1.msra.mxu0 0.0
      %5601 = vmatprep.subr.mxu0 0.0
      %5602 = vmatpush1.msra.mxu0 0.0
      %5603 = vmatprep.subr.mxu0 0.0
      %5604 = vmatpush1.msra.mxu0 0.0
      %5605 = vmatprep.subr.mxu0 0.0
      %5606 = vmatpush1.msra.mxu0 0.0
      %5607 = vmatprep.subr.mxu0 0.0
      %5608 = vmatpush1.msra.mxu0 0.0
      %5609 = vmatprep.subr.mxu0 0.0
      %5610 = vmatpush1.msra.mxu0 0.0
      %5611 = vmatprep.subr.mxu0 0.0
      %5612 = vmatpush1.msra.mxu0 0.0
      %5613 = vmatprep.subr.mxu0 0.0
      %5614 = vmatpush1.msra.mxu0 0.0
      %5615 = vmatprep.subr.mxu0 0.0
      %5616 = vmatpush1.msra.mxu0 0.0
      %5617 = vmatprep.subr.mxu0 0.0
      %5618 = vmatpush1.msra.mxu0 0.0
      %5619 = vmatprep.subr.mxu0 0.0
      %5620 = vmatpush1.msra.mxu0 0.0
      %5621 = vmatprep.subr.mxu0 0.0
      %5622 = vmatpush1.msra.mxu0 0.0
      %5623 = vmatprep.subr.mxu0 0.0
      %5624 = vmatpush1.msra.mxu0 0.0
      %5625 = vmatprep.subr.mxu0 0.0
      %5626 = vmatpush1.msra.mxu0 0.0
      %5627 = vmatprep.subr.mxu0 0.0
      %5628 = vmatpush1.msra.mxu0 0.0
      %5629 = vmatprep.subr.mxu0 0.0
      %5630 = vmatpush1.msra.mxu0 0.0
      %5631 = vmatprep.mubr.f32.mxu0 0.0
      %5632 = vmatmul.mubr.f32.gmra.mrb[0].mxu0 %v4001
      %v5633 = vpop.f32.mrb[0].mxu0
      %v5634 = vadd.f32 %v4165, %v5633
      %v5635 = vpop.f32.mrb[0].mxu0
      %5636 = vmatprep.mubr.f32.mxu0 0.0
      %5637 = vmatmul.mubr.f32.gmra.mrb[0].mxu0 %v4002
      %v5638 = vpop.f32.mrb[0].mxu0
      %v5639 = vadd.f32 %v4170, %v5638
      %v5640 = vpop.f32.mrb[0].mxu0
      %5641 = vmatprep.mubr.f32.mxu0 0.0
      %5642 = vmatmul.mubr.f32.gmra.mrb[0].mxu0 %v4003
      %v5643 = vpop.f32.mrb[0].mxu0
      %v5644 = vadd.f32 %v4175, %v5643
      %v5645 = vpop.f32.mrb[0].mxu0
      %5646 = vmatprep.mubr.f32.mxu0 0.0
      %5647 = vmatmul.mubr.f32.gmra.mrb[0].mxu0 %v4004
      %v5648 = vpop.f32.mrb[0].mxu0
      %v5649 = vadd.f32 %v4180, %v5648
      %v5650 = vpop.f32.mrb[0].mxu0
      %5651 = vmatprep.mubr.f32.mxu0 0.0
      %5652 = vmatmul.mubr.f32.gmra.mrb[0].mxu0 %v4005
      %v5653 = vpop.f32.mrb[0].mxu0
      %v5654 = vadd.f32 %v4185, %v5653
      %v5655 = vpop.f32.mrb[0].mxu0
      %5656 = vmatprep.mubr.f32.mxu0 0.0
      %5657 = vmatmul.mubr.f32.gmra.mrb[0].mxu0 %v4006
      %v5658 = vpop.f32.mrb[0].mxu0
      %v5659 = vadd.f32 %v4190, %v5658
      %v5660 = vpop.f32.mrb[0].mxu0
      %5661 = vmatprep.mubr.f32.mxu0 0.0
      %5662 = vmatmul.mubr.f32.gmra.mrb[0].mxu0 %v4007
      %v5663 = vpop.f32.mrb[0].mxu0
      %v5664 = vadd.f32 %v4195, %v5663
      %v5665 = vpop.f32.mrb[0].mxu0
      %5666 = vmatprep.mubr.f32.mxu0 0.0
      %5667 = vmatmul.mubr.f32.gmra.mrb[0].mxu0 %v4008
      %v5668 = vpop.f32.mrb[0].mxu0
      %v5669 = vadd.f32 %v4200, %v5668
      %v5670 = vpop.f32.mrb[0].mxu0
      %5671 = vmatprep.mubr.f32.mxu0 0.0
      %5672 = vmatmul.mubr.f32.gmra.mrb[0].mxu0 %v4009
      %v5673 = vpop.f32.mrb[0].mxu0
      %v5674 = vadd.f32 %v4205, %v5673
      %v5675 = vpop.f32.mrb[0].mxu0
      %5676 = vmatprep.mubr.f32.mxu0 0.0
      %5677 = vmatmul.mubr.f32.gmra.mrb[0].mxu0 %v4010
      %v5678 = vpop.f32.mrb[0].mxu0
      %v5679 = vadd.f32 %v4210, %v5678
      %v5680 = vpop.f32.mrb[0].mxu0
      %5681 = vmatprep.mubr.f32.mxu0 0.0
      %5682 = vmatmul.mubr.f32.gmra.mrb[0].mxu0 %v4011
      %v5683 = vpop.f32.mrb[0].mxu0
      %v5684 = vadd.f32 %v4215, %v5683
      %v5685 = vpop.f32.mrb[0].mxu0
      %5686 = vmatprep.mubr.f32.mxu0 0.0
      %5687 = vmatmul.mubr.f32.gmra.mrb[0].mxu0 %v4012
      %v5688 = vpop.f32.mrb[0].mxu0
      %v5689 = vadd.f32 %v4220, %v5688
      %v5690 = vpop.f32.mrb[0].mxu0
      %5691 = vmatprep.mubr.f32.mxu0 0.0
      %5692 = vmatmul.mubr.f32.gmra.mrb[0].mxu0 %v4013
      %v5693 = vpop.f32.mrb[0].mxu0
      %v5694 = vadd.f32 %v4225, %v5693
      %v5695 = vpop.f32.mrb[0].mxu0
      %5696 = vmatprep.mubr.f32.mxu0 0.0
      %5697 = vmatmul.mubr.f32.gmra.mrb[0].mxu0 %v4014
      %v5698 = vpop.f32.mrb[0].mxu0
      %v5699 = vadd.f32 %v4230, %v5698
      %v5700 = vpop.f32.mrb[0].mxu0
      %5701 = vmatprep.mubr.f32.mxu0 0.0
      %5702 = vmatmul.mubr.f32.gmra.mrb[0].mxu0 %v4015
      %v5703 = vpop.f32.mrb[0].mxu0
      %v5704 = vadd.f32 %v4235, %v5703
      %v5705 = vpop.f32.mrb[0].mxu0
      %5706 = vmatprep.mubr.f32.mxu0 0.0
      %5707 = vmatmul.mubr.f32.gmra.mrb[0].mxu0 %v4016
      %v5708 = vpop.f32.mrb[0].mxu0
      %v5709 = vadd.f32 %v4240, %v5708
      %v5710 = vpop.f32.mrb[0].mxu0
      %5711 = vmatprep.mubr.f32.mxu0 0.0
      %5712 = vmatmul.mubr.f32.gmra.mrb[0].mxu0 %v4017
      %v5713 = vpop.f32.mrb[0].mxu0
      %v5714 = vadd.f32 %v4245, %v5713
      %v5715 = vpop.f32.mrb[0].mxu0
      %5716 = vmatprep.mubr.f32.mxu0 0.0
      %5717 = vmatmul.mubr.f32.gmra.mrb[0].mxu0 %v4018
      %v5718 = vpop.f32.mrb[0].mxu0
      %v5719 = vadd.f32 %v4250, %v5718
      %v5720 = vpop.f32.mrb[0].mxu0
      %5721 = vmatprep.mubr.f32.mxu0 0.0
      %5722 = vmatmul.mubr.f32.gmra.mrb[0].mxu0 %v4019
      %v5723 = vpop.f32.mrb[0].mxu0
      %v5724 = vadd.f32 %v4255, %v5723
      %v5725 = vpop.f32.mrb[0].mxu0
      %5726 = vmatprep.mubr.f32.mxu0 0.0
      %5727 = vmatmul.mubr.f32.gmra.mrb[0].mxu0 %v4020
      %v5728 = vpop.f32.mrb[0].mxu0
      %v5729 = vadd.f32 %v4260, %v5728
      %v5730 = vpop.f32.mrb[0].mxu0
      %5731 = vmatprep.mubr.f32.mxu0 0.0
      %5732 = vmatmul.mubr.f32.gmra.mrb[0].mxu0 %v4021
      %v5733 = vpop.f32.mrb[0].mxu0
      %v5734 = vadd.f32 %v4265, %v5733
      %v5735 = vpop.f32.mrb[0].mxu0
      %5736 = vmatprep.mubr.f32.mxu0 0.0
      %5737 = vmatmul.mubr.f32.gmra.mrb[0].mxu0 %v4022
      %v5738 = vpop.f32.mrb[0].mxu0
      %v5739 = vadd.f32 %v4270, %v5738
      %v5740 = vpop.f32.mrb[0].mxu0
      %5741 = vmatprep.mubr.f32.mxu0 0.0
      %5742 = vmatmul.mubr.f32.gmra.mrb[0].mxu0 %v4023
      %v5743 = vpop.f32.mrb[0].mxu0
      %v5744 = vadd.f32 %v4275, %v5743
      %v5745 = vpop.f32.mrb[0].mxu0
      %5746 = vmatprep.mubr.f32.mxu0 0.0
      %5747 = vmatmul.mubr.f32.gmra.mrb[0].mxu0 %v4024
      %v5748 = vpop.f32.mrb[0].mxu0
      %v5749 = vadd.f32 %v4280, %v5748
      %v5750 = vpop.f32.mrb[0].mxu0
      %5751 = vmatprep.mubr.f32.mxu0 0.0
      %5752 = vmatmul.mubr.f32.gmra.mrb[0].mxu0 %v4025
      %v5753 = vpop.f32.mrb[0].mxu0
      %v5754 = vadd.f32 %v4285, %v5753
      %v5755 = vpop.f32.mrb[0].mxu0
      %5756 = vmatprep.mubr.f32.mxu0 0.0
      %5757 = vmatmul.mubr.f32.gmra.mrb[0].mxu0 %v4026
      %v5758 = vpop.f32.mrb[0].mxu0
      %v5759 = vadd.f32 %v4290, %v5758
      %v5760 = vpop.f32.mrb[0].mxu0
      %5761 = vmatprep.mubr.f32.mxu0 0.0
      %5762 = vmatmul.mubr.f32.gmra.mrb[0].mxu0 %v4027
      %v5763 = vpop.f32.mrb[0].mxu0
      %v5764 = vadd.f32 %v4295, %v5763
      %v5765 = vpop.f32.mrb[0].mxu0
      %5766 = vmatprep.mubr.f32.mxu0 0.0
      %5767 = vmatmul.mubr.f32.gmra.mrb[0].mxu0 %v4028
      %v5768 = vpop.f32.mrb[0].mxu0
      %v5769 = vadd.f32 %v4300, %v5768
      %v5770 = vpop.f32.mrb[0].mxu0
      %5771 = vmatprep.mubr.f32.mxu0 0.0
      %5772 = vmatmul.mubr.f32.gmra.mrb[0].mxu0 %v4029
      %v5773 = vpop.f32.mrb[0].mxu0
      %v5774 = vadd.f32 %v4305, %v5773
      %v5775 = vpop.f32.mrb[0].mxu0
      %5776 = vmatprep.mubr.f32.mxu0 0.0
      %5777 = vmatmul.mubr.f32.gmra.mrb[0].mxu0 %v4030
      %v5778 = vpop.f32.mrb[0].mxu0
      %v5779 = vadd.f32 %v4310, %v5778
      %v5780 = vpop.f32.mrb[0].mxu0
      %5781 = vmatprep.mubr.f32.mxu0 0.0
      %5782 = vmatmul.mubr.f32.gmra.mrb[0].mxu0 %v4031
      %v5783 = vpop.f32.mrb[0].mxu0
      %v5784 = vadd.f32 %v4315, %v5783
      %v5785 = vpop.f32.mrb[0].mxu0
      %5786 = vmatprep.mubr.f32.mxu0 0.0
      %5787 = vmatmul.mubr.f32.gmra.mrb[0].mxu0 %v4032
      %v5788 = vpop.f32.mrb[0].mxu0
      %v5789 = vadd.f32 %v4320, %v5788
      %v5790 = vpop.f32.mrb[0].mxu0
      %5791 = vdwg.mxu0
      %5792 = vmatprep.subr.mxu0 0.0
      %5793 = vmatpush1.msra.mxu0 %v4356
      %5794 = vmatprep.subr.mxu0 0.0
      %5795 = vmatpush1.msra.mxu0 %v4357
      %5796 = vmatprep.subr.mxu0 0.0
      %5797 = vmatpush1.msra.mxu0 %v4358
      %5798 = vmatprep.subr.mxu0 0.0
      %5799 = vmatpush1.msra.mxu0 %v4359
      %5800 = vmatprep.subr.mxu0 0.0
      %5801 = vmatpush1.msra.mxu0 %v4360
      %5802 = vmatprep.subr.mxu0 0.0
      %5803 = vmatpush1.msra.mxu0 %v4361
      %5804 = vmatprep.subr.mxu0 0.0
      %5805 = vmatpush1.msra.mxu0 %v4362
      %5806 = vmatprep.subr.mxu0 0.0
      %5807 = vmatpush1.msra.mxu0 %v4363
      %5808 = vmatprep.subr.mxu0 0.0
      %5809 = vmatpush1.msra.mxu0 %v4364
      %5810 = vmatprep.subr.mxu0 0.0
      %5811 = vmatpush1.msra.mxu0 %v4365
      %5812 = vmatprep.subr.mxu0 0.0
      %5813 = vmatpush1.msra.mxu0 %v4366
      %5814 = vmatprep.subr.mxu0 0.0
      %5815 = vmatpush1.msra.mxu0 %v4367
      %5816 = vmatprep.subr.mxu0 0.0
      %5817 = vmatpush1.msra.mxu0 %v4368
      %5818 = vmatprep.subr.mxu0 0.0
      %5819 = vmatpush1.msra.mxu0 %v4369
      %5820 = vmatprep.subr.mxu0 0.0
      %5821 = vmatpush1.msra.mxu0 %v4370
      %5822 = vmatprep.subr.mxu0 0.0
      %5823 = vmatpush1.msra.mxu0 %v4371
      %5824 = vmatprep.subr.mxu0 0.0
      %5825 = vmatpush1.msra.mxu0 0.0
      %5826 = vmatprep.subr.mxu0 0.0
      %5827 = vmatpush1.msra.mxu0 0.0
      %5828 = vmatprep.subr.mxu0 0.0
      %5829 = vmatpush1.msra.mxu0 0.0
      %5830 = vmatprep.subr.mxu0 0.0
      %5831 = vmatpush1.msra.mxu0 0.0
      %5832 = vmatprep.subr.mxu0 0.0
      %5833 = vmatpush1.msra.mxu0 0.0
      %5834 = vmatprep.subr.mxu0 0.0
      %5835 = vmatpush1.msra.mxu0 0.0
      %5836 = vmatprep.subr.mxu0 0.0
      %5837 = vmatpush1.msra.mxu0 0.0
      %5838 = vmatprep.subr.mxu0 0.0
      %5839 = vmatpush1.msra.mxu0 0.0
      %5840 = vmatprep.subr.mxu0 0.0
      %5841 = vmatpush1.msra.mxu0 0.0
      %5842 = vmatprep.subr.mxu0 0.0
      %5843 = vmatpush1.msra.mxu0 0.0
      %5844 = vmatprep.subr.mxu0 0.0
      %5845 = vmatpush1.msra.mxu0 0.0
      %5846 = vmatprep.subr.mxu0 0.0
      %5847 = vmatpush1.msra.mxu0 0.0
      %5848 = vmatprep.subr.mxu0 0.0
      %5849 = vmatpush1.msra.mxu0 0.0
      %5850 = vmatprep.subr.mxu0 0.0
      %5851 = vmatpush1.msra.mxu0 0.0
      %5852 = vmatprep.subr.mxu0 0.0
      %5853 = vmatpush1.msra.mxu0 0.0
      %5854 = vmatprep.subr.mxu0 0.0
      %5855 = vmatpush1.msra.mxu0 0.0
      %5856 = vmatprep.mubr.f32.mxu0 0.0
      %5857 = vmatmul.mubr.f32.gmra.mrb[0].mxu0 %v4323
      %v5858 = vpop.f32.mrb[0].mxu0
      %v5859 = vadd.f32 %v4488, %v5858
      %v5860 = vpop.f32.mrb[0].mxu0
      %5861 = vmatprep.mubr.f32.mxu0 0.0
      %5862 = vmatmul.mubr.f32.gmra.mrb[0].mxu0 %v4324
      %v5863 = vpop.f32.mrb[0].mxu0
      %v5864 = vadd.f32 %v4493, %v5863
      %v5865 = vpop.f32.mrb[0].mxu0
      %5866 = vmatprep.mubr.f32.mxu0 0.0
      %5867 = vmatmul.mubr.f32.gmra.mrb[0].mxu0 %v4325
      %v5868 = vpop.f32.mrb[0].mxu0
      %v5869 = vadd.f32 %v4498, %v5868
      %v5870 = vpop.f32.mrb[0].mxu0
      %5871 = vmatprep.mubr.f32.mxu0 0.0
      %5872 = vmatmul.mubr.f32.gmra.mrb[0].mxu0 %v4326
      %v5873 = vpop.f32.mrb[0].mxu0
      %v5874 = vadd.f32 %v4503, %v5873
      %v5875 = vpop.f32.mrb[0].mxu0
      %5876 = vmatprep.mubr.f32.mxu0 0.0
      %5877 = vmatmul.mubr.f32.gmra.mrb[0].mxu0 %v4327
      %v5878 = vpop.f32.mrb[0].mxu0
      %v5879 = vadd.f32 %v4508, %v5878
      %v5880 = vpop.f32.mrb[0].mxu0
      %5881 = vmatprep.mubr.f32.mxu0 0.0
      %5882 = vmatmul.mubr.f32.gmra.mrb[0].mxu0 %v4328
      %v5883 = vpop.f32.mrb[0].mxu0
      %v5884 = vadd.f32 %v4513, %v5883
      %v5885 = vpop.f32.mrb[0].mxu0
      %5886 = vmatprep.mubr.f32.mxu0 0.0
      %5887 = vmatmul.mubr.f32.gmra.mrb[0].mxu0 %v4329
      %v5888 = vpop.f32.mrb[0].mxu0
      %v5889 = vadd.f32 %v4518, %v5888
      %v5890 = vpop.f32.mrb[0].mxu0
      %5891 = vmatprep.mubr.f32.mxu0 0.0
      %5892 = vmatmul.mubr.f32.gmra.mrb[0].mxu0 %v4330
      %v5893 = vpop.f32.mrb[0].mxu0
      %v5894 = vadd.f32 %v4523, %v5893
      %v5895 = vpop.f32.mrb[0].mxu0
      %5896 = vmatprep.mubr.f32.mxu0 0.0
      %5897 = vmatmul.mubr.f32.gmra.mrb[0].mxu0 %v4331
      %v5898 = vpop.f32.mrb[0].mxu0
      %v5899 = vadd.f32 %v4528, %v5898
      %v5900 = vpop.f32.mrb[0].mxu0
      %5901 = vmatprep.mubr.f32.mxu0 0.0
      %5902 = vmatmul.mubr.f32.gmra.mrb[0].mxu0 %v4332
      %v5903 = vpop.f32.mrb[0].mxu0
      %v5904 = vadd.f32 %v4533, %v5903
      %v5905 = vpop.f32.mrb[0].mxu0
      %5906 = vmatprep.mubr.f32.mxu0 0.0
      %5907 = vmatmul.mubr.f32.gmra.mrb[0].mxu0 %v4333
      %v5908 = vpop.f32.mrb[0].mxu0
      %v5909 = vadd.f32 %v4538, %v5908
      %v5910 = vpop.f32.mrb[0].mxu0
      %5911 = vmatprep.mubr.f32.mxu0 0.0
      %5912 = vmatmul.mubr.f32.gmra.mrb[0].mxu0 %v4334
      %v5913 = vpop.f32.mrb[0].mxu0
      %v5914 = vadd.f32 %v4543, %v5913
      %v5915 = vpop.f32.mrb[0].mxu0
      %5916 = vmatprep.mubr.f32.mxu0 0.0
      %5917 = vmatmul.mubr.f32.gmra.mrb[0].mxu0 %v4335
      %v5918 = vpop.f32.mrb[0].mxu0
      %v5919 = vadd.f32 %v4548, %v5918
      %v5920 = vpop.f32.mrb[0].mxu0
      %5921 = vmatprep.mubr.f32.mxu0 0.0
      %5922 = vmatmul.mubr.f32.gmra.mrb[0].mxu0 %v4336
      %v5923 = vpop.f32.mrb[0].mxu0
      %v5924 = vadd.f32 %v4553, %v5923
      %v5925 = vpop.f32.mrb[0].mxu0
      %5926 = vmatprep.mubr.f32.mxu0 0.0
      %5927 = vmatmul.mubr.f32.gmra.mrb[0].mxu0 %v4337
      %v5928 = vpop.f32.mrb[0].mxu0
      %v5929 = vadd.f32 %v4558, %v5928
      %v5930 = vpop.f32.mrb[0].mxu0
      %5931 = vmatprep.mubr.f32.mxu0 0.0
      %5932 = vmatmul.mubr.f32.gmra.mrb[0].mxu0 %v4338
      %v5933 = vpop.f32.mrb[0].mxu0
      %v5934 = vadd.f32 %v4563, %v5933
      %v5935 = vpop.f32.mrb[0].mxu0
      %5936 = vmatprep.mubr.f32.mxu0 0.0
      %5937 = vmatmul.mubr.f32.gmra.mrb[0].mxu0 %v4339
      %v5938 = vpop.f32.mrb[0].mxu0
      %v5939 = vadd.f32 %v4568, %v5938
      %v5940 = vpop.f32.mrb[0].mxu0
      %5941 = vmatprep.mubr.f32.mxu0 0.0
      %5942 = vmatmul.mubr.f32.gmra.mrb[0].mxu0 %v4340
      %v5943 = vpop.f32.mrb[0].mxu0
      %v5944 = vadd.f32 %v4573, %v5943
      %v5945 = vpop.f32.mrb[0].mxu0
      %5946 = vmatprep.mubr.f32.mxu0 0.0
      %5947 = vmatmul.mubr.f32.gmra.mrb[0].mxu0 %v4341
      %v5948 = vpop.f32.mrb[0].mxu0
      %v5949 = vadd.f32 %v4578, %v5948
      %v5950 = vpop.f32.mrb[0].mxu0
      %5951 = vmatprep.mubr.f32.mxu0 0.0
      %5952 = vmatmul.mubr.f32.gmra.mrb[0].mxu0 %v4342
      %v5953 = vpop.f32.mrb[0].mxu0
      %v5954 = vadd.f32 %v4583, %v5953
      %v5955 = vpop.f32.mrb[0].mxu0
      %5956 = vmatprep.mubr.f32.mxu0 0.0
      %5957 = vmatmul.mubr.f32.gmra.mrb[0].mxu0 %v4343
      %v5958 = vpop.f32.mrb[0].mxu0
      %v5959 = vadd.f32 %v4588, %v5958
      %v5960 = vpop.f32.mrb[0].mxu0
      %5961 = vmatprep.mubr.f32.mxu0 0.0
      %5962 = vmatmul.mubr.f32.gmra.mrb[0].mxu0 %v4344
      %v5963 = vpop.f32.mrb[0].mxu0
      %v5964 = vadd.f32 %v4593, %v5963
      %v5965 = vpop.f32.mrb[0].mxu0
      %5966 = vmatprep.mubr.f32.mxu0 0.0
      %5967 = vmatmul.mubr.f32.gmra.mrb[0].mxu0 %v4345
      %v5968 = vpop.f32.mrb[0].mxu0
      %v5969 = vadd.f32 %v4598, %v5968
      %v5970 = vpop.f32.mrb[0].mxu0
      %5971 = vmatprep.mubr.f32.mxu0 0.0
      %5972 = vmatmul.mubr.f32.gmra.mrb[0].mxu0 %v4346
      %v5973 = vpop.f32.mrb[0].mxu0
      %v5974 = vadd.f32 %v4603, %v5973
      %v5975 = vpop.f32.mrb[0].mxu0
      %5976 = vmatprep.mubr.f32.mxu0 0.0
      %5977 = vmatmul.mubr.f32.gmra.mrb[0].mxu0 %v4347
      %v5978 = vpop.f32.mrb[0].mxu0
      %v5979 = vadd.f32 %v4608, %v5978
      %v5980 = vpop.f32.mrb[0].mxu0
      %5981 = vmatprep.mubr.f32.mxu0 0.0
      %5982 = vmatmul.mubr.f32.gmra.mrb[0].mxu0 %v4348
      %v5983 = vpop.f32.mrb[0].mxu0
      %v5984 = vadd.f32 %v4613, %v5983
      %v5985 = vpop.f32.mrb[0].mxu0
      %5986 = vmatprep.mubr.f32.mxu0 0.0
      %5987 = vmatmul.mubr.f32.gmra.mrb[0].mxu0 %v4349
      %v5988 = vpop.f32.mrb[0].mxu0
      %v5989 = vadd.f32 %v4618, %v5988
      %v5990 = vpop.f32.mrb[0].mxu0
      %5991 = vmatprep.mubr.f32.mxu0 0.0
      %5992 = vmatmul.mubr.f32.gmra.mrb[0].mxu0 %v4350
      %v5993 = vpop.f32.mrb[0].mxu0
      %v5994 = vadd.f32 %v4623, %v5993
      %v5995 = vpop.f32.mrb[0].mxu0
      %5996 = vmatprep.mubr.f32.mxu0 0.0
      %5997 = vmatmul.mubr.f32.gmra.mrb[0].mxu0 %v4351
      %v5998 = vpop.f32.mrb[0].mxu0
      %v5999 = vadd.f32 %v4628, %v5998
      %v6000 = vpop.f32.mrb[0].mxu0
      %6001 = vmatprep.mubr.f32.mxu0 0.0
      %6002 = vmatmul.mubr.f32.gmra.mrb[0].mxu0 %v4352
      %v6003 = vpop.f32.mrb[0].mxu0
      %v6004 = vadd.f32 %v4633, %v6003
      %v6005 = vpop.f32.mrb[0].mxu0
      %6006 = vmatprep.mubr.f32.mxu0 0.0
      %6007 = vmatmul.mubr.f32.gmra.mrb[0].mxu0 %v4353
      %v6008 = vpop.f32.mrb[0].mxu0
      %v6009 = vadd.f32 %v4638, %v6008
      %v6010 = vpop.f32.mrb[0].mxu0
      %6011 = vmatprep.mubr.f32.mxu0 0.0
      %6012 = vmatmul.mubr.f32.gmra.mrb[0].mxu0 %v4354
      %v6013 = vpop.f32.mrb[0].mxu0
      %v6014 = vadd.f32 %v4643, %v6013
      %v6015 = vpop.f32.mrb[0].mxu0
      %6016 = vdwg.mxu0
      %6017 = vmatprep.subr.mxu0 0.0
      %6018 = vmatpush1.msra.mxu0 %v4679
      %6019 = vmatprep.subr.mxu0 0.0
      %6020 = vmatpush1.msra.mxu0 %v4680
      %6021 = vmatprep.subr.mxu0 0.0
      %6022 = vmatpush1.msra.mxu0 %v4681
      %6023 = vmatprep.subr.mxu0 0.0
      %6024 = vmatpush1.msra.mxu0 %v4682
      %6025 = vmatprep.subr.mxu0 0.0
      %6026 = vmatpush1.msra.mxu0 %v4683
      %6027 = vmatprep.subr.mxu0 0.0
      %6028 = vmatpush1.msra.mxu0 %v4684
      %6029 = vmatprep.subr.mxu0 0.0
      %6030 = vmatpush1.msra.mxu0 %v4685
      %6031 = vmatprep.subr.mxu0 0.0
      %6032 = vmatpush1.msra.mxu0 %v4686
      %6033 = vmatprep.subr.mxu0 0.0
      %6034 = vmatpush1.msra.mxu0 %v4687
      %6035 = vmatprep.subr.mxu0 0.0
      %6036 = vmatpush1.msra.mxu0 %v4688
      %6037 = vmatprep.subr.mxu0 0.0
      %6038 = vmatpush1.msra.mxu0 %v4689
      %6039 = vmatprep.subr.mxu0 0.0
      %6040 = vmatpush1.msra.mxu0 %v4690
      %6041 = vmatprep.subr.mxu0 0.0
      %6042 = vmatpush1.msra.mxu0 %v4691
      %6043 = vmatprep.subr.mxu0 0.0
      %6044 = vmatpush1.msra.mxu0 %v4692
      %6045 = vmatprep.subr.mxu0 0.0
      %6046 = vmatpush1.msra.mxu0 %v4693
      %6047 = vmatprep.subr.mxu0 0.0
      %6048 = vmatpush1.msra.mxu0 %v4694
      %6049 = vmatprep.subr.mxu0 0.0
      %6050 = vmatpush1.msra.mxu0 0.0
      %6051 = vmatprep.subr.mxu0 0.0
      %6052 = vmatpush1.msra.mxu0 0.0
      %6053 = vmatprep.subr.mxu0 0.0
      %6054 = vmatpush1.msra.mxu0 0.0
      %6055 = vmatprep.subr.mxu0 0.0
      %6056 = vmatpush1.msra.mxu0 0.0
      %6057 = vmatprep.subr.mxu0 0.0
      %6058 = vmatpush1.msra.mxu0 0.0
      %6059 = vmatprep.subr.mxu0 0.0
      %6060 = vmatpush1.msra.mxu0 0.0
      %6061 = vmatprep.subr.mxu0 0.0
      %6062 = vmatpush1.msra.mxu0 0.0
      %6063 = vmatprep.subr.mxu0 0.0
      %6064 = vmatpush1.msra.mxu0 0.0
      %6065 = vmatprep.subr.mxu0 0.0
      %6066 = vmatpush1.msra.mxu0 0.0
      %6067 = vmatprep.subr.mxu0 0.0
      %6068 = vmatpush1.msra.mxu0 0.0
      %6069 = vmatprep.subr.mxu0 0.0
      %6070 = vmatpush1.msra.mxu0 0.0
      %6071 = vmatprep.subr.mxu0 0.0
      %6072 = vmatpush1.msra.mxu0 0.0
      %6073 = vmatprep.subr.mxu0 0.0
      %6074 = vmatpush1.msra.mxu0 0.0
      %6075 = vmatprep.subr.mxu0 0.0
      %6076 = vmatpush1.msra.mxu0 0.0
      %6077 = vmatprep.subr.mxu0 0.0
      %6078 = vmatpush1.msra.mxu0 0.0
      %6079 = vmatprep.subr.mxu0 0.0
      %6080 = vmatpush1.msra.mxu0 0.0
      %6081 = vmatprep.mubr.f32.mxu0 0.0
      %6082 = vmatmul.mubr.f32.gmra.mrb[0].mxu0 %v4646
      %v6083 = vpop.f32.mrb[0].mxu0
      %v6084 = vadd.f32 %v4811, %v6083
      %v6085 = vpop.f32.mrb[0].mxu0
      %6086 = vmatprep.mubr.f32.mxu0 0.0
      %6087 = vmatmul.mubr.f32.gmra.mrb[0].mxu0 %v4647
      %v6088 = vpop.f32.mrb[0].mxu0
      %v6089 = vadd.f32 %v4816, %v6088
      %v6090 = vpop.f32.mrb[0].mxu0
      %6091 = vmatprep.mubr.f32.mxu0 0.0
      %6092 = vmatmul.mubr.f32.gmra.mrb[0].mxu0 %v4648
      %v6093 = vpop.f32.mrb[0].mxu0
      %v6094 = vadd.f32 %v4821, %v6093
      %v6095 = vpop.f32.mrb[0].mxu0
      %6096 = vmatprep.mubr.f32.mxu0 0.0
      %6097 = vmatmul.mubr.f32.gmra.mrb[0].mxu0 %v4649
      %v6098 = vpop.f32.mrb[0].mxu0
      %v6099 = vadd.f32 %v4826, %v6098
      %v6100 = vpop.f32.mrb[0].mxu0
      %6101 = vmatprep.mubr.f32.mxu0 0.0
      %6102 = vmatmul.mubr.f32.gmra.mrb[0].mxu0 %v4650
      %v6103 = vpop.f32.mrb[0].mxu0
      %v6104 = vadd.f32 %v4831, %v6103
      %v6105 = vpop.f32.mrb[0].mxu0
      %6106 = vmatprep.mubr.f32.mxu0 0.0
      %6107 = vmatmul.mubr.f32.gmra.mrb[0].mxu0 %v4651
      %v6108 = vpop.f32.mrb[0].mxu0
      %v6109 = vadd.f32 %v4836, %v6108
      %v6110 = vpop.f32.mrb[0].mxu0
      %6111 = vmatprep.mubr.f32.mxu0 0.0
      %6112 = vmatmul.mubr.f32.gmra.mrb[0].mxu0 %v4652
      %v6113 = vpop.f32.mrb[0].mxu0
      %v6114 = vadd.f32 %v4841, %v6113
      %v6115 = vpop.f32.mrb[0].mxu0
      %6116 = vmatprep.mubr.f32.mxu0 0.0
      %6117 = vmatmul.mubr.f32.gmra.mrb[0].mxu0 %v4653
      %v6118 = vpop.f32.mrb[0].mxu0
      %v6119 = vadd.f32 %v4846, %v6118
      %v6120 = vpop.f32.mrb[0].mxu0
      %6121 = vmatprep.mubr.f32.mxu0 0.0
      %6122 = vmatmul.mubr.f32.gmra.mrb[0].mxu0 %v4654
      %v6123 = vpop.f32.mrb[0].mxu0
      %v6124 = vadd.f32 %v4851, %v6123
      %v6125 = vpop.f32.mrb[0].mxu0
      %6126 = vmatprep.mubr.f32.mxu0 0.0
      %6127 = vmatmul.mubr.f32.gmra.mrb[0].mxu0 %v4655
      %v6128 = vpop.f32.mrb[0].mxu0
      %v6129 = vadd.f32 %v4856, %v6128
      %v6130 = vpop.f32.mrb[0].mxu0
      %6131 = vmatprep.mubr.f32.mxu0 0.0
      %6132 = vmatmul.mubr.f32.gmra.mrb[0].mxu0 %v4656
      %v6133 = vpop.f32.mrb[0].mxu0
      %v6134 = vadd.f32 %v4861, %v6133
      %v6135 = vpop.f32.mrb[0].mxu0
      %6136 = vmatprep.mubr.f32.mxu0 0.0
      %6137 = vmatmul.mubr.f32.gmra.mrb[0].mxu0 %v4657
      %v6138 = vpop.f32.mrb[0].mxu0
      %v6139 = vadd.f32 %v4866, %v6138
      %v6140 = vpop.f32.mrb[0].mxu0
      %6141 = vmatprep.mubr.f32.mxu0 0.0
      %6142 = vmatmul.mubr.f32.gmra.mrb[0].mxu0 %v4658
      %v6143 = vpop.f32.mrb[0].mxu0
      %v6144 = vadd.f32 %v4871, %v6143
      %v6145 = vpop.f32.mrb[0].mxu0
      %6146 = vmatprep.mubr.f32.mxu0 0.0
      %6147 = vmatmul.mubr.f32.gmra.mrb[0].mxu0 %v4659
      %v6148 = vpop.f32.mrb[0].mxu0
      %v6149 = vadd.f32 %v4876, %v6148
      %v6150 = vpop.f32.mrb[0].mxu0
      %6151 = vmatprep.mubr.f32.mxu0 0.0
      %6152 = vmatmul.mubr.f32.gmra.mrb[0].mxu0 %v4660
      %v6153 = vpop.f32.mrb[0].mxu0
      %v6154 = vadd.f32 %v4881, %v6153
      %v6155 = vpop.f32.mrb[0].mxu0
      %6156 = vmatprep.mubr.f32.mxu0 0.0
      %6157 = vmatmul.mubr.f32.gmra.mrb[0].mxu0 %v4661
      %v6158 = vpop.f32.mrb[0].mxu0
      %v6159 = vadd.f32 %v4886, %v6158
      %v6160 = vpop.f32.mrb[0].mxu0
      %6161 = vmatprep.mubr.f32.mxu0 0.0
      %6162 = vmatmul.mubr.f32.gmra.mrb[0].mxu0 %v4662
      %v6163 = vpop.f32.mrb[0].mxu0
      %v6164 = vadd.f32 %v4891, %v6163
      %v6165 = vpop.f32.mrb[0].mxu0
      %6166 = vmatprep.mubr.f32.mxu0 0.0
      %6167 = vmatmul.mubr.f32.gmra.mrb[0].mxu0 %v4663
      %v6168 = vpop.f32.mrb[0].mxu0
      %v6169 = vadd.f32 %v4896, %v6168
      %v6170 = vpop.f32.mrb[0].mxu0
      %6171 = vmatprep.mubr.f32.mxu0 0.0
      %6172 = vmatmul.mubr.f32.gmra.mrb[0].mxu0 %v4664
      %v6173 = vpop.f32.mrb[0].mxu0
      %v6174 = vadd.f32 %v4901, %v6173
      %v6175 = vpop.f32.mrb[0].mxu0
      %6176 = vmatprep.mubr.f32.mxu0 0.0
      %6177 = vmatmul.mubr.f32.gmra.mrb[0].mxu0 %v4665
      %v6178 = vpop.f32.mrb[0].mxu0
      %v6179 = vadd.f32 %v4906, %v6178
      %v6180 = vpop.f32.mrb[0].mxu0
      %6181 = vmatprep.mubr.f32.mxu0 0.0
      %6182 = vmatmul.mubr.f32.gmra.mrb[0].mxu0 %v4666
      %v6183 = vpop.f32.mrb[0].mxu0
      %v6184 = vadd.f32 %v4911, %v6183
      %v6185 = vpop.f32.mrb[0].mxu0
      %6186 = vmatprep.mubr.f32.mxu0 0.0
      %6187 = vmatmul.mubr.f32.gmra.mrb[0].mxu0 %v4667
      %v6188 = vpop.f32.mrb[0].mxu0
      %v6189 = vadd.f32 %v4916, %v6188
      %v6190 = vpop.f32.mrb[0].mxu0
      %6191 = vmatprep.mubr.f32.mxu0 0.0
      %6192 = vmatmul.mubr.f32.gmra.mrb[0].mxu0 %v4668
      %v6193 = vpop.f32.mrb[0].mxu0
      %v6194 = vadd.f32 %v4921, %v6193
      %v6195 = vpop.f32.mrb[0].mxu0
      %6196 = vmatprep.mubr.f32.mxu0 0.0
      %6197 = vmatmul.mubr.f32.gmra.mrb[0].mxu0 %v4669
      %v6198 = vpop.f32.mrb[0].mxu0
      %v6199 = vadd.f32 %v4926, %v6198
      %v6200 = vpop.f32.mrb[0].mxu0
      %6201 = vmatprep.mubr.f32.mxu0 0.0
      %6202 = vmatmul.mubr.f32.gmra.mrb[0].mxu0 %v4670
      %v6203 = vpop.f32.mrb[0].mxu0
      %v6204 = vadd.f32 %v4931, %v6203
      %v6205 = vpop.f32.mrb[0].mxu0
      %6206 = vmatprep.mubr.f32.mxu0 0.0
      %6207 = vmatmul.mubr.f32.gmra.mrb[0].mxu0 %v4671
      %v6208 = vpop.f32.mrb[0].mxu0
      %v6209 = vadd.f32 %v4936, %v6208
      %v6210 = vpop.f32.mrb[0].mxu0
      %6211 = vmatprep.mubr.f32.mxu0 0.0
      %6212 = vmatmul.mubr.f32.gmra.mrb[0].mxu0 %v4672
      %v6213 = vpop.f32.mrb[0].mxu0
      %v6214 = vadd.f32 %v4941, %v6213
      %v6215 = vpop.f32.mrb[0].mxu0
      %6216 = vmatprep.mubr.f32.mxu0 0.0
      %6217 = vmatmul.mubr.f32.gmra.mrb[0].mxu0 %v4673
      %v6218 = vpop.f32.mrb[0].mxu0
      %v6219 = vadd.f32 %v4946, %v6218
      %v6220 = vpop.f32.mrb[0].mxu0
      %6221 = vmatprep.mubr.f32.mxu0 0.0
      %6222 = vmatmul.mubr.f32.gmra.mrb[0].mxu0 %v4674
      %v6223 = vpop.f32.mrb[0].mxu0
      %v6224 = vadd.f32 %v4951, %v6223
      %v6225 = vpop.f32.mrb[0].mxu0
      %6226 = vmatprep.mubr.f32.mxu0 0.0
      %6227 = vmatmul.mubr.f32.gmra.mrb[0].mxu0 %v4675
      %v6228 = vpop.f32.mrb[0].mxu0
      %v6229 = vadd.f32 %v4956, %v6228
      %v6230 = vpop.f32.mrb[0].mxu0
      %6231 = vmatprep.mubr.f32.mxu0 0.0
      %6232 = vmatmul.mubr.f32.gmra.mrb[0].mxu0 %v4676
      %v6233 = vpop.f32.mrb[0].mxu0
      %v6234 = vadd.f32 %v4961, %v6233
      %v6235 = vpop.f32.mrb[0].mxu0
      %6236 = vmatprep.mubr.f32.mxu0 0.0
      %6237 = vmatmul.mubr.f32.gmra.mrb[0].mxu0 %v4677
      %v6238 = vpop.f32.mrb[0].mxu0
      %v6239 = vadd.f32 %v4966, %v6238
      %v6240 = vpop.f32.mrb[0].mxu0
      %6241 = vdwg.mxu0
      %6242 = vmatprep.subr.mxu0 0.0
      %6243 = vmatpush1.msra.mxu0 %v5003
      %6244 = vmatprep.subr.mxu0 0.0
      %6245 = vmatpush1.msra.mxu0 %v5004
      %6246 = vmatprep.subr.mxu0 0.0
      %6247 = vmatpush1.msra.mxu0 %v5005
      %6248 = vmatprep.subr.mxu0 0.0
      %6249 = vmatpush1.msra.mxu0 %v5006
      %6250 = vmatprep.subr.mxu0 0.0
      %6251 = vmatpush1.msra.mxu0 %v5007
      %6252 = vmatprep.subr.mxu0 0.0
      %6253 = vmatpush1.msra.mxu0 %v5008
      %6254 = vmatprep.subr.mxu0 0.0
      %6255 = vmatpush1.msra.mxu0 %v5009
      %6256 = vmatprep.subr.mxu0 0.0
      %6257 = vmatpush1.msra.mxu0 %v5010
      %6258 = vmatprep.subr.mxu0 0.0
      %6259 = vmatpush1.msra.mxu0 %v5011
      %6260 = vmatprep.subr.mxu0 0.0
      %6261 = vmatpush1.msra.mxu0 %v5012
      %6262 = vmatprep.subr.mxu0 0.0
      %6263 = vmatpush1.msra.mxu0 %v5013
      %6264 = vmatprep.subr.mxu0 0.0
      %6265 = vmatpush1.msra.mxu0 %v5014
      %6266 = vmatprep.subr.mxu0 0.0
      %6267 = vmatpush1.msra.mxu0 %v5015
      %6268 = vmatprep.subr.mxu0 0.0
      %6269 = vmatpush1.msra.mxu0 %v5016
      %6270 = vmatprep.subr.mxu0 0.0
      %6271 = vmatpush1.msra.mxu0 %v5017
      %6272 = vmatprep.subr.mxu0 0.0
      %6273 = vmatpush1.msra.mxu0 %v5018
      %6274 = vmatprep.subr.mxu0 0.0
      %6275 = vmatpush1.msra.mxu0 0.0
      %6276 = vmatprep.subr.mxu0 0.0
      %6277 = vmatpush1.msra.mxu0 0.0
      %6278 = vmatprep.subr.mxu0 0.0
      %6279 = vmatpush1.msra.mxu0 0.0
      %6280 = vmatprep.subr.mxu0 0.0
      %6281 = vmatpush1.msra.mxu0 0.0
      %6282 = vmatprep.subr.mxu0 0.0
      %6283 = vmatpush1.msra.mxu0 0.0
      %6284 = vmatprep.subr.mxu0 0.0
      %6285 = vmatpush1.msra.mxu0 0.0
      %6286 = vmatprep.subr.mxu0 0.0
      %6287 = vmatpush1.msra.mxu0 0.0
      %6288 = vmatprep.subr.mxu0 0.0
      %6289 = vmatpush1.msra.mxu0 0.0
      %6290 = vmatprep.subr.mxu0 0.0
      %6291 = vmatpush1.msra.mxu0 0.0
      %6292 = vmatprep.subr.mxu0 0.0
      %6293 = vmatpush1.msra.mxu0 0.0
      %6294 = vmatprep.subr.mxu0 0.0
      %6295 = vmatpush1.msra.mxu0 0.0
      %6296 = vmatprep.subr.mxu0 0.0
      %6297 = vmatpush1.msra.mxu0 0.0
      %6298 = vmatprep.subr.mxu0 0.0
      %6299 = vmatpush1.msra.mxu0 0.0
      %6300 = vmatprep.subr.mxu0 0.0
      %6301 = vmatpush1.msra.mxu0 0.0
      %6302 = vmatprep.subr.mxu0 0.0
      %6303 = vmatpush1.msra.mxu0 0.0
      %6304 = vmatprep.subr.mxu0 0.0
      %6305 = vmatpush1.msra.mxu0 0.0
      %6306 = vmatprep.mubr.f32.mxu0 0.0
      %6307 = vmatmul.mubr.f32.gmra.mrb[0].mxu0 %v4970
      %v6308 = vpop.f32.mrb[0].mxu0
      %v6309 = vadd.f32 %v5135, %v6308
      %v6310 = vpop.f32.mrb[0].mxu0
      %6311 = vmatprep.mubr.f32.mxu0 0.0
      %6312 = vmatmul.mubr.f32.gmra.mrb[0].mxu0 %v4971
      %v6313 = vpop.f32.mrb[0].mxu0
      %v6314 = vadd.f32 %v5140, %v6313
      %v6315 = vpop.f32.mrb[0].mxu0
      %6316 = vmatprep.mubr.f32.mxu0 0.0
      %6317 = vmatmul.mubr.f32.gmra.mrb[0].mxu0 %v4972
      %v6318 = vpop.f32.mrb[0].mxu0
      %v6319 = vadd.f32 %v5145, %v6318
      %v6320 = vpop.f32.mrb[0].mxu0
      %6321 = vmatprep.mubr.f32.mxu0 0.0
      %6322 = vmatmul.mubr.f32.gmra.mrb[0].mxu0 %v4973
      %v6323 = vpop.f32.mrb[0].mxu0
      %v6324 = vadd.f32 %v5150, %v6323
      %v6325 = vpop.f32.mrb[0].mxu0
      %6326 = vmatprep.mubr.f32.mxu0 0.0
      %6327 = vmatmul.mubr.f32.gmra.mrb[0].mxu0 %v4974
      %v6328 = vpop.f32.mrb[0].mxu0
      %v6329 = vadd.f32 %v5155, %v6328
      %v6330 = vpop.f32.mrb[0].mxu0
      %6331 = vmatprep.mubr.f32.mxu0 0.0
      %6332 = vmatmul.mubr.f32.gmra.mrb[0].mxu0 %v4975
      %v6333 = vpop.f32.mrb[0].mxu0
      %v6334 = vadd.f32 %v5160, %v6333
      %v6335 = vpop.f32.mrb[0].mxu0
      %6336 = vmatprep.mubr.f32.mxu0 0.0
      %6337 = vmatmul.mubr.f32.gmra.mrb[0].mxu0 %v4976
      %v6338 = vpop.f32.mrb[0].mxu0
      %v6339 = vadd.f32 %v5165, %v6338
      %v6340 = vpop.f32.mrb[0].mxu0
      %6341 = vmatprep.mubr.f32.mxu0 0.0
      %6342 = vmatmul.mubr.f32.gmra.mrb[0].mxu0 %v4977
      %v6343 = vpop.f32.mrb[0].mxu0
      %v6344 = vadd.f32 %v5170, %v6343
      %v6345 = vpop.f32.mrb[0].mxu0
      %6346 = vmatprep.mubr.f32.mxu0 0.0
      %6347 = vmatmul.mubr.f32.gmra.mrb[0].mxu0 %v4978
      %v6348 = vpop.f32.mrb[0].mxu0
      %v6349 = vadd.f32 %v5175, %v6348
      %v6350 = vpop.f32.mrb[0].mxu0
      %6351 = vmatprep.mubr.f32.mxu0 0.0
      %6352 = vmatmul.mubr.f32.gmra.mrb[0].mxu0 %v4979
      %v6353 = vpop.f32.mrb[0].mxu0
      %v6354 = vadd.f32 %v5180, %v6353
      %v6355 = vpop.f32.mrb[0].mxu0
      %6356 = vmatprep.mubr.f32.mxu0 0.0
      %6357 = vmatmul.mubr.f32.gmra.mrb[0].mxu0 %v4980
      %v6358 = vpop.f32.mrb[0].mxu0
      %v6359 = vadd.f32 %v5185, %v6358
      %v6360 = vpop.f32.mrb[0].mxu0
      %6361 = vmatprep.mubr.f32.mxu0 0.0
      %6362 = vmatmul.mubr.f32.gmra.mrb[0].mxu0 %v4981
      %v6363 = vpop.f32.mrb[0].mxu0
      %v6364 = vadd.f32 %v5190, %v6363
      %v6365 = vpop.f32.mrb[0].mxu0
      %6366 = vmatprep.mubr.f32.mxu0 0.0
      %6367 = vmatmul.mubr.f32.gmra.mrb[0].mxu0 %v4982
      %v6368 = vpop.f32.mrb[0].mxu0
      %v6369 = vadd.f32 %v5195, %v6368
      %v6370 = vpop.f32.mrb[0].mxu0
      %6371 = vmatprep.mubr.f32.mxu0 0.0
      %6372 = vmatmul.mubr.f32.gmra.mrb[0].mxu0 %v4983
      %v6373 = vpop.f32.mrb[0].mxu0
      %v6374 = vadd.f32 %v5200, %v6373
      %v6375 = vpop.f32.mrb[0].mxu0
      %6376 = vmatprep.mubr.f32.mxu0 0.0
      %6377 = vmatmul.mubr.f32.gmra.mrb[0].mxu0 %v4984
      %v6378 = vpop.f32.mrb[0].mxu0
      %v6379 = vadd.f32 %v5205, %v6378
      %v6380 = vpop.f32.mrb[0].mxu0
      %6381 = vmatprep.mubr.f32.mxu0 0.0
      %6382 = vmatmul.mubr.f32.gmra.mrb[0].mxu0 %v4985
      %v6383 = vpop.f32.mrb[0].mxu0
      %v6384 = vadd.f32 %v5210, %v6383
      %v6385 = vpop.f32.mrb[0].mxu0
      %6386 = vmatprep.mubr.f32.mxu0 0.0
      %6387 = vmatmul.mubr.f32.gmra.mrb[0].mxu0 %v4986
      %v6388 = vpop.f32.mrb[0].mxu0
      %v6389 = vadd.f32 %v5215, %v6388
      %v6390 = vpop.f32.mrb[0].mxu0
      %6391 = vmatprep.mubr.f32.mxu0 0.0
      %6392 = vmatmul.mubr.f32.gmra.mrb[0].mxu0 %v4987
      %v6393 = vpop.f32.mrb[0].mxu0
      %v6394 = vadd.f32 %v5220, %v6393
      %v6395 = vpop.f32.mrb[0].mxu0
      %6396 = vmatprep.mubr.f32.mxu0 0.0
      %6397 = vmatmul.mubr.f32.gmra.mrb[0].mxu0 %v4988
      %v6398 = vpop.f32.mrb[0].mxu0
      %v6399 = vadd.f32 %v5225, %v6398
      %v6400 = vpop.f32.mrb[0].mxu0
      %6401 = vmatprep.mubr.f32.mxu0 0.0
      %6402 = vmatmul.mubr.f32.gmra.mrb[0].mxu0 %v4989
      %v6403 = vpop.f32.mrb[0].mxu0
      %v6404 = vadd.f32 %v5230, %v6403
      %v6405 = vpop.f32.mrb[0].mxu0
      %6406 = vmatprep.mubr.f32.mxu0 0.0
      %6407 = vmatmul.mubr.f32.gmra.mrb[0].mxu0 %v4990
      %v6408 = vpop.f32.mrb[0].mxu0
      %v6409 = vadd.f32 %v5235, %v6408
      %v6410 = vpop.f32.mrb[0].mxu0
      %6411 = vmatprep.mubr.f32.mxu0 0.0
      %6412 = vmatmul.mubr.f32.gmra.mrb[0].mxu0 %v4991
      %v6413 = vpop.f32.mrb[0].mxu0
      %v6414 = vadd.f32 %v5240, %v6413
      %v6415 = vpop.f32.mrb[0].mxu0
      %6416 = vmatprep.mubr.f32.mxu0 0.0
      %6417 = vmatmul.mubr.f32.gmra.mrb[0].mxu0 %v4992
      %v6418 = vpop.f32.mrb[0].mxu0
      %v6419 = vadd.f32 %v5245, %v6418
      %v6420 = vpop.f32.mrb[0].mxu0
      %6421 = vmatprep.mubr.f32.mxu0 0.0
      %6422 = vmatmul.mubr.f32.gmra.mrb[0].mxu0 %v4993
      %v6423 = vpop.f32.mrb[0].mxu0
      %v6424 = vadd.f32 %v5250, %v6423
      %v6425 = vpop.f32.mrb[0].mxu0
      %6426 = vmatprep.mubr.f32.mxu0 0.0
      %6427 = vmatmul.mubr.f32.gmra.mrb[0].mxu0 %v4994
      %v6428 = vpop.f32.mrb[0].mxu0
      %v6429 = vadd.f32 %v5255, %v6428
      %v6430 = vpop.f32.mrb[0].mxu0
      %6431 = vmatprep.mubr.f32.mxu0 0.0
      %6432 = vmatmul.mubr.f32.gmra.mrb[0].mxu0 %v4995
      %v6433 = vpop.f32.mrb[0].mxu0
      %v6434 = vadd.f32 %v5260, %v6433
      %v6435 = vpop.f32.mrb[0].mxu0
      %6436 = vmatprep.mubr.f32.mxu0 0.0
      %6437 = vmatmul.mubr.f32.gmra.mrb[0].mxu0 %v4996
      %v6438 = vpop.f32.mrb[0].mxu0
      %v6439 = vadd.f32 %v5265, %v6438
      %v6440 = vpop.f32.mrb[0].mxu0
      %6441 = vmatprep.mubr.f32.mxu0 0.0
      %6442 = vmatmul.mubr.f32.gmra.mrb[0].mxu0 %v4997
      %v6443 = vpop.f32.mrb[0].mxu0
      %v6444 = vadd.f32 %v5270, %v6443
      %v6445 = vpop.f32.mrb[0].mxu0
      %6446 = vmatprep.mubr.f32.mxu0 0.0
      %6447 = vmatmul.mubr.f32.gmra.mrb[0].mxu0 %v4998
      %v6448 = vpop.f32.mrb[0].mxu0
      %v6449 = vadd.f32 %v5275, %v6448
      %v6450 = vpop.f32.mrb[0].mxu0
      %6451 = vmatprep.mubr.f32.mxu0 0.0
      %6452 = vmatmul.mubr.f32.gmra.mrb[0].mxu0 %v4999
      %v6453 = vpop.f32.mrb[0].mxu0
      %v6454 = vadd.f32 %v5280, %v6453
      %v6455 = vpop.f32.mrb[0].mxu0
      %6456 = vmatprep.mubr.f32.mxu0 0.0
      %6457 = vmatmul.mubr.f32.gmra.mrb[0].mxu0 %v5000
      %v6458 = vpop.f32.mrb[0].mxu0
      %v6459 = vadd.f32 %v5285, %v6458
      %v6460 = vpop.f32.mrb[0].mxu0
      %6461 = vmatprep.mubr.f32.mxu0 0.0
      %6462 = vmatmul.mubr.f32.gmra.mrb[0].mxu0 %v5001
      %v6463 = vpop.f32.mrb[0].mxu0
      %v6464 = vadd.f32 %v5290, %v6463
      %v6465 = vpop.f32.mrb[0].mxu0
      %6466 = vdwg.mxu0
      %v6467 = vadd.f32 %v5634, %v5859
      %v6468 = vadd.f32 %v5639, %v5864
      %v6469 = vadd.f32 %v5644, %v5869
      %v6470 = vadd.f32 %v5649, %v5874
      %v6471 = vadd.f32 %v5654, %v5879
      %v6472 = vadd.f32 %v5659, %v5884
      %v6473 = vadd.f32 %v5664, %v5889
      %v6474 = vadd.f32 %v5669, %v5894
      %v6475 = vadd.f32 %v5674, %v5899
      %v6476 = vadd.f32 %v5679, %v5904
      %v6477 = vadd.f32 %v5684, %v5909
      %v6478 = vadd.f32 %v5689, %v5914
      %v6479 = vadd.f32 %v5694, %v5919
      %v6480 = vadd.f32 %v5699, %v5924
      %v6481 = vadd.f32 %v5704, %v5929
      %v6482 = vadd.f32 %v5709, %v5934
      %v6483 = vadd.f32 %v5714, %v5939
      %v6484 = vadd.f32 %v5719, %v5944
      %v6485 = vadd.f32 %v5724, %v5949
      %v6486 = vadd.f32 %v5729, %v5954
      %v6487 = vadd.f32 %v5734, %v5959
      %v6488 = vadd.f32 %v5739, %v5964
      %v6489 = vadd.f32 %v5744, %v5969
      %v6490 = vadd.f32 %v5749, %v5974
      %v6491 = vadd.f32 %v5754, %v5979
      %v6492 = vadd.f32 %v5759, %v5984
      %v6493 = vadd.f32 %v5764, %v5989
      %v6494 = vadd.f32 %v5769, %v5994
      %v6495 = vadd.f32 %v5774, %v5999
      %v6496 = vadd.f32 %v5779, %v6004
      %v6497 = vadd.f32 %v5784, %v6009
      %v6498 = vadd.f32 %v5789, %v6014
      %v6499 = vadd.f32 %v6084, %v6309
      %v6500 = vadd.f32 %v6089, %v6314
      %v6501 = vadd.f32 %v6094, %v6319
      %v6502 = vadd.f32 %v6099, %v6324
      %v6503 = vadd.f32 %v6104, %v6329
      %v6504 = vadd.f32 %v6109, %v6334
      %v6505 = vadd.f32 %v6114, %v6339
      %v6506 = vadd.f32 %v6119, %v6344
      %v6507 = vadd.f32 %v6124, %v6349
      %v6508 = vadd.f32 %v6129, %v6354
      %v6509 = vadd.f32 %v6134, %v6359
      %v6510 = vadd.f32 %v6139, %v6364
      %v6511 = vadd.f32 %v6144, %v6369
      %v6512 = vadd.f32 %v6149, %v6374
      %v6513 = vadd.f32 %v6154, %v6379
      %v6514 = vadd.f32 %v6159, %v6384
      %v6515 = vadd.f32 %v6164, %v6389
      %v6516 = vadd.f32 %v6169, %v6394
      %v6517 = vadd.f32 %v6174, %v6399
      %v6518 = vadd.f32 %v6179, %v6404
      %v6519 = vadd.f32 %v6184, %v6409
      %v6520 = vadd.f32 %v6189, %v6414
      %v6521 = vadd.f32 %v6194, %v6419
      %v6522 = vadd.f32 %v6199, %v6424
      %v6523 = vadd.f32 %v6204, %v6429
      %v6524 = vadd.f32 %v6209, %v6434
      %v6525 = vadd.f32 %v6214, %v6439
      %v6526 = vadd.f32 %v6219, %v6444
      %v6527 = vadd.f32 %v6224, %v6449
      %v6528 = vadd.f32 %v6229, %v6454
      %v6529 = vadd.f32 %v6234, %v6459
      %v6530 = vadd.f32 %v6239, %v6464
      %v6531 = vadd.f32 %v6467, %v6499
      %v6532 = vadd.f32 %v6468, %v6500
      %v6533 = vadd.f32 %v6469, %v6501
      %v6534 = vadd.f32 %v6470, %v6502
      %v6535 = vadd.f32 %v6471, %v6503
      %v6536 = vadd.f32 %v6472, %v6504
      %v6537 = vadd.f32 %v6473, %v6505
      %v6538 = vadd.f32 %v6474, %v6506
      %v6539 = vadd.f32 %v6475, %v6507
      %v6540 = vadd.f32 %v6476, %v6508
      %v6541 = vadd.f32 %v6477, %v6509
      %v6542 = vadd.f32 %v6478, %v6510
      %v6543 = vadd.f32 %v6479, %v6511
      %v6544 = vadd.f32 %v6480, %v6512
      %v6545 = vadd.f32 %v6481, %v6513
      %v6546 = vadd.f32 %v6482, %v6514
      %v6547 = vadd.f32 %v6483, %v6515
      %v6548 = vadd.f32 %v6484, %v6516
      %v6549 = vadd.f32 %v6485, %v6517
      %v6550 = vadd.f32 %v6486, %v6518
      %v6551 = vadd.f32 %v6487, %v6519
      %v6552 = vadd.f32 %v6488, %v6520
      %v6553 = vadd.f32 %v6489, %v6521
      %v6554 = vadd.f32 %v6490, %v6522
      %v6555 = vadd.f32 %v6491, %v6523
      %v6556 = vadd.f32 %v6492, %v6524
      %v6557 = vadd.f32 %v6493, %v6525
      %v6558 = vadd.f32 %v6494, %v6526
      %v6559 = vadd.f32 %v6495, %v6527
      %v6560 = vadd.f32 %v6496, %v6528
      %v6561 = vadd.f32 %v6497, %v6529
      %v6562 = vadd.f32 %v6498, %v6530
      %v6563 = vadd.f32 %v6531, %v5409
      %v6564 = vadd.f32 %v6532, %v5414
      %v6565 = vadd.f32 %v6533, %v5419
      %v6566 = vadd.f32 %v6534, %v5424
      %v6567 = vadd.f32 %v6535, %v5429
      %v6568 = vadd.f32 %v6536, %v5434
      %v6569 = vadd.f32 %v6537, %v5439
      %v6570 = vadd.f32 %v6538, %v5444
      %v6571 = vadd.f32 %v6539, %v5449
      %v6572 = vadd.f32 %v6540, %v5454
      %v6573 = vadd.f32 %v6541, %v5459
      %v6574 = vadd.f32 %v6542, %v5464
      %v6575 = vadd.f32 %v6543, %v5469
      %v6576 = vadd.f32 %v6544, %v5474
      %v6577 = vadd.f32 %v6545, %v5479
      %v6578 = vadd.f32 %v6546, %v5484
      %v6579 = vadd.f32 %v6547, %v5489
      %v6580 = vadd.f32 %v6548, %v5494
      %v6581 = vadd.f32 %v6549, %v5499
      %v6582 = vadd.f32 %v6550, %v5504
      %v6583 = vadd.f32 %v6551, %v5509
      %v6584 = vadd.f32 %v6552, %v5514
      %v6585 = vadd.f32 %v6553, %v5519
      %v6586 = vadd.f32 %v6554, %v5524
      %v6587 = vadd.f32 %v6555, %v5529
      %v6588 = vadd.f32 %v6556, %v5534
      %v6589 = vadd.f32 %v6557, %v5539
      %v6590 = vadd.f32 %v6558, %v5544
      %v6591 = vadd.f32 %v6559, %v5549
      %v6592 = vadd.f32 %v6560, %v5554
      %v6593 = vadd.f32 %v6561, %v5559
      %v6594 = vadd.f32 %v6562, %v5564
      %v6595 = vld [vmem:[%s5] sm:$0x1]
      %v6597 = vlaneseq
      %v6598 = vshrl.u32 %v6597, 7
      %v6599 = vsub.s32 0, %v6598
      %v6600 = vrot.slane %v6595, %v6599
      %v6602 = vmul.f32 %v6563, %v6600
      %v6603 = vmul.f32 %v6564, %v6600
      %v6604 = vmul.f32 %v6565, %v6600
      %v6605 = vmul.f32 %v6566, %v6600
      %v6606 = vmul.f32 %v6567, %v6600
      %v6607 = vmul.f32 %v6568, %v6600
      %v6608 = vmul.f32 %v6569, %v6600
      %v6609 = vmul.f32 %v6570, %v6600
      %v6610 = vmul.f32 %v6571, %v6600
      %v6611 = vmul.f32 %v6572, %v6600
      %v6612 = vmul.f32 %v6573, %v6600
      %v6613 = vmul.f32 %v6574, %v6600
      %v6614 = vmul.f32 %v6575, %v6600
      %v6615 = vmul.f32 %v6576, %v6600
      %v6616 = vmul.f32 %v6577, %v6600
      %v6617 = vmul.f32 %v6578, %v6600
      %v6618 = vmul.f32 %v6579, %v6600
      %v6619 = vmul.f32 %v6580, %v6600
      %v6620 = vmul.f32 %v6581, %v6600
      %v6621 = vmul.f32 %v6582, %v6600
      %v6622 = vmul.f32 %v6583, %v6600
      %v6623 = vmul.f32 %v6584, %v6600
      %v6624 = vmul.f32 %v6585, %v6600
      %v6625 = vmul.f32 %v6586, %v6600
      %v6626 = vmul.f32 %v6587, %v6600
      %v6627 = vmul.f32 %v6588, %v6600
      %v6628 = vmul.f32 %v6589, %v6600
      %v6629 = vmul.f32 %v6590, %v6600
      %v6630 = vmul.f32 %v6591, %v6600
      %v6631 = vmul.f32 %v6592, %v6600
      %v6632 = vmul.f32 %v6593, %v6600
      %v6633 = vmul.f32 %v6594, %v6600
      %v6634 = vld [vmem:[%s6] sm:$0x1]
      %v6636 = vlaneseq
      %v6637 = vshrl.u32 %v6636, 7
      %v6638 = vsub.s32 0, %v6637
      %v6639 = vrot.slane %v6634, %v6638
      %v6641 = vadd.f32 %v6602, %v6639
      %v6642 = vadd.f32 %v6603, %v6639
      %v6643 = vadd.f32 %v6604, %v6639
      %v6644 = vadd.f32 %v6605, %v6639
      %v6645 = vadd.f32 %v6606, %v6639
      %v6646 = vadd.f32 %v6607, %v6639
      %v6647 = vadd.f32 %v6608, %v6639
      %v6648 = vadd.f32 %v6609, %v6639
      %v6649 = vadd.f32 %v6610, %v6639
      %v6650 = vadd.f32 %v6611, %v6639
      %v6651 = vadd.f32 %v6612, %v6639
      %v6652 = vadd.f32 %v6613, %v6639
      %v6653 = vadd.f32 %v6614, %v6639
      %v6654 = vadd.f32 %v6615, %v6639
      %v6655 = vadd.f32 %v6616, %v6639
      %v6656 = vadd.f32 %v6617, %v6639
      %v6657 = vadd.f32 %v6618, %v6639
      %v6658 = vadd.f32 %v6619, %v6639
      %v6659 = vadd.f32 %v6620, %v6639
      %v6660 = vadd.f32 %v6621, %v6639
      %v6661 = vadd.f32 %v6622, %v6639
      %v6662 = vadd.f32 %v6623, %v6639
      %v6663 = vadd.f32 %v6624, %v6639
      %v6664 = vadd.f32 %v6625, %v6639
      %v6665 = vadd.f32 %v6626, %v6639
      %v6666 = vadd.f32 %v6627, %v6639
      %v6667 = vadd.f32 %v6628, %v6639
      %v6668 = vadd.f32 %v6629, %v6639
      %v6669 = vadd.f32 %v6630, %v6639
      %v6670 = vadd.f32 %v6631, %v6639
      %v6671 = vadd.f32 %v6632, %v6639
      %v6672 = vadd.f32 %v6633, %v6639
      %v6673 = vmax.f32 %v6641, 0.0
      %v6674 = vmax.f32 %v6642, 0.0
      %v6675 = vmax.f32 %v6643, 0.0
      %v6676 = vmax.f32 %v6644, 0.0
      %v6677 = vmax.f32 %v6645, 0.0
      %v6678 = vmax.f32 %v6646, 0.0
      %v6679 = vmax.f32 %v6647, 0.0
      %v6680 = vmax.f32 %v6648, 0.0
      %v6681 = vmax.f32 %v6649, 0.0
      %v6682 = vmax.f32 %v6650, 0.0
      %v6683 = vmax.f32 %v6651, 0.0
      %v6684 = vmax.f32 %v6652, 0.0
      %v6685 = vmax.f32 %v6653, 0.0
      %v6686 = vmax.f32 %v6654, 0.0
      %v6687 = vmax.f32 %v6655, 0.0
      %v6688 = vmax.f32 %v6656, 0.0
      %v6689 = vmax.f32 %v6657, 0.0
      %v6690 = vmax.f32 %v6658, 0.0
      %v6691 = vmax.f32 %v6659, 0.0
      %v6692 = vmax.f32 %v6660, 0.0
      %v6693 = vmax.f32 %v6661, 0.0
      %v6694 = vmax.f32 %v6662, 0.0
      %v6695 = vmax.f32 %v6663, 0.0
      %v6696 = vmax.f32 %v6664, 0.0
      %v6697 = vmax.f32 %v6665, 0.0
      %v6698 = vmax.f32 %v6666, 0.0
      %v6699 = vmax.f32 %v6667, 0.0
      %v6700 = vmax.f32 %v6668, 0.0
      %v6701 = vmax.f32 %v6669, 0.0
      %v6702 = vmax.f32 %v6670, 0.0
      %v6703 = vmax.f32 %v6671, 0.0
      %v6704 = vmax.f32 %v6672, 0.0
      %v6705 = vld [vmem:[%s7] sm:$0xff]
      %v6706 = vld [vmem:[%s7 + $0x8] sm:$0xff]
      %v6707 = vld [vmem:[%s7 + $0x10] sm:$0xff]
      %v6708 = vld [vmem:[%s7 + $0x18] sm:$0xff]
      %v6709 = vld [vmem:[%s7 + $0x20] sm:$0xff]
      %v6710 = vld [vmem:[%s7 + $0x28] sm:$0xff]
      %v6711 = vld [vmem:[%s7 + $0x30] sm:$0xff]
      %v6712 = vld [vmem:[%s7 + $0x38] sm:$0xff]
      %v6713 = vld [vmem:[%s7 + $0x40] sm:$0xff]
      %v6714 = vld [vmem:[%s7 + $0x48] sm:$0xff]
      %v6715 = vld [vmem:[%s7 + $0x50] sm:$0xff]
      %v6716 = vld [vmem:[%s7 + $0x58] sm:$0xff]
      %v6717 = vld [vmem:[%s7 + $0x60] sm:$0xff]
      %v6718 = vld [vmem:[%s7 + $0x68] sm:$0xff]
      %v6719 = vld [vmem:[%s7 + $0x70] sm:$0xff]
      %v6720 = vld [vmem:[%s7 + $0x78] sm:$0xff]
      %v6721 = vld [vmem:[%s8] sm:$0x1]
      %v6723 = vlaneseq
      %v6724 = vshrl.u32 %v6723, 7
      %v6725 = vsub.s32 0, %v6724
      %v6726 = vrot.slane %v6721, %v6725
      %6728 = vmatprep.subr.mxu0 0.0
      %6729 = vmatpush1.msra.mxu0 %v6705
      %6730 = vmatprep.subr.mxu0 0.0
      %6731 = vmatpush1.msra.mxu0 %v6706
      %6732 = vmatprep.subr.mxu0 0.0
      %6733 = vmatpush1.msra.mxu0 %v6707
      %6734 = vmatprep.subr.mxu0 0.0
      %6735 = vmatpush1.msra.mxu0 %v6708
      %6736 = vmatprep.subr.mxu0 0.0
      %6737 = vmatpush1.msra.mxu0 %v6709
      %6738 = vmatprep.subr.mxu0 0.0
      %6739 = vmatpush1.msra.mxu0 %v6710
      %6740 = vmatprep.subr.mxu0 0.0
      %6741 = vmatpush1.msra.mxu0 %v6711
      %6742 = vmatprep.subr.mxu0 0.0
      %6743 = vmatpush1.msra.mxu0 %v6712
      %6744 = vmatprep.subr.mxu0 0.0
      %6745 = vmatpush1.msra.mxu0 %v6713
      %6746 = vmatprep.subr.mxu0 0.0
      %6747 = vmatpush1.msra.mxu0 %v6714
      %6748 = vmatprep.subr.mxu0 0.0
      %6749 = vmatpush1.msra.mxu0 %v6715
      %6750 = vmatprep.subr.mxu0 0.0
      %6751 = vmatpush1.msra.mxu0 %v6716
      %6752 = vmatprep.subr.mxu0 0.0
      %6753 = vmatpush1.msra.mxu0 %v6717
      %6754 = vmatprep.subr.mxu0 0.0
      %6755 = vmatpush1.msra.mxu0 %v6718
      %6756 = vmatprep.subr.mxu0 0.0
      %6757 = vmatpush1.msra.mxu0 %v6719
      %6758 = vmatprep.subr.mxu0 0.0
      %6759 = vmatpush1.msra.mxu0 %v6720
      %6760 = vmatprep.subr.mxu0 0.0
      %6761 = vmatpush1.msra.mxu0 0.0
      %6762 = vmatprep.subr.mxu0 0.0
      %6763 = vmatpush1.msra.mxu0 0.0
      %6764 = vmatprep.subr.mxu0 0.0
      %6765 = vmatpush1.msra.mxu0 0.0
      %6766 = vmatprep.subr.mxu0 0.0
      %6767 = vmatpush1.msra.mxu0 0.0
      %6768 = vmatprep.subr.mxu0 0.0
      %6769 = vmatpush1.msra.mxu0 0.0
      %6770 = vmatprep.subr.mxu0 0.0
      %6771 = vmatpush1.msra.mxu0 0.0
      %6772 = vmatprep.subr.mxu0 0.0
      %6773 = vmatpush1.msra.mxu0 0.0
      %6774 = vmatprep.subr.mxu0 0.0
      %6775 = vmatpush1.msra.mxu0 0.0
      %6776 = vmatprep.subr.mxu0 0.0
      %6777 = vmatpush1.msra.mxu0 0.0
      %6778 = vmatprep.subr.mxu0 0.0
      %6779 = vmatpush1.msra.mxu0 0.0
      %6780 = vmatprep.subr.mxu0 0.0
      %6781 = vmatpush1.msra.mxu0 0.0
      %6782 = vmatprep.subr.mxu0 0.0
      %6783 = vmatpush1.msra.mxu0 0.0
      %6784 = vmatprep.subr.mxu0 0.0
      %6785 = vmatpush1.msra.mxu0 0.0
      %6786 = vmatprep.subr.mxu0 0.0
      %6787 = vmatpush1.msra.mxu0 0.0
      %6788 = vmatprep.subr.mxu0 0.0
      %6789 = vmatpush1.msra.mxu0 0.0
      %6790 = vmatprep.subr.mxu0 0.0
      %6791 = vmatpush1.msra.mxu0 0.0
      %6792 = vmatprep.mubr.f32.mxu0 0.0
      %6793 = vmatmul.mubr.f32.gmra.mrb[0].mxu0 %v6673
      %v6794 = vpop.f32.mrb[0].mxu0
      %v6795 = vadd.f32 %v6726, %v6794
      %v6796 = vpop.f32.mrb[0].mxu0
      %6797 = vmatprep.mubr.f32.mxu0 0.0
      %6798 = vmatmul.mubr.f32.gmra.mrb[0].mxu0 %v6674
      %v6799 = vpop.f32.mrb[0].mxu0
      %v6800 = vadd.f32 %v6726, %v6799
      %v6801 = vpop.f32.mrb[0].mxu0
      %6802 = vmatprep.mubr.f32.mxu0 0.0
      %6803 = vmatmul.mubr.f32.gmra.mrb[0].mxu0 %v6675
      %v6804 = vpop.f32.mrb[0].mxu0
      %v6805 = vadd.f32 %v6726, %v6804
      %v6806 = vpop.f32.mrb[0].mxu0
      %6807 = vmatprep.mubr.f32.mxu0 0.0
      %6808 = vmatmul.mubr.f32.gmra.mrb[0].mxu0 %v6676
      %v6809 = vpop.f32.mrb[0].mxu0
      %v6810 = vadd.f32 %v6726, %v6809
      %v6811 = vpop.f32.mrb[0].mxu0
      %6812 = vmatprep.mubr.f32.mxu0 0.0
      %6813 = vmatmul.mubr.f32.gmra.mrb[0].mxu0 %v6677
      %v6814 = vpop.f32.mrb[0].mxu0
      %v6815 = vadd.f32 %v6726, %v6814
      %v6816 = vpop.f32.mrb[0].mxu0
      %6817 = vmatprep.mubr.f32.mxu0 0.0
      %6818 = vmatmul.mubr.f32.gmra.mrb[0].mxu0 %v6678
      %v6819 = vpop.f32.mrb[0].mxu0
      %v6820 = vadd.f32 %v6726, %v6819
      %v6821 = vpop.f32.mrb[0].mxu0
      %6822 = vmatprep.mubr.f32.mxu0 0.0
      %6823 = vmatmul.mubr.f32.gmra.mrb[0].mxu0 %v6679
      %v6824 = vpop.f32.mrb[0].mxu0
      %v6825 = vadd.f32 %v6726, %v6824
      %v6826 = vpop.f32.mrb[0].mxu0
      %6827 = vmatprep.mubr.f32.mxu0 0.0
      %6828 = vmatmul.mubr.f32.gmra.mrb[0].mxu0 %v6680
      %v6829 = vpop.f32.mrb[0].mxu0
      %v6830 = vadd.f32 %v6726, %v6829
      %v6831 = vpop.f32.mrb[0].mxu0
      %6832 = vmatprep.mubr.f32.mxu0 0.0
      %6833 = vmatmul.mubr.f32.gmra.mrb[0].mxu0 %v6681
      %v6834 = vpop.f32.mrb[0].mxu0
      %v6835 = vadd.f32 %v6726, %v6834
      %v6836 = vpop.f32.mrb[0].mxu0
      %6837 = vmatprep.mubr.f32.mxu0 0.0
      %6838 = vmatmul.mubr.f32.gmra.mrb[0].mxu0 %v6682
      %v6839 = vpop.f32.mrb[0].mxu0
      %v6840 = vadd.f32 %v6726, %v6839
      %v6841 = vpop.f32.mrb[0].mxu0
      %6842 = vmatprep.mubr.f32.mxu0 0.0
      %6843 = vmatmul.mubr.f32.gmra.mrb[0].mxu0 %v6683
      %v6844 = vpop.f32.mrb[0].mxu0
      %v6845 = vadd.f32 %v6726, %v6844
      %v6846 = vpop.f32.mrb[0].mxu0
      %6847 = vmatprep.mubr.f32.mxu0 0.0
      %6848 = vmatmul.mubr.f32.gmra.mrb[0].mxu0 %v6684
      %v6849 = vpop.f32.mrb[0].mxu0
      %v6850 = vadd.f32 %v6726, %v6849
      %v6851 = vpop.f32.mrb[0].mxu0
      %6852 = vmatprep.mubr.f32.mxu0 0.0
      %6853 = vmatmul.mubr.f32.gmra.mrb[0].mxu0 %v6685
      %v6854 = vpop.f32.mrb[0].mxu0
      %v6855 = vadd.f32 %v6726, %v6854
      %v6856 = vpop.f32.mrb[0].mxu0
      %6857 = vmatprep.mubr.f32.mxu0 0.0
      %6858 = vmatmul.mubr.f32.gmra.mrb[0].mxu0 %v6686
      %v6859 = vpop.f32.mrb[0].mxu0
      %v6860 = vadd.f32 %v6726, %v6859
      %v6861 = vpop.f32.mrb[0].mxu0
      %6862 = vmatprep.mubr.f32.mxu0 0.0
      %6863 = vmatmul.mubr.f32.gmra.mrb[0].mxu0 %v6687
      %v6864 = vpop.f32.mrb[0].mxu0
      %v6865 = vadd.f32 %v6726, %v6864
      %v6866 = vpop.f32.mrb[0].mxu0
      %6867 = vmatprep.mubr.f32.mxu0 0.0
      %6868 = vmatmul.mubr.f32.gmra.mrb[0].mxu0 %v6688
      %v6869 = vpop.f32.mrb[0].mxu0
      %v6870 = vadd.f32 %v6726, %v6869
      %v6871 = vpop.f32.mrb[0].mxu0
      %6872 = vmatprep.mubr.f32.mxu0 0.0
      %6873 = vmatmul.mubr.f32.gmra.mrb[0].mxu0 %v6689
      %v6874 = vpop.f32.mrb[0].mxu0
      %v6875 = vadd.f32 %v6726, %v6874
      %v6876 = vpop.f32.mrb[0].mxu0
      %6877 = vmatprep.mubr.f32.mxu0 0.0
      %6878 = vmatmul.mubr.f32.gmra.mrb[0].mxu0 %v6690
      %v6879 = vpop.f32.mrb[0].mxu0
      %v6880 = vadd.f32 %v6726, %v6879
      %v6881 = vpop.f32.mrb[0].mxu0
      %6882 = vmatprep.mubr.f32.mxu0 0.0
      %6883 = vmatmul.mubr.f32.gmra.mrb[0].mxu0 %v6691
      %v6884 = vpop.f32.mrb[0].mxu0
      %v6885 = vadd.f32 %v6726, %v6884
      %v6886 = vpop.f32.mrb[0].mxu0
      %6887 = vmatprep.mubr.f32.mxu0 0.0
      %6888 = vmatmul.mubr.f32.gmra.mrb[0].mxu0 %v6692
      %v6889 = vpop.f32.mrb[0].mxu0
      %v6890 = vadd.f32 %v6726, %v6889
      %v6891 = vpop.f32.mrb[0].mxu0
      %6892 = vmatprep.mubr.f32.mxu0 0.0
      %6893 = vmatmul.mubr.f32.gmra.mrb[0].mxu0 %v6693
      %v6894 = vpop.f32.mrb[0].mxu0
      %v6895 = vadd.f32 %v6726, %v6894
      %v6896 = vpop.f32.mrb[0].mxu0
      %6897 = vmatprep.mubr.f32.mxu0 0.0
      %6898 = vmatmul.mubr.f32.gmra.mrb[0].mxu0 %v6694
      %v6899 = vpop.f32.mrb[0].mxu0
      %v6900 = vadd.f32 %v6726, %v6899
      %v6901 = vpop.f32.mrb[0].mxu0
      %6902 = vmatprep.mubr.f32.mxu0 0.0
      %6903 = vmatmul.mubr.f32.gmra.mrb[0].mxu0 %v6695
      %v6904 = vpop.f32.mrb[0].mxu0
      %v6905 = vadd.f32 %v6726, %v6904
      %v6906 = vpop.f32.mrb[0].mxu0
      %6907 = vmatprep.mubr.f32.mxu0 0.0
      %6908 = vmatmul.mubr.f32.gmra.mrb[0].mxu0 %v6696
      %v6909 = vpop.f32.mrb[0].mxu0
      %v6910 = vadd.f32 %v6726, %v6909
      %v6911 = vpop.f32.mrb[0].mxu0
      %6912 = vmatprep.mubr.f32.mxu0 0.0
      %6913 = vmatmul.mubr.f32.gmra.mrb[0].mxu0 %v6697
      %v6914 = vpop.f32.mrb[0].mxu0
      %v6915 = vadd.f32 %v6726, %v6914
      %v6916 = vpop.f32.mrb[0].mxu0
      %6917 = vmatprep.mubr.f32.mxu0 0.0
      %6918 = vmatmul.mubr.f32.gmra.mrb[0].mxu0 %v6698
      %v6919 = vpop.f32.mrb[0].mxu0
      %v6920 = vadd.f32 %v6726, %v6919
      %v6921 = vpop.f32.mrb[0].mxu0
      %6922 = vmatprep.mubr.f32.mxu0 0.0
      %6923 = vmatmul.mubr.f32.gmra.mrb[0].mxu0 %v6699
      %v6924 = vpop.f32.mrb[0].mxu0
      %v6925 = vadd.f32 %v6726, %v6924
      %v6926 = vpop.f32.mrb[0].mxu0
      %6927 = vmatprep.mubr.f32.mxu0 0.0
      %6928 = vmatmul.mubr.f32.gmra.mrb[0].mxu0 %v6700
      %v6929 = vpop.f32.mrb[0].mxu0
      %v6930 = vadd.f32 %v6726, %v6929
      %v6931 = vpop.f32.mrb[0].mxu0
      %6932 = vmatprep.mubr.f32.mxu0 0.0
      %6933 = vmatmul.mubr.f32.gmra.mrb[0].mxu0 %v6701
      %v6934 = vpop.f32.mrb[0].mxu0
      %v6935 = vadd.f32 %v6726, %v6934
      %v6936 = vpop.f32.mrb[0].mxu0
      %6937 = vmatprep.mubr.f32.mxu0 0.0
      %6938 = vmatmul.mubr.f32.gmra.mrb[0].mxu0 %v6702
      %v6939 = vpop.f32.mrb[0].mxu0
      %v6940 = vadd.f32 %v6726, %v6939
      %v6941 = vpop.f32.mrb[0].mxu0
      %6942 = vmatprep.mubr.f32.mxu0 0.0
      %6943 = vmatmul.mubr.f32.gmra.mrb[0].mxu0 %v6703
      %v6944 = vpop.f32.mrb[0].mxu0
      %v6945 = vadd.f32 %v6726, %v6944
      %v6946 = vpop.f32.mrb[0].mxu0
      %6947 = vmatprep.mubr.f32.mxu0 0.0
      %6948 = vmatmul.mubr.f32.gmra.mrb[0].mxu0 %v6704
      %v6949 = vpop.f32.mrb[0].mxu0
      %v6950 = vadd.f32 %v6726, %v6949
      %v6951 = vpop.f32.mrb[0].mxu0
      %6952 = vdwg.mxu0
      %6953 = vst [vmem:[%s332] sm:$0xff] %v6795
      %6954 = vst [vmem:[%s332 + $0x8] sm:$0xff] %v6800
      %6955 = vst [vmem:[%s332 + $0x10] sm:$0xff] %v6805
      %6956 = vst [vmem:[%s332 + $0x18] sm:$0xff] %v6810
      %6957 = vst [vmem:[%s332 + $0x20] sm:$0xff] %v6815
      %6958 = vst [vmem:[%s332 + $0x28] sm:$0xff] %v6820
      %6959 = vst [vmem:[%s332 + $0x30] sm:$0xff] %v6825
      %6960 = vst [vmem:[%s332 + $0x38] sm:$0xff] %v6830
      %6961 = vst [vmem:[%s332 + $0x40] sm:$0xff] %v6835
      %6962 = vst [vmem:[%s332 + $0x48] sm:$0xff] %v6840
      %6963 = vst [vmem:[%s332 + $0x50] sm:$0xff] %v6845
      %6964 = vst [vmem:[%s332 + $0x58] sm:$0xff] %v6850
      %6965 = vst [vmem:[%s332 + $0x60] sm:$0xff] %v6855
      %6966 = vst [vmem:[%s332 + $0x68] sm:$0xff] %v6860
      %6967 = vst [vmem:[%s332 + $0x70] sm:$0xff] %v6865
      %6968 = vst [vmem:[%s332 + $0x78] sm:$0xff] %v6870
      %6969 = vst [vmem:[%s332 + $0x80] sm:$0xff] %v6875
      %6970 = vst [vmem:[%s332 + $0x88] sm:$0xff] %v6880
      %6971 = vst [vmem:[%s332 + $0x90] sm:$0xff] %v6885
      %6972 = vst [vmem:[%s332 + $0x98] sm:$0xff] %v6890
      %6973 = vst [vmem:[%s332 + $0xa0] sm:$0xff] %v6895
      %6974 = vst [vmem:[%s332 + $0xa8] sm:$0xff] %v6900
      %6975 = vst [vmem:[%s332 + $0xb0] sm:$0xff] %v6905
      %6976 = vst [vmem:[%s332 + $0xb8] sm:$0xff] %v6910
      %6977 = vst [vmem:[%s332 + $0xc0] sm:$0xff] %v6915
      %6978 = vst [vmem:[%s332 + $0xc8] sm:$0xff] %v6920
      %6979 = vst [vmem:[%s332 + $0xd0] sm:$0xff] %v6925
      %6980 = vst [vmem:[%s332 + $0xd8] sm:$0xff] %v6930
      %6981 = vst [vmem:[%s332 + $0xe0] sm:$0xff] %v6935
      %6982 = vst [vmem:[%s332 + $0xe8] sm:$0xff] %v6940
      %6983 = vst [vmem:[%s332 + $0xf0] sm:$0xff] %v6945
      %6984 = vst [vmem:[%s332 + $0xf8] sm:$0xff] %v6950
      %p6985 = scmp.lt.s32.totalorder %s20, 1
      %s6986 = scalar_select %p6985, %s20, 1
      %s6987 = smul.addr %s6986, 32
      %s6988 = smul.addr %s6987, 8
      %s6989 = scalar_lea.vmem %s9, %s6988
      // Predicated region
      $region57: #{multitask_head_forward.1} parent=55 // pred_check
        %p6990 = pneg %p232
      $region58: #{multitask_head_forward.1} parent=55 // pred_check_branch
        %6992 = sbr.rel (%p6990) target = $region60
      $region59: #{multitask_head_forward.1} parent=55 // pred_region
        _
      $region60: #{multitask_head_forward.1} parent=55 // pred_fallthru
        _
    $region56: #{multitask_head_forward.1} parent=5 // pred_fallthru
      _
    %p6993 = scmp.le.s32.totalorder 2, %s15
    // Predicated region
    $region61: #{multitask_head_forward.1} parent=5 // pred_check
      %p6994 = pneg %p6993
    $region62: #{multitask_head_forward.1} parent=5 // pred_check_branch
      %6996 = sbr.rel (%p6994) target = $region64
    $region63: #{multitask_head_forward.1} parent=5 // pred_region
      %s6997 = ssub.s32 %s15, 2
      // Predicated region
      $region65: #{multitask_head_forward.1} parent=63 // pred_check
        %p6998 = pneg %p238
      $region66: #{multitask_head_forward.1} parent=63 // pred_check_branch
        %7000 = sbr.rel (%p6998) target = $region68
      $region67: #{multitask_head_forward.1} parent=63 // pred_region
        %p7001 = scmp.lt.s32.totalorder %s21, 1
        %s7002 = scalar_select %p7001, %s21, 1
        %s7003 = smul.addr %s7002, 32
        %s7004 = smul.addr %s7003, 8
        %s7005 = scalar_lea.vmem %s9, %s7004
      $region68: #{multitask_head_forward.1} parent=63 // pred_fallthru
        _
    $region64: #{multitask_head_forward.1} parent=5 // pred_fallthru
      _
  $region6: #{multitask_head_forward.1} parent=0 // loop_footer
    %s19 = sadd.s32 1, %s15
  $region7: #{multitask_head_forward.1} parent=0 // loop_footer_branch
    %14 = sbr.rel target = $region3
  $region8: #{multitask_head_forward.1} parent=0 // loop_exit
    _

</llo_original>
